<compile_context>
chip_gen: v6e
topology: v6e:2x2x1
jax: 0.10.0
libtpu: 0.0.40
codegen_flags: <defaults>
</compile_context>

<pallas_src>
import jax
import jax.numpy as jnp
from jax.experimental import pallas as pl
from jax.experimental.pallas import tpu as pltpu

CG = 32        # per-window output channels (96 // 3 windows)
COUT = 96      # real MultiResConv output channels
CPAD = 128     # lane-padded channel count used inside the kernel
TAPS = 7       # largest window (w=3) -> 7 combined taps, 3 pad rows each side


def _round8(v):
    return (v + 7) // 8 * 8


def _conv_out_len(l, s):
    return (l - 1) // s + 1


# --------------------------- fused forward kernel ---------------------------

def _make_fused_kernel(nb, l_in, c_in):
    l1 = l_in                      # conv1 out length (stride 1)
    l2 = _conv_out_len(l1, 2)      # conv2
    l3 = _conv_out_len(l2, 2)      # conv3
    l4 = _conv_out_len(l3, 2)      # conv4
    l5 = _conv_out_len(l4, 2)      # positions entering the conv5 mean

    # Per-batch slot sizes of the batch-flattened, zero-bordered activation
    # buffers; data lives at rows [b*slot + 3, b*slot + 3 + L).  Slots are
    # multiples of 8 (hence even) so stride-2 row parity is batch-invariant.
    s0 = _round8(l_in + 6)
    s1 = _round8(l1 + 6)
    s2 = _round8(l2 + 6)
    s3 = _round8(l3 + 6)

    # Matmul row counts: batch b's outputs sit at rows b*step + t.
    m1 = (nb - 1) * s0 + l1
    m2 = (nb - 1) * (s1 // 2) + l2
    m3 = (nb - 1) * (s2 // 2) + l3
    m4 = (nb - 1) * (s3 // 2) + l4

    def kernel(x_ref, w1_ref, b1_ref, w234_ref, b234_ref, w5_ref, b5_ref,
               o_ref, a0, a1, a2, a3):
        f32, bf16 = jnp.float32, jnp.bfloat16

        def zero_borders(dst, slot, length):
            # Only the 3 leading pad rows and the tail-gap rows of each slot
            # are zeroed; data rows are written exactly once by the epilogue.
            head = jnp.zeros((3, dst.shape[1]), dst.dtype)
            tail = jnp.zeros((slot - 3 - length, dst.shape[1]), dst.dtype)
            for b in range(nb):
                dst[b * slot:b * slot + 3, :] = head
                dst[b * slot + 3 + length:(b + 1) * slot, :] = tail

        # ---- stage conv1 input ---------------------------------------------
        zero_borders(a0, s0, l_in)
        for b in range(nb):
            a0[b * s0 + 3:b * s0 + 3 + l_in, :] = x_ref[b]

        # ---- conv1: stride 1, 7-tap matmul loop (K = c_in) ------------------
        acc = jnp.dot(a0[0:m1, :].astype(bf16), w1_ref[0],
                      preferred_element_type=f32)
        for j in range(1, TAPS):
            acc = acc + jnp.dot(a0[j:j + m1, :].astype(bf16), w1_ref[j],
                                preferred_element_type=f32)

        # Fused epilogue: bias + ReLU on the needed rows only, written
        # directly into conv2's padded staging buffer.
        zero_borders(a1, s1, l1)
        for b in range(nb):
            a1[b * s1 + 3:b * s1 + 3 + l1, :] = jnp.maximum(
                acc[b * s0:b * s0 + l1, :] + b1_ref[...], 0.0)

        # ---- conv2..conv4: stride 2, one im2col matmul (K = 7*128) ----------
        def mrc_s2(src, m, w):
            taps = [src[pl.ds(j, m, stride=2), :] for j in range(TAPS)]
            col = jnp.concatenate(taps, axis=-1).astype(bf16)     # (m, 896)
            return jnp.dot(col, w, preferred_element_type=f32)    # (m, 128)

        # conv2 -> stage into a2
        acc = mrc_s2(a1, m2, w234_ref[0])
        zero_borders(a2, s2, l2)
        step1 = s1 // 2
        for b in range(nb):
            a2[b * s2 + 3:b * s2 + 3 + l2, :] = jnp.maximum(
                acc[b * step1:b * step1 + l2, :] + b234_ref[0], 0.0)

        # conv3 -> stage into a3
        acc = mrc_s2(a2, m3, w234_ref[1])
        zero_borders(a3, s3, l3)
        step2 = s2 // 2
        for b in range(nb):
            a3[b * s3 + 3:b * s3 + 3 + l3, :] = jnp.maximum(
                acc[b * step2:b * step2 + l3, :] + b234_ref[1], 0.0)

        # conv4 (no staging; feeds the head directly)
        acc = mrc_s2(a3, m4, w234_ref[2])
        y4 = jnp.maximum(acc + b234_ref[2], 0.0)                   # (m4, 128)

        # ---- head: conv5 (1x1, stride 2) + mean over positions --------------
        # kernel_size == 1, so mean_t(x[2t] @ W + b) == (mean_t x[2t]) @ W + b.
        # The even-position mean over all batch rows is one tiny (nb, m4) x
        # (m4, 128) selection matmul instead of a serial add chain.
        step3 = s3 // 2
        col_ids = jax.lax.broadcasted_iota(jnp.int32, (nb, m4), 1)
        row_ids = jax.lax.broadcasted_iota(jnp.int32, (nb, m4), 0)
        rel = col_ids - row_ids * step3
        sel = jnp.where((rel >= 0) & (rel <= 2 * (l5 - 1))
                        & (jnp.bitwise_and(rel, 1) == 0),
                        1.0, 0.0).astype(f32)                      # (nb, m4)
        xmean = jnp.dot(sel, y4, preferred_element_type=f32) * (1.0 / l5)
        out = jnp.dot(xmean.astype(bf16), w5_ref[...],
                      preferred_element_type=f32) + b5_ref[...]    # (nb, 128)
        o_ref[0] = out.astype(o_ref.dtype)

    scratch = [
        pltpu.VMEM((nb * s0, c_in), jnp.float32),   # conv1 padded input
        pltpu.VMEM((nb * s1, CPAD), jnp.float32),   # conv2 padded input
        pltpu.VMEM((nb * s2, CPAD), jnp.float32),   # conv3 padded input
        pltpu.VMEM((nb * s3, CPAD), jnp.float32),   # conv4 padded input
    ]
    return kernel, scratch


def _pick_batch_tile(n, l_in, c_in):
    """Largest batch tile (a divisor of n, capped) fitting a ~24 MiB scratch
    budget so the same tile also fits v7x's 64 MiB/core VMEM."""
    l1 = l_in
    l2 = _conv_out_len(l1, 2)
    l3 = _conv_out_len(l2, 2)
    s0 = _round8(l_in + 6)
    s1 = _round8(l1 + 6)
    s2 = _round8(l2 + 6)
    s3 = _round8(l3 + 6)
    per_b = 4 * (s0 * c_in + (s1 + s2 + s3) * CPAD)        # f32 staging scratch
    per_b += 2 * 4 * l_in * c_in                           # double-buffered x block
    per_b += 4 * (s0 + s1) * CPAD + 2 * (s1 // 2) * TAPS * CPAD  # temporaries
    budget = 24 * 1024 * 1024
    nb = max(1, min(n, 16, budget // max(per_b, 1)))
    while n % nb:
        nb -= 1
    return nb


@jax.jit
def rect_cnn_forward(x_ncl, params):
    """x_ncl: (N, in_f, L) exactly like the PyTorch Conv1d input -> (N, 7)."""
    # Single tiny glue HLO: NCL -> NLC so channels land on the 128-wide lanes.
    x = jnp.transpose(x_ncl, (0, 2, 1)).astype(jnp.float32)
    n, l_in, c_in = x.shape

    nb = _pick_batch_tile(n, l_in, c_in)
    kernel, scratch = _make_fused_kernel(nb, l_in, c_in)

    w1, b1 = params["w1"], params["b1"]
    w234, b234 = params["w234"], params["b234"]
    w5, b5 = params["w5"], params["b5"]

    out = pl.pallas_call(
        kernel,
        out_shape=jax.ShapeDtypeStruct((n // nb, nb, 128), jnp.float32),
        grid=(n // nb,),
        in_specs=[
            pl.BlockSpec((nb, l_in, c_in), lambda i: (i, 0, 0)),   # batch tile
            pl.BlockSpec(w1.shape, lambda i: (0, 0, 0)),           # weights stay
            pl.BlockSpec(b1.shape, lambda i: (0, 0)),              # resident
            pl.BlockSpec(w234.shape, lambda i: (0, 0, 0)),
            pl.BlockSpec(b234.shape, lambda i: (0, 0, 0)),
            pl.BlockSpec(w5.shape, lambda i: (0, 0)),
            pl.BlockSpec(b5.shape, lambda i: (0, 0)),
        ],
        out_specs=pl.BlockSpec((1, nb, 128), lambda i: (i, 0, 0)),
        scratch_shapes=scratch,
        compiler_params=pltpu.CompilerParams(
            dimension_semantics=("parallel",),       # v7x: 2 TCs split the batch
            vmem_limit_bytes=48 * 1024 * 1024),
    )(x, w1, b1, w234, b234, w5, b5)
    return out.reshape(n, 128)[:, :7]


# ------------------------------- parameters ---------------------------------

def init_params(key, in_f=513):
    """Per-layer weights with the 3 window convs fused into one 7-tap tensor
    and channels padded to 128 (padded rows/columns/biases are exactly zero,
    so padded lanes stay 0 through ReLU and never leak downstream)."""

    def conv1d_init(k, c_in, c_out, ksize):
        wk, bk = jax.random.split(k)
        bound = 1.0 / (c_in * ksize) ** 0.5
        w = jax.random.uniform(wk, (ksize, c_in, c_out), jnp.float32, -bound, bound)
        b = jax.random.uniform(bk, (1, c_out), jnp.float32, -bound, bound)
        return w, b

    def mrc_combined(k, c_in, c_in_pad):
        k1, k2, k3 = jax.random.split(k, 3)
        w1, b1 = conv1d_init(k1, c_in, CG, 3)   # window w=1
        w2, b2 = conv1d_init(k2, c_in, CG, 5)   # window w=2
        w3, b3 = conv1d_init(k3, c_in, CG, 7)   # window w=3
        # Center-align the 3/5/7 windows inside one 7-tap tensor; taps outside
        # a window and all padded channels stay zero, reproducing per-window
        # 'same' padding and the torch.cat channel order (w=1, w=2, w=3).
        wc = jnp.zeros((TAPS, c_in_pad, CPAD), jnp.float32)
        wc = wc.at[2:5, :c_in, 0 * CG:1 * CG].set(w1)
        wc = wc.at[1:6, :c_in, 1 * CG:2 * CG].set(w2)
        wc = wc.at[0:7, :c_in, 2 * CG:3 * CG].set(w3)
        bc = jnp.zeros((1, CPAD), jnp.float32)
        bc = bc.at[:, 0 * CG:1 * CG].set(b1)
        bc = bc.at[:, 1 * CG:2 * CG].set(b2)
        bc = bc.at[:, 2 * CG:3 * CG].set(b3)
        return wc, bc

    keys = jax.random.split(key, 5)
    w1c, b1c = mrc_combined(keys[0], in_f, in_f)     # (7, in_f, 128)
    w2c, b2c = mrc_combined(keys[1], COUT, CPAD)     # (7, 128, 128) each
    w3c, b3c = mrc_combined(keys[2], COUT, CPAD)
    w4c, b4c = mrc_combined(keys[3], COUT, CPAD)

    w5k, b5k = jax.random.split(keys[4])
    bound = 1.0 / COUT ** 0.5
    # conv5 weights/bias lane-padded to 128 output lanes (lanes 7..127 zero)
    # so the kernel's final store is a full-lane (unmasked) store.
    w5 = jnp.zeros((CPAD, 128), jnp.float32).at[:COUT, :7].set(
        jax.random.uniform(w5k, (COUT, 7), jnp.float32, -bound, bound))
    b5 = jnp.zeros((1, 128), jnp.float32).at[:, :7].set(
        jax.random.uniform(b5k, (1, 7), jnp.float32, -bound, bound))

    w234 = jnp.stack([w2c, w3c, w4c]).reshape(3, TAPS * CPAD, CPAD)

    return {
        "w1": w1c.astype(jnp.bfloat16),        # (7, in_f, 128) bf16
        "b1": b1c,                             # (1, 128) f32
        "w234": w234.astype(jnp.bfloat16),     # (3, 896, 128) bf16 (im2col K)
        "b234": jnp.stack([b2c, b3c, b4c]),    # (3, 1, 128) f32
        "w5": w5.astype(jnp.bfloat16),         # (128, 128) bf16
        "b5": b5,                              # (1, 128) f32
    }


# --------------------------- pure-JAX reference ------------------------------

def _ref_forward(x_ncl, params):
    """f32 reference of the PyTorch forward, using the same fused/padded
    weights (padded channels are exactly zero so the math is identical)."""
    x = jnp.transpose(x_ncl, (0, 2, 1)).astype(jnp.float32)   # (N, L, C)

    def conv(h, w, b, stride):            # w: (7, Cin, Cout), 'same' pad 3
        n, l, _ = h.shape
        hp = jnp.pad(h, ((0, 0), (3, 3), (0, 0)))
        lout = (l - 1) // stride + 1
        y = b
        for j in range(TAPS):
            tap = hp[:, j:j + (lout - 1) * stride + 1:stride, :]
            y = y + jnp.einsum('nlc,cd->nld', tap, w[j])
        return y

    h = jnp.maximum(conv(x, params["w1"].astype(jnp.float32), params["b1"], 1), 0.0)
    w234 = params["w234"].astype(jnp.float32).reshape(3, TAPS, CPAD, CPAD)
    for i in range(3):
        h = jnp.maximum(conv(h, w234[i], params["b234"][i], 2), 0.0)
    ev = h[:, ::2, :]                                           # conv5 stride 2
    out = jnp.mean(ev, axis=1) @ params["w5"].astype(jnp.float32) + params["b5"]
    return out[:, :7]


if __name__ == "__main__":
    key = jax.random.PRNGKey(0)
    pkey, xkey = jax.random.split(key)
    N, IN_F, L = 2, 513, 32
    params = init_params(pkey, IN_F)
    x = jax.random.normal(xkey, (N, IN_F, L), jnp.float32)

    out = rect_cnn_forward(x, params)
    out = jax.block_until_ready(out)
    assert out.shape == (N, 7), out.shape
    assert bool(jnp.all(jnp.isfinite(out)))

    ref = jax.block_until_ready(_ref_forward(x, params))
    # Kernel uses bf16 matmul operands with f32 accumulation (deliberate);
    # validate against the f32 reference with a correspondingly loose tol.
    assert bool(jnp.allclose(out, ref, rtol=5e-2, atol=5e-2)), (
        float(jnp.max(jnp.abs(out - ref))))

    print("KERNEL_OK")
</pallas_src>

<mosaic_0001>
module attributes {stable_mosaic.version = 11 : i64} {
  func.func @kernel(%arg0: i32, %arg1: memref<2x32x513xf32, #tpu.memory_space<vmem>>, %arg2: memref<7x513x128xbf16, #tpu.memory_space<vmem>>, %arg3: memref<1x128xf32, #tpu.memory_space<vmem>>, %arg4: memref<3x896x128xbf16, #tpu.memory_space<vmem>>, %arg5: memref<3x1x128xf32, #tpu.memory_space<vmem>>, %arg6: memref<128x128xbf16, #tpu.memory_space<vmem>>, %arg7: memref<1x128xf32, #tpu.memory_space<vmem>>, %arg8: memref<1x2x128xf32, #tpu.memory_space<vmem>>, %arg9: memref<80x513xf32, #tpu.memory_space<vmem>>, %arg10: memref<80x128xf32, #tpu.memory_space<vmem>>, %arg11: memref<48x128xf32, #tpu.memory_space<vmem>>, %arg12: memref<32x128xf32, #tpu.memory_space<vmem>>) attributes {dimension_semantics = [#tpu.dimension_semantics<parallel>], iteration_bounds = array<i64: 1>, scalar_prefetch = 0 : i64, scratch_operands = 4 : i64, tpu.core_type = #tpu.core_type<tc>, window_params = [{transform_indices = @transform_0, window_bounds = array<i64: 2, 32, 513>}, {pipeline_mode = #tpu.pipeline_mode<synchronous>, transform_indices = @transform_1, window_bounds = array<i64: 7, 513, 128>}, {pipeline_mode = #tpu.pipeline_mode<synchronous>, transform_indices = @transform_2, window_bounds = array<i64: 1, 128>}, {pipeline_mode = #tpu.pipeline_mode<synchronous>, transform_indices = @transform_3, window_bounds = array<i64: 3, 896, 128>}, {pipeline_mode = #tpu.pipeline_mode<synchronous>, transform_indices = @transform_4, window_bounds = array<i64: 3, 1, 128>}, {pipeline_mode = #tpu.pipeline_mode<synchronous>, transform_indices = @transform_5, window_bounds = array<i64: 128, 128>}, {pipeline_mode = #tpu.pipeline_mode<synchronous>, transform_indices = @transform_6, window_bounds = array<i64: 1, 128>}, {transform_indices = @transform_7, window_bounds = array<i64: 1, 2, 128>}]} {
    %cst = arith.constant 0.000000e+00 : f32
    %0 = vector.broadcast %cst : f32 to vector<3x513xf32>
    %cst_0 = arith.constant 0.000000e+00 : f32
    %1 = vector.broadcast %cst_0 : f32 to vector<5x513xf32>
    %c0 = arith.constant 0 : index
    %c0_1 = arith.constant 0 : index
    %2 = vector.load %arg9[%c0, %c0_1] : memref<80x513xf32, #tpu.memory_space<vmem>>, vector<3x513xf32>
    tpu.vector_store %arg9[%c0, %c0_1], %0 {strides = array<i32>} : memref<80x513xf32, #tpu.memory_space<vmem>>, vector<3x513xf32>,
    %c35 = arith.constant 35 : index
    %c0_2 = arith.constant 0 : index
    %3 = vector.load %arg9[%c35, %c0_2] : memref<80x513xf32, #tpu.memory_space<vmem>>, vector<5x513xf32>
    tpu.vector_store %arg9[%c35, %c0_2], %1 {strides = array<i32>} : memref<80x513xf32, #tpu.memory_space<vmem>>, vector<5x513xf32>,
    %c40 = arith.constant 40 : index
    %c0_3 = arith.constant 0 : index
    %4 = vector.load %arg9[%c40, %c0_3] : memref<80x513xf32, #tpu.memory_space<vmem>>, vector<3x513xf32>
    tpu.vector_store %arg9[%c40, %c0_3], %0 {strides = array<i32>} : memref<80x513xf32, #tpu.memory_space<vmem>>, vector<3x513xf32>,
    %c75 = arith.constant 75 : index
    %c0_4 = arith.constant 0 : index
    %5 = vector.load %arg9[%c75, %c0_4] : memref<80x513xf32, #tpu.memory_space<vmem>>, vector<5x513xf32>
    tpu.vector_store %arg9[%c75, %c0_4], %1 {strides = array<i32>} : memref<80x513xf32, #tpu.memory_space<vmem>>, vector<5x513xf32>,
    %c0_5 = arith.constant 0 : index
    %c0_6 = arith.constant 0 : index
    %c0_7 = arith.constant 0 : index
    %6 = vector.load %arg1[%c0_5, %c0_6, %c0_7] : memref<2x32x513xf32, #tpu.memory_space<vmem>>, vector<1x32x513xf32>
    %7 = vector.shape_cast %6 : vector<1x32x513xf32> to vector<32x513xf32>
    %c3 = arith.constant 3 : index
    %c0_8 = arith.constant 0 : index
    %8 = vector.load %arg9[%c3, %c0_8] : memref<80x513xf32, #tpu.memory_space<vmem>>, vector<32x513xf32>
    tpu.vector_store %arg9[%c3, %c0_8], %7 {strides = array<i32>} : memref<80x513xf32, #tpu.memory_space<vmem>>, vector<32x513xf32>,
    %c1 = arith.constant 1 : index
    %c0_9 = arith.constant 0 : index
    %c0_10 = arith.constant 0 : index
    %9 = vector.load %arg1[%c1, %c0_9, %c0_10] : memref<2x32x513xf32, #tpu.memory_space<vmem>>, vector<1x32x513xf32>
    %10 = vector.shape_cast %9 : vector<1x32x513xf32> to vector<32x513xf32>
    %c43 = arith.constant 43 : index
    %c0_11 = arith.constant 0 : index
    %11 = vector.load %arg9[%c43, %c0_11] : memref<80x513xf32, #tpu.memory_space<vmem>>, vector<32x513xf32>
    tpu.vector_store %arg9[%c43, %c0_11], %10 {strides = array<i32>} : memref<80x513xf32, #tpu.memory_space<vmem>>, vector<32x513xf32>,
    %c0_12 = arith.constant 0 : index
    %c0_13 = arith.constant 0 : index
    %12 = vector.load %arg9[%c0_12, %c0_13] : memref<80x513xf32, #tpu.memory_space<vmem>>, vector<72x513xf32>
    %13 = arith.truncf %12 : vector<72x513xf32> to vector<72x513xbf16>
    %c0_14 = arith.constant 0 : index
    %c0_15 = arith.constant 0 : index
    %c0_16 = arith.constant 0 : index
    %14 = vector.load %arg2[%c0_14, %c0_15, %c0_16] : memref<7x513x128xbf16, #tpu.memory_space<vmem>>, vector<1x513x128xbf16>
    %15 = vector.shape_cast %14 : vector<1x513x128xbf16> to vector<513x128xbf16>
    %cst_17 = arith.constant dense<0.000000e+00> : vector<72x128xf32>
    %16 = tpu.matmul %13, %15, %cst_17 {dimension_numbers = #tpu.dot_dimension_numbers<[1], [0], [0], [1], [0, 0, 1, 1], [], []>} : vector<72x513xbf16>, vector<513x128xbf16>, vector<72x128xf32> -> vector<72x128xf32>
    %c1_18 = arith.constant 1 : index
    %c0_19 = arith.constant 0 : index
    %17 = vector.load %arg9[%c1_18, %c0_19] : memref<80x513xf32, #tpu.memory_space<vmem>>, vector<72x513xf32>
    %18 = arith.truncf %17 : vector<72x513xf32> to vector<72x513xbf16>
    %c1_20 = arith.constant 1 : index
    %c0_21 = arith.constant 0 : index
    %c0_22 = arith.constant 0 : index
    %19 = vector.load %arg2[%c1_20, %c0_21, %c0_22] : memref<7x513x128xbf16, #tpu.memory_space<vmem>>, vector<1x513x128xbf16>
    %20 = vector.shape_cast %19 : vector<1x513x128xbf16> to vector<513x128xbf16>
    %cst_23 = arith.constant dense<0.000000e+00> : vector<72x128xf32>
    %21 = tpu.matmul %18, %20, %cst_23 {dimension_numbers = #tpu.dot_dimension_numbers<[1], [0], [0], [1], [0, 0, 1, 1], [], []>} : vector<72x513xbf16>, vector<513x128xbf16>, vector<72x128xf32> -> vector<72x128xf32>
    %22 = arith.addf %16, %21 : vector<72x128xf32>
    %c2 = arith.constant 2 : index
    %c0_24 = arith.constant 0 : index
    %23 = vector.load %arg9[%c2, %c0_24] : memref<80x513xf32, #tpu.memory_space<vmem>>, vector<72x513xf32>
    %24 = arith.truncf %23 : vector<72x513xf32> to vector<72x513xbf16>
    %c2_25 = arith.constant 2 : index
    %c0_26 = arith.constant 0 : index
    %c0_27 = arith.constant 0 : index
    %25 = vector.load %arg2[%c2_25, %c0_26, %c0_27] : memref<7x513x128xbf16, #tpu.memory_space<vmem>>, vector<1x513x128xbf16>
    %26 = vector.shape_cast %25 : vector<1x513x128xbf16> to vector<513x128xbf16>
    %cst_28 = arith.constant dense<0.000000e+00> : vector<72x128xf32>
    %27 = tpu.matmul %24, %26, %cst_28 {dimension_numbers = #tpu.dot_dimension_numbers<[1], [0], [0], [1], [0, 0, 1, 1], [], []>} : vector<72x513xbf16>, vector<513x128xbf16>, vector<72x128xf32> -> vector<72x128xf32>
    %28 = arith.addf %22, %27 : vector<72x128xf32>
    %c3_29 = arith.constant 3 : index
    %c0_30 = arith.constant 0 : index
    %29 = vector.load %arg9[%c3_29, %c0_30] : memref<80x513xf32, #tpu.memory_space<vmem>>, vector<72x513xf32>
    %30 = arith.truncf %29 : vector<72x513xf32> to vector<72x513xbf16>
    %c3_31 = arith.constant 3 : index
    %c0_32 = arith.constant 0 : index
    %c0_33 = arith.constant 0 : index
    %31 = vector.load %arg2[%c3_31, %c0_32, %c0_33] : memref<7x513x128xbf16, #tpu.memory_space<vmem>>, vector<1x513x128xbf16>
    %32 = vector.shape_cast %31 : vector<1x513x128xbf16> to vector<513x128xbf16>
    %cst_34 = arith.constant dense<0.000000e+00> : vector<72x128xf32>
    %33 = tpu.matmul %30, %32, %cst_34 {dimension_numbers = #tpu.dot_dimension_numbers<[1], [0], [0], [1], [0, 0, 1, 1], [], []>} : vector<72x513xbf16>, vector<513x128xbf16>, vector<72x128xf32> -> vector<72x128xf32>
    %34 = arith.addf %28, %33 : vector<72x128xf32>
    %c4 = arith.constant 4 : index
    %c0_35 = arith.constant 0 : index
    %35 = vector.load %arg9[%c4, %c0_35] : memref<80x513xf32, #tpu.memory_space<vmem>>, vector<72x513xf32>
    %36 = arith.truncf %35 : vector<72x513xf32> to vector<72x513xbf16>
    %c4_36 = arith.constant 4 : index
    %c0_37 = arith.constant 0 : index
    %c0_38 = arith.constant 0 : index
    %37 = vector.load %arg2[%c4_36, %c0_37, %c0_38] : memref<7x513x128xbf16, #tpu.memory_space<vmem>>, vector<1x513x128xbf16>
    %38 = vector.shape_cast %37 : vector<1x513x128xbf16> to vector<513x128xbf16>
    %cst_39 = arith.constant dense<0.000000e+00> : vector<72x128xf32>
    %39 = tpu.matmul %36, %38, %cst_39 {dimension_numbers = #tpu.dot_dimension_numbers<[1], [0], [0], [1], [0, 0, 1, 1], [], []>} : vector<72x513xbf16>, vector<513x128xbf16>, vector<72x128xf32> -> vector<72x128xf32>
    %40 = arith.addf %34, %39 : vector<72x128xf32>
    %c5 = arith.constant 5 : index
    %c0_40 = arith.constant 0 : index
    %41 = vector.load %arg9[%c5, %c0_40] : memref<80x513xf32, #tpu.memory_space<vmem>>, vector<72x513xf32>
    %42 = arith.truncf %41 : vector<72x513xf32> to vector<72x513xbf16>
    %c5_41 = arith.constant 5 : index
    %c0_42 = arith.constant 0 : index
    %c0_43 = arith.constant 0 : index
    %43 = vector.load %arg2[%c5_41, %c0_42, %c0_43] : memref<7x513x128xbf16, #tpu.memory_space<vmem>>, vector<1x513x128xbf16>
    %44 = vector.shape_cast %43 : vector<1x513x128xbf16> to vector<513x128xbf16>
    %cst_44 = arith.constant dense<0.000000e+00> : vector<72x128xf32>
    %45 = tpu.matmul %42, %44, %cst_44 {dimension_numbers = #tpu.dot_dimension_numbers<[1], [0], [0], [1], [0, 0, 1, 1], [], []>} : vector<72x513xbf16>, vector<513x128xbf16>, vector<72x128xf32> -> vector<72x128xf32>
    %46 = arith.addf %40, %45 : vector<72x128xf32>
    %c6 = arith.constant 6 : index
    %c0_45 = arith.constant 0 : index
    %47 = vector.load %arg9[%c6, %c0_45] : memref<80x513xf32, #tpu.memory_space<vmem>>, vector<72x513xf32>
    %48 = arith.truncf %47 : vector<72x513xf32> to vector<72x513xbf16>
    %c6_46 = arith.constant 6 : index
    %c0_47 = arith.constant 0 : index
    %c0_48 = arith.constant 0 : index
    %49 = vector.load %arg2[%c6_46, %c0_47, %c0_48] : memref<7x513x128xbf16, #tpu.memory_space<vmem>>, vector<1x513x128xbf16>
    %50 = vector.shape_cast %49 : vector<1x513x128xbf16> to vector<513x128xbf16>
    %cst_49 = arith.constant dense<0.000000e+00> : vector<72x128xf32>
    %51 = tpu.matmul %48, %50, %cst_49 {dimension_numbers = #tpu.dot_dimension_numbers<[1], [0], [0], [1], [0, 0, 1, 1], [], []>} : vector<72x513xbf16>, vector<513x128xbf16>, vector<72x128xf32> -> vector<72x128xf32>
    %52 = arith.addf %46, %51 : vector<72x128xf32>
    %cst_50 = arith.constant 0.000000e+00 : f32
    %53 = vector.broadcast %cst_50 : f32 to vector<3x128xf32>
    %cst_51 = arith.constant 0.000000e+00 : f32
    %54 = vector.broadcast %cst_51 : f32 to vector<5x128xf32>
    %c0_52 = arith.constant 0 : index
    %c0_53 = arith.constant 0 : index
    %55 = vector.load %arg10[%c0_52, %c0_53] : memref<80x128xf32, #tpu.memory_space<vmem>>, vector<3x128xf32>
    tpu.vector_store %arg10[%c0_52, %c0_53], %53 {strides = array<i32>} : memref<80x128xf32, #tpu.memory_space<vmem>>, vector<3x128xf32>,
    %c35_54 = arith.constant 35 : index
    %c0_55 = arith.constant 0 : index
    %56 = vector.load %arg10[%c35_54, %c0_55] : memref<80x128xf32, #tpu.memory_space<vmem>>, vector<5x128xf32>
    tpu.vector_store %arg10[%c35_54, %c0_55], %54 {strides = array<i32>} : memref<80x128xf32, #tpu.memory_space<vmem>>, vector<5x128xf32>,
    %c40_56 = arith.constant 40 : index
    %c0_57 = arith.constant 0 : index
    %57 = vector.load %arg10[%c40_56, %c0_57] : memref<80x128xf32, #tpu.memory_space<vmem>>, vector<3x128xf32>
    tpu.vector_store %arg10[%c40_56, %c0_57], %53 {strides = array<i32>} : memref<80x128xf32, #tpu.memory_space<vmem>>, vector<3x128xf32>,
    %c75_58 = arith.constant 75 : index
    %c0_59 = arith.constant 0 : index
    %58 = vector.load %arg10[%c75_58, %c0_59] : memref<80x128xf32, #tpu.memory_space<vmem>>, vector<5x128xf32>
    tpu.vector_store %arg10[%c75_58, %c0_59], %54 {strides = array<i32>} : memref<80x128xf32, #tpu.memory_space<vmem>>, vector<5x128xf32>,
    %59 = vector.extract_strided_slice %52 {offsets = [0, 0], sizes = [32, 128], strides = [1, 1]} : vector<72x128xf32> to vector<32x128xf32>
    %c0_60 = arith.constant 0 : index
    %c0_61 = arith.constant 0 : index
    %60 = vector.load %arg3[%c0_60, %c0_61] : memref<1x128xf32, #tpu.memory_space<vmem>>, vector<1x128xf32>
    %61 = vector.broadcast %60 : vector<1x128xf32> to vector<32x128xf32>
    %62 = arith.addf %59, %61 : vector<32x128xf32>
    %cst_62 = arith.constant 0.000000e+00 : f32
    %63 = vector.broadcast %cst_62 : f32 to vector<32x128xf32>
    %64 = arith.maximumf %62, %63 : vector<32x128xf32>
    %c3_63 = arith.constant 3 : index
    %c0_64 = arith.constant 0 : index
    %65 = vector.load %arg10[%c3_63, %c0_64] : memref<80x128xf32, #tpu.memory_space<vmem>>, vector<32x128xf32>
    tpu.vector_store %arg10[%c3_63, %c0_64], %64 {strides = array<i32>} : memref<80x128xf32, #tpu.memory_space<vmem>>, vector<32x128xf32>,
    %66 = vector.extract_strided_slice %52 {offsets = [40, 0], sizes = [32, 128], strides = [1, 1]} : vector<72x128xf32> to vector<32x128xf32>
    %c0_65 = arith.constant 0 : index
    %c0_66 = arith.constant 0 : index
    %67 = vector.load %arg3[%c0_65, %c0_66] : memref<1x128xf32, #tpu.memory_space<vmem>>, vector<1x128xf32>
    %68 = vector.broadcast %67 : vector<1x128xf32> to vector<32x128xf32>
    %69 = arith.addf %66, %68 : vector<32x128xf32>
    %cst_67 = arith.constant 0.000000e+00 : f32
    %70 = vector.broadcast %cst_67 : f32 to vector<32x128xf32>
    %71 = arith.maximumf %69, %70 : vector<32x128xf32>
    %c43_68 = arith.constant 43 : index
    %c0_69 = arith.constant 0 : index
    %72 = vector.load %arg10[%c43_68, %c0_69] : memref<80x128xf32, #tpu.memory_space<vmem>>, vector<32x128xf32>
    tpu.vector_store %arg10[%c43_68, %c0_69], %71 {strides = array<i32>} : memref<80x128xf32, #tpu.memory_space<vmem>>, vector<32x128xf32>,
    %c0_70 = arith.constant 0 : index
    %c0_71 = arith.constant 0 : index
    %c0_72 = arith.constant 0 : index
    %73 = vector.load %arg4[%c0_70, %c0_71, %c0_72] : memref<3x896x128xbf16, #tpu.memory_space<vmem>>, vector<1x896x128xbf16>
    %74 = vector.shape_cast %73 : vector<1x896x128xbf16> to vector<896x128xbf16>
    %c0_73 = arith.constant 0 : index
    %c0_74 = arith.constant 0 : index
    %75 = tpu.strided_load %arg10[%c0_73, %c0_74] {strides = array<i32: 2, 1>} : memref<80x128xf32, #tpu.memory_space<vmem>>, vector<36x128xf32>
    %c1_75 = arith.constant 1 : index
    %c0_76 = arith.constant 0 : index
    %76 = tpu.strided_load %arg10[%c1_75, %c0_76] {strides = array<i32: 2, 1>} : memref<80x128xf32, #tpu.memory_space<vmem>>, vector<36x128xf32>
    %c2_77 = arith.constant 2 : index
    %c0_78 = arith.constant 0 : index
    %77 = tpu.strided_load %arg10[%c2_77, %c0_78] {strides = array<i32: 2, 1>} : memref<80x128xf32, #tpu.memory_space<vmem>>, vector<36x128xf32>
    %c3_79 = arith.constant 3 : index
    %c0_80 = arith.constant 0 : index
    %78 = tpu.strided_load %arg10[%c3_79, %c0_80] {strides = array<i32: 2, 1>} : memref<80x128xf32, #tpu.memory_space<vmem>>, vector<36x128xf32>
    %c4_81 = arith.constant 4 : index
    %c0_82 = arith.constant 0 : index
    %79 = tpu.strided_load %arg10[%c4_81, %c0_82] {strides = array<i32: 2, 1>} : memref<80x128xf32, #tpu.memory_space<vmem>>, vector<36x128xf32>
    %c5_83 = arith.constant 5 : index
    %c0_84 = arith.constant 0 : index
    %80 = tpu.strided_load %arg10[%c5_83, %c0_84] {strides = array<i32: 2, 1>} : memref<80x128xf32, #tpu.memory_space<vmem>>, vector<36x128xf32>
    %c6_85 = arith.constant 6 : index
    %c0_86 = arith.constant 0 : index
    %81 = tpu.strided_load %arg10[%c6_85, %c0_86] {strides = array<i32: 2, 1>} : memref<80x128xf32, #tpu.memory_space<vmem>>, vector<36x128xf32>
    %82 = tpu.concatenate %75, %76, %77, %78, %79, %80, %81 in 1 : vector<36x128xf32>, vector<36x128xf32>, vector<36x128xf32>, vector<36x128xf32>, vector<36x128xf32>, vector<36x128xf32>, vector<36x128xf32> -> vector<36x896xf32>
    %83 = arith.truncf %82 : vector<36x896xf32> to vector<36x896xbf16>
    %cst_87 = arith.constant dense<0.000000e+00> : vector<36x128xf32>
    %84 = tpu.matmul %83, %74, %cst_87 {dimension_numbers = #tpu.dot_dimension_numbers<[1], [0], [0], [1], [0, 0, 1, 1], [], []>} : vector<36x896xbf16>, vector<896x128xbf16>, vector<36x128xf32> -> vector<36x128xf32>
    %cst_88 = arith.constant 0.000000e+00 : f32
    %85 = vector.broadcast %cst_88 : f32 to vector<3x128xf32>
    %cst_89 = arith.constant 0.000000e+00 : f32
    %86 = vector.broadcast %cst_89 : f32 to vector<5x128xf32>
    %c0_90 = arith.constant 0 : index
    %c0_91 = arith.constant 0 : index
    %87 = vector.load %arg11[%c0_90, %c0_91] : memref<48x128xf32, #tpu.memory_space<vmem>>, vector<3x128xf32>
    tpu.vector_store %arg11[%c0_90, %c0_91], %85 {strides = array<i32>} : memref<48x128xf32, #tpu.memory_space<vmem>>, vector<3x128xf32>,
    %c19 = arith.constant 19 : index
    %c0_92 = arith.constant 0 : index
    %88 = vector.load %arg11[%c19, %c0_92] : memref<48x128xf32, #tpu.memory_space<vmem>>, vector<5x128xf32>
    tpu.vector_store %arg11[%c19, %c0_92], %86 {strides = array<i32>} : memref<48x128xf32, #tpu.memory_space<vmem>>, vector<5x128xf32>,
    %c24 = arith.constant 24 : index
    %c0_93 = arith.constant 0 : index
    %89 = vector.load %arg11[%c24, %c0_93] : memref<48x128xf32, #tpu.memory_space<vmem>>, vector<3x128xf32>
    tpu.vector_store %arg11[%c24, %c0_93], %85 {strides = array<i32>} : memref<48x128xf32, #tpu.memory_space<vmem>>, vector<3x128xf32>,
    %c43_94 = arith.constant 43 : index
    %c0_95 = arith.constant 0 : index
    %90 = vector.load %arg11[%c43_94, %c0_95] : memref<48x128xf32, #tpu.memory_space<vmem>>, vector<5x128xf32>
    tpu.vector_store %arg11[%c43_94, %c0_95], %86 {strides = array<i32>} : memref<48x128xf32, #tpu.memory_space<vmem>>, vector<5x128xf32>,
    %91 = vector.extract_strided_slice %84 {offsets = [0, 0], sizes = [16, 128], strides = [1, 1]} : vector<36x128xf32> to vector<16x128xf32>
    %c0_96 = arith.constant 0 : index
    %c0_97 = arith.constant 0 : index
    %c0_98 = arith.constant 0 : index
    %92 = vector.load %arg5[%c0_96, %c0_97, %c0_98] : memref<3x1x128xf32, #tpu.memory_space<vmem>>, vector<1x1x128xf32>
    %93 = vector.shape_cast %92 : vector<1x1x128xf32> to vector<1x128xf32>
    %94 = vector.broadcast %93 : vector<1x128xf32> to vector<16x128xf32>
    %95 = arith.addf %91, %94 : vector<16x128xf32>
    %cst_99 = arith.constant 0.000000e+00 : f32
    %96 = vector.broadcast %cst_99 : f32 to vector<16x128xf32>
    %97 = arith.maximumf %95, %96 : vector<16x128xf32>
    %c3_100 = arith.constant 3 : index
    %c0_101 = arith.constant 0 : index
    %98 = vector.load %arg11[%c3_100, %c0_101] : memref<48x128xf32, #tpu.memory_space<vmem>>, vector<16x128xf32>
    tpu.vector_store %arg11[%c3_100, %c0_101], %97 {strides = array<i32>} : memref<48x128xf32, #tpu.memory_space<vmem>>, vector<16x128xf32>,
    %99 = vector.extract_strided_slice %84 {offsets = [20, 0], sizes = [16, 128], strides = [1, 1]} : vector<36x128xf32> to vector<16x128xf32>
    %c0_102 = arith.constant 0 : index
    %c0_103 = arith.constant 0 : index
    %c0_104 = arith.constant 0 : index
    %100 = vector.load %arg5[%c0_102, %c0_103, %c0_104] : memref<3x1x128xf32, #tpu.memory_space<vmem>>, vector<1x1x128xf32>
    %101 = vector.shape_cast %100 : vector<1x1x128xf32> to vector<1x128xf32>
    %102 = vector.broadcast %101 : vector<1x128xf32> to vector<16x128xf32>
    %103 = arith.addf %99, %102 : vector<16x128xf32>
    %cst_105 = arith.constant 0.000000e+00 : f32
    %104 = vector.broadcast %cst_105 : f32 to vector<16x128xf32>
    %105 = arith.maximumf %103, %104 : vector<16x128xf32>
    %c27 = arith.constant 27 : index
    %c0_106 = arith.constant 0 : index
    %106 = vector.load %arg11[%c27, %c0_106] : memref<48x128xf32, #tpu.memory_space<vmem>>, vector<16x128xf32>
    tpu.vector_store %arg11[%c27, %c0_106], %105 {strides = array<i32>} : memref<48x128xf32, #tpu.memory_space<vmem>>, vector<16x128xf32>,
    %c1_107 = arith.constant 1 : index
    %c0_108 = arith.constant 0 : index
    %c0_109 = arith.constant 0 : index
    %107 = vector.load %arg4[%c1_107, %c0_108, %c0_109] : memref<3x896x128xbf16, #tpu.memory_space<vmem>>, vector<1x896x128xbf16>
    %108 = vector.shape_cast %107 : vector<1x896x128xbf16> to vector<896x128xbf16>
    %c0_110 = arith.constant 0 : index
    %c0_111 = arith.constant 0 : index
    %109 = tpu.strided_load %arg11[%c0_110, %c0_111] {strides = array<i32: 2, 1>} : memref<48x128xf32, #tpu.memory_space<vmem>>, vector<20x128xf32>
    %c1_112 = arith.constant 1 : index
    %c0_113 = arith.constant 0 : index
    %110 = tpu.strided_load %arg11[%c1_112, %c0_113] {strides = array<i32: 2, 1>} : memref<48x128xf32, #tpu.memory_space<vmem>>, vector<20x128xf32>
    %c2_114 = arith.constant 2 : index
    %c0_115 = arith.constant 0 : index
    %111 = tpu.strided_load %arg11[%c2_114, %c0_115] {strides = array<i32: 2, 1>} : memref<48x128xf32, #tpu.memory_space<vmem>>, vector<20x128xf32>
    %c3_116 = arith.constant 3 : index
    %c0_117 = arith.constant 0 : index
    %112 = tpu.strided_load %arg11[%c3_116, %c0_117] {strides = array<i32: 2, 1>} : memref<48x128xf32, #tpu.memory_space<vmem>>, vector<20x128xf32>
    %c4_118 = arith.constant 4 : index
    %c0_119 = arith.constant 0 : index
    %113 = tpu.strided_load %arg11[%c4_118, %c0_119] {strides = array<i32: 2, 1>} : memref<48x128xf32, #tpu.memory_space<vmem>>, vector<20x128xf32>
    %c5_120 = arith.constant 5 : index
    %c0_121 = arith.constant 0 : index
    %114 = tpu.strided_load %arg11[%c5_120, %c0_121] {strides = array<i32: 2, 1>} : memref<48x128xf32, #tpu.memory_space<vmem>>, vector<20x128xf32>
    %c6_122 = arith.constant 6 : index
    %c0_123 = arith.constant 0 : index
    %115 = tpu.strided_load %arg11[%c6_122, %c0_123] {strides = array<i32: 2, 1>} : memref<48x128xf32, #tpu.memory_space<vmem>>, vector<20x128xf32>
    %116 = tpu.concatenate %109, %110, %111, %112, %113, %114, %115 in 1 : vector<20x128xf32>, vector<20x128xf32>, vector<20x128xf32>, vector<20x128xf32>, vector<20x128xf32>, vector<20x128xf32>, vector<20x128xf32> -> vector<20x896xf32>
    %117 = arith.truncf %116 : vector<20x896xf32> to vector<20x896xbf16>
    %cst_124 = arith.constant dense<0.000000e+00> : vector<20x128xf32>
    %118 = tpu.matmul %117, %108, %cst_124 {dimension_numbers = #tpu.dot_dimension_numbers<[1], [0], [0], [1], [0, 0, 1, 1], [], []>} : vector<20x896xbf16>, vector<896x128xbf16>, vector<20x128xf32> -> vector<20x128xf32>
    %cst_125 = arith.constant 0.000000e+00 : f32
    %119 = vector.broadcast %cst_125 : f32 to vector<3x128xf32>
    %cst_126 = arith.constant 0.000000e+00 : f32
    %120 = vector.broadcast %cst_126 : f32 to vector<5x128xf32>
    %c0_127 = arith.constant 0 : index
    %c0_128 = arith.constant 0 : index
    %121 = vector.load %arg12[%c0_127, %c0_128] : memref<32x128xf32, #tpu.memory_space<vmem>>, vector<3x128xf32>
    tpu.vector_store %arg12[%c0_127, %c0_128], %119 {strides = array<i32>} : memref<32x128xf32, #tpu.memory_space<vmem>>, vector<3x128xf32>,
    %c11 = arith.constant 11 : index
    %c0_129 = arith.constant 0 : index
    %122 = vector.load %arg12[%c11, %c0_129] : memref<32x128xf32, #tpu.memory_space<vmem>>, vector<5x128xf32>
    tpu.vector_store %arg12[%c11, %c0_129], %120 {strides = array<i32>} : memref<32x128xf32, #tpu.memory_space<vmem>>, vector<5x128xf32>,
    %c16 = arith.constant 16 : index
    %c0_130 = arith.constant 0 : index
    %123 = vector.load %arg12[%c16, %c0_130] : memref<32x128xf32, #tpu.memory_space<vmem>>, vector<3x128xf32>
    tpu.vector_store %arg12[%c16, %c0_130], %119 {strides = array<i32>} : memref<32x128xf32, #tpu.memory_space<vmem>>, vector<3x128xf32>,
    %c27_131 = arith.constant 27 : index
    %c0_132 = arith.constant 0 : index
    %124 = vector.load %arg12[%c27_131, %c0_132] : memref<32x128xf32, #tpu.memory_space<vmem>>, vector<5x128xf32>
    tpu.vector_store %arg12[%c27_131, %c0_132], %120 {strides = array<i32>} : memref<32x128xf32, #tpu.memory_space<vmem>>, vector<5x128xf32>,
    %125 = vector.extract_strided_slice %118 {offsets = [0, 0], sizes = [8, 128], strides = [1, 1]} : vector<20x128xf32> to vector<8x128xf32>
    %c1_133 = arith.constant 1 : index
    %c0_134 = arith.constant 0 : index
    %c0_135 = arith.constant 0 : index
    %126 = vector.load %arg5[%c1_133, %c0_134, %c0_135] : memref<3x1x128xf32, #tpu.memory_space<vmem>>, vector<1x1x128xf32>
    %127 = vector.shape_cast %126 : vector<1x1x128xf32> to vector<1x128xf32>
    %128 = vector.broadcast %127 : vector<1x128xf32> to vector<8x128xf32>
    %129 = arith.addf %125, %128 : vector<8x128xf32>
    %cst_136 = arith.constant 0.000000e+00 : f32
    %130 = vector.broadcast %cst_136 : f32 to vector<8x128xf32>
    %131 = arith.maximumf %129, %130 : vector<8x128xf32>
    %c3_137 = arith.constant 3 : index
    %c0_138 = arith.constant 0 : index
    %132 = vector.load %arg12[%c3_137, %c0_138] : memref<32x128xf32, #tpu.memory_space<vmem>>, vector<8x128xf32>
    tpu.vector_store %arg12[%c3_137, %c0_138], %131 {strides = array<i32>} : memref<32x128xf32, #tpu.memory_space<vmem>>, vector<8x128xf32>,
    %133 = vector.extract_strided_slice %118 {offsets = [12, 0], sizes = [8, 128], strides = [1, 1]} : vector<20x128xf32> to vector<8x128xf32>
    %c1_139 = arith.constant 1 : index
    %c0_140 = arith.constant 0 : index
    %c0_141 = arith.constant 0 : index
    %134 = vector.load %arg5[%c1_139, %c0_140, %c0_141] : memref<3x1x128xf32, #tpu.memory_space<vmem>>, vector<1x1x128xf32>
    %135 = vector.shape_cast %134 : vector<1x1x128xf32> to vector<1x128xf32>
    %136 = vector.broadcast %135 : vector<1x128xf32> to vector<8x128xf32>
    %137 = arith.addf %133, %136 : vector<8x128xf32>
    %cst_142 = arith.constant 0.000000e+00 : f32
    %138 = vector.broadcast %cst_142 : f32 to vector<8x128xf32>
    %139 = arith.maximumf %137, %138 : vector<8x128xf32>
    %c19_143 = arith.constant 19 : index
    %c0_144 = arith.constant 0 : index
    %140 = vector.load %arg12[%c19_143, %c0_144] : memref<32x128xf32, #tpu.memory_space<vmem>>, vector<8x128xf32>
    tpu.vector_store %arg12[%c19_143, %c0_144], %139 {strides = array<i32>} : memref<32x128xf32, #tpu.memory_space<vmem>>, vector<8x128xf32>,
    %c2_145 = arith.constant 2 : index
    %c0_146 = arith.constant 0 : index
    %c0_147 = arith.constant 0 : index
    %141 = vector.load %arg4[%c2_145, %c0_146, %c0_147] : memref<3x896x128xbf16, #tpu.memory_space<vmem>>, vector<1x896x128xbf16>
    %142 = vector.shape_cast %141 : vector<1x896x128xbf16> to vector<896x128xbf16>
    %c0_148 = arith.constant 0 : index
    %c0_149 = arith.constant 0 : index
    %143 = tpu.strided_load %arg12[%c0_148, %c0_149] {strides = array<i32: 2, 1>} : memref<32x128xf32, #tpu.memory_space<vmem>>, vector<12x128xf32>
    %c1_150 = arith.constant 1 : index
    %c0_151 = arith.constant 0 : index
    %144 = tpu.strided_load %arg12[%c1_150, %c0_151] {strides = array<i32: 2, 1>} : memref<32x128xf32, #tpu.memory_space<vmem>>, vector<12x128xf32>
    %c2_152 = arith.constant 2 : index
    %c0_153 = arith.constant 0 : index
    %145 = tpu.strided_load %arg12[%c2_152, %c0_153] {strides = array<i32: 2, 1>} : memref<32x128xf32, #tpu.memory_space<vmem>>, vector<12x128xf32>
    %c3_154 = arith.constant 3 : index
    %c0_155 = arith.constant 0 : index
    %146 = tpu.strided_load %arg12[%c3_154, %c0_155] {strides = array<i32: 2, 1>} : memref<32x128xf32, #tpu.memory_space<vmem>>, vector<12x128xf32>
    %c4_156 = arith.constant 4 : index
    %c0_157 = arith.constant 0 : index
    %147 = tpu.strided_load %arg12[%c4_156, %c0_157] {strides = array<i32: 2, 1>} : memref<32x128xf32, #tpu.memory_space<vmem>>, vector<12x128xf32>
    %c5_158 = arith.constant 5 : index
    %c0_159 = arith.constant 0 : index
    %148 = tpu.strided_load %arg12[%c5_158, %c0_159] {strides = array<i32: 2, 1>} : memref<32x128xf32, #tpu.memory_space<vmem>>, vector<12x128xf32>
    %c6_160 = arith.constant 6 : index
    %c0_161 = arith.constant 0 : index
    %149 = tpu.strided_load %arg12[%c6_160, %c0_161] {strides = array<i32: 2, 1>} : memref<32x128xf32, #tpu.memory_space<vmem>>, vector<12x128xf32>
    %150 = tpu.concatenate %143, %144, %145, %146, %147, %148, %149 in 1 : vector<12x128xf32>, vector<12x128xf32>, vector<12x128xf32>, vector<12x128xf32>, vector<12x128xf32>, vector<12x128xf32>, vector<12x128xf32> -> vector<12x896xf32>
    %151 = arith.truncf %150 : vector<12x896xf32> to vector<12x896xbf16>
    %cst_162 = arith.constant dense<0.000000e+00> : vector<12x128xf32>
    %152 = tpu.matmul %151, %142, %cst_162 {dimension_numbers = #tpu.dot_dimension_numbers<[1], [0], [0], [1], [0, 0, 1, 1], [], []>} : vector<12x896xbf16>, vector<896x128xbf16>, vector<12x128xf32> -> vector<12x128xf32>
    %c2_163 = arith.constant 2 : index
    %c0_164 = arith.constant 0 : index
    %c0_165 = arith.constant 0 : index
    %153 = vector.load %arg5[%c2_163, %c0_164, %c0_165] : memref<3x1x128xf32, #tpu.memory_space<vmem>>, vector<1x1x128xf32>
    %154 = vector.shape_cast %153 : vector<1x1x128xf32> to vector<1x128xf32>
    %155 = vector.broadcast %154 : vector<1x128xf32> to vector<12x128xf32>
    %156 = arith.addf %152, %155 : vector<12x128xf32>
    %cst_166 = arith.constant 0.000000e+00 : f32
    %157 = vector.broadcast %cst_166 : f32 to vector<12x128xf32>
    %158 = arith.maximumf %156, %157 : vector<12x128xf32>
    %159 = tpu.iota {dimensions = array<i32: 1>} : vector<2x12xi32>
    %160 = tpu.iota {dimensions = array<i32: 0>} : vector<2x12xi32>
    %c8_i32 = arith.constant 8 : i32
    %161 = vector.broadcast %c8_i32 : i32 to vector<2x12xi32>
    %162 = arith.muli %160, %161 : vector<2x12xi32>
    %163 = arith.subi %159, %162 : vector<2x12xi32>
    %c0_i32 = arith.constant 0 : i32
    %164 = vector.broadcast %c0_i32 : i32 to vector<2x12xi32>
    %165 = arith.cmpi sge, %163, %164 : vector<2x12xi32>
    %c2_i32 = arith.constant 2 : i32
    %166 = vector.broadcast %c2_i32 : i32 to vector<2x12xi32>
    %167 = arith.cmpi sle, %163, %166 : vector<2x12xi32>
    %168 = arith.andi %165, %167 : vector<2x12xi1>
    %c1_i32 = arith.constant 1 : i32
    %169 = vector.broadcast %c1_i32 : i32 to vector<2x12xi32>
    %170 = arith.andi %163, %169 : vector<2x12xi32>
    %c0_i32_167 = arith.constant 0 : i32
    %171 = vector.broadcast %c0_i32_167 : i32 to vector<2x12xi32>
    %172 = arith.cmpi eq, %170, %171 : vector<2x12xi32>
    %173 = arith.andi %168, %172 : vector<2x12xi1>
    %cst_168 = arith.constant 1.000000e+00 : f32
    %cst_169 = arith.constant 0.000000e+00 : f32
    %174 = vector.broadcast %cst_168 : f32 to vector<2x12xf32>
    %175 = vector.broadcast %cst_169 : f32 to vector<2x12xf32>
    %176 = arith.select %173, %174, %175 : vector<2x12xi1>, vector<2x12xf32>
    %cst_170 = arith.constant dense<0.000000e+00> : vector<2x128xf32>
    %177 = tpu.matmul %176, %158, %cst_170 {dimension_numbers = #tpu.dot_dimension_numbers<[1], [0], [0], [1], [0, 0, 1, 1], [], []>} : vector<2x12xf32>, vector<12x128xf32>, vector<2x128xf32> -> vector<2x128xf32>
    %cst_171 = arith.constant 5.000000e-01 : f32
    %178 = vector.broadcast %cst_171 : f32 to vector<2x128xf32>
    %179 = arith.mulf %177, %178 : vector<2x128xf32>
    %180 = arith.truncf %179 : vector<2x128xf32> to vector<2x128xbf16>
    %c0_172 = arith.constant 0 : index
    %c0_173 = arith.constant 0 : index
    %181 = vector.load %arg6[%c0_172, %c0_173] : memref<128x128xbf16, #tpu.memory_space<vmem>>, vector<128x128xbf16>
    %cst_174 = arith.constant dense<0.000000e+00> : vector<2x128xf32>
    %182 = tpu.matmul %180, %181, %cst_174 {dimension_numbers = #tpu.dot_dimension_numbers<[1], [0], [0], [1], [0, 0, 1, 1], [], []>} : vector<2x128xbf16>, vector<128x128xbf16>, vector<2x128xf32> -> vector<2x128xf32>
    %c0_175 = arith.constant 0 : index
    %c0_176 = arith.constant 0 : index
    %183 = vector.load %arg7[%c0_175, %c0_176] : memref<1x128xf32, #tpu.memory_space<vmem>>, vector<1x128xf32>
    %184 = vector.broadcast %183 : vector<1x128xf32> to vector<2x128xf32>
    %185 = arith.addf %182, %184 : vector<2x128xf32>
    %c0_177 = arith.constant 0 : index
    %c0_178 = arith.constant 0 : index
    %c0_179 = arith.constant 0 : index
    %186 = vector.load %arg8[%c0_177, %c0_178, %c0_179] : memref<1x2x128xf32, #tpu.memory_space<vmem>>, vector<1x2x128xf32>
    %187 = vector.shape_cast %186 : vector<1x2x128xf32> to vector<2x128xf32>
    %188 = vector.shape_cast %185 : vector<2x128xf32> to vector<1x2x128xf32>
    tpu.vector_store %arg8[%c0_177, %c0_178, %c0_179], %188 {strides = array<i32>} : memref<1x2x128xf32, #tpu.memory_space<vmem>>, vector<1x2x128xf32>,
    return
  }
  func.func @transform_0(%arg0: i32) -> (i32, i32, i32) {
    %c0_i32 = arith.constant 0 : i32
    %c0_i32_0 = arith.constant 0 : i32
    %c0_i32_1 = arith.constant 0 : i32
    return %arg0, %c0_i32, %c0_i32_0 : i32, i32, i32
  }
  func.func @transform_1(%arg0: i32) -> (i32, i32, i32) {
    %c0_i32 = arith.constant 0 : i32
    %c0_i32_0 = arith.constant 0 : i32
    %c0_i32_1 = arith.constant 0 : i32
    %c0_i32_2 = arith.constant 0 : i32
    return %c0_i32, %c0_i32_0, %c0_i32_1 : i32, i32, i32
  }
  func.func @transform_2(%arg0: i32) -> (i32, i32) {
    %c0_i32 = arith.constant 0 : i32
    %c0_i32_0 = arith.constant 0 : i32
    %c0_i32_1 = arith.constant 0 : i32
    return %c0_i32, %c0_i32_0 : i32, i32
  }
  func.func @transform_3(%arg0: i32) -> (i32, i32, i32) {
    %c0_i32 = arith.constant 0 : i32
    %c0_i32_0 = arith.constant 0 : i32
    %c0_i32_1 = arith.constant 0 : i32
    %c0_i32_2 = arith.constant 0 : i32
    return %c0_i32, %c0_i32_0, %c0_i32_1 : i32, i32, i32
  }
  func.func @transform_4(%arg0: i32) -> (i32, i32, i32) {
    %c0_i32 = arith.constant 0 : i32
    %c0_i32_0 = arith.constant 0 : i32
    %c0_i32_1 = arith.constant 0 : i32
    %c0_i32_2 = arith.constant 0 : i32
    return %c0_i32, %c0_i32_0, %c0_i32_1 : i32, i32, i32
  }
  func.func @transform_5(%arg0: i32) -> (i32, i32) {
    %c0_i32 = arith.constant 0 : i32
    %c0_i32_0 = arith.constant 0 : i32
    %c0_i32_1 = arith.constant 0 : i32
    return %c0_i32, %c0_i32_0 : i32, i32
  }
  func.func @transform_6(%arg0: i32) -> (i32, i32) {
    %c0_i32 = arith.constant 0 : i32
    %c0_i32_0 = arith.constant 0 : i32
    %c0_i32_1 = arith.constant 0 : i32
    return %c0_i32, %c0_i32_0 : i32, i32
  }
  func.func @transform_7(%arg0: i32) -> (i32, i32, i32) {
    %c0_i32 = arith.constant 0 : i32
    %c0_i32_0 = arith.constant 0 : i32
    %c0_i32_1 = arith.constant 0 : i32
    return %arg0, %c0_i32, %c0_i32_0 : i32, i32, i32
  }
}

</mosaic_0001>

<llo_original>
// kernel: rect_cnn_forward.1
$region0: #{rect_cnn_forward.1}
  #allocation0 [shape = 'u32[]', space=smem, size = 0x4, offset = 0x4, fixed_abs, tag = 'smem constant byte address 0x4 - core index']
  #allocation1 [shape = 'u32[144,128]{1,0:T(1,128)}', space=vmem, size = 0x12000, scoped, tag = 'internal scratch']
  #allocation2 [shape = 'f32[80,513]{1,0:T(8,128)}', space=vmem, size = 0x32000, scoped, tag = 'scratch operand']
  #allocation3 [shape = 'f32[80,128]{1,0:T(8,128)}', space=vmem, size = 0xa000, scoped, tag = 'scratch operand']
  #allocation4 [shape = 'f32[48,128]{1,0:T(8,128)}', space=vmem, size = 0x6000, scoped, tag = 'scratch operand']
  #allocation5 [shape = 'f32[32,128]{1,0:T(8,128)}', space=vmem, size = 0x4000, scoped, tag = 'scratch operand']
  %s0 = inlined_call_operand.hbm [shape: f32[2,32,513], index: 0, kind: input, shape index: {}]
  %s1 = inlined_call_operand.hbm [shape: bf16[7,513,128], index: 1, kind: input, shape index: {}]
  %s2 = inlined_call_operand.vmem [shape: f32[1,128], index: 2, kind: input, shape index: {}]
  %s3 = inlined_call_operand.hbm [shape: bf16[3,896,128], index: 3, kind: input, shape index: {}]
  %s4 = inlined_call_operand.vmem [shape: f32[3,1,128], index: 4, kind: input, shape index: {}]
  %s5 = inlined_call_operand.hbm [shape: bf16[128,128], index: 5, kind: input, shape index: {}]
  %s6 = inlined_call_operand.vmem [shape: f32[1,128], index: 6, kind: input, shape index: {}]
  %s7 = inlined_call_operand.hbm [shape: f32[1,2,128], index: 7, kind: output, shape index: {}]
  %s8 = sld [smem:[#allocation0]]
  $region54: #{rect_cnn_forward.1} parent=0
    _
  %s10 = ssub.s32 1, %s8
  %s11 = scalar_select 0, %s10, %s8
  $region1: #{rect_cnn_forward.1} parent=0
    #allocation6 [shape = 'u8[163840]{0}', space=vmem, size = 0x28000, scoped, tag = 'input window, operand 0, single buffered']
    #allocation7 [shape = 's32[1]{0}', space=sflag, size = 0x4, scoped, tag = 'scoped memory for rect_cnn_forward.1']
    #allocation8 [shape = 's32[1]{0}', space=sflag, size = 0x4, scoped, tag = 'scoped memory for rect_cnn_forward.1']
    #allocation9 [shape = 'u8[931840]{0}', space=vmem, size = 0xe3800, scoped, tag = 'input window, operand 1, single buffered']
    #allocation10 [shape = 's32[1]{0}', space=sflag, size = 0x4, scoped, tag = 'scoped memory for rect_cnn_forward.1']
    #allocation11 [shape = 'u8[688128]{0}', space=vmem, size = 0xa8000, scoped, tag = 'input window, operand 3, single buffered']
    #allocation12 [shape = 'u8[32768]{0}', space=vmem, size = 0x8000, scoped, tag = 'input window, operand 5, single buffered']
    #allocation13 [shape = 's32[1]{0}', space=sflag, size = 0x4, scoped, tag = 'scoped memory for rect_cnn_forward.1']
    #allocation14 [shape = 'u8[1024]{0}', space=vmem, size = 0x400, scoped, tag = 'output window, operand 0, single buffered']
    %12 = vsyncpa [#allocation7], 0
    %13 = vsyncpa [#allocation10], 0
    %14 = vsyncpa [#allocation13], 0
    %15 = vsyncpa [#allocation8], 0
    // Predicated region
    $region2: #{rect_cnn_forward.1} parent=1 // pred_check
      _
    $region3: #{rect_cnn_forward.1} parent=1 // pred_check_branch
      %17 = sbr.rel (0) target = $region5
    $region4: #{rect_cnn_forward.1} parent=1 // pred_region
      %s19 = ssub.s32 5120, 5120
      %20 = vsyncadd [#allocation7], %s19
      %s21 = sshll.u32 [#allocation6], 4
      %s22 = int_to_ptr.vmem [resolvable:$true] %s21
      %27 = dma.hbm_to_vmem [thread:$0]  %s0, 5120, %s22, [#allocation7], 640, 640, 40
    $region5: #{rect_cnn_forward.1} parent=1 // pred_fallthru
      _
    // Predicated region
    $region6: #{rect_cnn_forward.1} parent=1 // pred_check
      _
    $region7: #{rect_cnn_forward.1} parent=1 // pred_check_branch
      %29 = sbr.rel (0) target = $region9
    $region8: #{rect_cnn_forward.1} parent=1 // pred_region
      %s31 = ssub.s32 29120, 29120
      %32 = vsyncadd [#allocation10], %s31
      %s33 = sshll.u32 [#allocation9], 4
      %s34 = int_to_ptr.vmem [resolvable:$true] %s33
      %39 = dma.hbm_to_vmem [thread:$0]  %s1, 29120, %s34, [#allocation10], 64, 64, 4
    $region9: #{rect_cnn_forward.1} parent=1 // pred_fallthru
      _
    // Predicated region
    $region10: #{rect_cnn_forward.1} parent=1 // pred_check
      _
    $region11: #{rect_cnn_forward.1} parent=1 // pred_check_branch
      %41 = sbr.rel (0) target = $region13
    $region12: #{rect_cnn_forward.1} parent=1 // pred_region
      _
    $region13: #{rect_cnn_forward.1} parent=1 // pred_fallthru
      _
    // Predicated region
    $region14: #{rect_cnn_forward.1} parent=1 // pred_check
      _
    $region15: #{rect_cnn_forward.1} parent=1 // pred_check_branch
      %43 = sbr.rel (0) target = $region17
    $region16: #{rect_cnn_forward.1} parent=1 // pred_region
      %s45 = ssub.s32 21504, 21504
      %46 = vsyncadd [#allocation10], %s45
      %s47 = sshll.u32 [#allocation11], 4
      %s48 = int_to_ptr.vmem [resolvable:$true] %s47
      %53 = dma.hbm_to_vmem [thread:$0]  %s3, 21504, %s48, [#allocation10], 64, 64, 4
    $region17: #{rect_cnn_forward.1} parent=1 // pred_fallthru
      _
    // Predicated region
    $region18: #{rect_cnn_forward.1} parent=1 // pred_check
      _
    $region19: #{rect_cnn_forward.1} parent=1 // pred_check_branch
      %55 = sbr.rel (0) target = $region21
    $region20: #{rect_cnn_forward.1} parent=1 // pred_region
      _
    $region21: #{rect_cnn_forward.1} parent=1 // pred_fallthru
      _
    // Predicated region
    $region22: #{rect_cnn_forward.1} parent=1 // pred_check
      _
    $region23: #{rect_cnn_forward.1} parent=1 // pred_check_branch
      %57 = sbr.rel (0) target = $region25
    $region24: #{rect_cnn_forward.1} parent=1 // pred_region
      %s59 = ssub.s32 1024, 1024
      %60 = vsyncadd [#allocation13], %s59
      %s61 = sshll.u32 [#allocation12], 4
      %s62 = int_to_ptr.vmem [resolvable:$true] %s61
      %67 = dma.hbm_to_vmem [thread:$0]  %s5, 1024, %s62, [#allocation13], 64, 64, 4
    $region25: #{rect_cnn_forward.1} parent=1 // pred_fallthru
      _
    // Predicated region
    $region26: #{rect_cnn_forward.1} parent=1 // pred_check
      _
    $region27: #{rect_cnn_forward.1} parent=1 // pred_check_branch
      %69 = sbr.rel (0) target = $region29
    $region28: #{rect_cnn_forward.1} parent=1 // pred_region
      _
    $region29: #{rect_cnn_forward.1} parent=1 // pred_fallthru
      _
    // Predicated region
    $region30: #{rect_cnn_forward.1} parent=1 // pred_check
      _
    $region31: #{rect_cnn_forward.1} parent=1 // pred_check_branch
      %71 = sbr.rel (0) target = $region33
    $region32: #{rect_cnn_forward.1} parent=1 // pred_region
      %72 = dma.done [#allocation7], 5120
    $region33: #{rect_cnn_forward.1} parent=1 // pred_fallthru
      _
    // Predicated region
    $region34: #{rect_cnn_forward.1} parent=1 // pred_check
      _
    $region35: #{rect_cnn_forward.1} parent=1 // pred_check_branch
      %74 = sbr.rel (0) target = $region37
    $region36: #{rect_cnn_forward.1} parent=1 // pred_region
      %75 = dma.done [#allocation10], 29120
    $region37: #{rect_cnn_forward.1} parent=1 // pred_fallthru
      _
    // Predicated region
    $region38: #{rect_cnn_forward.1} parent=1 // pred_check
      _
    $region39: #{rect_cnn_forward.1} parent=1 // pred_check_branch
      %77 = sbr.rel (0) target = $region41
    $region40: #{rect_cnn_forward.1} parent=1 // pred_region
      %78 = dma.done [#allocation10], 21504
    $region41: #{rect_cnn_forward.1} parent=1 // pred_fallthru
      _
    // Predicated region
    $region42: #{rect_cnn_forward.1} parent=1 // pred_check
      _
    $region43: #{rect_cnn_forward.1} parent=1 // pred_check_branch
      %80 = sbr.rel (0) target = $region45
    $region44: #{rect_cnn_forward.1} parent=1 // pred_region
      %81 = dma.done [#allocation13], 1024
    $region45: #{rect_cnn_forward.1} parent=1 // pred_fallthru
      _
    %83 = vst [vmem:[#allocation2] sm:$0x7] 0.0
    %84 = vst [vmem:[#allocation2 + $0x8] sm:$0x7] 0.0
    %85 = vst [vmem:[#allocation2 + $0x10] sm:$0x7] 0.0
    %86 = vst [vmem:[#allocation2 + $0x18] sm:$0x7] 0.0
    %vm87 = vcmask 2048
    %88 = vst.msk [vmem:[#allocation2 + $0x20] sm:$0x7] %vm87, 0.0
    %89 = vst [vmem:[#allocation2 + $0xa0] sm:$0xf8] 0.0
    %90 = vst [vmem:[#allocation2 + $0xa8] sm:$0xf8] 0.0
    %91 = vst [vmem:[#allocation2 + $0xb0] sm:$0xf8] 0.0
    %92 = vst [vmem:[#allocation2 + $0xb8] sm:$0xf8] 0.0
    %vm93 = vcmask 7171
    %94 = vst.msk [vmem:[#allocation2 + $0xc0] sm:$0xf8] %vm93, 0.0
    %95 = vst [vmem:[#allocation2 + $0xc8] sm:$0x7] 0.0
    %96 = vst [vmem:[#allocation2 + $0xd0] sm:$0x7] 0.0
    %97 = vst [vmem:[#allocation2 + $0xd8] sm:$0x7] 0.0
    %98 = vst [vmem:[#allocation2 + $0xe0] sm:$0x7] 0.0
    %99 = vst.msk [vmem:[#allocation2 + $0xe8] sm:$0x7] %vm87, 0.0
    %100 = vst [vmem:[#allocation2 + $0x168] sm:$0xf8] 0.0
    %101 = vst [vmem:[#allocation2 + $0x170] sm:$0xf8] 0.0
    %102 = vst [vmem:[#allocation2 + $0x178] sm:$0xf8] 0.0
    %103 = vst [vmem:[#allocation2 + $0x180] sm:$0xf8] 0.0
    %104 = vst.msk [vmem:[#allocation2 + $0x188] sm:$0xf8] %vm93, 0.0
    %v105 = vld [vmem:[#allocation6] sm:$0xff]
    %v106 = vld [vmem:[#allocation6 + $0x8] sm:$0xff]
    %v107 = vld [vmem:[#allocation6 + $0x10] sm:$0xff]
    %v108 = vld [vmem:[#allocation6 + $0x18] sm:$0xff]
    %v109 = vld [vmem:[#allocation6 + $0x20] sm:$0xff]
    %v110 = vld [vmem:[#allocation6 + $0x28] sm:$0xff]
    %v111 = vld [vmem:[#allocation6 + $0x30] sm:$0xff]
    %v112 = vld [vmem:[#allocation6 + $0x38] sm:$0xff]
    %v113 = vld [vmem:[#allocation6 + $0x40] sm:$0xff]
    %v114 = vld [vmem:[#allocation6 + $0x48] sm:$0xff]
    %v115 = vld [vmem:[#allocation6 + $0x50] sm:$0xff]
    %v116 = vld [vmem:[#allocation6 + $0x58] sm:$0xff]
    %v117 = vld [vmem:[#allocation6 + $0x60] sm:$0xff]
    %v118 = vld [vmem:[#allocation6 + $0x68] sm:$0xff]
    %v119 = vld [vmem:[#allocation6 + $0x70] sm:$0xff]
    %v120 = vld [vmem:[#allocation6 + $0x78] sm:$0xff]
    %v121 = vld [vmem:[#allocation6 + $0x80] sm:$0xff]
    %v122 = vld [vmem:[#allocation6 + $0x88] sm:$0xff]
    %v123 = vld [vmem:[#allocation6 + $0x90] sm:$0xff]
    %v124 = vld [vmem:[#allocation6 + $0x98] sm:$0xff]
    %vm145 = vcmask 1042432
    %v146 = vrot.slane %v105, 5
    %v147 = vrot.slane %v106, 5
    %v148 = vrot.slane %v107, 5
    %v149 = vrot.slane %v108, 5
    %v150 = vrot.slane %v109, 5
    %v151 = vrot.slane %v110, 5
    %v152 = vsel %vm145, %v146, %v151
    %v153 = vrot.slane %v111, 5
    %v154 = vsel %vm145, %v147, %v153
    %v155 = vrot.slane %v112, 5
    %v156 = vsel %vm145, %v148, %v155
    %v157 = vrot.slane %v113, 5
    %v158 = vsel %vm145, %v149, %v157
    %v159 = vrot.slane %v114, 5
    %v160 = vsel %vm145, %v150, %v159
    %v161 = vrot.slane %v115, 5
    %v162 = vsel %vm145, %v151, %v161
    %v163 = vrot.slane %v116, 5
    %v164 = vsel %vm145, %v153, %v163
    %v165 = vrot.slane %v117, 5
    %v166 = vsel %vm145, %v155, %v165
    %v167 = vrot.slane %v118, 5
    %v168 = vsel %vm145, %v157, %v167
    %v169 = vrot.slane %v119, 5
    %v170 = vsel %vm145, %v159, %v169
    %v171 = vrot.slane %v120, 5
    %v172 = vsel %vm145, %v161, %v171
    %v173 = vrot.slane %v121, 5
    %v174 = vsel %vm145, %v163, %v173
    %v175 = vrot.slane %v122, 5
    %v176 = vsel %vm145, %v165, %v175
    %v177 = vrot.slane %v123, 5
    %v178 = vsel %vm145, %v167, %v177
    %v179 = vrot.slane %v124, 5
    %v180 = vsel %vm145, %v169, %v179
    %206 = vst [vmem:[#allocation2] sm:$0xf8] %v146
    %207 = vst [vmem:[#allocation2 + $0x8] sm:$0xf8] %v147
    %208 = vst [vmem:[#allocation2 + $0x10] sm:$0xf8] %v148
    %209 = vst [vmem:[#allocation2 + $0x18] sm:$0xf8] %v149
    %210 = vst.msk [vmem:[#allocation2 + $0x20] sm:$0xf8] %vm93, %v150
    %211 = vst [vmem:[#allocation2 + $0x28] sm:$0xff] %v152
    %212 = vst [vmem:[#allocation2 + $0x30] sm:$0xff] %v154
    %213 = vst [vmem:[#allocation2 + $0x38] sm:$0xff] %v156
    %214 = vst [vmem:[#allocation2 + $0x40] sm:$0xff] %v158
    %vm215 = vcmask 7168
    %216 = vst.msk [vmem:[#allocation2 + $0x48] sm:$0xff] %vm215, %v160
    %217 = vst [vmem:[#allocation2 + $0x50] sm:$0xff] %v162
    %218 = vst [vmem:[#allocation2 + $0x58] sm:$0xff] %v164
    %219 = vst [vmem:[#allocation2 + $0x60] sm:$0xff] %v166
    %220 = vst [vmem:[#allocation2 + $0x68] sm:$0xff] %v168
    %221 = vst.msk [vmem:[#allocation2 + $0x70] sm:$0xff] %vm215, %v170
    %222 = vst [vmem:[#allocation2 + $0x78] sm:$0xff] %v172
    %223 = vst [vmem:[#allocation2 + $0x80] sm:$0xff] %v174
    %224 = vst [vmem:[#allocation2 + $0x88] sm:$0xff] %v176
    %225 = vst [vmem:[#allocation2 + $0x90] sm:$0xff] %v178
    %226 = vst.msk [vmem:[#allocation2 + $0x98] sm:$0xff] %vm215, %v180
    %227 = vst [vmem:[#allocation2 + $0xa0] sm:$0x7] %v171
    %228 = vst [vmem:[#allocation2 + $0xa8] sm:$0x7] %v173
    %229 = vst [vmem:[#allocation2 + $0xb0] sm:$0x7] %v175
    %230 = vst [vmem:[#allocation2 + $0xb8] sm:$0x7] %v177
    %231 = vst.msk [vmem:[#allocation2 + $0xc0] sm:$0x7] %vm87, %v179
    %s232 = scalar_lea.vmem [#allocation6], 160
    %v233 = vld [vmem:[%s232] sm:$0xff]
    %v234 = vld [vmem:[%s232 + $0x8] sm:$0xff]
    %v235 = vld [vmem:[%s232 + $0x10] sm:$0xff]
    %v236 = vld [vmem:[%s232 + $0x18] sm:$0xff]
    %v237 = vld [vmem:[%s232 + $0x20] sm:$0xff]
    %v238 = vld [vmem:[%s232 + $0x28] sm:$0xff]
    %v239 = vld [vmem:[%s232 + $0x30] sm:$0xff]
    %v240 = vld [vmem:[%s232 + $0x38] sm:$0xff]
    %v241 = vld [vmem:[%s232 + $0x40] sm:$0xff]
    %v242 = vld [vmem:[%s232 + $0x48] sm:$0xff]
    %v243 = vld [vmem:[%s232 + $0x50] sm:$0xff]
    %v244 = vld [vmem:[%s232 + $0x58] sm:$0xff]
    %v245 = vld [vmem:[%s232 + $0x60] sm:$0xff]
    %v246 = vld [vmem:[%s232 + $0x68] sm:$0xff]
    %v247 = vld [vmem:[%s232 + $0x70] sm:$0xff]
    %v248 = vld [vmem:[%s232 + $0x78] sm:$0xff]
    %v249 = vld [vmem:[%s232 + $0x80] sm:$0xff]
    %v250 = vld [vmem:[%s232 + $0x88] sm:$0xff]
    %v251 = vld [vmem:[%s232 + $0x90] sm:$0xff]
    %v252 = vld [vmem:[%s232 + $0x98] sm:$0xff]
    %v273 = vrot.slane %v233, 5
    %v274 = vrot.slane %v234, 5
    %v275 = vrot.slane %v235, 5
    %v276 = vrot.slane %v236, 5
    %v277 = vrot.slane %v237, 5
    %v278 = vrot.slane %v238, 5
    %v279 = vsel %vm145, %v273, %v278
    %v280 = vrot.slane %v239, 5
    %v281 = vsel %vm145, %v274, %v280
    %v282 = vrot.slane %v240, 5
    %v283 = vsel %vm145, %v275, %v282
    %v284 = vrot.slane %v241, 5
    %v285 = vsel %vm145, %v276, %v284
    %v286 = vrot.slane %v242, 5
    %v287 = vsel %vm145, %v277, %v286
    %v288 = vrot.slane %v243, 5
    %v289 = vsel %vm145, %v278, %v288
    %v290 = vrot.slane %v244, 5
    %v291 = vsel %vm145, %v280, %v290
    %v292 = vrot.slane %v245, 5
    %v293 = vsel %vm145, %v282, %v292
    %v294 = vrot.slane %v246, 5
    %v295 = vsel %vm145, %v284, %v294
    %v296 = vrot.slane %v247, 5
    %v297 = vsel %vm145, %v286, %v296
    %v298 = vrot.slane %v248, 5
    %v299 = vsel %vm145, %v288, %v298
    %v300 = vrot.slane %v249, 5
    %v301 = vsel %vm145, %v290, %v300
    %v302 = vrot.slane %v250, 5
    %v303 = vsel %vm145, %v292, %v302
    %v304 = vrot.slane %v251, 5
    %v305 = vsel %vm145, %v294, %v304
    %v306 = vrot.slane %v252, 5
    %v307 = vsel %vm145, %v296, %v306
    %333 = vst [vmem:[#allocation2 + $0xc8] sm:$0xf8] %v273
    %334 = vst [vmem:[#allocation2 + $0xd0] sm:$0xf8] %v274
    %335 = vst [vmem:[#allocation2 + $0xd8] sm:$0xf8] %v275
    %336 = vst [vmem:[#allocation2 + $0xe0] sm:$0xf8] %v276
    %337 = vst.msk [vmem:[#allocation2 + $0xe8] sm:$0xf8] %vm93, %v277
    %338 = vst [vmem:[#allocation2 + $0xf0] sm:$0xff] %v279
    %339 = vst [vmem:[#allocation2 + $0xf8] sm:$0xff] %v281
    %340 = vst [vmem:[#allocation2 + $0x100] sm:$0xff] %v283
    %341 = vst [vmem:[#allocation2 + $0x108] sm:$0xff] %v285
    %342 = vst.msk [vmem:[#allocation2 + $0x110] sm:$0xff] %vm215, %v287
    %343 = vst [vmem:[#allocation2 + $0x118] sm:$0xff] %v289
    %344 = vst [vmem:[#allocation2 + $0x120] sm:$0xff] %v291
    %345 = vst [vmem:[#allocation2 + $0x128] sm:$0xff] %v293
    %346 = vst [vmem:[#allocation2 + $0x130] sm:$0xff] %v295
    %347 = vst.msk [vmem:[#allocation2 + $0x138] sm:$0xff] %vm215, %v297
    %348 = vst [vmem:[#allocation2 + $0x140] sm:$0xff] %v299
    %349 = vst [vmem:[#allocation2 + $0x148] sm:$0xff] %v301
    %350 = vst [vmem:[#allocation2 + $0x150] sm:$0xff] %v303
    %351 = vst [vmem:[#allocation2 + $0x158] sm:$0xff] %v305
    %352 = vst.msk [vmem:[#allocation2 + $0x160] sm:$0xff] %vm215, %v307
    %353 = vst [vmem:[#allocation2 + $0x168] sm:$0x7] %v298
    %354 = vst [vmem:[#allocation2 + $0x170] sm:$0x7] %v300
    %355 = vst [vmem:[#allocation2 + $0x178] sm:$0x7] %v302
    %356 = vst [vmem:[#allocation2 + $0x180] sm:$0x7] %v304
    %357 = vst.msk [vmem:[#allocation2 + $0x188] sm:$0x7] %vm87, %v306
    %v358 = vld [vmem:[#allocation2] sm:$0xff]
    %v359 = vld [vmem:[#allocation2 + $0x8] sm:$0xff]
    %v360 = vld [vmem:[#allocation2 + $0x10] sm:$0xff]
    %v361 = vld [vmem:[#allocation2 + $0x18] sm:$0xff]
    %v362 = vld [vmem:[#allocation2 + $0x20] sm:$0xff]
    %v363 = vld [vmem:[#allocation2 + $0x28] sm:$0xff]
    %v364 = vld [vmem:[#allocation2 + $0x30] sm:$0xff]
    %v365 = vld [vmem:[#allocation2 + $0x38] sm:$0xff]
    %v366 = vld [vmem:[#allocation2 + $0x40] sm:$0xff]
    %v367 = vld [vmem:[#allocation2 + $0x48] sm:$0xff]
    %v368 = vld [vmem:[#allocation2 + $0x50] sm:$0xff]
    %v369 = vld [vmem:[#allocation2 + $0x58] sm:$0xff]
    %v370 = vld [vmem:[#allocation2 + $0x60] sm:$0xff]
    %v371 = vld [vmem:[#allocation2 + $0x68] sm:$0xff]
    %v372 = vld [vmem:[#allocation2 + $0x70] sm:$0xff]
    %v373 = vld [vmem:[#allocation2 + $0x78] sm:$0xff]
    %v374 = vld [vmem:[#allocation2 + $0x80] sm:$0xff]
    %v375 = vld [vmem:[#allocation2 + $0x88] sm:$0xff]
    %v376 = vld [vmem:[#allocation2 + $0x90] sm:$0xff]
    %v377 = vld [vmem:[#allocation2 + $0x98] sm:$0xff]
    %v378 = vld [vmem:[#allocation2 + $0xa0] sm:$0xff]
    %v379 = vld [vmem:[#allocation2 + $0xa8] sm:$0xff]
    %v380 = vld [vmem:[#allocation2 + $0xb0] sm:$0xff]
    %v381 = vld [vmem:[#allocation2 + $0xb8] sm:$0xff]
    %v382 = vld [vmem:[#allocation2 + $0xc0] sm:$0xff]
    %v383 = vld [vmem:[#allocation2 + $0xc8] sm:$0xff]
    %v384 = vld [vmem:[#allocation2 + $0xd0] sm:$0xff]
    %v385 = vld [vmem:[#allocation2 + $0xd8] sm:$0xff]
    %v386 = vld [vmem:[#allocation2 + $0xe0] sm:$0xff]
    %v387 = vld [vmem:[#allocation2 + $0xe8] sm:$0xff]
    %v388 = vld [vmem:[#allocation2 + $0xf0] sm:$0xff]
    %v389 = vld [vmem:[#allocation2 + $0xf8] sm:$0xff]
    %v390 = vld [vmem:[#allocation2 + $0x100] sm:$0xff]
    %v391 = vld [vmem:[#allocation2 + $0x108] sm:$0xff]
    %v392 = vld [vmem:[#allocation2 + $0x110] sm:$0xff]
    %v393 = vld [vmem:[#allocation2 + $0x118] sm:$0xff]
    %v394 = vld [vmem:[#allocation2 + $0x120] sm:$0xff]
    %v395 = vld [vmem:[#allocation2 + $0x128] sm:$0xff]
    %v396 = vld [vmem:[#allocation2 + $0x130] sm:$0xff]
    %v397 = vld [vmem:[#allocation2 + $0x138] sm:$0xff]
    %v398 = vld [vmem:[#allocation2 + $0x140] sm:$0xff]
    %v399 = vld [vmem:[#allocation2 + $0x148] sm:$0xff]
    %v400 = vld [vmem:[#allocation2 + $0x150] sm:$0xff]
    %v401 = vld [vmem:[#allocation2 + $0x158] sm:$0xff]
    %v402 = vld [vmem:[#allocation2 + $0x160] sm:$0xff]
    %v403 = vpack.c.bf16 %v363, %v358
    %v404 = vpack.c.bf16 %v364, %v359
    %v405 = vpack.c.bf16 %v365, %v360
    %v406 = vpack.c.bf16 %v366, %v361
    %v407 = vpack.c.bf16 %v367, %v362
    %v408 = vpack.c.bf16 %v373, %v368
    %v409 = vpack.c.bf16 %v374, %v369
    %v410 = vpack.c.bf16 %v375, %v370
    %v411 = vpack.c.bf16 %v376, %v371
    %v412 = vpack.c.bf16 %v377, %v372
    %v413 = vpack.c.bf16 %v383, %v378
    %v414 = vpack.c.bf16 %v384, %v379
    %v415 = vpack.c.bf16 %v385, %v380
    %v416 = vpack.c.bf16 %v386, %v381
    %v417 = vpack.c.bf16 %v387, %v382
    %v418 = vpack.c.bf16 %v393, %v388
    %v419 = vpack.c.bf16 %v394, %v389
    %v420 = vpack.c.bf16 %v395, %v390
    %v421 = vpack.c.bf16 %v396, %v391
    %v422 = vpack.c.bf16 %v397, %v392
    %v423 = vpack.c.bf16 %v398, %v398
    %v424 = vpack.c.bf16 %v399, %v399
    %v425 = vpack.c.bf16 %v400, %v400
    %v426 = vpack.c.bf16 %v401, %v401
    %v427 = vpack.c.bf16 %v402, %v402
    %v428 = vld [vmem:[#allocation9] sm:$0xf]
    %v429 = vld [vmem:[#allocation9 + $0x4] sm:$0xf]
    %v430 = vld [vmem:[#allocation9 + $0x8] sm:$0xf]
    %v431 = vld [vmem:[#allocation9 + $0xc] sm:$0xf]
    %v432 = vld [vmem:[#allocation9 + $0x10] sm:$0xf]
    %v433 = vld [vmem:[#allocation9 + $0x14] sm:$0xf]
    %v434 = vld [vmem:[#allocation9 + $0x18] sm:$0xf]
    %v435 = vld [vmem:[#allocation9 + $0x1c] sm:$0xf]
    %v436 = vld [vmem:[#allocation9 + $0x20] sm:$0xf]
    %v437 = vld [vmem:[#allocation9 + $0x24] sm:$0xf]
    %v438 = vld [vmem:[#allocation9 + $0x28] sm:$0xf]
    %v439 = vld [vmem:[#allocation9 + $0x2c] sm:$0xf]
    %v440 = vld [vmem:[#allocation9 + $0x30] sm:$0xf]
    %v441 = vld [vmem:[#allocation9 + $0x34] sm:$0xf]
    %v442 = vld [vmem:[#allocation9 + $0x38] sm:$0xf]
    %v443 = vld [vmem:[#allocation9 + $0x3c] sm:$0xf]
    %v444 = vld [vmem:[#allocation9 + $0x40] sm:$0xf]
    %v445 = vld [vmem:[#allocation9 + $0x44] sm:$0xf]
    %v446 = vld [vmem:[#allocation9 + $0x48] sm:$0xf]
    %v447 = vld [vmem:[#allocation9 + $0x4c] sm:$0xf]
    %v448 = vld [vmem:[#allocation9 + $0x50] sm:$0xf]
    %v449 = vld [vmem:[#allocation9 + $0x54] sm:$0xf]
    %v450 = vld [vmem:[#allocation9 + $0x58] sm:$0xf]
    %v451 = vld [vmem:[#allocation9 + $0x5c] sm:$0xf]
    %v452 = vld [vmem:[#allocation9 + $0x60] sm:$0xf]
    %v453 = vld [vmem:[#allocation9 + $0x64] sm:$0xf]
    %v454 = vld [vmem:[#allocation9 + $0x68] sm:$0xf]
    %v455 = vld [vmem:[#allocation9 + $0x6c] sm:$0xf]
    %v456 = vld [vmem:[#allocation9 + $0x70] sm:$0xf]
    %v457 = vld [vmem:[#allocation9 + $0x74] sm:$0xf]
    %v458 = vld [vmem:[#allocation9 + $0x78] sm:$0xf]
    %v459 = vld [vmem:[#allocation9 + $0x7c] sm:$0xf]
    %v460 = vld [vmem:[#allocation9 + $0x80] sm:$0xf]
    %v461 = vld [vmem:[#allocation9 + $0x84] sm:$0xf]
    %v462 = vld [vmem:[#allocation9 + $0x88] sm:$0xf]
    %v463 = vld [vmem:[#allocation9 + $0x8c] sm:$0xf]
    %v464 = vld [vmem:[#allocation9 + $0x90] sm:$0xf]
    %v465 = vld [vmem:[#allocation9 + $0x94] sm:$0xf]
    %v466 = vld [vmem:[#allocation9 + $0x98] sm:$0xf]
    %v467 = vld [vmem:[#allocation9 + $0x9c] sm:$0xf]
    %v468 = vld [vmem:[#allocation9 + $0xa0] sm:$0xf]
    %v469 = vld [vmem:[#allocation9 + $0xa4] sm:$0xf]
    %v470 = vld [vmem:[#allocation9 + $0xa8] sm:$0xf]
    %v471 = vld [vmem:[#allocation9 + $0xac] sm:$0xf]
    %v472 = vld [vmem:[#allocation9 + $0xb0] sm:$0xf]
    %v473 = vld [vmem:[#allocation9 + $0xb4] sm:$0xf]
    %v474 = vld [vmem:[#allocation9 + $0xb8] sm:$0xf]
    %v475 = vld [vmem:[#allocation9 + $0xbc] sm:$0xf]
    %v476 = vld [vmem:[#allocation9 + $0xc0] sm:$0xf]
    %v477 = vld [vmem:[#allocation9 + $0xc4] sm:$0xf]
    %v478 = vld [vmem:[#allocation9 + $0xc8] sm:$0xf]
    %v479 = vld [vmem:[#allocation9 + $0xcc] sm:$0xf]
    %v480 = vld [vmem:[#allocation9 + $0xd0] sm:$0xf]
    %v481 = vld [vmem:[#allocation9 + $0xd4] sm:$0xf]
    %v482 = vld [vmem:[#allocation9 + $0xd8] sm:$0xf]
    %v483 = vld [vmem:[#allocation9 + $0xdc] sm:$0xf]
    %v484 = vld [vmem:[#allocation9 + $0xe0] sm:$0xf]
    %v485 = vld [vmem:[#allocation9 + $0xe4] sm:$0xf]
    %v486 = vld [vmem:[#allocation9 + $0xe8] sm:$0xf]
    %v487 = vld [vmem:[#allocation9 + $0xec] sm:$0xf]
    %v488 = vld [vmem:[#allocation9 + $0xf0] sm:$0xf]
    %v489 = vld [vmem:[#allocation9 + $0xf4] sm:$0xf]
    %v490 = vld [vmem:[#allocation9 + $0xf8] sm:$0xf]
    %v491 = vld [vmem:[#allocation9 + $0xfc] sm:$0xf]
    %v492 = vld [vmem:[#allocation9 + $0x100] sm:$0x1]
    %v493 = vld [vmem:[#allocation2] sm:$0xfe]
    %v494 = vld [vmem:[#allocation2 + $0x8] sm:$0xfe]
    %v495 = vld [vmem:[#allocation2 + $0x10] sm:$0xfe]
    %v496 = vld [vmem:[#allocation2 + $0x18] sm:$0xfe]
    %v497 = vld [vmem:[#allocation2 + $0x20] sm:$0xfe]
    %v498 = vld [vmem:[#allocation2 + $0x168] sm:$0x1]
    %v499 = vld [vmem:[#allocation2 + $0x170] sm:$0x1]
    %v500 = vld [vmem:[#allocation2 + $0x178] sm:$0x1]
    %v501 = vld [vmem:[#allocation2 + $0x180] sm:$0x1]
    %v502 = vld [vmem:[#allocation2 + $0x188] sm:$0x1]
    %v503 = vpack.c.bf16 %v363, %v493
    %v504 = vpack.c.bf16 %v364, %v494
    %v505 = vpack.c.bf16 %v365, %v495
    %v506 = vpack.c.bf16 %v366, %v496
    %v507 = vpack.c.bf16 %v367, %v497
    %v508 = vpack.c.bf16 %v498, %v398
    %v509 = vpack.c.bf16 %v499, %v399
    %v510 = vpack.c.bf16 %v500, %v400
    %v511 = vpack.c.bf16 %v501, %v401
    %v512 = vpack.c.bf16 %v502, %v402
    %s513 = scalar_lea.vmem [#allocation9], 260
    %v514 = vld [vmem:[%s513] sm:$0xf]
    %v515 = vld [vmem:[%s513 + $0x4] sm:$0xf]
    %v516 = vld [vmem:[%s513 + $0x8] sm:$0xf]
    %v517 = vld [vmem:[%s513 + $0xc] sm:$0xf]
    %v518 = vld [vmem:[%s513 + $0x10] sm:$0xf]
    %v519 = vld [vmem:[%s513 + $0x14] sm:$0xf]
    %v520 = vld [vmem:[%s513 + $0x18] sm:$0xf]
    %v521 = vld [vmem:[%s513 + $0x1c] sm:$0xf]
    %v522 = vld [vmem:[%s513 + $0x20] sm:$0xf]
    %v523 = vld [vmem:[%s513 + $0x24] sm:$0xf]
    %v524 = vld [vmem:[%s513 + $0x28] sm:$0xf]
    %v525 = vld [vmem:[%s513 + $0x2c] sm:$0xf]
    %v526 = vld [vmem:[%s513 + $0x30] sm:$0xf]
    %v527 = vld [vmem:[%s513 + $0x34] sm:$0xf]
    %v528 = vld [vmem:[%s513 + $0x38] sm:$0xf]
    %v529 = vld [vmem:[%s513 + $0x3c] sm:$0xf]
    %v530 = vld [vmem:[%s513 + $0x40] sm:$0xf]
    %v531 = vld [vmem:[%s513 + $0x44] sm:$0xf]
    %v532 = vld [vmem:[%s513 + $0x48] sm:$0xf]
    %v533 = vld [vmem:[%s513 + $0x4c] sm:$0xf]
    %v534 = vld [vmem:[%s513 + $0x50] sm:$0xf]
    %v535 = vld [vmem:[%s513 + $0x54] sm:$0xf]
    %v536 = vld [vmem:[%s513 + $0x58] sm:$0xf]
    %v537 = vld [vmem:[%s513 + $0x5c] sm:$0xf]
    %v538 = vld [vmem:[%s513 + $0x60] sm:$0xf]
    %v539 = vld [vmem:[%s513 + $0x64] sm:$0xf]
    %v540 = vld [vmem:[%s513 + $0x68] sm:$0xf]
    %v541 = vld [vmem:[%s513 + $0x6c] sm:$0xf]
    %v542 = vld [vmem:[%s513 + $0x70] sm:$0xf]
    %v543 = vld [vmem:[%s513 + $0x74] sm:$0xf]
    %v544 = vld [vmem:[%s513 + $0x78] sm:$0xf]
    %v545 = vld [vmem:[%s513 + $0x7c] sm:$0xf]
    %v546 = vld [vmem:[%s513 + $0x80] sm:$0xf]
    %v547 = vld [vmem:[%s513 + $0x84] sm:$0xf]
    %v548 = vld [vmem:[%s513 + $0x88] sm:$0xf]
    %v549 = vld [vmem:[%s513 + $0x8c] sm:$0xf]
    %v550 = vld [vmem:[%s513 + $0x90] sm:$0xf]
    %v551 = vld [vmem:[%s513 + $0x94] sm:$0xf]
    %v552 = vld [vmem:[%s513 + $0x98] sm:$0xf]
    %v553 = vld [vmem:[%s513 + $0x9c] sm:$0xf]
    %v554 = vld [vmem:[%s513 + $0xa0] sm:$0xf]
    %v555 = vld [vmem:[%s513 + $0xa4] sm:$0xf]
    %v556 = vld [vmem:[%s513 + $0xa8] sm:$0xf]
    %v557 = vld [vmem:[%s513 + $0xac] sm:$0xf]
    %v558 = vld [vmem:[%s513 + $0xb0] sm:$0xf]
    %v559 = vld [vmem:[%s513 + $0xb4] sm:$0xf]
    %v560 = vld [vmem:[%s513 + $0xb8] sm:$0xf]
    %v561 = vld [vmem:[%s513 + $0xbc] sm:$0xf]
    %v562 = vld [vmem:[%s513 + $0xc0] sm:$0xf]
    %v563 = vld [vmem:[%s513 + $0xc4] sm:$0xf]
    %v564 = vld [vmem:[%s513 + $0xc8] sm:$0xf]
    %v565 = vld [vmem:[%s513 + $0xcc] sm:$0xf]
    %v566 = vld [vmem:[%s513 + $0xd0] sm:$0xf]
    %v567 = vld [vmem:[%s513 + $0xd4] sm:$0xf]
    %v568 = vld [vmem:[%s513 + $0xd8] sm:$0xf]
    %v569 = vld [vmem:[%s513 + $0xdc] sm:$0xf]
    %v570 = vld [vmem:[%s513 + $0xe0] sm:$0xf]
    %v571 = vld [vmem:[%s513 + $0xe4] sm:$0xf]
    %v572 = vld [vmem:[%s513 + $0xe8] sm:$0xf]
    %v573 = vld [vmem:[%s513 + $0xec] sm:$0xf]
    %v574 = vld [vmem:[%s513 + $0xf0] sm:$0xf]
    %v575 = vld [vmem:[%s513 + $0xf4] sm:$0xf]
    %v576 = vld [vmem:[%s513 + $0xf8] sm:$0xf]
    %v577 = vld [vmem:[%s513 + $0xfc] sm:$0xf]
    %v578 = vld [vmem:[%s513 + $0x100] sm:$0x1]
    %vm579 = vsmask.f32 7424
    %v581 = vshrl.u32 %v503, 16
    %v583 = vshll.u32 %v503, 16
    %v585 = vrot.slane %v583, 1
    %v586 = vor.u32 %v581, %v585
    %v588 = vshll.u32 %v408, 16
    %v590 = vrot.slane %v588, 1
    %v591 = vsel %vm579, %v586, %v590
    %v593 = vshrl.u32 %v504, 16
    %v595 = vshll.u32 %v504, 16
    %v597 = vrot.slane %v595, 1
    %v598 = vor.u32 %v593, %v597
    %v600 = vshll.u32 %v409, 16
    %v602 = vrot.slane %v600, 1
    %v603 = vsel %vm579, %v598, %v602
    %v605 = vshrl.u32 %v505, 16
    %v607 = vshll.u32 %v505, 16
    %v609 = vrot.slane %v607, 1
    %v610 = vor.u32 %v605, %v609
    %v612 = vshll.u32 %v410, 16
    %v614 = vrot.slane %v612, 1
    %v615 = vsel %vm579, %v610, %v614
    %v617 = vshrl.u32 %v506, 16
    %v619 = vshll.u32 %v506, 16
    %v621 = vrot.slane %v619, 1
    %v622 = vor.u32 %v617, %v621
    %v624 = vshll.u32 %v411, 16
    %v626 = vrot.slane %v624, 1
    %v627 = vsel %vm579, %v622, %v626
    %v629 = vshrl.u32 %v507, 16
    %v631 = vshll.u32 %v507, 16
    %v633 = vrot.slane %v631, 1
    %v634 = vor.u32 %v629, %v633
    %v636 = vshll.u32 %v412, 16
    %v638 = vrot.slane %v636, 1
    %v639 = vsel %vm579, %v634, %v638
    %v640 = vshrl.u32 %v408, 16
    %v642 = vor.u32 %v640, %v590
    %v644 = vshll.u32 %v413, 16
    %v646 = vrot.slane %v644, 1
    %v647 = vsel %vm579, %v642, %v646
    %v648 = vshrl.u32 %v409, 16
    %v650 = vor.u32 %v648, %v602
    %v652 = vshll.u32 %v414, 16
    %v654 = vrot.slane %v652, 1
    %v655 = vsel %vm579, %v650, %v654
    %v656 = vshrl.u32 %v410, 16
    %v658 = vor.u32 %v656, %v614
    %v660 = vshll.u32 %v415, 16
    %v662 = vrot.slane %v660, 1
    %v663 = vsel %vm579, %v658, %v662
    %v664 = vshrl.u32 %v411, 16
    %v666 = vor.u32 %v664, %v626
    %v668 = vshll.u32 %v416, 16
    %v670 = vrot.slane %v668, 1
    %v671 = vsel %vm579, %v666, %v670
    %v672 = vshrl.u32 %v412, 16
    %v674 = vor.u32 %v672, %v638
    %v676 = vshll.u32 %v417, 16
    %v678 = vrot.slane %v676, 1
    %v679 = vsel %vm579, %v674, %v678
    %v680 = vshrl.u32 %v413, 16
    %v682 = vor.u32 %v680, %v646
    %v684 = vshll.u32 %v418, 16
    %v686 = vrot.slane %v684, 1
    %v687 = vsel %vm579, %v682, %v686
    %v688 = vshrl.u32 %v414, 16
    %v690 = vor.u32 %v688, %v654
    %v692 = vshll.u32 %v419, 16
    %v694 = vrot.slane %v692, 1
    %v695 = vsel %vm579, %v690, %v694
    %v696 = vshrl.u32 %v415, 16
    %v698 = vor.u32 %v696, %v662
    %v700 = vshll.u32 %v420, 16
    %v702 = vrot.slane %v700, 1
    %v703 = vsel %vm579, %v698, %v702
    %v704 = vshrl.u32 %v416, 16
    %v706 = vor.u32 %v704, %v670
    %v708 = vshll.u32 %v421, 16
    %v710 = vrot.slane %v708, 1
    %v711 = vsel %vm579, %v706, %v710
    %v712 = vshrl.u32 %v417, 16
    %v714 = vor.u32 %v712, %v678
    %v716 = vshll.u32 %v422, 16
    %v718 = vrot.slane %v716, 1
    %v719 = vsel %vm579, %v714, %v718
    %v720 = vshrl.u32 %v418, 16
    %v722 = vor.u32 %v720, %v686
    %v724 = vshll.u32 %v508, 16
    %v726 = vrot.slane %v724, 1
    %v727 = vsel %vm579, %v722, %v726
    %v728 = vshrl.u32 %v419, 16
    %v730 = vor.u32 %v728, %v694
    %v732 = vshll.u32 %v509, 16
    %v734 = vrot.slane %v732, 1
    %v735 = vsel %vm579, %v730, %v734
    %v736 = vshrl.u32 %v420, 16
    %v738 = vor.u32 %v736, %v702
    %v740 = vshll.u32 %v510, 16
    %v742 = vrot.slane %v740, 1
    %v743 = vsel %vm579, %v738, %v742
    %v744 = vshrl.u32 %v421, 16
    %v746 = vor.u32 %v744, %v710
    %v748 = vshll.u32 %v511, 16
    %v750 = vrot.slane %v748, 1
    %v751 = vsel %vm579, %v746, %v750
    %v752 = vshrl.u32 %v422, 16
    %v754 = vor.u32 %v752, %v718
    %v756 = vshll.u32 %v512, 16
    %v758 = vrot.slane %v756, 1
    %v759 = vsel %vm579, %v754, %v758
    %v760 = vshrl.u32 %v508, 16
    %v762 = vor.u32 %v760, %v726
    %v763 = vshrl.u32 %v509, 16
    %v765 = vor.u32 %v763, %v734
    %v766 = vshrl.u32 %v510, 16
    %v768 = vor.u32 %v766, %v742
    %v769 = vshrl.u32 %v511, 16
    %v771 = vor.u32 %v769, %v750
    %v772 = vshrl.u32 %v512, 16
    %v774 = vor.u32 %v772, %v758
    %v860 = vunpack.c.l.b16 %v514
    %v861 = vunpack.c.l.b16 %v515
    %v862 = vunpack.c.l.b16 %v516
    %v863 = vunpack.c.l.b16 %v517
    %v864 = vunpack.c.l.b16 %v518
    %v865 = vunpack.c.l.b16 %v519
    %v866 = vunpack.c.l.b16 %v520
    %v867 = vunpack.c.l.b16 %v521
    %v868 = vunpack.c.l.b16 %v522
    %v869 = vunpack.c.l.b16 %v523
    %v870 = vunpack.c.l.b16 %v524
    %v871 = vunpack.c.l.b16 %v525
    %v872 = vunpack.c.l.b16 %v526
    %v873 = vunpack.c.l.b16 %v527
    %v874 = vunpack.c.l.b16 %v528
    %v875 = vunpack.c.l.b16 %v529
    %v876 = vunpack.c.l.b16 %v530
    %v877 = vunpack.c.l.b16 %v531
    %v878 = vunpack.c.l.b16 %v532
    %v879 = vunpack.c.l.b16 %v533
    %v880 = vunpack.c.l.b16 %v534
    %v881 = vunpack.c.l.b16 %v535
    %v882 = vunpack.c.l.b16 %v536
    %v883 = vunpack.c.l.b16 %v537
    %v884 = vunpack.c.l.b16 %v538
    %v885 = vunpack.c.l.b16 %v539
    %v886 = vunpack.c.l.b16 %v540
    %v887 = vunpack.c.l.b16 %v541
    %v888 = vunpack.c.l.b16 %v542
    %v889 = vunpack.c.l.b16 %v543
    %v890 = vunpack.c.l.b16 %v544
    %v891 = vunpack.c.l.b16 %v545
    %v892 = vunpack.c.l.b16 %v546
    %v893 = vunpack.c.l.b16 %v547
    %v894 = vunpack.c.l.b16 %v548
    %v895 = vunpack.c.l.b16 %v549
    %v896 = vunpack.c.l.b16 %v550
    %v897 = vunpack.c.l.b16 %v551
    %v898 = vunpack.c.l.b16 %v552
    %v899 = vunpack.c.l.b16 %v553
    %v900 = vunpack.c.l.b16 %v554
    %v901 = vunpack.c.l.b16 %v555
    %v902 = vunpack.c.l.b16 %v556
    %v903 = vunpack.c.l.b16 %v557
    %v904 = vunpack.c.l.b16 %v558
    %v905 = vunpack.c.l.b16 %v559
    %v906 = vunpack.c.l.b16 %v560
    %v907 = vunpack.c.l.b16 %v561
    %v908 = vunpack.c.l.b16 %v562
    %v909 = vunpack.c.l.b16 %v563
    %v910 = vunpack.c.l.b16 %v564
    %v911 = vunpack.c.l.b16 %v565
    %v912 = vunpack.c.l.b16 %v566
    %v913 = vunpack.c.l.b16 %v567
    %v914 = vunpack.c.l.b16 %v568
    %v915 = vunpack.c.l.b16 %v569
    %v916 = vunpack.c.l.b16 %v570
    %v917 = vunpack.c.l.b16 %v571
    %v918 = vunpack.c.l.b16 %v572
    %v919 = vunpack.c.l.b16 %v573
    %v920 = vunpack.c.l.b16 %v574
    %v921 = vunpack.c.l.b16 %v575
    %v922 = vunpack.c.l.b16 %v576
    %v923 = vunpack.c.l.b16 %v577
    %v924 = vunpack.c.l.b16 %v578
    %v925 = vpack.c.b16 %v861, %v860
    %v926 = vpack.c.b16 %v863, %v862
    %v927 = vpack.c.b16 %v865, %v864
    %v928 = vpack.c.b16 %v867, %v866
    %v929 = vpack.c.b16 %v869, %v868
    %v930 = vpack.c.b16 %v871, %v870
    %v931 = vpack.c.b16 %v873, %v872
    %v932 = vpack.c.b16 %v875, %v874
    %v933 = vpack.c.b16 %v877, %v876
    %v934 = vpack.c.b16 %v879, %v878
    %v935 = vpack.c.b16 %v881, %v880
    %v936 = vpack.c.b16 %v883, %v882
    %v937 = vpack.c.b16 %v885, %v884
    %v938 = vpack.c.b16 %v887, %v886
    %v939 = vpack.c.b16 %v889, %v888
    %v940 = vpack.c.b16 %v891, %v890
    %v941 = vpack.c.b16 %v893, %v892
    %v942 = vpack.c.b16 %v895, %v894
    %v943 = vpack.c.b16 %v897, %v896
    %v944 = vpack.c.b16 %v899, %v898
    %v945 = vpack.c.b16 %v901, %v900
    %v946 = vpack.c.b16 %v903, %v902
    %v947 = vpack.c.b16 %v905, %v904
    %v948 = vpack.c.b16 %v907, %v906
    %v949 = vpack.c.b16 %v909, %v908
    %v950 = vpack.c.b16 %v911, %v910
    %v951 = vpack.c.b16 %v913, %v912
    %v952 = vpack.c.b16 %v915, %v914
    %v953 = vpack.c.b16 %v917, %v916
    %v954 = vpack.c.b16 %v919, %v918
    %v955 = vpack.c.b16 %v921, %v920
    %v956 = vpack.c.b16 %v923, %v922
    %v957 = vpack.c.b16 %v924, %v924
    %v991 = vsel %vm215, %v639, 0
    %v994 = vsel %vm215, %v679, 0
    %v997 = vsel %vm215, %v719, 0
    %v1000 = vsel %vm215, %v759, 0
    %v1003 = vsel %vm215, %v774, 0
    %vm1005 = vcmask 1040384
    %v1006 = vsel 0, 4294967295, 65535
    %v1007 = vsel %vm1005, %v1006, 0
    %v1009 = vand.u32 %v957, %v1007
    %1011 = vmatprep.subr.bf16.mxu0 0
    %1012 = vmatpush1.bf16.msra.mxu0 %v932
    %1013 = vmatprep.subr.bf16.mxu0 0
    %1014 = vmatpush1.bf16.msra.mxu0 %v931
    %1015 = vmatprep.subr.bf16.mxu0 0
    %1016 = vmatpush1.bf16.msra.mxu0 %v930
    %1017 = vmatprep.subr.bf16.mxu0 0
    %1018 = vmatpush1.bf16.msra.mxu0 %v929
    %1019 = vmatprep.subr.bf16.mxu0 0
    %1020 = vmatpush1.bf16.msra.mxu0 %v928
    %1021 = vmatprep.subr.bf16.mxu0 0
    %1022 = vmatpush1.bf16.msra.mxu0 %v927
    %1023 = vmatprep.subr.bf16.mxu0 0
    %1024 = vmatpush1.bf16.msra.mxu0 %v926
    %1025 = vmatprep.subr.bf16.mxu0 0
    %1026 = vmatpush1.bf16.msra.mxu0 %v925
    %1027 = vmatprep.subr.bf16.mxu0 0
    %1028 = vmatpush2.bf16.msra.mxu0 %v940
    %1029 = vmatprep.subr.bf16.mxu0 0
    %1030 = vmatpush2.bf16.msra.mxu0 %v939
    %1031 = vmatprep.subr.bf16.mxu0 0
    %1032 = vmatpush2.bf16.msra.mxu0 %v938
    %1033 = vmatprep.subr.bf16.mxu0 0
    %1034 = vmatpush2.bf16.msra.mxu0 %v937
    %1035 = vmatprep.subr.bf16.mxu0 0
    %1036 = vmatpush2.bf16.msra.mxu0 %v936
    %1037 = vmatprep.subr.bf16.mxu0 0
    %1038 = vmatpush2.bf16.msra.mxu0 %v935
    %1039 = vmatprep.subr.bf16.mxu0 0
    %1040 = vmatpush2.bf16.msra.mxu0 %v934
    %1041 = vmatprep.subr.bf16.mxu0 0
    %1042 = vmatpush2.bf16.msra.mxu0 %v933
    %1043 = vmatprep.mubr.bf16.mxu0 %v603
    %1044 = vmatmul.mubr.bf16.gmra.mxu0 %v591
    %v1045 = vpop.f32.mrf.mxu0
    %v1046 = vadd.f32 0.0, %v1045
    %v1047 = vpop.f32.mrf.mxu0
    %v1048 = vpop.f32.mrf.mxu0
    %v1049 = vadd.f32 0.0, %v1048
    %v1050 = vpop.f32.mrf.mxu0
    %1051 = vmatprep.mubr.bf16.mxu0 %v655
    %1052 = vmatmul.mubr.bf16.gmra.mxu0 %v647
    %v1053 = vpop.f32.mrf.mxu0
    %v1054 = vadd.f32 0.0, %v1053
    %v1055 = vpop.f32.mrf.mxu0
    %v1056 = vpop.f32.mrf.mxu0
    %v1057 = vadd.f32 0.0, %v1056
    %v1058 = vpop.f32.mrf.mxu0
    %1059 = vmatprep.mubr.bf16.mxu0 %v695
    %1060 = vmatmul.mubr.bf16.gmra.mxu0 %v687
    %v1061 = vpop.f32.mrf.mxu0
    %v1062 = vpop.f32.mrf.mxu0
    %v1063 = vpop.f32.mrf.mxu0
    %v1064 = vadd.f32 0.0, %v1063
    %v1065 = vpop.f32.mrf.mxu0
    %1066 = vmatprep.mubr.bf16.mxu0 %v735
    %1067 = vmatmul.mubr.bf16.gmra.mxu0 %v727
    %v1068 = vpop.f32.mrf.mxu0
    %v1069 = vadd.f32 0.0, %v1068
    %v1070 = vpop.f32.mrf.mxu0
    %v1071 = vpop.f32.mrf.mxu0
    %v1072 = vadd.f32 0.0, %v1071
    %v1073 = vpop.f32.mrf.mxu0
    %1074 = vmatprep.mubr.bf16.mxu0 %v765
    %1075 = vmatmul.mubr.bf16.gmra.mxu0 %v762
    %v1076 = vpop.f32.mrf.mxu0
    %v1077 = vadd.f32 0.0, %v1076
    %v1078 = vpop.f32.mrf.mxu0
    %v1079 = vpop.f32.mrf.mxu0
    %v1080 = vpop.f32.mrf.mxu0
    %1081 = vdwg.mxu0
    %1082 = vmatprep.subr.bf16.mxu0 0
    %1083 = vmatpush1.bf16.msra.mxu0 %v948
    %1084 = vmatprep.subr.bf16.mxu0 0
    %1085 = vmatpush1.bf16.msra.mxu0 %v947
    %1086 = vmatprep.subr.bf16.mxu0 0
    %1087 = vmatpush1.bf16.msra.mxu0 %v946
    %1088 = vmatprep.subr.bf16.mxu0 0
    %1089 = vmatpush1.bf16.msra.mxu0 %v945
    %1090 = vmatprep.subr.bf16.mxu0 0
    %1091 = vmatpush1.bf16.msra.mxu0 %v944
    %1092 = vmatprep.subr.bf16.mxu0 0
    %1093 = vmatpush1.bf16.msra.mxu0 %v943
    %1094 = vmatprep.subr.bf16.mxu0 0
    %1095 = vmatpush1.bf16.msra.mxu0 %v942
    %1096 = vmatprep.subr.bf16.mxu0 0
    %1097 = vmatpush1.bf16.msra.mxu0 %v941
    %1098 = vmatprep.subr.bf16.mxu0 0
    %1099 = vmatpush2.bf16.msra.mxu0 %v956
    %1100 = vmatprep.subr.bf16.mxu0 0
    %1101 = vmatpush2.bf16.msra.mxu0 %v955
    %1102 = vmatprep.subr.bf16.mxu0 0
    %1103 = vmatpush2.bf16.msra.mxu0 %v954
    %1104 = vmatprep.subr.bf16.mxu0 0
    %1105 = vmatpush2.bf16.msra.mxu0 %v953
    %1106 = vmatprep.subr.bf16.mxu0 0
    %1107 = vmatpush2.bf16.msra.mxu0 %v952
    %1108 = vmatprep.subr.bf16.mxu0 0
    %1109 = vmatpush2.bf16.msra.mxu0 %v951
    %1110 = vmatprep.subr.bf16.mxu0 0
    %1111 = vmatpush2.bf16.msra.mxu0 %v950
    %1112 = vmatprep.subr.bf16.mxu0 0
    %1113 = vmatpush2.bf16.msra.mxu0 %v949
    %1114 = vmatprep.mubr.bf16.mxu0 %v627
    %1115 = vmatmul.mubr.bf16.gmra.mxu0 %v615
    %v1116 = vpop.f32.mrf.mxu0
    %v1117 = vadd.f32 %v1046, %v1116
    %v1118 = vpop.f32.mrf.mxu0
    %v1119 = vpop.f32.mrf.mxu0
    %v1120 = vadd.f32 %v1049, %v1119
    %v1121 = vpop.f32.mrf.mxu0
    %1122 = vmatprep.mubr.bf16.mxu0 %v671
    %1123 = vmatmul.mubr.bf16.gmra.mxu0 %v663
    %v1124 = vpop.f32.mrf.mxu0
    %v1125 = vadd.f32 %v1054, %v1124
    %v1126 = vpop.f32.mrf.mxu0
    %v1127 = vpop.f32.mrf.mxu0
    %v1128 = vadd.f32 %v1057, %v1127
    %v1129 = vpop.f32.mrf.mxu0
    %1130 = vmatprep.mubr.bf16.mxu0 %v711
    %1131 = vmatmul.mubr.bf16.gmra.mxu0 %v703
    %v1132 = vpop.f32.mrf.mxu0
    %v1133 = vpop.f32.mrf.mxu0
    %v1134 = vpop.f32.mrf.mxu0
    %v1135 = vadd.f32 %v1064, %v1134
    %v1136 = vpop.f32.mrf.mxu0
    %1137 = vmatprep.mubr.bf16.mxu0 %v751
    %1138 = vmatmul.mubr.bf16.gmra.mxu0 %v743
    %v1139 = vpop.f32.mrf.mxu0
    %v1140 = vadd.f32 %v1069, %v1139
    %v1141 = vpop.f32.mrf.mxu0
    %v1142 = vpop.f32.mrf.mxu0
    %v1143 = vadd.f32 %v1072, %v1142
    %v1144 = vpop.f32.mrf.mxu0
    %1145 = vmatprep.mubr.bf16.mxu0 %v771
    %1146 = vmatmul.mubr.bf16.gmra.mxu0 %v768
    %v1147 = vpop.f32.mrf.mxu0
    %v1148 = vadd.f32 %v1077, %v1147
    %v1149 = vpop.f32.mrf.mxu0
    %v1150 = vpop.f32.mrf.mxu0
    %v1151 = vpop.f32.mrf.mxu0
    %1152 = vdwg.mxu0
    %1153 = vmatprep.subr.bf16.mxu0 0
    %1154 = vmatpush1.bf16.msra.mxu0 0
    %1155 = vmatprep.subr.bf16.mxu0 0
    %1156 = vmatpush1.bf16.msra.mxu0 0
    %1157 = vmatprep.subr.bf16.mxu0 0
    %1158 = vmatpush1.bf16.msra.mxu0 0
    %1159 = vmatprep.subr.bf16.mxu0 0
    %1160 = vmatpush1.bf16.msra.mxu0 0
    %1161 = vmatprep.subr.bf16.mxu0 0
    %1162 = vmatpush1.bf16.msra.mxu0 0
    %1163 = vmatprep.subr.bf16.mxu0 0
    %1164 = vmatpush1.bf16.msra.mxu0 0
    %1165 = vmatprep.subr.bf16.mxu0 0
    %1166 = vmatpush1.bf16.msra.mxu0 0
    %1167 = vmatprep.subr.bf16.mxu0 0
    %1168 = vmatpush1.bf16.msra.mxu0 %v1009
    %1169 = vmatprep.subr.bf16.mxu0 0
    %1170 = vmatpush2.bf16.msra.mxu0 0
    %1171 = vmatprep.subr.bf16.mxu0 0
    %1172 = vmatpush2.bf16.msra.mxu0 0
    %1173 = vmatprep.subr.bf16.mxu0 0
    %1174 = vmatpush2.bf16.msra.mxu0 0
    %1175 = vmatprep.subr.bf16.mxu0 0
    %1176 = vmatpush2.bf16.msra.mxu0 0
    %1177 = vmatprep.subr.bf16.mxu0 0
    %1178 = vmatpush2.bf16.msra.mxu0 0
    %1179 = vmatprep.subr.bf16.mxu0 0
    %1180 = vmatpush2.bf16.msra.mxu0 0
    %1181 = vmatprep.subr.bf16.mxu0 0
    %1182 = vmatpush2.bf16.msra.mxu0 0
    %1183 = vmatprep.subr.bf16.mxu0 0
    %1184 = vmatpush2.bf16.msra.mxu0 0
    %1185 = vmatprep.mubr.bf16.mxu0 0
    %1186 = vmatmul.mubr.bf16.gmra.mxu0 %v991
    %v1187 = vpop.f32.mrf.mxu0
    %v1188 = vadd.f32 %v1117, %v1187
    %v1189 = vpop.f32.mrf.mxu0
    %v1190 = vpop.f32.mrf.mxu0
    %v1191 = vadd.f32 %v1120, %v1190
    %v1192 = vpop.f32.mrf.mxu0
    %1193 = vmatprep.mubr.bf16.mxu0 0
    %1194 = vmatmul.mubr.bf16.gmra.mxu0 %v994
    %v1195 = vpop.f32.mrf.mxu0
    %v1196 = vadd.f32 %v1125, %v1195
    %v1197 = vpop.f32.mrf.mxu0
    %v1198 = vpop.f32.mrf.mxu0
    %v1199 = vadd.f32 %v1128, %v1198
    %v1200 = vpop.f32.mrf.mxu0
    %1201 = vmatprep.mubr.bf16.mxu0 0
    %1202 = vmatmul.mubr.bf16.gmra.mxu0 %v997
    %v1203 = vpop.f32.mrf.mxu0
    %v1204 = vpop.f32.mrf.mxu0
    %v1205 = vpop.f32.mrf.mxu0
    %v1206 = vadd.f32 %v1135, %v1205
    %v1207 = vpop.f32.mrf.mxu0
    %1208 = vmatprep.mubr.bf16.mxu0 0
    %1209 = vmatmul.mubr.bf16.gmra.mxu0 %v1000
    %v1210 = vpop.f32.mrf.mxu0
    %v1211 = vadd.f32 %v1140, %v1210
    %v1212 = vpop.f32.mrf.mxu0
    %v1213 = vpop.f32.mrf.mxu0
    %v1214 = vadd.f32 %v1143, %v1213
    %v1215 = vpop.f32.mrf.mxu0
    %1216 = vmatprep.mubr.bf16.mxu0 0
    %1217 = vmatmul.mubr.bf16.gmra.mxu0 %v1003
    %v1218 = vpop.f32.mrf.mxu0
    %v1219 = vadd.f32 %v1148, %v1218
    %v1220 = vpop.f32.mrf.mxu0
    %v1221 = vpop.f32.mrf.mxu0
    %v1222 = vpop.f32.mrf.mxu0
    %1223 = vdwg.mxu0
    %v1289 = vunpack.c.l.b16 %v428
    %v1290 = vunpack.c.l.b16 %v429
    %v1291 = vunpack.c.l.b16 %v430
    %v1292 = vunpack.c.l.b16 %v431
    %v1293 = vunpack.c.l.b16 %v432
    %v1294 = vunpack.c.l.b16 %v433
    %v1295 = vunpack.c.l.b16 %v434
    %v1296 = vunpack.c.l.b16 %v435
    %v1297 = vunpack.c.l.b16 %v436
    %v1298 = vunpack.c.l.b16 %v437
    %v1299 = vunpack.c.l.b16 %v438
    %v1300 = vunpack.c.l.b16 %v439
    %v1301 = vunpack.c.l.b16 %v440
    %v1302 = vunpack.c.l.b16 %v441
    %v1303 = vunpack.c.l.b16 %v442
    %v1304 = vunpack.c.l.b16 %v443
    %v1305 = vunpack.c.l.b16 %v444
    %v1306 = vunpack.c.l.b16 %v445
    %v1307 = vunpack.c.l.b16 %v446
    %v1308 = vunpack.c.l.b16 %v447
    %v1309 = vunpack.c.l.b16 %v448
    %v1310 = vunpack.c.l.b16 %v449
    %v1311 = vunpack.c.l.b16 %v450
    %v1312 = vunpack.c.l.b16 %v451
    %v1313 = vunpack.c.l.b16 %v452
    %v1314 = vunpack.c.l.b16 %v453
    %v1315 = vunpack.c.l.b16 %v454
    %v1316 = vunpack.c.l.b16 %v455
    %v1317 = vunpack.c.l.b16 %v456
    %v1318 = vunpack.c.l.b16 %v457
    %v1319 = vunpack.c.l.b16 %v458
    %v1320 = vunpack.c.l.b16 %v459
    %v1321 = vunpack.c.l.b16 %v460
    %v1322 = vunpack.c.l.b16 %v461
    %v1323 = vunpack.c.l.b16 %v462
    %v1324 = vunpack.c.l.b16 %v463
    %v1325 = vunpack.c.l.b16 %v464
    %v1326 = vunpack.c.l.b16 %v465
    %v1327 = vunpack.c.l.b16 %v466
    %v1328 = vunpack.c.l.b16 %v467
    %v1329 = vunpack.c.l.b16 %v468
    %v1330 = vunpack.c.l.b16 %v469
    %v1331 = vunpack.c.l.b16 %v470
    %v1332 = vunpack.c.l.b16 %v471
    %v1333 = vunpack.c.l.b16 %v472
    %v1334 = vunpack.c.l.b16 %v473
    %v1335 = vunpack.c.l.b16 %v474
    %v1336 = vunpack.c.l.b16 %v475
    %v1337 = vunpack.c.l.b16 %v476
    %v1338 = vunpack.c.l.b16 %v477
    %v1339 = vunpack.c.l.b16 %v478
    %v1340 = vunpack.c.l.b16 %v479
    %v1341 = vunpack.c.l.b16 %v480
    %v1342 = vunpack.c.l.b16 %v481
    %v1343 = vunpack.c.l.b16 %v482
    %v1344 = vunpack.c.l.b16 %v483
    %v1345 = vunpack.c.l.b16 %v484
    %v1346 = vunpack.c.l.b16 %v485
    %v1347 = vunpack.c.l.b16 %v486
    %v1348 = vunpack.c.l.b16 %v487
    %v1349 = vunpack.c.l.b16 %v488
    %v1350 = vunpack.c.l.b16 %v489
    %v1351 = vunpack.c.l.b16 %v490
    %v1352 = vunpack.c.l.b16 %v491
    %v1353 = vunpack.c.l.b16 %v492
    %v1354 = vpack.c.b16 %v1290, %v1289
    %v1355 = vpack.c.b16 %v1292, %v1291
    %v1356 = vpack.c.b16 %v1294, %v1293
    %v1357 = vpack.c.b16 %v1296, %v1295
    %v1358 = vpack.c.b16 %v1298, %v1297
    %v1359 = vpack.c.b16 %v1300, %v1299
    %v1360 = vpack.c.b16 %v1302, %v1301
    %v1361 = vpack.c.b16 %v1304, %v1303
    %v1362 = vpack.c.b16 %v1306, %v1305
    %v1363 = vpack.c.b16 %v1308, %v1307
    %v1364 = vpack.c.b16 %v1310, %v1309
    %v1365 = vpack.c.b16 %v1312, %v1311
    %v1366 = vpack.c.b16 %v1314, %v1313
    %v1367 = vpack.c.b16 %v1316, %v1315
    %v1368 = vpack.c.b16 %v1318, %v1317
    %v1369 = vpack.c.b16 %v1320, %v1319
    %v1370 = vpack.c.b16 %v1322, %v1321
    %v1371 = vpack.c.b16 %v1324, %v1323
    %v1372 = vpack.c.b16 %v1326, %v1325
    %v1373 = vpack.c.b16 %v1328, %v1327
    %v1374 = vpack.c.b16 %v1330, %v1329
    %v1375 = vpack.c.b16 %v1332, %v1331
    %v1376 = vpack.c.b16 %v1334, %v1333
    %v1377 = vpack.c.b16 %v1336, %v1335
    %v1378 = vpack.c.b16 %v1338, %v1337
    %v1379 = vpack.c.b16 %v1340, %v1339
    %v1380 = vpack.c.b16 %v1342, %v1341
    %v1381 = vpack.c.b16 %v1344, %v1343
    %v1382 = vpack.c.b16 %v1346, %v1345
    %v1383 = vpack.c.b16 %v1348, %v1347
    %v1384 = vpack.c.b16 %v1350, %v1349
    %v1385 = vpack.c.b16 %v1352, %v1351
    %v1386 = vpack.c.b16 %v1353, %v1353
    %v1420 = vsel %vm215, %v407, 0
    %v1422 = vsel %vm215, %v412, 0
    %v1424 = vsel %vm215, %v417, 0
    %v1426 = vsel %vm215, %v422, 0
    %v1429 = vsel %vm215, %v427, 0
    %v1432 = vand.u32 %v1386, %v1007
    %1434 = vmatprep.subr.bf16.mxu0 0
    %1435 = vmatpush1.bf16.msra.mxu0 %v1361
    %1436 = vmatprep.subr.bf16.mxu0 0
    %1437 = vmatpush1.bf16.msra.mxu0 %v1360
    %1438 = vmatprep.subr.bf16.mxu0 0
    %1439 = vmatpush1.bf16.msra.mxu0 %v1359
    %1440 = vmatprep.subr.bf16.mxu0 0
    %1441 = vmatpush1.bf16.msra.mxu0 %v1358
    %1442 = vmatprep.subr.bf16.mxu0 0
    %1443 = vmatpush1.bf16.msra.mxu0 %v1357
    %1444 = vmatprep.subr.bf16.mxu0 0
    %1445 = vmatpush1.bf16.msra.mxu0 %v1356
    %1446 = vmatprep.subr.bf16.mxu0 0
    %1447 = vmatpush1.bf16.msra.mxu0 %v1355
    %1448 = vmatprep.subr.bf16.mxu0 0
    %1449 = vmatpush1.bf16.msra.mxu0 %v1354
    %1450 = vmatprep.subr.bf16.mxu0 0
    %1451 = vmatpush2.bf16.msra.mxu0 %v1369
    %1452 = vmatprep.subr.bf16.mxu0 0
    %1453 = vmatpush2.bf16.msra.mxu0 %v1368
    %1454 = vmatprep.subr.bf16.mxu0 0
    %1455 = vmatpush2.bf16.msra.mxu0 %v1367
    %1456 = vmatprep.subr.bf16.mxu0 0
    %1457 = vmatpush2.bf16.msra.mxu0 %v1366
    %1458 = vmatprep.subr.bf16.mxu0 0
    %1459 = vmatpush2.bf16.msra.mxu0 %v1365
    %1460 = vmatprep.subr.bf16.mxu0 0
    %1461 = vmatpush2.bf16.msra.mxu0 %v1364
    %1462 = vmatprep.subr.bf16.mxu0 0
    %1463 = vmatpush2.bf16.msra.mxu0 %v1363
    %1464 = vmatprep.subr.bf16.mxu0 0
    %1465 = vmatpush2.bf16.msra.mxu0 %v1362
    %1466 = vmatprep.mubr.bf16.mxu0 %v404
    %1467 = vmatmul.mubr.bf16.gmra.mxu0 %v403
    %v1468 = vpop.f32.mrf.mxu0
    %v1469 = vadd.f32 %v1188, %v1468
    %v1470 = vpop.f32.mrf.mxu0
    %v1471 = vpop.f32.mrf.mxu0
    %v1472 = vadd.f32 %v1191, %v1471
    %v1473 = vpop.f32.mrf.mxu0
    %1474 = vmatprep.mubr.bf16.mxu0 %v409
    %1475 = vmatmul.mubr.bf16.gmra.mxu0 %v408
    %v1476 = vpop.f32.mrf.mxu0
    %v1477 = vadd.f32 %v1196, %v1476
    %v1478 = vpop.f32.mrf.mxu0
    %v1479 = vpop.f32.mrf.mxu0
    %v1480 = vadd.f32 %v1199, %v1479
    %v1481 = vpop.f32.mrf.mxu0
    %1482 = vmatprep.mubr.bf16.mxu0 %v414
    %1483 = vmatmul.mubr.bf16.gmra.mxu0 %v413
    %v1484 = vpop.f32.mrf.mxu0
    %v1485 = vpop.f32.mrf.mxu0
    %v1486 = vpop.f32.mrf.mxu0
    %v1487 = vadd.f32 %v1206, %v1486
    %v1488 = vpop.f32.mrf.mxu0
    %1489 = vmatprep.mubr.bf16.mxu0 %v419
    %1490 = vmatmul.mubr.bf16.gmra.mxu0 %v418
    %v1491 = vpop.f32.mrf.mxu0
    %v1492 = vadd.f32 %v1211, %v1491
    %v1493 = vpop.f32.mrf.mxu0
    %v1494 = vpop.f32.mrf.mxu0
    %v1495 = vadd.f32 %v1214, %v1494
    %v1496 = vpop.f32.mrf.mxu0
    %1497 = vmatprep.mubr.bf16.mxu0 %v424
    %1498 = vmatmul.mubr.bf16.gmra.mxu0 %v423
    %v1499 = vpop.f32.mrf.mxu0
    %v1500 = vadd.f32 %v1219, %v1499
    %v1501 = vpop.f32.mrf.mxu0
    %v1502 = vpop.f32.mrf.mxu0
    %v1503 = vpop.f32.mrf.mxu0
    %1504 = vdwg.mxu0
    %1505 = vmatprep.subr.bf16.mxu0 0
    %1506 = vmatpush1.bf16.msra.mxu0 %v1377
    %1507 = vmatprep.subr.bf16.mxu0 0
    %1508 = vmatpush1.bf16.msra.mxu0 %v1376
    %1509 = vmatprep.subr.bf16.mxu0 0
    %1510 = vmatpush1.bf16.msra.mxu0 %v1375
    %1511 = vmatprep.subr.bf16.mxu0 0
    %1512 = vmatpush1.bf16.msra.mxu0 %v1374
    %1513 = vmatprep.subr.bf16.mxu0 0
    %1514 = vmatpush1.bf16.msra.mxu0 %v1373
    %1515 = vmatprep.subr.bf16.mxu0 0
    %1516 = vmatpush1.bf16.msra.mxu0 %v1372
    %1517 = vmatprep.subr.bf16.mxu0 0
    %1518 = vmatpush1.bf16.msra.mxu0 %v1371
    %1519 = vmatprep.subr.bf16.mxu0 0
    %1520 = vmatpush1.bf16.msra.mxu0 %v1370
    %1521 = vmatprep.subr.bf16.mxu0 0
    %1522 = vmatpush2.bf16.msra.mxu0 %v1385
    %1523 = vmatprep.subr.bf16.mxu0 0
    %1524 = vmatpush2.bf16.msra.mxu0 %v1384
    %1525 = vmatprep.subr.bf16.mxu0 0
    %1526 = vmatpush2.bf16.msra.mxu0 %v1383
    %1527 = vmatprep.subr.bf16.mxu0 0
    %1528 = vmatpush2.bf16.msra.mxu0 %v1382
    %1529 = vmatprep.subr.bf16.mxu0 0
    %1530 = vmatpush2.bf16.msra.mxu0 %v1381
    %1531 = vmatprep.subr.bf16.mxu0 0
    %1532 = vmatpush2.bf16.msra.mxu0 %v1380
    %1533 = vmatprep.subr.bf16.mxu0 0
    %1534 = vmatpush2.bf16.msra.mxu0 %v1379
    %1535 = vmatprep.subr.bf16.mxu0 0
    %1536 = vmatpush2.bf16.msra.mxu0 %v1378
    %1537 = vmatprep.mubr.bf16.mxu0 %v406
    %1538 = vmatmul.mubr.bf16.gmra.mxu0 %v405
    %v1539 = vpop.f32.mrf.mxu0
    %v1540 = vadd.f32 %v1469, %v1539
    %v1541 = vpop.f32.mrf.mxu0
    %v1542 = vpop.f32.mrf.mxu0
    %v1543 = vadd.f32 %v1472, %v1542
    %v1544 = vpop.f32.mrf.mxu0
    %1545 = vmatprep.mubr.bf16.mxu0 %v411
    %1546 = vmatmul.mubr.bf16.gmra.mxu0 %v410
    %v1547 = vpop.f32.mrf.mxu0
    %v1548 = vadd.f32 %v1477, %v1547
    %v1549 = vpop.f32.mrf.mxu0
    %v1550 = vpop.f32.mrf.mxu0
    %v1551 = vadd.f32 %v1480, %v1550
    %v1552 = vpop.f32.mrf.mxu0
    %1553 = vmatprep.mubr.bf16.mxu0 %v416
    %1554 = vmatmul.mubr.bf16.gmra.mxu0 %v415
    %v1555 = vpop.f32.mrf.mxu0
    %v1556 = vpop.f32.mrf.mxu0
    %v1557 = vpop.f32.mrf.mxu0
    %v1558 = vadd.f32 %v1487, %v1557
    %v1559 = vpop.f32.mrf.mxu0
    %1560 = vmatprep.mubr.bf16.mxu0 %v421
    %1561 = vmatmul.mubr.bf16.gmra.mxu0 %v420
    %v1562 = vpop.f32.mrf.mxu0
    %v1563 = vadd.f32 %v1492, %v1562
    %v1564 = vpop.f32.mrf.mxu0
    %v1565 = vpop.f32.mrf.mxu0
    %v1566 = vadd.f32 %v1495, %v1565
    %v1567 = vpop.f32.mrf.mxu0
    %1568 = vmatprep.mubr.bf16.mxu0 %v426
    %1569 = vmatmul.mubr.bf16.gmra.mxu0 %v425
    %v1570 = vpop.f32.mrf.mxu0
    %v1571 = vadd.f32 %v1500, %v1570
    %v1572 = vpop.f32.mrf.mxu0
    %v1573 = vpop.f32.mrf.mxu0
    %v1574 = vpop.f32.mrf.mxu0
    %1575 = vdwg.mxu0
    %1576 = vmatprep.subr.bf16.mxu0 0
    %1577 = vmatpush1.bf16.msra.mxu0 0
    %1578 = vmatprep.subr.bf16.mxu0 0
    %1579 = vmatpush1.bf16.msra.mxu0 0
    %1580 = vmatprep.subr.bf16.mxu0 0
    %1581 = vmatpush1.bf16.msra.mxu0 0
    %1582 = vmatprep.subr.bf16.mxu0 0
    %1583 = vmatpush1.bf16.msra.mxu0 0
    %1584 = vmatprep.subr.bf16.mxu0 0
    %1585 = vmatpush1.bf16.msra.mxu0 0
    %1586 = vmatprep.subr.bf16.mxu0 0
    %1587 = vmatpush1.bf16.msra.mxu0 0
    %1588 = vmatprep.subr.bf16.mxu0 0
    %1589 = vmatpush1.bf16.msra.mxu0 0
    %1590 = vmatprep.subr.bf16.mxu0 0
    %1591 = vmatpush1.bf16.msra.mxu0 %v1432
    %1592 = vmatprep.subr.bf16.mxu0 0
    %1593 = vmatpush2.bf16.msra.mxu0 0
    %1594 = vmatprep.subr.bf16.mxu0 0
    %1595 = vmatpush2.bf16.msra.mxu0 0
    %1596 = vmatprep.subr.bf16.mxu0 0
    %1597 = vmatpush2.bf16.msra.mxu0 0
    %1598 = vmatprep.subr.bf16.mxu0 0
    %1599 = vmatpush2.bf16.msra.mxu0 0
    %1600 = vmatprep.subr.bf16.mxu0 0
    %1601 = vmatpush2.bf16.msra.mxu0 0
    %1602 = vmatprep.subr.bf16.mxu0 0
    %1603 = vmatpush2.bf16.msra.mxu0 0
    %1604 = vmatprep.subr.bf16.mxu0 0
    %1605 = vmatpush2.bf16.msra.mxu0 0
    %1606 = vmatprep.subr.bf16.mxu0 0
    %1607 = vmatpush2.bf16.msra.mxu0 0
    %1608 = vmatprep.mubr.bf16.mxu0 0
    %1609 = vmatmul.mubr.bf16.gmra.mxu0 %v1420
    %v1610 = vpop.f32.mrf.mxu0
    %v1611 = vadd.f32 %v1540, %v1610
    %v1612 = vpop.f32.mrf.mxu0
    %v1613 = vpop.f32.mrf.mxu0
    %v1614 = vadd.f32 %v1543, %v1613
    %v1615 = vpop.f32.mrf.mxu0
    %1616 = vmatprep.mubr.bf16.mxu0 0
    %1617 = vmatmul.mubr.bf16.gmra.mxu0 %v1422
    %v1618 = vpop.f32.mrf.mxu0
    %v1619 = vadd.f32 %v1548, %v1618
    %v1620 = vpop.f32.mrf.mxu0
    %v1621 = vpop.f32.mrf.mxu0
    %v1622 = vadd.f32 %v1551, %v1621
    %v1623 = vpop.f32.mrf.mxu0
    %1624 = vmatprep.mubr.bf16.mxu0 0
    %1625 = vmatmul.mubr.bf16.gmra.mxu0 %v1424
    %v1626 = vpop.f32.mrf.mxu0
    %v1627 = vpop.f32.mrf.mxu0
    %v1628 = vpop.f32.mrf.mxu0
    %v1629 = vadd.f32 %v1558, %v1628
    %v1630 = vpop.f32.mrf.mxu0
    %1631 = vmatprep.mubr.bf16.mxu0 0
    %1632 = vmatmul.mubr.bf16.gmra.mxu0 %v1426
    %v1633 = vpop.f32.mrf.mxu0
    %v1634 = vadd.f32 %v1563, %v1633
    %v1635 = vpop.f32.mrf.mxu0
    %v1636 = vpop.f32.mrf.mxu0
    %v1637 = vadd.f32 %v1566, %v1636
    %v1638 = vpop.f32.mrf.mxu0
    %1639 = vmatprep.mubr.bf16.mxu0 0
    %1640 = vmatmul.mubr.bf16.gmra.mxu0 %v1429
    %v1641 = vpop.f32.mrf.mxu0
    %v1642 = vadd.f32 %v1571, %v1641
    %v1643 = vpop.f32.mrf.mxu0
    %v1644 = vpop.f32.mrf.mxu0
    %v1645 = vpop.f32.mrf.mxu0
    %1646 = vdwg.mxu0
    %v1647 = vld [vmem:[#allocation2] sm:$0xfc]
    %v1648 = vld [vmem:[#allocation2 + $0x8] sm:$0xfc]
    %v1649 = vld [vmem:[#allocation2 + $0x10] sm:$0xfc]
    %v1650 = vld [vmem:[#allocation2 + $0x18] sm:$0xfc]
    %v1651 = vld [vmem:[#allocation2 + $0x20] sm:$0xfc]
    %v1652 = vld [vmem:[#allocation2 + $0x168] sm:$0x3]
    %v1653 = vld [vmem:[#allocation2 + $0x170] sm:$0x3]
    %v1654 = vld [vmem:[#allocation2 + $0x178] sm:$0x3]
    %v1655 = vld [vmem:[#allocation2 + $0x180] sm:$0x3]
    %v1656 = vld [vmem:[#allocation2 + $0x188] sm:$0x3]
    %v1657 = vpack.c.bf16 %v363, %v1647
    %v1658 = vpack.c.bf16 %v364, %v1648
    %v1659 = vpack.c.bf16 %v365, %v1649
    %v1660 = vpack.c.bf16 %v366, %v1650
    %v1661 = vpack.c.bf16 %v367, %v1651
    %v1662 = vpack.c.bf16 %v1652, %v398
    %v1663 = vpack.c.bf16 %v1653, %v399
    %v1664 = vpack.c.bf16 %v1654, %v400
    %v1665 = vpack.c.bf16 %v1655, %v401
    %v1666 = vpack.c.bf16 %v1656, %v402
    %s1667 = scalar_lea.vmem [#allocation9], 520
    %v1668 = vld [vmem:[%s1667] sm:$0xf]
    %v1669 = vld [vmem:[%s1667 + $0x4] sm:$0xf]
    %v1670 = vld [vmem:[%s1667 + $0x8] sm:$0xf]
    %v1671 = vld [vmem:[%s1667 + $0xc] sm:$0xf]
    %v1672 = vld [vmem:[%s1667 + $0x10] sm:$0xf]
    %v1673 = vld [vmem:[%s1667 + $0x14] sm:$0xf]
    %v1674 = vld [vmem:[%s1667 + $0x18] sm:$0xf]
    %v1675 = vld [vmem:[%s1667 + $0x1c] sm:$0xf]
    %v1676 = vld [vmem:[%s1667 + $0x20] sm:$0xf]
    %v1677 = vld [vmem:[%s1667 + $0x24] sm:$0xf]
    %v1678 = vld [vmem:[%s1667 + $0x28] sm:$0xf]
    %v1679 = vld [vmem:[%s1667 + $0x2c] sm:$0xf]
    %v1680 = vld [vmem:[%s1667 + $0x30] sm:$0xf]
    %v1681 = vld [vmem:[%s1667 + $0x34] sm:$0xf]
    %v1682 = vld [vmem:[%s1667 + $0x38] sm:$0xf]
    %v1683 = vld [vmem:[%s1667 + $0x3c] sm:$0xf]
    %v1684 = vld [vmem:[%s1667 + $0x40] sm:$0xf]
    %v1685 = vld [vmem:[%s1667 + $0x44] sm:$0xf]
    %v1686 = vld [vmem:[%s1667 + $0x48] sm:$0xf]
    %v1687 = vld [vmem:[%s1667 + $0x4c] sm:$0xf]
    %v1688 = vld [vmem:[%s1667 + $0x50] sm:$0xf]
    %v1689 = vld [vmem:[%s1667 + $0x54] sm:$0xf]
    %v1690 = vld [vmem:[%s1667 + $0x58] sm:$0xf]
    %v1691 = vld [vmem:[%s1667 + $0x5c] sm:$0xf]
    %v1692 = vld [vmem:[%s1667 + $0x60] sm:$0xf]
    %v1693 = vld [vmem:[%s1667 + $0x64] sm:$0xf]
    %v1694 = vld [vmem:[%s1667 + $0x68] sm:$0xf]
    %v1695 = vld [vmem:[%s1667 + $0x6c] sm:$0xf]
    %v1696 = vld [vmem:[%s1667 + $0x70] sm:$0xf]
    %v1697 = vld [vmem:[%s1667 + $0x74] sm:$0xf]
    %v1698 = vld [vmem:[%s1667 + $0x78] sm:$0xf]
    %v1699 = vld [vmem:[%s1667 + $0x7c] sm:$0xf]
    %v1700 = vld [vmem:[%s1667 + $0x80] sm:$0xf]
    %v1701 = vld [vmem:[%s1667 + $0x84] sm:$0xf]
    %v1702 = vld [vmem:[%s1667 + $0x88] sm:$0xf]
    %v1703 = vld [vmem:[%s1667 + $0x8c] sm:$0xf]
    %v1704 = vld [vmem:[%s1667 + $0x90] sm:$0xf]
    %v1705 = vld [vmem:[%s1667 + $0x94] sm:$0xf]
    %v1706 = vld [vmem:[%s1667 + $0x98] sm:$0xf]
    %v1707 = vld [vmem:[%s1667 + $0x9c] sm:$0xf]
    %v1708 = vld [vmem:[%s1667 + $0xa0] sm:$0xf]
    %v1709 = vld [vmem:[%s1667 + $0xa4] sm:$0xf]
    %v1710 = vld [vmem:[%s1667 + $0xa8] sm:$0xf]
    %v1711 = vld [vmem:[%s1667 + $0xac] sm:$0xf]
    %v1712 = vld [vmem:[%s1667 + $0xb0] sm:$0xf]
    %v1713 = vld [vmem:[%s1667 + $0xb4] sm:$0xf]
    %v1714 = vld [vmem:[%s1667 + $0xb8] sm:$0xf]
    %v1715 = vld [vmem:[%s1667 + $0xbc] sm:$0xf]
    %v1716 = vld [vmem:[%s1667 + $0xc0] sm:$0xf]
    %v1717 = vld [vmem:[%s1667 + $0xc4] sm:$0xf]
    %v1718 = vld [vmem:[%s1667 + $0xc8] sm:$0xf]
    %v1719 = vld [vmem:[%s1667 + $0xcc] sm:$0xf]
    %v1720 = vld [vmem:[%s1667 + $0xd0] sm:$0xf]
    %v1721 = vld [vmem:[%s1667 + $0xd4] sm:$0xf]
    %v1722 = vld [vmem:[%s1667 + $0xd8] sm:$0xf]
    %v1723 = vld [vmem:[%s1667 + $0xdc] sm:$0xf]
    %v1724 = vld [vmem:[%s1667 + $0xe0] sm:$0xf]
    %v1725 = vld [vmem:[%s1667 + $0xe4] sm:$0xf]
    %v1726 = vld [vmem:[%s1667 + $0xe8] sm:$0xf]
    %v1727 = vld [vmem:[%s1667 + $0xec] sm:$0xf]
    %v1728 = vld [vmem:[%s1667 + $0xf0] sm:$0xf]
    %v1729 = vld [vmem:[%s1667 + $0xf4] sm:$0xf]
    %v1730 = vld [vmem:[%s1667 + $0xf8] sm:$0xf]
    %v1731 = vld [vmem:[%s1667 + $0xfc] sm:$0xf]
    %v1732 = vld [vmem:[%s1667 + $0x100] sm:$0x1]
    %vm1758 = vcmask 1046528
    %v1759 = vrot.slane %v1657, 1
    %v1760 = vrot.slane %v408, 1
    %v1761 = vsel %vm1758, %v1759, %v1760
    %v1762 = vrot.slane %v1658, 1
    %v1763 = vrot.slane %v409, 1
    %v1764 = vsel %vm1758, %v1762, %v1763
    %v1765 = vrot.slane %v1659, 1
    %v1766 = vrot.slane %v410, 1
    %v1767 = vsel %vm1758, %v1765, %v1766
    %v1768 = vrot.slane %v1660, 1
    %v1769 = vrot.slane %v411, 1
    %v1770 = vsel %vm1758, %v1768, %v1769
    %v1771 = vrot.slane %v1661, 1
    %v1772 = vrot.slane %v412, 1
    %v1773 = vsel %vm1758, %v1771, %v1772
    %v1774 = vrot.slane %v413, 1
    %v1775 = vsel %vm1758, %v1760, %v1774
    %v1776 = vrot.slane %v414, 1
    %v1777 = vsel %vm1758, %v1763, %v1776
    %v1778 = vrot.slane %v415, 1
    %v1779 = vsel %vm1758, %v1766, %v1778
    %v1780 = vrot.slane %v416, 1
    %v1781 = vsel %vm1758, %v1769, %v1780
    %v1782 = vrot.slane %v417, 1
    %v1783 = vsel %vm1758, %v1772, %v1782
    %v1784 = vrot.slane %v418, 1
    %v1785 = vsel %vm1758, %v1774, %v1784
    %v1786 = vrot.slane %v419, 1
    %v1787 = vsel %vm1758, %v1776, %v1786
    %v1788 = vrot.slane %v420, 1
    %v1789 = vsel %vm1758, %v1778, %v1788
    %v1790 = vrot.slane %v421, 1
    %v1791 = vsel %vm1758, %v1780, %v1790
    %v1792 = vrot.slane %v422, 1
    %v1793 = vsel %vm1758, %v1782, %v1792
    %v1794 = vrot.slane %v1662, 1
    %v1795 = vsel %vm1758, %v1784, %v1794
    %v1796 = vrot.slane %v1663, 1
    %v1797 = vsel %vm1758, %v1786, %v1796
    %v1798 = vrot.slane %v1664, 1
    %v1799 = vsel %vm1758, %v1788, %v1798
    %v1800 = vrot.slane %v1665, 1
    %v1801 = vsel %vm1758, %v1790, %v1800
    %v1802 = vrot.slane %v1666, 1
    %v1803 = vsel %vm1758, %v1792, %v1802
    %v1889 = vunpack.c.l.b16 %v1668
    %v1890 = vunpack.c.l.b16 %v1669
    %v1891 = vunpack.c.l.b16 %v1670
    %v1892 = vunpack.c.l.b16 %v1671
    %v1893 = vunpack.c.l.b16 %v1672
    %v1894 = vunpack.c.l.b16 %v1673
    %v1895 = vunpack.c.l.b16 %v1674
    %v1896 = vunpack.c.l.b16 %v1675
    %v1897 = vunpack.c.l.b16 %v1676
    %v1898 = vunpack.c.l.b16 %v1677
    %v1899 = vunpack.c.l.b16 %v1678
    %v1900 = vunpack.c.l.b16 %v1679
    %v1901 = vunpack.c.l.b16 %v1680
    %v1902 = vunpack.c.l.b16 %v1681
    %v1903 = vunpack.c.l.b16 %v1682
    %v1904 = vunpack.c.l.b16 %v1683
    %v1905 = vunpack.c.l.b16 %v1684
    %v1906 = vunpack.c.l.b16 %v1685
    %v1907 = vunpack.c.l.b16 %v1686
    %v1908 = vunpack.c.l.b16 %v1687
    %v1909 = vunpack.c.l.b16 %v1688
    %v1910 = vunpack.c.l.b16 %v1689
    %v1911 = vunpack.c.l.b16 %v1690
    %v1912 = vunpack.c.l.b16 %v1691
    %v1913 = vunpack.c.l.b16 %v1692
    %v1914 = vunpack.c.l.b16 %v1693
    %v1915 = vunpack.c.l.b16 %v1694
    %v1916 = vunpack.c.l.b16 %v1695
    %v1917 = vunpack.c.l.b16 %v1696
    %v1918 = vunpack.c.l.b16 %v1697
    %v1919 = vunpack.c.l.b16 %v1698
    %v1920 = vunpack.c.l.b16 %v1699
    %v1921 = vunpack.c.l.b16 %v1700
    %v1922 = vunpack.c.l.b16 %v1701
    %v1923 = vunpack.c.l.b16 %v1702
    %v1924 = vunpack.c.l.b16 %v1703
    %v1925 = vunpack.c.l.b16 %v1704
    %v1926 = vunpack.c.l.b16 %v1705
    %v1927 = vunpack.c.l.b16 %v1706
    %v1928 = vunpack.c.l.b16 %v1707
    %v1929 = vunpack.c.l.b16 %v1708
    %v1930 = vunpack.c.l.b16 %v1709
    %v1931 = vunpack.c.l.b16 %v1710
    %v1932 = vunpack.c.l.b16 %v1711
    %v1933 = vunpack.c.l.b16 %v1712
    %v1934 = vunpack.c.l.b16 %v1713
    %v1935 = vunpack.c.l.b16 %v1714
    %v1936 = vunpack.c.l.b16 %v1715
    %v1937 = vunpack.c.l.b16 %v1716
    %v1938 = vunpack.c.l.b16 %v1717
    %v1939 = vunpack.c.l.b16 %v1718
    %v1940 = vunpack.c.l.b16 %v1719
    %v1941 = vunpack.c.l.b16 %v1720
    %v1942 = vunpack.c.l.b16 %v1721
    %v1943 = vunpack.c.l.b16 %v1722
    %v1944 = vunpack.c.l.b16 %v1723
    %v1945 = vunpack.c.l.b16 %v1724
    %v1946 = vunpack.c.l.b16 %v1725
    %v1947 = vunpack.c.l.b16 %v1726
    %v1948 = vunpack.c.l.b16 %v1727
    %v1949 = vunpack.c.l.b16 %v1728
    %v1950 = vunpack.c.l.b16 %v1729
    %v1951 = vunpack.c.l.b16 %v1730
    %v1952 = vunpack.c.l.b16 %v1731
    %v1953 = vunpack.c.l.b16 %v1732
    %v1954 = vpack.c.b16 %v1890, %v1889
    %v1955 = vpack.c.b16 %v1892, %v1891
    %v1956 = vpack.c.b16 %v1894, %v1893
    %v1957 = vpack.c.b16 %v1896, %v1895
    %v1958 = vpack.c.b16 %v1898, %v1897
    %v1959 = vpack.c.b16 %v1900, %v1899
    %v1960 = vpack.c.b16 %v1902, %v1901
    %v1961 = vpack.c.b16 %v1904, %v1903
    %v1962 = vpack.c.b16 %v1906, %v1905
    %v1963 = vpack.c.b16 %v1908, %v1907
    %v1964 = vpack.c.b16 %v1910, %v1909
    %v1965 = vpack.c.b16 %v1912, %v1911
    %v1966 = vpack.c.b16 %v1914, %v1913
    %v1967 = vpack.c.b16 %v1916, %v1915
    %v1968 = vpack.c.b16 %v1918, %v1917
    %v1969 = vpack.c.b16 %v1920, %v1919
    %v1970 = vpack.c.b16 %v1922, %v1921
    %v1971 = vpack.c.b16 %v1924, %v1923
    %v1972 = vpack.c.b16 %v1926, %v1925
    %v1973 = vpack.c.b16 %v1928, %v1927
    %v1974 = vpack.c.b16 %v1930, %v1929
    %v1975 = vpack.c.b16 %v1932, %v1931
    %v1976 = vpack.c.b16 %v1934, %v1933
    %v1977 = vpack.c.b16 %v1936, %v1935
    %v1978 = vpack.c.b16 %v1938, %v1937
    %v1979 = vpack.c.b16 %v1940, %v1939
    %v1980 = vpack.c.b16 %v1942, %v1941
    %v1981 = vpack.c.b16 %v1944, %v1943
    %v1982 = vpack.c.b16 %v1946, %v1945
    %v1983 = vpack.c.b16 %v1948, %v1947
    %v1984 = vpack.c.b16 %v1950, %v1949
    %v1985 = vpack.c.b16 %v1952, %v1951
    %v1986 = vpack.c.b16 %v1953, %v1953
    %v2020 = vsel %vm215, %v1773, 0
    %v2023 = vsel %vm215, %v1783, 0
    %v2026 = vsel %vm215, %v1793, 0
    %v2029 = vsel %vm215, %v1803, 0
    %v2032 = vsel %vm215, %v1802, 0
    %v2035 = vand.u32 %v1986, %v1007
    %2037 = vmatprep.subr.bf16.mxu0 0
    %2038 = vmatpush1.bf16.msra.mxu0 %v1961
    %2039 = vmatprep.subr.bf16.mxu0 0
    %2040 = vmatpush1.bf16.msra.mxu0 %v1960
    %2041 = vmatprep.subr.bf16.mxu0 0
    %2042 = vmatpush1.bf16.msra.mxu0 %v1959
    %2043 = vmatprep.subr.bf16.mxu0 0
    %2044 = vmatpush1.bf16.msra.mxu0 %v1958
    %2045 = vmatprep.subr.bf16.mxu0 0
    %2046 = vmatpush1.bf16.msra.mxu0 %v1957
    %2047 = vmatprep.subr.bf16.mxu0 0
    %2048 = vmatpush1.bf16.msra.mxu0 %v1956
    %2049 = vmatprep.subr.bf16.mxu0 0
    %2050 = vmatpush1.bf16.msra.mxu0 %v1955
    %2051 = vmatprep.subr.bf16.mxu0 0
    %2052 = vmatpush1.bf16.msra.mxu0 %v1954
    %2053 = vmatprep.subr.bf16.mxu0 0
    %2054 = vmatpush2.bf16.msra.mxu0 %v1969
    %2055 = vmatprep.subr.bf16.mxu0 0
    %2056 = vmatpush2.bf16.msra.mxu0 %v1968
    %2057 = vmatprep.subr.bf16.mxu0 0
    %2058 = vmatpush2.bf16.msra.mxu0 %v1967
    %2059 = vmatprep.subr.bf16.mxu0 0
    %2060 = vmatpush2.bf16.msra.mxu0 %v1966
    %2061 = vmatprep.subr.bf16.mxu0 0
    %2062 = vmatpush2.bf16.msra.mxu0 %v1965
    %2063 = vmatprep.subr.bf16.mxu0 0
    %2064 = vmatpush2.bf16.msra.mxu0 %v1964
    %2065 = vmatprep.subr.bf16.mxu0 0
    %2066 = vmatpush2.bf16.msra.mxu0 %v1963
    %2067 = vmatprep.subr.bf16.mxu0 0
    %2068 = vmatpush2.bf16.msra.mxu0 %v1962
    %2069 = vmatprep.mubr.bf16.mxu0 %v1764
    %2070 = vmatmul.mubr.bf16.gmra.mxu0 %v1761
    %v2071 = vpop.f32.mrf.mxu0
    %v2072 = vadd.f32 0.0, %v2071
    %v2073 = vpop.f32.mrf.mxu0
    %v2074 = vpop.f32.mrf.mxu0
    %v2075 = vadd.f32 0.0, %v2074
    %v2076 = vpop.f32.mrf.mxu0
    %2077 = vmatprep.mubr.bf16.mxu0 %v1777
    %2078 = vmatmul.mubr.bf16.gmra.mxu0 %v1775
    %v2079 = vpop.f32.mrf.mxu0
    %v2080 = vadd.f32 0.0, %v2079
    %v2081 = vpop.f32.mrf.mxu0
    %v2082 = vpop.f32.mrf.mxu0
    %v2083 = vadd.f32 0.0, %v2082
    %v2084 = vpop.f32.mrf.mxu0
    %2085 = vmatprep.mubr.bf16.mxu0 %v1787
    %2086 = vmatmul.mubr.bf16.gmra.mxu0 %v1785
    %v2087 = vpop.f32.mrf.mxu0
    %v2088 = vpop.f32.mrf.mxu0
    %v2089 = vpop.f32.mrf.mxu0
    %v2090 = vadd.f32 0.0, %v2089
    %v2091 = vpop.f32.mrf.mxu0
    %2092 = vmatprep.mubr.bf16.mxu0 %v1797
    %2093 = vmatmul.mubr.bf16.gmra.mxu0 %v1795
    %v2094 = vpop.f32.mrf.mxu0
    %v2095 = vadd.f32 0.0, %v2094
    %v2096 = vpop.f32.mrf.mxu0
    %v2097 = vpop.f32.mrf.mxu0
    %v2098 = vadd.f32 0.0, %v2097
    %v2099 = vpop.f32.mrf.mxu0
    %2100 = vmatprep.mubr.bf16.mxu0 %v1796
    %2101 = vmatmul.mubr.bf16.gmra.mxu0 %v1794
    %v2102 = vpop.f32.mrf.mxu0
    %v2103 = vadd.f32 0.0, %v2102
    %v2104 = vpop.f32.mrf.mxu0
    %v2105 = vpop.f32.mrf.mxu0
    %v2106 = vpop.f32.mrf.mxu0
    %2107 = vdwg.mxu0
    %2108 = vmatprep.subr.bf16.mxu0 0
    %2109 = vmatpush1.bf16.msra.mxu0 %v1977
    %2110 = vmatprep.subr.bf16.mxu0 0
    %2111 = vmatpush1.bf16.msra.mxu0 %v1976
    %2112 = vmatprep.subr.bf16.mxu0 0
    %2113 = vmatpush1.bf16.msra.mxu0 %v1975
    %2114 = vmatprep.subr.bf16.mxu0 0
    %2115 = vmatpush1.bf16.msra.mxu0 %v1974
    %2116 = vmatprep.subr.bf16.mxu0 0
    %2117 = vmatpush1.bf16.msra.mxu0 %v1973
    %2118 = vmatprep.subr.bf16.mxu0 0
    %2119 = vmatpush1.bf16.msra.mxu0 %v1972
    %2120 = vmatprep.subr.bf16.mxu0 0
    %2121 = vmatpush1.bf16.msra.mxu0 %v1971
    %2122 = vmatprep.subr.bf16.mxu0 0
    %2123 = vmatpush1.bf16.msra.mxu0 %v1970
    %2124 = vmatprep.subr.bf16.mxu0 0
    %2125 = vmatpush2.bf16.msra.mxu0 %v1985
    %2126 = vmatprep.subr.bf16.mxu0 0
    %2127 = vmatpush2.bf16.msra.mxu0 %v1984
    %2128 = vmatprep.subr.bf16.mxu0 0
    %2129 = vmatpush2.bf16.msra.mxu0 %v1983
    %2130 = vmatprep.subr.bf16.mxu0 0
    %2131 = vmatpush2.bf16.msra.mxu0 %v1982
    %2132 = vmatprep.subr.bf16.mxu0 0
    %2133 = vmatpush2.bf16.msra.mxu0 %v1981
    %2134 = vmatprep.subr.bf16.mxu0 0
    %2135 = vmatpush2.bf16.msra.mxu0 %v1980
    %2136 = vmatprep.subr.bf16.mxu0 0
    %2137 = vmatpush2.bf16.msra.mxu0 %v1979
    %2138 = vmatprep.subr.bf16.mxu0 0
    %2139 = vmatpush2.bf16.msra.mxu0 %v1978
    %2140 = vmatprep.mubr.bf16.mxu0 %v1770
    %2141 = vmatmul.mubr.bf16.gmra.mxu0 %v1767
    %v2142 = vpop.f32.mrf.mxu0
    %v2143 = vadd.f32 %v2072, %v2142
    %v2144 = vpop.f32.mrf.mxu0
    %v2145 = vpop.f32.mrf.mxu0
    %v2146 = vadd.f32 %v2075, %v2145
    %v2147 = vpop.f32.mrf.mxu0
    %2148 = vmatprep.mubr.bf16.mxu0 %v1781
    %2149 = vmatmul.mubr.bf16.gmra.mxu0 %v1779
    %v2150 = vpop.f32.mrf.mxu0
    %v2151 = vadd.f32 %v2080, %v2150
    %v2152 = vpop.f32.mrf.mxu0
    %v2153 = vpop.f32.mrf.mxu0
    %v2154 = vadd.f32 %v2083, %v2153
    %v2155 = vpop.f32.mrf.mxu0
    %2156 = vmatprep.mubr.bf16.mxu0 %v1791
    %2157 = vmatmul.mubr.bf16.gmra.mxu0 %v1789
    %v2158 = vpop.f32.mrf.mxu0
    %v2159 = vpop.f32.mrf.mxu0
    %v2160 = vpop.f32.mrf.mxu0
    %v2161 = vadd.f32 %v2090, %v2160
    %v2162 = vpop.f32.mrf.mxu0
    %2163 = vmatprep.mubr.bf16.mxu0 %v1801
    %2164 = vmatmul.mubr.bf16.gmra.mxu0 %v1799
    %v2165 = vpop.f32.mrf.mxu0
    %v2166 = vadd.f32 %v2095, %v2165
    %v2167 = vpop.f32.mrf.mxu0
    %v2168 = vpop.f32.mrf.mxu0
    %v2169 = vadd.f32 %v2098, %v2168
    %v2170 = vpop.f32.mrf.mxu0
    %2171 = vmatprep.mubr.bf16.mxu0 %v1800
    %2172 = vmatmul.mubr.bf16.gmra.mxu0 %v1798
    %v2173 = vpop.f32.mrf.mxu0
    %v2174 = vadd.f32 %v2103, %v2173
    %v2175 = vpop.f32.mrf.mxu0
    %v2176 = vpop.f32.mrf.mxu0
    %v2177 = vpop.f32.mrf.mxu0
    %2178 = vdwg.mxu0
    %2179 = vmatprep.subr.bf16.mxu0 0
    %2180 = vmatpush1.bf16.msra.mxu0 0
    %2181 = vmatprep.subr.bf16.mxu0 0
    %2182 = vmatpush1.bf16.msra.mxu0 0
    %2183 = vmatprep.subr.bf16.mxu0 0
    %2184 = vmatpush1.bf16.msra.mxu0 0
    %2185 = vmatprep.subr.bf16.mxu0 0
    %2186 = vmatpush1.bf16.msra.mxu0 0
    %2187 = vmatprep.subr.bf16.mxu0 0
    %2188 = vmatpush1.bf16.msra.mxu0 0
    %2189 = vmatprep.subr.bf16.mxu0 0
    %2190 = vmatpush1.bf16.msra.mxu0 0
    %2191 = vmatprep.subr.bf16.mxu0 0
    %2192 = vmatpush1.bf16.msra.mxu0 0
    %2193 = vmatprep.subr.bf16.mxu0 0
    %2194 = vmatpush1.bf16.msra.mxu0 %v2035
    %2195 = vmatprep.subr.bf16.mxu0 0
    %2196 = vmatpush2.bf16.msra.mxu0 0
    %2197 = vmatprep.subr.bf16.mxu0 0
    %2198 = vmatpush2.bf16.msra.mxu0 0
    %2199 = vmatprep.subr.bf16.mxu0 0
    %2200 = vmatpush2.bf16.msra.mxu0 0
    %2201 = vmatprep.subr.bf16.mxu0 0
    %2202 = vmatpush2.bf16.msra.mxu0 0
    %2203 = vmatprep.subr.bf16.mxu0 0
    %2204 = vmatpush2.bf16.msra.mxu0 0
    %2205 = vmatprep.subr.bf16.mxu0 0
    %2206 = vmatpush2.bf16.msra.mxu0 0
    %2207 = vmatprep.subr.bf16.mxu0 0
    %2208 = vmatpush2.bf16.msra.mxu0 0
    %2209 = vmatprep.subr.bf16.mxu0 0
    %2210 = vmatpush2.bf16.msra.mxu0 0
    %2211 = vmatprep.mubr.bf16.mxu0 0
    %2212 = vmatmul.mubr.bf16.gmra.mxu0 %v2020
    %v2213 = vpop.f32.mrf.mxu0
    %v2214 = vadd.f32 %v2143, %v2213
    %v2215 = vpop.f32.mrf.mxu0
    %v2216 = vpop.f32.mrf.mxu0
    %v2217 = vadd.f32 %v2146, %v2216
    %v2218 = vpop.f32.mrf.mxu0
    %2219 = vmatprep.mubr.bf16.mxu0 0
    %2220 = vmatmul.mubr.bf16.gmra.mxu0 %v2023
    %v2221 = vpop.f32.mrf.mxu0
    %v2222 = vadd.f32 %v2151, %v2221
    %v2223 = vpop.f32.mrf.mxu0
    %v2224 = vpop.f32.mrf.mxu0
    %v2225 = vadd.f32 %v2154, %v2224
    %v2226 = vpop.f32.mrf.mxu0
    %2227 = vmatprep.mubr.bf16.mxu0 0
    %2228 = vmatmul.mubr.bf16.gmra.mxu0 %v2026
    %v2229 = vpop.f32.mrf.mxu0
    %v2230 = vpop.f32.mrf.mxu0
    %v2231 = vpop.f32.mrf.mxu0
    %v2232 = vadd.f32 %v2161, %v2231
    %v2233 = vpop.f32.mrf.mxu0
    %2234 = vmatprep.mubr.bf16.mxu0 0
    %2235 = vmatmul.mubr.bf16.gmra.mxu0 %v2029
    %v2236 = vpop.f32.mrf.mxu0
    %v2237 = vadd.f32 %v2166, %v2236
    %v2238 = vpop.f32.mrf.mxu0
    %v2239 = vpop.f32.mrf.mxu0
    %v2240 = vadd.f32 %v2169, %v2239
    %v2241 = vpop.f32.mrf.mxu0
    %2242 = vmatprep.mubr.bf16.mxu0 0
    %2243 = vmatmul.mubr.bf16.gmra.mxu0 %v2032
    %v2244 = vpop.f32.mrf.mxu0
    %v2245 = vadd.f32 %v2174, %v2244
    %v2246 = vpop.f32.mrf.mxu0
    %v2247 = vpop.f32.mrf.mxu0
    %v2248 = vpop.f32.mrf.mxu0
    %2249 = vdwg.mxu0
    %v2250 = vadd.f32 %v1611, %v2214
    %v2251 = vadd.f32 %v1614, %v2217
    %v2252 = vadd.f32 %v1619, %v2222
    %v2253 = vadd.f32 %v1622, %v2225
    %v2254 = vadd.f32 %v1629, %v2232
    %v2255 = vadd.f32 %v1634, %v2237
    %v2256 = vadd.f32 %v1637, %v2240
    %v2257 = vadd.f32 %v1642, %v2245
    %v2258 = vld [vmem:[#allocation2] sm:$0xf8]
    %v2259 = vld [vmem:[#allocation2 + $0x8] sm:$0xf8]
    %v2260 = vld [vmem:[#allocation2 + $0x10] sm:$0xf8]
    %v2261 = vld [vmem:[#allocation2 + $0x18] sm:$0xf8]
    %v2262 = vld [vmem:[#allocation2 + $0x20] sm:$0xf8]
    %v2263 = vld [vmem:[#allocation2 + $0x168] sm:$0x7]
    %v2264 = vld [vmem:[#allocation2 + $0x170] sm:$0x7]
    %v2265 = vld [vmem:[#allocation2 + $0x178] sm:$0x7]
    %v2266 = vld [vmem:[#allocation2 + $0x180] sm:$0x7]
    %v2267 = vld [vmem:[#allocation2 + $0x188] sm:$0x7]
    %v2268 = vpack.c.bf16 %v363, %v2258
    %v2269 = vpack.c.bf16 %v364, %v2259
    %v2270 = vpack.c.bf16 %v365, %v2260
    %v2271 = vpack.c.bf16 %v366, %v2261
    %v2272 = vpack.c.bf16 %v367, %v2262
    %v2273 = vpack.c.bf16 %v2263, %v398
    %v2274 = vpack.c.bf16 %v2264, %v399
    %v2275 = vpack.c.bf16 %v2265, %v400
    %v2276 = vpack.c.bf16 %v2266, %v401
    %v2277 = vpack.c.bf16 %v2267, %v402
    %s2278 = scalar_lea.vmem [#allocation9], 780
    %v2279 = vld [vmem:[%s2278] sm:$0xf]
    %v2280 = vld [vmem:[%s2278 + $0x4] sm:$0xf]
    %v2281 = vld [vmem:[%s2278 + $0x8] sm:$0xf]
    %v2282 = vld [vmem:[%s2278 + $0xc] sm:$0xf]
    %v2283 = vld [vmem:[%s2278 + $0x10] sm:$0xf]
    %v2284 = vld [vmem:[%s2278 + $0x14] sm:$0xf]
    %v2285 = vld [vmem:[%s2278 + $0x18] sm:$0xf]
    %v2286 = vld [vmem:[%s2278 + $0x1c] sm:$0xf]
    %v2287 = vld [vmem:[%s2278 + $0x20] sm:$0xf]
    %v2288 = vld [vmem:[%s2278 + $0x24] sm:$0xf]
    %v2289 = vld [vmem:[%s2278 + $0x28] sm:$0xf]
    %v2290 = vld [vmem:[%s2278 + $0x2c] sm:$0xf]
    %v2291 = vld [vmem:[%s2278 + $0x30] sm:$0xf]
    %v2292 = vld [vmem:[%s2278 + $0x34] sm:$0xf]
    %v2293 = vld [vmem:[%s2278 + $0x38] sm:$0xf]
    %v2294 = vld [vmem:[%s2278 + $0x3c] sm:$0xf]
    %v2295 = vld [vmem:[%s2278 + $0x40] sm:$0xf]
    %v2296 = vld [vmem:[%s2278 + $0x44] sm:$0xf]
    %v2297 = vld [vmem:[%s2278 + $0x48] sm:$0xf]
    %v2298 = vld [vmem:[%s2278 + $0x4c] sm:$0xf]
    %v2299 = vld [vmem:[%s2278 + $0x50] sm:$0xf]
    %v2300 = vld [vmem:[%s2278 + $0x54] sm:$0xf]
    %v2301 = vld [vmem:[%s2278 + $0x58] sm:$0xf]
    %v2302 = vld [vmem:[%s2278 + $0x5c] sm:$0xf]
    %v2303 = vld [vmem:[%s2278 + $0x60] sm:$0xf]
    %v2304 = vld [vmem:[%s2278 + $0x64] sm:$0xf]
    %v2305 = vld [vmem:[%s2278 + $0x68] sm:$0xf]
    %v2306 = vld [vmem:[%s2278 + $0x6c] sm:$0xf]
    %v2307 = vld [vmem:[%s2278 + $0x70] sm:$0xf]
    %v2308 = vld [vmem:[%s2278 + $0x74] sm:$0xf]
    %v2309 = vld [vmem:[%s2278 + $0x78] sm:$0xf]
    %v2310 = vld [vmem:[%s2278 + $0x7c] sm:$0xf]
    %v2311 = vld [vmem:[%s2278 + $0x80] sm:$0xf]
    %v2312 = vld [vmem:[%s2278 + $0x84] sm:$0xf]
    %v2313 = vld [vmem:[%s2278 + $0x88] sm:$0xf]
    %v2314 = vld [vmem:[%s2278 + $0x8c] sm:$0xf]
    %v2315 = vld [vmem:[%s2278 + $0x90] sm:$0xf]
    %v2316 = vld [vmem:[%s2278 + $0x94] sm:$0xf]
    %v2317 = vld [vmem:[%s2278 + $0x98] sm:$0xf]
    %v2318 = vld [vmem:[%s2278 + $0x9c] sm:$0xf]
    %v2319 = vld [vmem:[%s2278 + $0xa0] sm:$0xf]
    %v2320 = vld [vmem:[%s2278 + $0xa4] sm:$0xf]
    %v2321 = vld [vmem:[%s2278 + $0xa8] sm:$0xf]
    %v2322 = vld [vmem:[%s2278 + $0xac] sm:$0xf]
    %v2323 = vld [vmem:[%s2278 + $0xb0] sm:$0xf]
    %v2324 = vld [vmem:[%s2278 + $0xb4] sm:$0xf]
    %v2325 = vld [vmem:[%s2278 + $0xb8] sm:$0xf]
    %v2326 = vld [vmem:[%s2278 + $0xbc] sm:$0xf]
    %v2327 = vld [vmem:[%s2278 + $0xc0] sm:$0xf]
    %v2328 = vld [vmem:[%s2278 + $0xc4] sm:$0xf]
    %v2329 = vld [vmem:[%s2278 + $0xc8] sm:$0xf]
    %v2330 = vld [vmem:[%s2278 + $0xcc] sm:$0xf]
    %v2331 = vld [vmem:[%s2278 + $0xd0] sm:$0xf]
    %v2332 = vld [vmem:[%s2278 + $0xd4] sm:$0xf]
    %v2333 = vld [vmem:[%s2278 + $0xd8] sm:$0xf]
    %v2334 = vld [vmem:[%s2278 + $0xdc] sm:$0xf]
    %v2335 = vld [vmem:[%s2278 + $0xe0] sm:$0xf]
    %v2336 = vld [vmem:[%s2278 + $0xe4] sm:$0xf]
    %v2337 = vld [vmem:[%s2278 + $0xe8] sm:$0xf]
    %v2338 = vld [vmem:[%s2278 + $0xec] sm:$0xf]
    %v2339 = vld [vmem:[%s2278 + $0xf0] sm:$0xf]
    %v2340 = vld [vmem:[%s2278 + $0xf4] sm:$0xf]
    %v2341 = vld [vmem:[%s2278 + $0xf8] sm:$0xf]
    %v2342 = vld [vmem:[%s2278 + $0xfc] sm:$0xf]
    %v2343 = vld [vmem:[%s2278 + $0x100] sm:$0x1]
    %vm2344 = vsmask.f32 6400
    %v2346 = vshrl.u32 %v2268, 16
    %v2348 = vrot.slane %v2346, 1
    %v2349 = vshll.u32 %v2268, 16
    %v2351 = vrot.slane %v2349, 2
    %v2352 = vor.u32 %v2348, %v2351
    %v2353 = vrot.slane %v640, 1
    %v2354 = vrot.slane %v588, 2
    %v2355 = vor.u32 %v2353, %v2354
    %v2356 = vsel %vm2344, %v2352, %v2355
    %v2358 = vshrl.u32 %v2269, 16
    %v2360 = vrot.slane %v2358, 1
    %v2361 = vshll.u32 %v2269, 16
    %v2363 = vrot.slane %v2361, 2
    %v2364 = vor.u32 %v2360, %v2363
    %v2365 = vrot.slane %v648, 1
    %v2366 = vrot.slane %v600, 2
    %v2367 = vor.u32 %v2365, %v2366
    %v2368 = vsel %vm2344, %v2364, %v2367
    %v2370 = vshrl.u32 %v2270, 16
    %v2372 = vrot.slane %v2370, 1
    %v2373 = vshll.u32 %v2270, 16
    %v2375 = vrot.slane %v2373, 2
    %v2376 = vor.u32 %v2372, %v2375
    %v2377 = vrot.slane %v656, 1
    %v2378 = vrot.slane %v612, 2
    %v2379 = vor.u32 %v2377, %v2378
    %v2380 = vsel %vm2344, %v2376, %v2379
    %v2382 = vshrl.u32 %v2271, 16
    %v2384 = vrot.slane %v2382, 1
    %v2385 = vshll.u32 %v2271, 16
    %v2387 = vrot.slane %v2385, 2
    %v2388 = vor.u32 %v2384, %v2387
    %v2389 = vrot.slane %v664, 1
    %v2390 = vrot.slane %v624, 2
    %v2391 = vor.u32 %v2389, %v2390
    %v2392 = vsel %vm2344, %v2388, %v2391
    %v2394 = vshrl.u32 %v2272, 16
    %v2396 = vrot.slane %v2394, 1
    %v2397 = vshll.u32 %v2272, 16
    %v2399 = vrot.slane %v2397, 2
    %v2400 = vor.u32 %v2396, %v2399
    %v2401 = vrot.slane %v672, 1
    %v2402 = vrot.slane %v636, 2
    %v2403 = vor.u32 %v2401, %v2402
    %v2404 = vsel %vm2344, %v2400, %v2403
    %v2405 = vrot.slane %v680, 1
    %v2406 = vrot.slane %v644, 2
    %v2407 = vor.u32 %v2405, %v2406
    %v2408 = vsel %vm2344, %v2355, %v2407
    %v2409 = vrot.slane %v688, 1
    %v2410 = vrot.slane %v652, 2
    %v2411 = vor.u32 %v2409, %v2410
    %v2412 = vsel %vm2344, %v2367, %v2411
    %v2413 = vrot.slane %v696, 1
    %v2414 = vrot.slane %v660, 2
    %v2415 = vor.u32 %v2413, %v2414
    %v2416 = vsel %vm2344, %v2379, %v2415
    %v2417 = vrot.slane %v704, 1
    %v2418 = vrot.slane %v668, 2
    %v2419 = vor.u32 %v2417, %v2418
    %v2420 = vsel %vm2344, %v2391, %v2419
    %v2421 = vrot.slane %v712, 1
    %v2422 = vrot.slane %v676, 2
    %v2423 = vor.u32 %v2421, %v2422
    %v2424 = vsel %vm2344, %v2403, %v2423
    %v2425 = vrot.slane %v720, 1
    %v2426 = vrot.slane %v684, 2
    %v2427 = vor.u32 %v2425, %v2426
    %v2428 = vsel %vm2344, %v2407, %v2427
    %v2429 = vrot.slane %v728, 1
    %v2430 = vrot.slane %v692, 2
    %v2431 = vor.u32 %v2429, %v2430
    %v2432 = vsel %vm2344, %v2411, %v2431
    %v2433 = vrot.slane %v736, 1
    %v2434 = vrot.slane %v700, 2
    %v2435 = vor.u32 %v2433, %v2434
    %v2436 = vsel %vm2344, %v2415, %v2435
    %v2437 = vrot.slane %v744, 1
    %v2438 = vrot.slane %v708, 2
    %v2439 = vor.u32 %v2437, %v2438
    %v2440 = vsel %vm2344, %v2419, %v2439
    %v2441 = vrot.slane %v752, 1
    %v2442 = vrot.slane %v716, 2
    %v2443 = vor.u32 %v2441, %v2442
    %v2444 = vsel %vm2344, %v2423, %v2443
    %v2446 = vshrl.u32 %v2273, 16
    %v2448 = vrot.slane %v2446, 1
    %v2449 = vshll.u32 %v2273, 16
    %v2451 = vrot.slane %v2449, 2
    %v2452 = vor.u32 %v2448, %v2451
    %v2453 = vsel %vm2344, %v2427, %v2452
    %v2455 = vshrl.u32 %v2274, 16
    %v2457 = vrot.slane %v2455, 1
    %v2458 = vshll.u32 %v2274, 16
    %v2460 = vrot.slane %v2458, 2
    %v2461 = vor.u32 %v2457, %v2460
    %v2462 = vsel %vm2344, %v2431, %v2461
    %v2464 = vshrl.u32 %v2275, 16
    %v2466 = vrot.slane %v2464, 1
    %v2467 = vshll.u32 %v2275, 16
    %v2469 = vrot.slane %v2467, 2
    %v2470 = vor.u32 %v2466, %v2469
    %v2471 = vsel %vm2344, %v2435, %v2470
    %v2473 = vshrl.u32 %v2276, 16
    %v2475 = vrot.slane %v2473, 1
    %v2476 = vshll.u32 %v2276, 16
    %v2478 = vrot.slane %v2476, 2
    %v2479 = vor.u32 %v2475, %v2478
    %v2480 = vsel %vm2344, %v2439, %v2479
    %v2482 = vshrl.u32 %v2277, 16
    %v2484 = vrot.slane %v2482, 1
    %v2485 = vshll.u32 %v2277, 16
    %v2487 = vrot.slane %v2485, 2
    %v2488 = vor.u32 %v2484, %v2487
    %v2489 = vsel %vm2344, %v2443, %v2488
    %v2575 = vunpack.c.l.b16 %v2279
    %v2576 = vunpack.c.l.b16 %v2280
    %v2577 = vunpack.c.l.b16 %v2281
    %v2578 = vunpack.c.l.b16 %v2282
    %v2579 = vunpack.c.l.b16 %v2283
    %v2580 = vunpack.c.l.b16 %v2284
    %v2581 = vunpack.c.l.b16 %v2285
    %v2582 = vunpack.c.l.b16 %v2286
    %v2583 = vunpack.c.l.b16 %v2287
    %v2584 = vunpack.c.l.b16 %v2288
    %v2585 = vunpack.c.l.b16 %v2289
    %v2586 = vunpack.c.l.b16 %v2290
    %v2587 = vunpack.c.l.b16 %v2291
    %v2588 = vunpack.c.l.b16 %v2292
    %v2589 = vunpack.c.l.b16 %v2293
    %v2590 = vunpack.c.l.b16 %v2294
    %v2591 = vunpack.c.l.b16 %v2295
    %v2592 = vunpack.c.l.b16 %v2296
    %v2593 = vunpack.c.l.b16 %v2297
    %v2594 = vunpack.c.l.b16 %v2298
    %v2595 = vunpack.c.l.b16 %v2299
    %v2596 = vunpack.c.l.b16 %v2300
    %v2597 = vunpack.c.l.b16 %v2301
    %v2598 = vunpack.c.l.b16 %v2302
    %v2599 = vunpack.c.l.b16 %v2303
    %v2600 = vunpack.c.l.b16 %v2304
    %v2601 = vunpack.c.l.b16 %v2305
    %v2602 = vunpack.c.l.b16 %v2306
    %v2603 = vunpack.c.l.b16 %v2307
    %v2604 = vunpack.c.l.b16 %v2308
    %v2605 = vunpack.c.l.b16 %v2309
    %v2606 = vunpack.c.l.b16 %v2310
    %v2607 = vunpack.c.l.b16 %v2311
    %v2608 = vunpack.c.l.b16 %v2312
    %v2609 = vunpack.c.l.b16 %v2313
    %v2610 = vunpack.c.l.b16 %v2314
    %v2611 = vunpack.c.l.b16 %v2315
    %v2612 = vunpack.c.l.b16 %v2316
    %v2613 = vunpack.c.l.b16 %v2317
    %v2614 = vunpack.c.l.b16 %v2318
    %v2615 = vunpack.c.l.b16 %v2319
    %v2616 = vunpack.c.l.b16 %v2320
    %v2617 = vunpack.c.l.b16 %v2321
    %v2618 = vunpack.c.l.b16 %v2322
    %v2619 = vunpack.c.l.b16 %v2323
    %v2620 = vunpack.c.l.b16 %v2324
    %v2621 = vunpack.c.l.b16 %v2325
    %v2622 = vunpack.c.l.b16 %v2326
    %v2623 = vunpack.c.l.b16 %v2327
    %v2624 = vunpack.c.l.b16 %v2328
    %v2625 = vunpack.c.l.b16 %v2329
    %v2626 = vunpack.c.l.b16 %v2330
    %v2627 = vunpack.c.l.b16 %v2331
    %v2628 = vunpack.c.l.b16 %v2332
    %v2629 = vunpack.c.l.b16 %v2333
    %v2630 = vunpack.c.l.b16 %v2334
    %v2631 = vunpack.c.l.b16 %v2335
    %v2632 = vunpack.c.l.b16 %v2336
    %v2633 = vunpack.c.l.b16 %v2337
    %v2634 = vunpack.c.l.b16 %v2338
    %v2635 = vunpack.c.l.b16 %v2339
    %v2636 = vunpack.c.l.b16 %v2340
    %v2637 = vunpack.c.l.b16 %v2341
    %v2638 = vunpack.c.l.b16 %v2342
    %v2639 = vunpack.c.l.b16 %v2343
    %v2640 = vpack.c.b16 %v2576, %v2575
    %v2641 = vpack.c.b16 %v2578, %v2577
    %v2642 = vpack.c.b16 %v2580, %v2579
    %v2643 = vpack.c.b16 %v2582, %v2581
    %v2644 = vpack.c.b16 %v2584, %v2583
    %v2645 = vpack.c.b16 %v2586, %v2585
    %v2646 = vpack.c.b16 %v2588, %v2587
    %v2647 = vpack.c.b16 %v2590, %v2589
    %v2648 = vpack.c.b16 %v2592, %v2591
    %v2649 = vpack.c.b16 %v2594, %v2593
    %v2650 = vpack.c.b16 %v2596, %v2595
    %v2651 = vpack.c.b16 %v2598, %v2597
    %v2652 = vpack.c.b16 %v2600, %v2599
    %v2653 = vpack.c.b16 %v2602, %v2601
    %v2654 = vpack.c.b16 %v2604, %v2603
    %v2655 = vpack.c.b16 %v2606, %v2605
    %v2656 = vpack.c.b16 %v2608, %v2607
    %v2657 = vpack.c.b16 %v2610, %v2609
    %v2658 = vpack.c.b16 %v2612, %v2611
    %v2659 = vpack.c.b16 %v2614, %v2613
    %v2660 = vpack.c.b16 %v2616, %v2615
    %v2661 = vpack.c.b16 %v2618, %v2617
    %v2662 = vpack.c.b16 %v2620, %v2619
    %v2663 = vpack.c.b16 %v2622, %v2621
    %v2664 = vpack.c.b16 %v2624, %v2623
    %v2665 = vpack.c.b16 %v2626, %v2625
    %v2666 = vpack.c.b16 %v2628, %v2627
    %v2667 = vpack.c.b16 %v2630, %v2629
    %v2668 = vpack.c.b16 %v2632, %v2631
    %v2669 = vpack.c.b16 %v2634, %v2633
    %v2670 = vpack.c.b16 %v2636, %v2635
    %v2671 = vpack.c.b16 %v2638, %v2637
    %v2672 = vpack.c.b16 %v2639, %v2639
    %v2706 = vsel %vm215, %v2404, 0
    %v2709 = vsel %vm215, %v2424, 0
    %v2712 = vsel %vm215, %v2444, 0
    %v2715 = vsel %vm215, %v2489, 0
    %v2718 = vsel %vm215, %v2488, 0
    %v2721 = vand.u32 %v2672, %v1007
    %2723 = vmatprep.subr.bf16.mxu0 0
    %2724 = vmatpush1.bf16.msra.mxu0 %v2647
    %2725 = vmatprep.subr.bf16.mxu0 0
    %2726 = vmatpush1.bf16.msra.mxu0 %v2646
    %2727 = vmatprep.subr.bf16.mxu0 0
    %2728 = vmatpush1.bf16.msra.mxu0 %v2645
    %2729 = vmatprep.subr.bf16.mxu0 0
    %2730 = vmatpush1.bf16.msra.mxu0 %v2644
    %2731 = vmatprep.subr.bf16.mxu0 0
    %2732 = vmatpush1.bf16.msra.mxu0 %v2643
    %2733 = vmatprep.subr.bf16.mxu0 0
    %2734 = vmatpush1.bf16.msra.mxu0 %v2642
    %2735 = vmatprep.subr.bf16.mxu0 0
    %2736 = vmatpush1.bf16.msra.mxu0 %v2641
    %2737 = vmatprep.subr.bf16.mxu0 0
    %2738 = vmatpush1.bf16.msra.mxu0 %v2640
    %2739 = vmatprep.subr.bf16.mxu0 0
    %2740 = vmatpush2.bf16.msra.mxu0 %v2655
    %2741 = vmatprep.subr.bf16.mxu0 0
    %2742 = vmatpush2.bf16.msra.mxu0 %v2654
    %2743 = vmatprep.subr.bf16.mxu0 0
    %2744 = vmatpush2.bf16.msra.mxu0 %v2653
    %2745 = vmatprep.subr.bf16.mxu0 0
    %2746 = vmatpush2.bf16.msra.mxu0 %v2652
    %2747 = vmatprep.subr.bf16.mxu0 0
    %2748 = vmatpush2.bf16.msra.mxu0 %v2651
    %2749 = vmatprep.subr.bf16.mxu0 0
    %2750 = vmatpush2.bf16.msra.mxu0 %v2650
    %2751 = vmatprep.subr.bf16.mxu0 0
    %2752 = vmatpush2.bf16.msra.mxu0 %v2649
    %2753 = vmatprep.subr.bf16.mxu0 0
    %2754 = vmatpush2.bf16.msra.mxu0 %v2648
    %2755 = vmatprep.mubr.bf16.mxu0 %v2368
    %2756 = vmatmul.mubr.bf16.gmra.mxu0 %v2356
    %v2757 = vpop.f32.mrf.mxu0
    %v2758 = vadd.f32 0.0, %v2757
    %v2759 = vpop.f32.mrf.mxu0
    %v2760 = vpop.f32.mrf.mxu0
    %v2761 = vadd.f32 0.0, %v2760
    %v2762 = vpop.f32.mrf.mxu0
    %2763 = vmatprep.mubr.bf16.mxu0 %v2412
    %2764 = vmatmul.mubr.bf16.gmra.mxu0 %v2408
    %v2765 = vpop.f32.mrf.mxu0
    %v2766 = vadd.f32 0.0, %v2765
    %v2767 = vpop.f32.mrf.mxu0
    %v2768 = vpop.f32.mrf.mxu0
    %v2769 = vadd.f32 0.0, %v2768
    %v2770 = vpop.f32.mrf.mxu0
    %2771 = vmatprep.mubr.bf16.mxu0 %v2432
    %2772 = vmatmul.mubr.bf16.gmra.mxu0 %v2428
    %v2773 = vpop.f32.mrf.mxu0
    %v2774 = vpop.f32.mrf.mxu0
    %v2775 = vpop.f32.mrf.mxu0
    %v2776 = vadd.f32 0.0, %v2775
    %v2777 = vpop.f32.mrf.mxu0
    %2778 = vmatprep.mubr.bf16.mxu0 %v2462
    %2779 = vmatmul.mubr.bf16.gmra.mxu0 %v2453
    %v2780 = vpop.f32.mrf.mxu0
    %v2781 = vadd.f32 0.0, %v2780
    %v2782 = vpop.f32.mrf.mxu0
    %v2783 = vpop.f32.mrf.mxu0
    %v2784 = vadd.f32 0.0, %v2783
    %v2785 = vpop.f32.mrf.mxu0
    %2786 = vmatprep.mubr.bf16.mxu0 %v2461
    %2787 = vmatmul.mubr.bf16.gmra.mxu0 %v2452
    %v2788 = vpop.f32.mrf.mxu0
    %v2789 = vadd.f32 0.0, %v2788
    %v2790 = vpop.f32.mrf.mxu0
    %v2791 = vpop.f32.mrf.mxu0
    %v2792 = vpop.f32.mrf.mxu0
    %2793 = vdwg.mxu0
    %2794 = vmatprep.subr.bf16.mxu0 0
    %2795 = vmatpush1.bf16.msra.mxu0 %v2663
    %2796 = vmatprep.subr.bf16.mxu0 0
    %2797 = vmatpush1.bf16.msra.mxu0 %v2662
    %2798 = vmatprep.subr.bf16.mxu0 0
    %2799 = vmatpush1.bf16.msra.mxu0 %v2661
    %2800 = vmatprep.subr.bf16.mxu0 0
    %2801 = vmatpush1.bf16.msra.mxu0 %v2660
    %2802 = vmatprep.subr.bf16.mxu0 0
    %2803 = vmatpush1.bf16.msra.mxu0 %v2659
    %2804 = vmatprep.subr.bf16.mxu0 0
    %2805 = vmatpush1.bf16.msra.mxu0 %v2658
    %2806 = vmatprep.subr.bf16.mxu0 0
    %2807 = vmatpush1.bf16.msra.mxu0 %v2657
    %2808 = vmatprep.subr.bf16.mxu0 0
    %2809 = vmatpush1.bf16.msra.mxu0 %v2656
    %2810 = vmatprep.subr.bf16.mxu0 0
    %2811 = vmatpush2.bf16.msra.mxu0 %v2671
    %2812 = vmatprep.subr.bf16.mxu0 0
    %2813 = vmatpush2.bf16.msra.mxu0 %v2670
    %2814 = vmatprep.subr.bf16.mxu0 0
    %2815 = vmatpush2.bf16.msra.mxu0 %v2669
    %2816 = vmatprep.subr.bf16.mxu0 0
    %2817 = vmatpush2.bf16.msra.mxu0 %v2668
    %2818 = vmatprep.subr.bf16.mxu0 0
    %2819 = vmatpush2.bf16.msra.mxu0 %v2667
    %2820 = vmatprep.subr.bf16.mxu0 0
    %2821 = vmatpush2.bf16.msra.mxu0 %v2666
    %2822 = vmatprep.subr.bf16.mxu0 0
    %2823 = vmatpush2.bf16.msra.mxu0 %v2665
    %2824 = vmatprep.subr.bf16.mxu0 0
    %2825 = vmatpush2.bf16.msra.mxu0 %v2664
    %2826 = vmatprep.mubr.bf16.mxu0 %v2392
    %2827 = vmatmul.mubr.bf16.gmra.mxu0 %v2380
    %v2828 = vpop.f32.mrf.mxu0
    %v2829 = vadd.f32 %v2758, %v2828
    %v2830 = vpop.f32.mrf.mxu0
    %v2831 = vpop.f32.mrf.mxu0
    %v2832 = vadd.f32 %v2761, %v2831
    %v2833 = vpop.f32.mrf.mxu0
    %2834 = vmatprep.mubr.bf16.mxu0 %v2420
    %2835 = vmatmul.mubr.bf16.gmra.mxu0 %v2416
    %v2836 = vpop.f32.mrf.mxu0
    %v2837 = vadd.f32 %v2766, %v2836
    %v2838 = vpop.f32.mrf.mxu0
    %v2839 = vpop.f32.mrf.mxu0
    %v2840 = vadd.f32 %v2769, %v2839
    %v2841 = vpop.f32.mrf.mxu0
    %2842 = vmatprep.mubr.bf16.mxu0 %v2440
    %2843 = vmatmul.mubr.bf16.gmra.mxu0 %v2436
    %v2844 = vpop.f32.mrf.mxu0
    %v2845 = vpop.f32.mrf.mxu0
    %v2846 = vpop.f32.mrf.mxu0
    %v2847 = vadd.f32 %v2776, %v2846
    %v2848 = vpop.f32.mrf.mxu0
    %2849 = vmatprep.mubr.bf16.mxu0 %v2480
    %2850 = vmatmul.mubr.bf16.gmra.mxu0 %v2471
    %v2851 = vpop.f32.mrf.mxu0
    %v2852 = vadd.f32 %v2781, %v2851
    %v2853 = vpop.f32.mrf.mxu0
    %v2854 = vpop.f32.mrf.mxu0
    %v2855 = vadd.f32 %v2784, %v2854
    %v2856 = vpop.f32.mrf.mxu0
    %2857 = vmatprep.mubr.bf16.mxu0 %v2479
    %2858 = vmatmul.mubr.bf16.gmra.mxu0 %v2470
    %v2859 = vpop.f32.mrf.mxu0
    %v2860 = vadd.f32 %v2789, %v2859
    %v2861 = vpop.f32.mrf.mxu0
    %v2862 = vpop.f32.mrf.mxu0
    %v2863 = vpop.f32.mrf.mxu0
    %2864 = vdwg.mxu0
    %2865 = vmatprep.subr.bf16.mxu0 0
    %2866 = vmatpush1.bf16.msra.mxu0 0
    %2867 = vmatprep.subr.bf16.mxu0 0
    %2868 = vmatpush1.bf16.msra.mxu0 0
    %2869 = vmatprep.subr.bf16.mxu0 0
    %2870 = vmatpush1.bf16.msra.mxu0 0
    %2871 = vmatprep.subr.bf16.mxu0 0
    %2872 = vmatpush1.bf16.msra.mxu0 0
    %2873 = vmatprep.subr.bf16.mxu0 0
    %2874 = vmatpush1.bf16.msra.mxu0 0
    %2875 = vmatprep.subr.bf16.mxu0 0
    %2876 = vmatpush1.bf16.msra.mxu0 0
    %2877 = vmatprep.subr.bf16.mxu0 0
    %2878 = vmatpush1.bf16.msra.mxu0 0
    %2879 = vmatprep.subr.bf16.mxu0 0
    %2880 = vmatpush1.bf16.msra.mxu0 %v2721
    %2881 = vmatprep.subr.bf16.mxu0 0
    %2882 = vmatpush2.bf16.msra.mxu0 0
    %2883 = vmatprep.subr.bf16.mxu0 0
    %2884 = vmatpush2.bf16.msra.mxu0 0
    %2885 = vmatprep.subr.bf16.mxu0 0
    %2886 = vmatpush2.bf16.msra.mxu0 0
    %2887 = vmatprep.subr.bf16.mxu0 0
    %2888 = vmatpush2.bf16.msra.mxu0 0
    %2889 = vmatprep.subr.bf16.mxu0 0
    %2890 = vmatpush2.bf16.msra.mxu0 0
    %2891 = vmatprep.subr.bf16.mxu0 0
    %2892 = vmatpush2.bf16.msra.mxu0 0
    %2893 = vmatprep.subr.bf16.mxu0 0
    %2894 = vmatpush2.bf16.msra.mxu0 0
    %2895 = vmatprep.subr.bf16.mxu0 0
    %2896 = vmatpush2.bf16.msra.mxu0 0
    %2897 = vmatprep.mubr.bf16.mxu0 0
    %2898 = vmatmul.mubr.bf16.gmra.mxu0 %v2706
    %v2899 = vpop.f32.mrf.mxu0
    %v2900 = vadd.f32 %v2829, %v2899
    %v2901 = vpop.f32.mrf.mxu0
    %v2902 = vpop.f32.mrf.mxu0
    %v2903 = vadd.f32 %v2832, %v2902
    %v2904 = vpop.f32.mrf.mxu0
    %2905 = vmatprep.mubr.bf16.mxu0 0
    %2906 = vmatmul.mubr.bf16.gmra.mxu0 %v2709
    %v2907 = vpop.f32.mrf.mxu0
    %v2908 = vadd.f32 %v2837, %v2907
    %v2909 = vpop.f32.mrf.mxu0
    %v2910 = vpop.f32.mrf.mxu0
    %v2911 = vadd.f32 %v2840, %v2910
    %v2912 = vpop.f32.mrf.mxu0
    %2913 = vmatprep.mubr.bf16.mxu0 0
    %2914 = vmatmul.mubr.bf16.gmra.mxu0 %v2712
    %v2915 = vpop.f32.mrf.mxu0
    %v2916 = vpop.f32.mrf.mxu0
    %v2917 = vpop.f32.mrf.mxu0
    %v2918 = vadd.f32 %v2847, %v2917
    %v2919 = vpop.f32.mrf.mxu0
    %2920 = vmatprep.mubr.bf16.mxu0 0
    %2921 = vmatmul.mubr.bf16.gmra.mxu0 %v2715
    %v2922 = vpop.f32.mrf.mxu0
    %v2923 = vadd.f32 %v2852, %v2922
    %v2924 = vpop.f32.mrf.mxu0
    %v2925 = vpop.f32.mrf.mxu0
    %v2926 = vadd.f32 %v2855, %v2925
    %v2927 = vpop.f32.mrf.mxu0
    %2928 = vmatprep.mubr.bf16.mxu0 0
    %2929 = vmatmul.mubr.bf16.gmra.mxu0 %v2718
    %v2930 = vpop.f32.mrf.mxu0
    %v2931 = vadd.f32 %v2860, %v2930
    %v2932 = vpop.f32.mrf.mxu0
    %v2933 = vpop.f32.mrf.mxu0
    %v2934 = vpop.f32.mrf.mxu0
    %2935 = vdwg.mxu0
    %v2936 = vadd.f32 %v2250, %v2900
    %v2937 = vadd.f32 %v2251, %v2903
    %v2938 = vadd.f32 %v2252, %v2908
    %v2939 = vadd.f32 %v2253, %v2911
    %v2940 = vadd.f32 %v2254, %v2918
    %v2941 = vadd.f32 %v2255, %v2923
    %v2942 = vadd.f32 %v2256, %v2926
    %v2943 = vadd.f32 %v2257, %v2931
    %v2944 = vld [vmem:[#allocation2] sm:$0xf0]
    %v2945 = vld [vmem:[#allocation2 + $0x8] sm:$0xf0]
    %v2946 = vld [vmem:[#allocation2 + $0x10] sm:$0xf0]
    %v2947 = vld [vmem:[#allocation2 + $0x18] sm:$0xf0]
    %v2948 = vld [vmem:[#allocation2 + $0x20] sm:$0xf0]
    %v2949 = vld [vmem:[#allocation2 + $0x168] sm:$0xf]
    %v2950 = vld [vmem:[#allocation2 + $0x170] sm:$0xf]
    %v2951 = vld [vmem:[#allocation2 + $0x178] sm:$0xf]
    %v2952 = vld [vmem:[#allocation2 + $0x180] sm:$0xf]
    %v2953 = vld [vmem:[#allocation2 + $0x188] sm:$0xf]
    %v2954 = vpack.c.bf16 %v363, %v2944
    %v2955 = vpack.c.bf16 %v364, %v2945
    %v2956 = vpack.c.bf16 %v365, %v2946
    %v2957 = vpack.c.bf16 %v366, %v2947
    %v2958 = vpack.c.bf16 %v367, %v2948
    %v2959 = vpack.c.bf16 %v2949, %v398
    %v2960 = vpack.c.bf16 %v2950, %v399
    %v2961 = vpack.c.bf16 %v2951, %v400
    %v2962 = vpack.c.bf16 %v2952, %v401
    %v2963 = vpack.c.bf16 %v2953, %v402
    %s2964 = scalar_lea.vmem [#allocation9], 1040
    %v2965 = vld [vmem:[%s2964] sm:$0xf]
    %v2966 = vld [vmem:[%s2964 + $0x4] sm:$0xf]
    %v2967 = vld [vmem:[%s2964 + $0x8] sm:$0xf]
    %v2968 = vld [vmem:[%s2964 + $0xc] sm:$0xf]
    %v2969 = vld [vmem:[%s2964 + $0x10] sm:$0xf]
    %v2970 = vld [vmem:[%s2964 + $0x14] sm:$0xf]
    %v2971 = vld [vmem:[%s2964 + $0x18] sm:$0xf]
    %v2972 = vld [vmem:[%s2964 + $0x1c] sm:$0xf]
    %v2973 = vld [vmem:[%s2964 + $0x20] sm:$0xf]
    %v2974 = vld [vmem:[%s2964 + $0x24] sm:$0xf]
    %v2975 = vld [vmem:[%s2964 + $0x28] sm:$0xf]
    %v2976 = vld [vmem:[%s2964 + $0x2c] sm:$0xf]
    %v2977 = vld [vmem:[%s2964 + $0x30] sm:$0xf]
    %v2978 = vld [vmem:[%s2964 + $0x34] sm:$0xf]
    %v2979 = vld [vmem:[%s2964 + $0x38] sm:$0xf]
    %v2980 = vld [vmem:[%s2964 + $0x3c] sm:$0xf]
    %v2981 = vld [vmem:[%s2964 + $0x40] sm:$0xf]
    %v2982 = vld [vmem:[%s2964 + $0x44] sm:$0xf]
    %v2983 = vld [vmem:[%s2964 + $0x48] sm:$0xf]
    %v2984 = vld [vmem:[%s2964 + $0x4c] sm:$0xf]
    %v2985 = vld [vmem:[%s2964 + $0x50] sm:$0xf]
    %v2986 = vld [vmem:[%s2964 + $0x54] sm:$0xf]
    %v2987 = vld [vmem:[%s2964 + $0x58] sm:$0xf]
    %v2988 = vld [vmem:[%s2964 + $0x5c] sm:$0xf]
    %v2989 = vld [vmem:[%s2964 + $0x60] sm:$0xf]
    %v2990 = vld [vmem:[%s2964 + $0x64] sm:$0xf]
    %v2991 = vld [vmem:[%s2964 + $0x68] sm:$0xf]
    %v2992 = vld [vmem:[%s2964 + $0x6c] sm:$0xf]
    %v2993 = vld [vmem:[%s2964 + $0x70] sm:$0xf]
    %v2994 = vld [vmem:[%s2964 + $0x74] sm:$0xf]
    %v2995 = vld [vmem:[%s2964 + $0x78] sm:$0xf]
    %v2996 = vld [vmem:[%s2964 + $0x7c] sm:$0xf]
    %v2997 = vld [vmem:[%s2964 + $0x80] sm:$0xf]
    %v2998 = vld [vmem:[%s2964 + $0x84] sm:$0xf]
    %v2999 = vld [vmem:[%s2964 + $0x88] sm:$0xf]
    %v3000 = vld [vmem:[%s2964 + $0x8c] sm:$0xf]
    %v3001 = vld [vmem:[%s2964 + $0x90] sm:$0xf]
    %v3002 = vld [vmem:[%s2964 + $0x94] sm:$0xf]
    %v3003 = vld [vmem:[%s2964 + $0x98] sm:$0xf]
    %v3004 = vld [vmem:[%s2964 + $0x9c] sm:$0xf]
    %v3005 = vld [vmem:[%s2964 + $0xa0] sm:$0xf]
    %v3006 = vld [vmem:[%s2964 + $0xa4] sm:$0xf]
    %v3007 = vld [vmem:[%s2964 + $0xa8] sm:$0xf]
    %v3008 = vld [vmem:[%s2964 + $0xac] sm:$0xf]
    %v3009 = vld [vmem:[%s2964 + $0xb0] sm:$0xf]
    %v3010 = vld [vmem:[%s2964 + $0xb4] sm:$0xf]
    %v3011 = vld [vmem:[%s2964 + $0xb8] sm:$0xf]
    %v3012 = vld [vmem:[%s2964 + $0xbc] sm:$0xf]
    %v3013 = vld [vmem:[%s2964 + $0xc0] sm:$0xf]
    %v3014 = vld [vmem:[%s2964 + $0xc4] sm:$0xf]
    %v3015 = vld [vmem:[%s2964 + $0xc8] sm:$0xf]
    %v3016 = vld [vmem:[%s2964 + $0xcc] sm:$0xf]
    %v3017 = vld [vmem:[%s2964 + $0xd0] sm:$0xf]
    %v3018 = vld [vmem:[%s2964 + $0xd4] sm:$0xf]
    %v3019 = vld [vmem:[%s2964 + $0xd8] sm:$0xf]
    %v3020 = vld [vmem:[%s2964 + $0xdc] sm:$0xf]
    %v3021 = vld [vmem:[%s2964 + $0xe0] sm:$0xf]
    %v3022 = vld [vmem:[%s2964 + $0xe4] sm:$0xf]
    %v3023 = vld [vmem:[%s2964 + $0xe8] sm:$0xf]
    %v3024 = vld [vmem:[%s2964 + $0xec] sm:$0xf]
    %v3025 = vld [vmem:[%s2964 + $0xf0] sm:$0xf]
    %v3026 = vld [vmem:[%s2964 + $0xf4] sm:$0xf]
    %v3027 = vld [vmem:[%s2964 + $0xf8] sm:$0xf]
    %v3028 = vld [vmem:[%s2964 + $0xfc] sm:$0xf]
    %v3029 = vld [vmem:[%s2964 + $0x100] sm:$0x1]
    %vm3040 = vcmask 1045504
    %v3041 = vrot.slane %v2954, 2
    %v3042 = vrot.slane %v408, 2
    %v3043 = vsel %vm3040, %v3041, %v3042
    %v3044 = vrot.slane %v2955, 2
    %v3045 = vrot.slane %v409, 2
    %v3046 = vsel %vm3040, %v3044, %v3045
    %v3047 = vrot.slane %v2956, 2
    %v3048 = vrot.slane %v410, 2
    %v3049 = vsel %vm3040, %v3047, %v3048
    %v3050 = vrot.slane %v2957, 2
    %v3051 = vrot.slane %v411, 2
    %v3052 = vsel %vm3040, %v3050, %v3051
    %v3053 = vrot.slane %v2958, 2
    %v3054 = vrot.slane %v412, 2
    %v3055 = vsel %vm3040, %v3053, %v3054
    %v3056 = vrot.slane %v413, 2
    %v3057 = vsel %vm3040, %v3042, %v3056
    %v3058 = vrot.slane %v414, 2
    %v3059 = vsel %vm3040, %v3045, %v3058
    %v3060 = vrot.slane %v415, 2
    %v3061 = vsel %vm3040, %v3048, %v3060
    %v3062 = vrot.slane %v416, 2
    %v3063 = vsel %vm3040, %v3051, %v3062
    %v3064 = vrot.slane %v417, 2
    %v3065 = vsel %vm3040, %v3054, %v3064
    %v3066 = vrot.slane %v418, 2
    %v3067 = vsel %vm3040, %v3056, %v3066
    %v3068 = vrot.slane %v419, 2
    %v3069 = vsel %vm3040, %v3058, %v3068
    %v3070 = vrot.slane %v420, 2
    %v3071 = vsel %vm3040, %v3060, %v3070
    %v3072 = vrot.slane %v421, 2
    %v3073 = vsel %vm3040, %v3062, %v3072
    %v3074 = vrot.slane %v422, 2
    %v3075 = vsel %vm3040, %v3064, %v3074
    %v3076 = vrot.slane %v2959, 2
    %v3077 = vsel %vm3040, %v3066, %v3076
    %v3078 = vrot.slane %v2960, 2
    %v3079 = vsel %vm3040, %v3068, %v3078
    %v3080 = vrot.slane %v2961, 2
    %v3081 = vsel %vm3040, %v3070, %v3080
    %v3082 = vrot.slane %v2962, 2
    %v3083 = vsel %vm3040, %v3072, %v3082
    %v3084 = vrot.slane %v2963, 2
    %v3085 = vsel %vm3040, %v3074, %v3084
    %v3171 = vunpack.c.l.b16 %v2965
    %v3172 = vunpack.c.l.b16 %v2966
    %v3173 = vunpack.c.l.b16 %v2967
    %v3174 = vunpack.c.l.b16 %v2968
    %v3175 = vunpack.c.l.b16 %v2969
    %v3176 = vunpack.c.l.b16 %v2970
    %v3177 = vunpack.c.l.b16 %v2971
    %v3178 = vunpack.c.l.b16 %v2972
    %v3179 = vunpack.c.l.b16 %v2973
    %v3180 = vunpack.c.l.b16 %v2974
    %v3181 = vunpack.c.l.b16 %v2975
    %v3182 = vunpack.c.l.b16 %v2976
    %v3183 = vunpack.c.l.b16 %v2977
    %v3184 = vunpack.c.l.b16 %v2978
    %v3185 = vunpack.c.l.b16 %v2979
    %v3186 = vunpack.c.l.b16 %v2980
    %v3187 = vunpack.c.l.b16 %v2981
    %v3188 = vunpack.c.l.b16 %v2982
    %v3189 = vunpack.c.l.b16 %v2983
    %v3190 = vunpack.c.l.b16 %v2984
    %v3191 = vunpack.c.l.b16 %v2985
    %v3192 = vunpack.c.l.b16 %v2986
    %v3193 = vunpack.c.l.b16 %v2987
    %v3194 = vunpack.c.l.b16 %v2988
    %v3195 = vunpack.c.l.b16 %v2989
    %v3196 = vunpack.c.l.b16 %v2990
    %v3197 = vunpack.c.l.b16 %v2991
    %v3198 = vunpack.c.l.b16 %v2992
    %v3199 = vunpack.c.l.b16 %v2993
    %v3200 = vunpack.c.l.b16 %v2994
    %v3201 = vunpack.c.l.b16 %v2995
    %v3202 = vunpack.c.l.b16 %v2996
    %v3203 = vunpack.c.l.b16 %v2997
    %v3204 = vunpack.c.l.b16 %v2998
    %v3205 = vunpack.c.l.b16 %v2999
    %v3206 = vunpack.c.l.b16 %v3000
    %v3207 = vunpack.c.l.b16 %v3001
    %v3208 = vunpack.c.l.b16 %v3002
    %v3209 = vunpack.c.l.b16 %v3003
    %v3210 = vunpack.c.l.b16 %v3004
    %v3211 = vunpack.c.l.b16 %v3005
    %v3212 = vunpack.c.l.b16 %v3006
    %v3213 = vunpack.c.l.b16 %v3007
    %v3214 = vunpack.c.l.b16 %v3008
    %v3215 = vunpack.c.l.b16 %v3009
    %v3216 = vunpack.c.l.b16 %v3010
    %v3217 = vunpack.c.l.b16 %v3011
    %v3218 = vunpack.c.l.b16 %v3012
    %v3219 = vunpack.c.l.b16 %v3013
    %v3220 = vunpack.c.l.b16 %v3014
    %v3221 = vunpack.c.l.b16 %v3015
    %v3222 = vunpack.c.l.b16 %v3016
    %v3223 = vunpack.c.l.b16 %v3017
    %v3224 = vunpack.c.l.b16 %v3018
    %v3225 = vunpack.c.l.b16 %v3019
    %v3226 = vunpack.c.l.b16 %v3020
    %v3227 = vunpack.c.l.b16 %v3021
    %v3228 = vunpack.c.l.b16 %v3022
    %v3229 = vunpack.c.l.b16 %v3023
    %v3230 = vunpack.c.l.b16 %v3024
    %v3231 = vunpack.c.l.b16 %v3025
    %v3232 = vunpack.c.l.b16 %v3026
    %v3233 = vunpack.c.l.b16 %v3027
    %v3234 = vunpack.c.l.b16 %v3028
    %v3235 = vunpack.c.l.b16 %v3029
    %v3236 = vpack.c.b16 %v3172, %v3171
    %v3237 = vpack.c.b16 %v3174, %v3173
    %v3238 = vpack.c.b16 %v3176, %v3175
    %v3239 = vpack.c.b16 %v3178, %v3177
    %v3240 = vpack.c.b16 %v3180, %v3179
    %v3241 = vpack.c.b16 %v3182, %v3181
    %v3242 = vpack.c.b16 %v3184, %v3183
    %v3243 = vpack.c.b16 %v3186, %v3185
    %v3244 = vpack.c.b16 %v3188, %v3187
    %v3245 = vpack.c.b16 %v3190, %v3189
    %v3246 = vpack.c.b16 %v3192, %v3191
    %v3247 = vpack.c.b16 %v3194, %v3193
    %v3248 = vpack.c.b16 %v3196, %v3195
    %v3249 = vpack.c.b16 %v3198, %v3197
    %v3250 = vpack.c.b16 %v3200, %v3199
    %v3251 = vpack.c.b16 %v3202, %v3201
    %v3252 = vpack.c.b16 %v3204, %v3203
    %v3253 = vpack.c.b16 %v3206, %v3205
    %v3254 = vpack.c.b16 %v3208, %v3207
    %v3255 = vpack.c.b16 %v3210, %v3209
    %v3256 = vpack.c.b16 %v3212, %v3211
    %v3257 = vpack.c.b16 %v3214, %v3213
    %v3258 = vpack.c.b16 %v3216, %v3215
    %v3259 = vpack.c.b16 %v3218, %v3217
    %v3260 = vpack.c.b16 %v3220, %v3219
    %v3261 = vpack.c.b16 %v3222, %v3221
    %v3262 = vpack.c.b16 %v3224, %v3223
    %v3263 = vpack.c.b16 %v3226, %v3225
    %v3264 = vpack.c.b16 %v3228, %v3227
    %v3265 = vpack.c.b16 %v3230, %v3229
    %v3266 = vpack.c.b16 %v3232, %v3231
    %v3267 = vpack.c.b16 %v3234, %v3233
    %v3268 = vpack.c.b16 %v3235, %v3235
    %v3302 = vsel %vm215, %v3055, 0
    %v3305 = vsel %vm215, %v3065, 0
    %v3308 = vsel %vm215, %v3075, 0
    %v3311 = vsel %vm215, %v3085, 0
    %v3314 = vsel %vm215, %v3084, 0
    %v3317 = vand.u32 %v3268, %v1007
    %3319 = vmatprep.subr.bf16.mxu0 0
    %3320 = vmatpush1.bf16.msra.mxu0 %v3243
    %3321 = vmatprep.subr.bf16.mxu0 0
    %3322 = vmatpush1.bf16.msra.mxu0 %v3242
    %3323 = vmatprep.subr.bf16.mxu0 0
    %3324 = vmatpush1.bf16.msra.mxu0 %v3241
    %3325 = vmatprep.subr.bf16.mxu0 0
    %3326 = vmatpush1.bf16.msra.mxu0 %v3240
    %3327 = vmatprep.subr.bf16.mxu0 0
    %3328 = vmatpush1.bf16.msra.mxu0 %v3239
    %3329 = vmatprep.subr.bf16.mxu0 0
    %3330 = vmatpush1.bf16.msra.mxu0 %v3238
    %3331 = vmatprep.subr.bf16.mxu0 0
    %3332 = vmatpush1.bf16.msra.mxu0 %v3237
    %3333 = vmatprep.subr.bf16.mxu0 0
    %3334 = vmatpush1.bf16.msra.mxu0 %v3236
    %3335 = vmatprep.subr.bf16.mxu0 0
    %3336 = vmatpush2.bf16.msra.mxu0 %v3251
    %3337 = vmatprep.subr.bf16.mxu0 0
    %3338 = vmatpush2.bf16.msra.mxu0 %v3250
    %3339 = vmatprep.subr.bf16.mxu0 0
    %3340 = vmatpush2.bf16.msra.mxu0 %v3249
    %3341 = vmatprep.subr.bf16.mxu0 0
    %3342 = vmatpush2.bf16.msra.mxu0 %v3248
    %3343 = vmatprep.subr.bf16.mxu0 0
    %3344 = vmatpush2.bf16.msra.mxu0 %v3247
    %3345 = vmatprep.subr.bf16.mxu0 0
    %3346 = vmatpush2.bf16.msra.mxu0 %v3246
    %3347 = vmatprep.subr.bf16.mxu0 0
    %3348 = vmatpush2.bf16.msra.mxu0 %v3245
    %3349 = vmatprep.subr.bf16.mxu0 0
    %3350 = vmatpush2.bf16.msra.mxu0 %v3244
    %3351 = vmatprep.mubr.bf16.mxu0 %v3046
    %3352 = vmatmul.mubr.bf16.gmra.mxu0 %v3043
    %v3353 = vpop.f32.mrf.mxu0
    %v3354 = vadd.f32 0.0, %v3353
    %v3355 = vpop.f32.mrf.mxu0
    %v3356 = vpop.f32.mrf.mxu0
    %v3357 = vadd.f32 0.0, %v3356
    %v3358 = vpop.f32.mrf.mxu0
    %3359 = vmatprep.mubr.bf16.mxu0 %v3059
    %3360 = vmatmul.mubr.bf16.gmra.mxu0 %v3057
    %v3361 = vpop.f32.mrf.mxu0
    %v3362 = vadd.f32 0.0, %v3361
    %v3363 = vpop.f32.mrf.mxu0
    %v3364 = vpop.f32.mrf.mxu0
    %v3365 = vadd.f32 0.0, %v3364
    %v3366 = vpop.f32.mrf.mxu0
    %3367 = vmatprep.mubr.bf16.mxu0 %v3069
    %3368 = vmatmul.mubr.bf16.gmra.mxu0 %v3067
    %v3369 = vpop.f32.mrf.mxu0
    %v3370 = vpop.f32.mrf.mxu0
    %v3371 = vpop.f32.mrf.mxu0
    %v3372 = vadd.f32 0.0, %v3371
    %v3373 = vpop.f32.mrf.mxu0
    %3374 = vmatprep.mubr.bf16.mxu0 %v3079
    %3375 = vmatmul.mubr.bf16.gmra.mxu0 %v3077
    %v3376 = vpop.f32.mrf.mxu0
    %v3377 = vadd.f32 0.0, %v3376
    %v3378 = vpop.f32.mrf.mxu0
    %v3379 = vpop.f32.mrf.mxu0
    %v3380 = vadd.f32 0.0, %v3379
    %v3381 = vpop.f32.mrf.mxu0
    %3382 = vmatprep.mubr.bf16.mxu0 %v3078
    %3383 = vmatmul.mubr.bf16.gmra.mxu0 %v3076
    %v3384 = vpop.f32.mrf.mxu0
    %v3385 = vadd.f32 0.0, %v3384
    %v3386 = vpop.f32.mrf.mxu0
    %v3387 = vpop.f32.mrf.mxu0
    %v3388 = vpop.f32.mrf.mxu0
    %3389 = vdwg.mxu0
    %3390 = vmatprep.subr.bf16.mxu0 0
    %3391 = vmatpush1.bf16.msra.mxu0 %v3259
    %3392 = vmatprep.subr.bf16.mxu0 0
    %3393 = vmatpush1.bf16.msra.mxu0 %v3258
    %3394 = vmatprep.subr.bf16.mxu0 0
    %3395 = vmatpush1.bf16.msra.mxu0 %v3257
    %3396 = vmatprep.subr.bf16.mxu0 0
    %3397 = vmatpush1.bf16.msra.mxu0 %v3256
    %3398 = vmatprep.subr.bf16.mxu0 0
    %3399 = vmatpush1.bf16.msra.mxu0 %v3255
    %3400 = vmatprep.subr.bf16.mxu0 0
    %3401 = vmatpush1.bf16.msra.mxu0 %v3254
    %3402 = vmatprep.subr.bf16.mxu0 0
    %3403 = vmatpush1.bf16.msra.mxu0 %v3253
    %3404 = vmatprep.subr.bf16.mxu0 0
    %3405 = vmatpush1.bf16.msra.mxu0 %v3252
    %3406 = vmatprep.subr.bf16.mxu0 0
    %3407 = vmatpush2.bf16.msra.mxu0 %v3267
    %3408 = vmatprep.subr.bf16.mxu0 0
    %3409 = vmatpush2.bf16.msra.mxu0 %v3266
    %3410 = vmatprep.subr.bf16.mxu0 0
    %3411 = vmatpush2.bf16.msra.mxu0 %v3265
    %3412 = vmatprep.subr.bf16.mxu0 0
    %3413 = vmatpush2.bf16.msra.mxu0 %v3264
    %3414 = vmatprep.subr.bf16.mxu0 0
    %3415 = vmatpush2.bf16.msra.mxu0 %v3263
    %3416 = vmatprep.subr.bf16.mxu0 0
    %3417 = vmatpush2.bf16.msra.mxu0 %v3262
    %3418 = vmatprep.subr.bf16.mxu0 0
    %3419 = vmatpush2.bf16.msra.mxu0 %v3261
    %3420 = vmatprep.subr.bf16.mxu0 0
    %3421 = vmatpush2.bf16.msra.mxu0 %v3260
    %3422 = vmatprep.mubr.bf16.mxu0 %v3052
    %3423 = vmatmul.mubr.bf16.gmra.mxu0 %v3049
    %v3424 = vpop.f32.mrf.mxu0
    %v3425 = vadd.f32 %v3354, %v3424
    %v3426 = vpop.f32.mrf.mxu0
    %v3427 = vpop.f32.mrf.mxu0
    %v3428 = vadd.f32 %v3357, %v3427
    %v3429 = vpop.f32.mrf.mxu0
    %3430 = vmatprep.mubr.bf16.mxu0 %v3063
    %3431 = vmatmul.mubr.bf16.gmra.mxu0 %v3061
    %v3432 = vpop.f32.mrf.mxu0
    %v3433 = vadd.f32 %v3362, %v3432
    %v3434 = vpop.f32.mrf.mxu0
    %v3435 = vpop.f32.mrf.mxu0
    %v3436 = vadd.f32 %v3365, %v3435
    %v3437 = vpop.f32.mrf.mxu0
    %3438 = vmatprep.mubr.bf16.mxu0 %v3073
    %3439 = vmatmul.mubr.bf16.gmra.mxu0 %v3071
    %v3440 = vpop.f32.mrf.mxu0
    %v3441 = vpop.f32.mrf.mxu0
    %v3442 = vpop.f32.mrf.mxu0
    %v3443 = vadd.f32 %v3372, %v3442
    %v3444 = vpop.f32.mrf.mxu0
    %3445 = vmatprep.mubr.bf16.mxu0 %v3083
    %3446 = vmatmul.mubr.bf16.gmra.mxu0 %v3081
    %v3447 = vpop.f32.mrf.mxu0
    %v3448 = vadd.f32 %v3377, %v3447
    %v3449 = vpop.f32.mrf.mxu0
    %v3450 = vpop.f32.mrf.mxu0
    %v3451 = vadd.f32 %v3380, %v3450
    %v3452 = vpop.f32.mrf.mxu0
    %3453 = vmatprep.mubr.bf16.mxu0 %v3082
    %3454 = vmatmul.mubr.bf16.gmra.mxu0 %v3080
    %v3455 = vpop.f32.mrf.mxu0
    %v3456 = vadd.f32 %v3385, %v3455
    %v3457 = vpop.f32.mrf.mxu0
    %v3458 = vpop.f32.mrf.mxu0
    %v3459 = vpop.f32.mrf.mxu0
    %3460 = vdwg.mxu0
    %3461 = vmatprep.subr.bf16.mxu0 0
    %3462 = vmatpush1.bf16.msra.mxu0 0
    %3463 = vmatprep.subr.bf16.mxu0 0
    %3464 = vmatpush1.bf16.msra.mxu0 0
    %3465 = vmatprep.subr.bf16.mxu0 0
    %3466 = vmatpush1.bf16.msra.mxu0 0
    %3467 = vmatprep.subr.bf16.mxu0 0
    %3468 = vmatpush1.bf16.msra.mxu0 0
    %3469 = vmatprep.subr.bf16.mxu0 0
    %3470 = vmatpush1.bf16.msra.mxu0 0
    %3471 = vmatprep.subr.bf16.mxu0 0
    %3472 = vmatpush1.bf16.msra.mxu0 0
    %3473 = vmatprep.subr.bf16.mxu0 0
    %3474 = vmatpush1.bf16.msra.mxu0 0
    %3475 = vmatprep.subr.bf16.mxu0 0
    %3476 = vmatpush1.bf16.msra.mxu0 %v3317
    %3477 = vmatprep.subr.bf16.mxu0 0
    %3478 = vmatpush2.bf16.msra.mxu0 0
    %3479 = vmatprep.subr.bf16.mxu0 0
    %3480 = vmatpush2.bf16.msra.mxu0 0
    %3481 = vmatprep.subr.bf16.mxu0 0
    %3482 = vmatpush2.bf16.msra.mxu0 0
    %3483 = vmatprep.subr.bf16.mxu0 0
    %3484 = vmatpush2.bf16.msra.mxu0 0
    %3485 = vmatprep.subr.bf16.mxu0 0
    %3486 = vmatpush2.bf16.msra.mxu0 0
    %3487 = vmatprep.subr.bf16.mxu0 0
    %3488 = vmatpush2.bf16.msra.mxu0 0
    %3489 = vmatprep.subr.bf16.mxu0 0
    %3490 = vmatpush2.bf16.msra.mxu0 0
    %3491 = vmatprep.subr.bf16.mxu0 0
    %3492 = vmatpush2.bf16.msra.mxu0 0
    %3493 = vmatprep.mubr.bf16.mxu0 0
    %3494 = vmatmul.mubr.bf16.gmra.mxu0 %v3302
    %v3495 = vpop.f32.mrf.mxu0
    %v3496 = vadd.f32 %v3425, %v3495
    %v3497 = vpop.f32.mrf.mxu0
    %v3498 = vpop.f32.mrf.mxu0
    %v3499 = vadd.f32 %v3428, %v3498
    %v3500 = vpop.f32.mrf.mxu0
    %3501 = vmatprep.mubr.bf16.mxu0 0
    %3502 = vmatmul.mubr.bf16.gmra.mxu0 %v3305
    %v3503 = vpop.f32.mrf.mxu0
    %v3504 = vadd.f32 %v3433, %v3503
    %v3505 = vpop.f32.mrf.mxu0
    %v3506 = vpop.f32.mrf.mxu0
    %v3507 = vadd.f32 %v3436, %v3506
    %v3508 = vpop.f32.mrf.mxu0
    %3509 = vmatprep.mubr.bf16.mxu0 0
    %3510 = vmatmul.mubr.bf16.gmra.mxu0 %v3308
    %v3511 = vpop.f32.mrf.mxu0
    %v3512 = vpop.f32.mrf.mxu0
    %v3513 = vpop.f32.mrf.mxu0
    %v3514 = vadd.f32 %v3443, %v3513
    %v3515 = vpop.f32.mrf.mxu0
    %3516 = vmatprep.mubr.bf16.mxu0 0
    %3517 = vmatmul.mubr.bf16.gmra.mxu0 %v3311
    %v3518 = vpop.f32.mrf.mxu0
    %v3519 = vadd.f32 %v3448, %v3518
    %v3520 = vpop.f32.mrf.mxu0
    %v3521 = vpop.f32.mrf.mxu0
    %v3522 = vadd.f32 %v3451, %v3521
    %v3523 = vpop.f32.mrf.mxu0
    %3524 = vmatprep.mubr.bf16.mxu0 0
    %3525 = vmatmul.mubr.bf16.gmra.mxu0 %v3314
    %v3526 = vpop.f32.mrf.mxu0
    %v3527 = vadd.f32 %v3456, %v3526
    %v3528 = vpop.f32.mrf.mxu0
    %v3529 = vpop.f32.mrf.mxu0
    %v3530 = vpop.f32.mrf.mxu0
    %3531 = vdwg.mxu0
    %v3532 = vadd.f32 %v2936, %v3496
    %v3533 = vadd.f32 %v2937, %v3499
    %v3534 = vadd.f32 %v2938, %v3504
    %v3535 = vadd.f32 %v2939, %v3507
    %v3536 = vadd.f32 %v2940, %v3514
    %v3537 = vadd.f32 %v2941, %v3519
    %v3538 = vadd.f32 %v2942, %v3522
    %v3539 = vadd.f32 %v2943, %v3527
    %v3540 = vld [vmem:[#allocation2] sm:$0xe0]
    %v3541 = vld [vmem:[#allocation2 + $0x8] sm:$0xe0]
    %v3542 = vld [vmem:[#allocation2 + $0x10] sm:$0xe0]
    %v3543 = vld [vmem:[#allocation2 + $0x18] sm:$0xe0]
    %v3544 = vld [vmem:[#allocation2 + $0x20] sm:$0xe0]
    %v3545 = vld [vmem:[#allocation2 + $0x168] sm:$0x1f]
    %v3546 = vld [vmem:[#allocation2 + $0x170] sm:$0x1f]
    %v3547 = vld [vmem:[#allocation2 + $0x178] sm:$0x1f]
    %v3548 = vld [vmem:[#allocation2 + $0x180] sm:$0x1f]
    %v3549 = vld [vmem:[#allocation2 + $0x188] sm:$0x1f]
    %v3550 = vpack.c.bf16 %v363, %v3540
    %v3551 = vpack.c.bf16 %v364, %v3541
    %v3552 = vpack.c.bf16 %v365, %v3542
    %v3553 = vpack.c.bf16 %v366, %v3543
    %v3554 = vpack.c.bf16 %v367, %v3544
    %v3555 = vpack.c.bf16 %v3545, %v398
    %v3556 = vpack.c.bf16 %v3546, %v399
    %v3557 = vpack.c.bf16 %v3547, %v400
    %v3558 = vpack.c.bf16 %v3548, %v401
    %v3559 = vpack.c.bf16 %v3549, %v402
    %s3560 = scalar_lea.vmem [#allocation9], 1300
    %v3561 = vld [vmem:[%s3560] sm:$0xf]
    %v3562 = vld [vmem:[%s3560 + $0x4] sm:$0xf]
    %v3563 = vld [vmem:[%s3560 + $0x8] sm:$0xf]
    %v3564 = vld [vmem:[%s3560 + $0xc] sm:$0xf]
    %v3565 = vld [vmem:[%s3560 + $0x10] sm:$0xf]
    %v3566 = vld [vmem:[%s3560 + $0x14] sm:$0xf]
    %v3567 = vld [vmem:[%s3560 + $0x18] sm:$0xf]
    %v3568 = vld [vmem:[%s3560 + $0x1c] sm:$0xf]
    %v3569 = vld [vmem:[%s3560 + $0x20] sm:$0xf]
    %v3570 = vld [vmem:[%s3560 + $0x24] sm:$0xf]
    %v3571 = vld [vmem:[%s3560 + $0x28] sm:$0xf]
    %v3572 = vld [vmem:[%s3560 + $0x2c] sm:$0xf]
    %v3573 = vld [vmem:[%s3560 + $0x30] sm:$0xf]
    %v3574 = vld [vmem:[%s3560 + $0x34] sm:$0xf]
    %v3575 = vld [vmem:[%s3560 + $0x38] sm:$0xf]
    %v3576 = vld [vmem:[%s3560 + $0x3c] sm:$0xf]
    %v3577 = vld [vmem:[%s3560 + $0x40] sm:$0xf]
    %v3578 = vld [vmem:[%s3560 + $0x44] sm:$0xf]
    %v3579 = vld [vmem:[%s3560 + $0x48] sm:$0xf]
    %v3580 = vld [vmem:[%s3560 + $0x4c] sm:$0xf]
    %v3581 = vld [vmem:[%s3560 + $0x50] sm:$0xf]
    %v3582 = vld [vmem:[%s3560 + $0x54] sm:$0xf]
    %v3583 = vld [vmem:[%s3560 + $0x58] sm:$0xf]
    %v3584 = vld [vmem:[%s3560 + $0x5c] sm:$0xf]
    %v3585 = vld [vmem:[%s3560 + $0x60] sm:$0xf]
    %v3586 = vld [vmem:[%s3560 + $0x64] sm:$0xf]
    %v3587 = vld [vmem:[%s3560 + $0x68] sm:$0xf]
    %v3588 = vld [vmem:[%s3560 + $0x6c] sm:$0xf]
    %v3589 = vld [vmem:[%s3560 + $0x70] sm:$0xf]
    %v3590 = vld [vmem:[%s3560 + $0x74] sm:$0xf]
    %v3591 = vld [vmem:[%s3560 + $0x78] sm:$0xf]
    %v3592 = vld [vmem:[%s3560 + $0x7c] sm:$0xf]
    %v3593 = vld [vmem:[%s3560 + $0x80] sm:$0xf]
    %v3594 = vld [vmem:[%s3560 + $0x84] sm:$0xf]
    %v3595 = vld [vmem:[%s3560 + $0x88] sm:$0xf]
    %v3596 = vld [vmem:[%s3560 + $0x8c] sm:$0xf]
    %v3597 = vld [vmem:[%s3560 + $0x90] sm:$0xf]
    %v3598 = vld [vmem:[%s3560 + $0x94] sm:$0xf]
    %v3599 = vld [vmem:[%s3560 + $0x98] sm:$0xf]
    %v3600 = vld [vmem:[%s3560 + $0x9c] sm:$0xf]
    %v3601 = vld [vmem:[%s3560 + $0xa0] sm:$0xf]
    %v3602 = vld [vmem:[%s3560 + $0xa4] sm:$0xf]
    %v3603 = vld [vmem:[%s3560 + $0xa8] sm:$0xf]
    %v3604 = vld [vmem:[%s3560 + $0xac] sm:$0xf]
    %v3605 = vld [vmem:[%s3560 + $0xb0] sm:$0xf]
    %v3606 = vld [vmem:[%s3560 + $0xb4] sm:$0xf]
    %v3607 = vld [vmem:[%s3560 + $0xb8] sm:$0xf]
    %v3608 = vld [vmem:[%s3560 + $0xbc] sm:$0xf]
    %v3609 = vld [vmem:[%s3560 + $0xc0] sm:$0xf]
    %v3610 = vld [vmem:[%s3560 + $0xc4] sm:$0xf]
    %v3611 = vld [vmem:[%s3560 + $0xc8] sm:$0xf]
    %v3612 = vld [vmem:[%s3560 + $0xcc] sm:$0xf]
    %v3613 = vld [vmem:[%s3560 + $0xd0] sm:$0xf]
    %v3614 = vld [vmem:[%s3560 + $0xd4] sm:$0xf]
    %v3615 = vld [vmem:[%s3560 + $0xd8] sm:$0xf]
    %v3616 = vld [vmem:[%s3560 + $0xdc] sm:$0xf]
    %v3617 = vld [vmem:[%s3560 + $0xe0] sm:$0xf]
    %v3618 = vld [vmem:[%s3560 + $0xe4] sm:$0xf]
    %v3619 = vld [vmem:[%s3560 + $0xe8] sm:$0xf]
    %v3620 = vld [vmem:[%s3560 + $0xec] sm:$0xf]
    %v3621 = vld [vmem:[%s3560 + $0xf0] sm:$0xf]
    %v3622 = vld [vmem:[%s3560 + $0xf4] sm:$0xf]
    %v3623 = vld [vmem:[%s3560 + $0xf8] sm:$0xf]
    %v3624 = vld [vmem:[%s3560 + $0xfc] sm:$0xf]
    %v3625 = vld [vmem:[%s3560 + $0x100] sm:$0x1]
    %vm3626 = vsmask.f32 5376
    %v3628 = vshrl.u32 %v3550, 16
    %v3630 = vrot.slane %v3628, 2
    %v3631 = vshll.u32 %v3550, 16
    %v3633 = vrot.slane %v3631, 3
    %v3634 = vor.u32 %v3630, %v3633
    %v3635 = vrot.slane %v640, 2
    %v3636 = vrot.slane %v588, 3
    %v3637 = vor.u32 %v3635, %v3636
    %v3638 = vsel %vm3626, %v3634, %v3637
    %v3640 = vshrl.u32 %v3551, 16
    %v3642 = vrot.slane %v3640, 2
    %v3643 = vshll.u32 %v3551, 16
    %v3645 = vrot.slane %v3643, 3
    %v3646 = vor.u32 %v3642, %v3645
    %v3647 = vrot.slane %v648, 2
    %v3648 = vrot.slane %v600, 3
    %v3649 = vor.u32 %v3647, %v3648
    %v3650 = vsel %vm3626, %v3646, %v3649
    %v3652 = vshrl.u32 %v3552, 16
    %v3654 = vrot.slane %v3652, 2
    %v3655 = vshll.u32 %v3552, 16
    %v3657 = vrot.slane %v3655, 3
    %v3658 = vor.u32 %v3654, %v3657
    %v3659 = vrot.slane %v656, 2
    %v3660 = vrot.slane %v612, 3
    %v3661 = vor.u32 %v3659, %v3660
    %v3662 = vsel %vm3626, %v3658, %v3661
    %v3664 = vshrl.u32 %v3553, 16
    %v3666 = vrot.slane %v3664, 2
    %v3667 = vshll.u32 %v3553, 16
    %v3669 = vrot.slane %v3667, 3
    %v3670 = vor.u32 %v3666, %v3669
    %v3671 = vrot.slane %v664, 2
    %v3672 = vrot.slane %v624, 3
    %v3673 = vor.u32 %v3671, %v3672
    %v3674 = vsel %vm3626, %v3670, %v3673
    %v3676 = vshrl.u32 %v3554, 16
    %v3678 = vrot.slane %v3676, 2
    %v3679 = vshll.u32 %v3554, 16
    %v3681 = vrot.slane %v3679, 3
    %v3682 = vor.u32 %v3678, %v3681
    %v3683 = vrot.slane %v672, 2
    %v3684 = vrot.slane %v636, 3
    %v3685 = vor.u32 %v3683, %v3684
    %v3686 = vsel %vm3626, %v3682, %v3685
    %v3687 = vrot.slane %v680, 2
    %v3688 = vrot.slane %v644, 3
    %v3689 = vor.u32 %v3687, %v3688
    %v3690 = vsel %vm3626, %v3637, %v3689
    %v3691 = vrot.slane %v688, 2
    %v3692 = vrot.slane %v652, 3
    %v3693 = vor.u32 %v3691, %v3692
    %v3694 = vsel %vm3626, %v3649, %v3693
    %v3695 = vrot.slane %v696, 2
    %v3696 = vrot.slane %v660, 3
    %v3697 = vor.u32 %v3695, %v3696
    %v3698 = vsel %vm3626, %v3661, %v3697
    %v3699 = vrot.slane %v704, 2
    %v3700 = vrot.slane %v668, 3
    %v3701 = vor.u32 %v3699, %v3700
    %v3702 = vsel %vm3626, %v3673, %v3701
    %v3703 = vrot.slane %v712, 2
    %v3704 = vrot.slane %v676, 3
    %v3705 = vor.u32 %v3703, %v3704
    %v3706 = vsel %vm3626, %v3685, %v3705
    %v3707 = vrot.slane %v720, 2
    %v3708 = vrot.slane %v684, 3
    %v3709 = vor.u32 %v3707, %v3708
    %v3710 = vsel %vm3626, %v3689, %v3709
    %v3711 = vrot.slane %v728, 2
    %v3712 = vrot.slane %v692, 3
    %v3713 = vor.u32 %v3711, %v3712
    %v3714 = vsel %vm3626, %v3693, %v3713
    %v3715 = vrot.slane %v736, 2
    %v3716 = vrot.slane %v700, 3
    %v3717 = vor.u32 %v3715, %v3716
    %v3718 = vsel %vm3626, %v3697, %v3717
    %v3719 = vrot.slane %v744, 2
    %v3720 = vrot.slane %v708, 3
    %v3721 = vor.u32 %v3719, %v3720
    %v3722 = vsel %vm3626, %v3701, %v3721
    %v3723 = vrot.slane %v752, 2
    %v3724 = vrot.slane %v716, 3
    %v3725 = vor.u32 %v3723, %v3724
    %v3726 = vsel %vm3626, %v3705, %v3725
    %v3728 = vshrl.u32 %v3555, 16
    %v3730 = vrot.slane %v3728, 2
    %v3731 = vshll.u32 %v3555, 16
    %v3733 = vrot.slane %v3731, 3
    %v3734 = vor.u32 %v3730, %v3733
    %v3735 = vsel %vm3626, %v3709, %v3734
    %v3737 = vshrl.u32 %v3556, 16
    %v3739 = vrot.slane %v3737, 2
    %v3740 = vshll.u32 %v3556, 16
    %v3742 = vrot.slane %v3740, 3
    %v3743 = vor.u32 %v3739, %v3742
    %v3744 = vsel %vm3626, %v3713, %v3743
    %v3746 = vshrl.u32 %v3557, 16
    %v3748 = vrot.slane %v3746, 2
    %v3749 = vshll.u32 %v3557, 16
    %v3751 = vrot.slane %v3749, 3
    %v3752 = vor.u32 %v3748, %v3751
    %v3753 = vsel %vm3626, %v3717, %v3752
    %v3755 = vshrl.u32 %v3558, 16
    %v3757 = vrot.slane %v3755, 2
    %v3758 = vshll.u32 %v3558, 16
    %v3760 = vrot.slane %v3758, 3
    %v3761 = vor.u32 %v3757, %v3760
    %v3762 = vsel %vm3626, %v3721, %v3761
    %v3764 = vshrl.u32 %v3559, 16
    %v3766 = vrot.slane %v3764, 2
    %v3767 = vshll.u32 %v3559, 16
    %v3769 = vrot.slane %v3767, 3
    %v3770 = vor.u32 %v3766, %v3769
    %v3771 = vsel %vm3626, %v3725, %v3770
    %v3857 = vunpack.c.l.b16 %v3561
    %v3858 = vunpack.c.l.b16 %v3562
    %v3859 = vunpack.c.l.b16 %v3563
    %v3860 = vunpack.c.l.b16 %v3564
    %v3861 = vunpack.c.l.b16 %v3565
    %v3862 = vunpack.c.l.b16 %v3566
    %v3863 = vunpack.c.l.b16 %v3567
    %v3864 = vunpack.c.l.b16 %v3568
    %v3865 = vunpack.c.l.b16 %v3569
    %v3866 = vunpack.c.l.b16 %v3570
    %v3867 = vunpack.c.l.b16 %v3571
    %v3868 = vunpack.c.l.b16 %v3572
    %v3869 = vunpack.c.l.b16 %v3573
    %v3870 = vunpack.c.l.b16 %v3574
    %v3871 = vunpack.c.l.b16 %v3575
    %v3872 = vunpack.c.l.b16 %v3576
    %v3873 = vunpack.c.l.b16 %v3577
    %v3874 = vunpack.c.l.b16 %v3578
    %v3875 = vunpack.c.l.b16 %v3579
    %v3876 = vunpack.c.l.b16 %v3580
    %v3877 = vunpack.c.l.b16 %v3581
    %v3878 = vunpack.c.l.b16 %v3582
    %v3879 = vunpack.c.l.b16 %v3583
    %v3880 = vunpack.c.l.b16 %v3584
    %v3881 = vunpack.c.l.b16 %v3585
    %v3882 = vunpack.c.l.b16 %v3586
    %v3883 = vunpack.c.l.b16 %v3587
    %v3884 = vunpack.c.l.b16 %v3588
    %v3885 = vunpack.c.l.b16 %v3589
    %v3886 = vunpack.c.l.b16 %v3590
    %v3887 = vunpack.c.l.b16 %v3591
    %v3888 = vunpack.c.l.b16 %v3592
    %v3889 = vunpack.c.l.b16 %v3593
    %v3890 = vunpack.c.l.b16 %v3594
    %v3891 = vunpack.c.l.b16 %v3595
    %v3892 = vunpack.c.l.b16 %v3596
    %v3893 = vunpack.c.l.b16 %v3597
    %v3894 = vunpack.c.l.b16 %v3598
    %v3895 = vunpack.c.l.b16 %v3599
    %v3896 = vunpack.c.l.b16 %v3600
    %v3897 = vunpack.c.l.b16 %v3601
    %v3898 = vunpack.c.l.b16 %v3602
    %v3899 = vunpack.c.l.b16 %v3603
    %v3900 = vunpack.c.l.b16 %v3604
    %v3901 = vunpack.c.l.b16 %v3605
    %v3902 = vunpack.c.l.b16 %v3606
    %v3903 = vunpack.c.l.b16 %v3607
    %v3904 = vunpack.c.l.b16 %v3608
    %v3905 = vunpack.c.l.b16 %v3609
    %v3906 = vunpack.c.l.b16 %v3610
    %v3907 = vunpack.c.l.b16 %v3611
    %v3908 = vunpack.c.l.b16 %v3612
    %v3909 = vunpack.c.l.b16 %v3613
    %v3910 = vunpack.c.l.b16 %v3614
    %v3911 = vunpack.c.l.b16 %v3615
    %v3912 = vunpack.c.l.b16 %v3616
    %v3913 = vunpack.c.l.b16 %v3617
    %v3914 = vunpack.c.l.b16 %v3618
    %v3915 = vunpack.c.l.b16 %v3619
    %v3916 = vunpack.c.l.b16 %v3620
    %v3917 = vunpack.c.l.b16 %v3621
    %v3918 = vunpack.c.l.b16 %v3622
    %v3919 = vunpack.c.l.b16 %v3623
    %v3920 = vunpack.c.l.b16 %v3624
    %v3921 = vunpack.c.l.b16 %v3625
    %v3922 = vpack.c.b16 %v3858, %v3857
    %v3923 = vpack.c.b16 %v3860, %v3859
    %v3924 = vpack.c.b16 %v3862, %v3861
    %v3925 = vpack.c.b16 %v3864, %v3863
    %v3926 = vpack.c.b16 %v3866, %v3865
    %v3927 = vpack.c.b16 %v3868, %v3867
    %v3928 = vpack.c.b16 %v3870, %v3869
    %v3929 = vpack.c.b16 %v3872, %v3871
    %v3930 = vpack.c.b16 %v3874, %v3873
    %v3931 = vpack.c.b16 %v3876, %v3875
    %v3932 = vpack.c.b16 %v3878, %v3877
    %v3933 = vpack.c.b16 %v3880, %v3879
    %v3934 = vpack.c.b16 %v3882, %v3881
    %v3935 = vpack.c.b16 %v3884, %v3883
    %v3936 = vpack.c.b16 %v3886, %v3885
    %v3937 = vpack.c.b16 %v3888, %v3887
    %v3938 = vpack.c.b16 %v3890, %v3889
    %v3939 = vpack.c.b16 %v3892, %v3891
    %v3940 = vpack.c.b16 %v3894, %v3893
    %v3941 = vpack.c.b16 %v3896, %v3895
    %v3942 = vpack.c.b16 %v3898, %v3897
    %v3943 = vpack.c.b16 %v3900, %v3899
    %v3944 = vpack.c.b16 %v3902, %v3901
    %v3945 = vpack.c.b16 %v3904, %v3903
    %v3946 = vpack.c.b16 %v3906, %v3905
    %v3947 = vpack.c.b16 %v3908, %v3907
    %v3948 = vpack.c.b16 %v3910, %v3909
    %v3949 = vpack.c.b16 %v3912, %v3911
    %v3950 = vpack.c.b16 %v3914, %v3913
    %v3951 = vpack.c.b16 %v3916, %v3915
    %v3952 = vpack.c.b16 %v3918, %v3917
    %v3953 = vpack.c.b16 %v3920, %v3919
    %v3954 = vpack.c.b16 %v3921, %v3921
    %v3988 = vsel %vm215, %v3686, 0
    %v3991 = vsel %vm215, %v3706, 0
    %v3994 = vsel %vm215, %v3726, 0
    %v3997 = vsel %vm215, %v3771, 0
    %v4000 = vsel %vm215, %v3770, 0
    %v4003 = vand.u32 %v3954, %v1007
    %4005 = vmatprep.subr.bf16.mxu0 0
    %4006 = vmatpush1.bf16.msra.mxu0 %v3929
    %4007 = vmatprep.subr.bf16.mxu0 0
    %4008 = vmatpush1.bf16.msra.mxu0 %v3928
    %4009 = vmatprep.subr.bf16.mxu0 0
    %4010 = vmatpush1.bf16.msra.mxu0 %v3927
    %4011 = vmatprep.subr.bf16.mxu0 0
    %4012 = vmatpush1.bf16.msra.mxu0 %v3926
    %4013 = vmatprep.subr.bf16.mxu0 0
    %4014 = vmatpush1.bf16.msra.mxu0 %v3925
    %4015 = vmatprep.subr.bf16.mxu0 0
    %4016 = vmatpush1.bf16.msra.mxu0 %v3924
    %4017 = vmatprep.subr.bf16.mxu0 0
    %4018 = vmatpush1.bf16.msra.mxu0 %v3923
    %4019 = vmatprep.subr.bf16.mxu0 0
    %4020 = vmatpush1.bf16.msra.mxu0 %v3922
    %4021 = vmatprep.subr.bf16.mxu0 0
    %4022 = vmatpush2.bf16.msra.mxu0 %v3937
    %4023 = vmatprep.subr.bf16.mxu0 0
    %4024 = vmatpush2.bf16.msra.mxu0 %v3936
    %4025 = vmatprep.subr.bf16.mxu0 0
    %4026 = vmatpush2.bf16.msra.mxu0 %v3935
    %4027 = vmatprep.subr.bf16.mxu0 0
    %4028 = vmatpush2.bf16.msra.mxu0 %v3934
    %4029 = vmatprep.subr.bf16.mxu0 0
    %4030 = vmatpush2.bf16.msra.mxu0 %v3933
    %4031 = vmatprep.subr.bf16.mxu0 0
    %4032 = vmatpush2.bf16.msra.mxu0 %v3932
    %4033 = vmatprep.subr.bf16.mxu0 0
    %4034 = vmatpush2.bf16.msra.mxu0 %v3931
    %4035 = vmatprep.subr.bf16.mxu0 0
    %4036 = vmatpush2.bf16.msra.mxu0 %v3930
    %4037 = vmatprep.mubr.bf16.mxu0 %v3650
    %4038 = vmatmul.mubr.bf16.gmra.mxu0 %v3638
    %v4039 = vpop.f32.mrf.mxu0
    %v4040 = vadd.f32 0.0, %v4039
    %v4041 = vpop.f32.mrf.mxu0
    %v4042 = vpop.f32.mrf.mxu0
    %v4043 = vadd.f32 0.0, %v4042
    %v4044 = vpop.f32.mrf.mxu0
    %4045 = vmatprep.mubr.bf16.mxu0 %v3694
    %4046 = vmatmul.mubr.bf16.gmra.mxu0 %v3690
    %v4047 = vpop.f32.mrf.mxu0
    %v4048 = vadd.f32 0.0, %v4047
    %v4049 = vpop.f32.mrf.mxu0
    %v4050 = vpop.f32.mrf.mxu0
    %v4051 = vadd.f32 0.0, %v4050
    %v4052 = vpop.f32.mrf.mxu0
    %4053 = vmatprep.mubr.bf16.mxu0 %v3714
    %4054 = vmatmul.mubr.bf16.gmra.mxu0 %v3710
    %v4055 = vpop.f32.mrf.mxu0
    %v4056 = vpop.f32.mrf.mxu0
    %v4057 = vpop.f32.mrf.mxu0
    %v4058 = vadd.f32 0.0, %v4057
    %v4059 = vpop.f32.mrf.mxu0
    %4060 = vmatprep.mubr.bf16.mxu0 %v3744
    %4061 = vmatmul.mubr.bf16.gmra.mxu0 %v3735
    %v4062 = vpop.f32.mrf.mxu0
    %v4063 = vadd.f32 0.0, %v4062
    %v4064 = vpop.f32.mrf.mxu0
    %v4065 = vpop.f32.mrf.mxu0
    %v4066 = vadd.f32 0.0, %v4065
    %v4067 = vpop.f32.mrf.mxu0
    %4068 = vmatprep.mubr.bf16.mxu0 %v3743
    %4069 = vmatmul.mubr.bf16.gmra.mxu0 %v3734
    %v4070 = vpop.f32.mrf.mxu0
    %v4071 = vadd.f32 0.0, %v4070
    %v4072 = vpop.f32.mrf.mxu0
    %v4073 = vpop.f32.mrf.mxu0
    %v4074 = vpop.f32.mrf.mxu0
    %4075 = vdwg.mxu0
    %4076 = vmatprep.subr.bf16.mxu0 0
    %4077 = vmatpush1.bf16.msra.mxu0 %v3945
    %4078 = vmatprep.subr.bf16.mxu0 0
    %4079 = vmatpush1.bf16.msra.mxu0 %v3944
    %4080 = vmatprep.subr.bf16.mxu0 0
    %4081 = vmatpush1.bf16.msra.mxu0 %v3943
    %4082 = vmatprep.subr.bf16.mxu0 0
    %4083 = vmatpush1.bf16.msra.mxu0 %v3942
    %4084 = vmatprep.subr.bf16.mxu0 0
    %4085 = vmatpush1.bf16.msra.mxu0 %v3941
    %4086 = vmatprep.subr.bf16.mxu0 0
    %4087 = vmatpush1.bf16.msra.mxu0 %v3940
    %4088 = vmatprep.subr.bf16.mxu0 0
    %4089 = vmatpush1.bf16.msra.mxu0 %v3939
    %4090 = vmatprep.subr.bf16.mxu0 0
    %4091 = vmatpush1.bf16.msra.mxu0 %v3938
    %4092 = vmatprep.subr.bf16.mxu0 0
    %4093 = vmatpush2.bf16.msra.mxu0 %v3953
    %4094 = vmatprep.subr.bf16.mxu0 0
    %4095 = vmatpush2.bf16.msra.mxu0 %v3952
    %4096 = vmatprep.subr.bf16.mxu0 0
    %4097 = vmatpush2.bf16.msra.mxu0 %v3951
    %4098 = vmatprep.subr.bf16.mxu0 0
    %4099 = vmatpush2.bf16.msra.mxu0 %v3950
    %4100 = vmatprep.subr.bf16.mxu0 0
    %4101 = vmatpush2.bf16.msra.mxu0 %v3949
    %4102 = vmatprep.subr.bf16.mxu0 0
    %4103 = vmatpush2.bf16.msra.mxu0 %v3948
    %4104 = vmatprep.subr.bf16.mxu0 0
    %4105 = vmatpush2.bf16.msra.mxu0 %v3947
    %4106 = vmatprep.subr.bf16.mxu0 0
    %4107 = vmatpush2.bf16.msra.mxu0 %v3946
    %4108 = vmatprep.mubr.bf16.mxu0 %v3674
    %4109 = vmatmul.mubr.bf16.gmra.mxu0 %v3662
    %v4110 = vpop.f32.mrf.mxu0
    %v4111 = vadd.f32 %v4040, %v4110
    %v4112 = vpop.f32.mrf.mxu0
    %v4113 = vpop.f32.mrf.mxu0
    %v4114 = vadd.f32 %v4043, %v4113
    %v4115 = vpop.f32.mrf.mxu0
    %4116 = vmatprep.mubr.bf16.mxu0 %v3702
    %4117 = vmatmul.mubr.bf16.gmra.mxu0 %v3698
    %v4118 = vpop.f32.mrf.mxu0
    %v4119 = vadd.f32 %v4048, %v4118
    %v4120 = vpop.f32.mrf.mxu0
    %v4121 = vpop.f32.mrf.mxu0
    %v4122 = vadd.f32 %v4051, %v4121
    %v4123 = vpop.f32.mrf.mxu0
    %4124 = vmatprep.mubr.bf16.mxu0 %v3722
    %4125 = vmatmul.mubr.bf16.gmra.mxu0 %v3718
    %v4126 = vpop.f32.mrf.mxu0
    %v4127 = vpop.f32.mrf.mxu0
    %v4128 = vpop.f32.mrf.mxu0
    %v4129 = vadd.f32 %v4058, %v4128
    %v4130 = vpop.f32.mrf.mxu0
    %4131 = vmatprep.mubr.bf16.mxu0 %v3762
    %4132 = vmatmul.mubr.bf16.gmra.mxu0 %v3753
    %v4133 = vpop.f32.mrf.mxu0
    %v4134 = vadd.f32 %v4063, %v4133
    %v4135 = vpop.f32.mrf.mxu0
    %v4136 = vpop.f32.mrf.mxu0
    %v4137 = vadd.f32 %v4066, %v4136
    %v4138 = vpop.f32.mrf.mxu0
    %4139 = vmatprep.mubr.bf16.mxu0 %v3761
    %4140 = vmatmul.mubr.bf16.gmra.mxu0 %v3752
    %v4141 = vpop.f32.mrf.mxu0
    %v4142 = vadd.f32 %v4071, %v4141
    %v4143 = vpop.f32.mrf.mxu0
    %v4144 = vpop.f32.mrf.mxu0
    %v4145 = vpop.f32.mrf.mxu0
    %4146 = vdwg.mxu0
    %4147 = vmatprep.subr.bf16.mxu0 0
    %4148 = vmatpush1.bf16.msra.mxu0 0
    %4149 = vmatprep.subr.bf16.mxu0 0
    %4150 = vmatpush1.bf16.msra.mxu0 0
    %4151 = vmatprep.subr.bf16.mxu0 0
    %4152 = vmatpush1.bf16.msra.mxu0 0
    %4153 = vmatprep.subr.bf16.mxu0 0
    %4154 = vmatpush1.bf16.msra.mxu0 0
    %4155 = vmatprep.subr.bf16.mxu0 0
    %4156 = vmatpush1.bf16.msra.mxu0 0
    %4157 = vmatprep.subr.bf16.mxu0 0
    %4158 = vmatpush1.bf16.msra.mxu0 0
    %4159 = vmatprep.subr.bf16.mxu0 0
    %4160 = vmatpush1.bf16.msra.mxu0 0
    %4161 = vmatprep.subr.bf16.mxu0 0
    %4162 = vmatpush1.bf16.msra.mxu0 %v4003
    %4163 = vmatprep.subr.bf16.mxu0 0
    %4164 = vmatpush2.bf16.msra.mxu0 0
    %4165 = vmatprep.subr.bf16.mxu0 0
    %4166 = vmatpush2.bf16.msra.mxu0 0
    %4167 = vmatprep.subr.bf16.mxu0 0
    %4168 = vmatpush2.bf16.msra.mxu0 0
    %4169 = vmatprep.subr.bf16.mxu0 0
    %4170 = vmatpush2.bf16.msra.mxu0 0
    %4171 = vmatprep.subr.bf16.mxu0 0
    %4172 = vmatpush2.bf16.msra.mxu0 0
    %4173 = vmatprep.subr.bf16.mxu0 0
    %4174 = vmatpush2.bf16.msra.mxu0 0
    %4175 = vmatprep.subr.bf16.mxu0 0
    %4176 = vmatpush2.bf16.msra.mxu0 0
    %4177 = vmatprep.subr.bf16.mxu0 0
    %4178 = vmatpush2.bf16.msra.mxu0 0
    %4179 = vmatprep.mubr.bf16.mxu0 0
    %4180 = vmatmul.mubr.bf16.gmra.mxu0 %v3988
    %v4181 = vpop.f32.mrf.mxu0
    %v4182 = vadd.f32 %v4111, %v4181
    %v4183 = vpop.f32.mrf.mxu0
    %v4184 = vpop.f32.mrf.mxu0
    %v4185 = vadd.f32 %v4114, %v4184
    %v4186 = vpop.f32.mrf.mxu0
    %4187 = vmatprep.mubr.bf16.mxu0 0
    %4188 = vmatmul.mubr.bf16.gmra.mxu0 %v3991
    %v4189 = vpop.f32.mrf.mxu0
    %v4190 = vadd.f32 %v4119, %v4189
    %v4191 = vpop.f32.mrf.mxu0
    %v4192 = vpop.f32.mrf.mxu0
    %v4193 = vadd.f32 %v4122, %v4192
    %v4194 = vpop.f32.mrf.mxu0
    %4195 = vmatprep.mubr.bf16.mxu0 0
    %4196 = vmatmul.mubr.bf16.gmra.mxu0 %v3994
    %v4197 = vpop.f32.mrf.mxu0
    %v4198 = vpop.f32.mrf.mxu0
    %v4199 = vpop.f32.mrf.mxu0
    %v4200 = vadd.f32 %v4129, %v4199
    %v4201 = vpop.f32.mrf.mxu0
    %4202 = vmatprep.mubr.bf16.mxu0 0
    %4203 = vmatmul.mubr.bf16.gmra.mxu0 %v3997
    %v4204 = vpop.f32.mrf.mxu0
    %v4205 = vadd.f32 %v4134, %v4204
    %v4206 = vpop.f32.mrf.mxu0
    %v4207 = vpop.f32.mrf.mxu0
    %v4208 = vadd.f32 %v4137, %v4207
    %v4209 = vpop.f32.mrf.mxu0
    %4210 = vmatprep.mubr.bf16.mxu0 0
    %4211 = vmatmul.mubr.bf16.gmra.mxu0 %v4000
    %v4212 = vpop.f32.mrf.mxu0
    %v4213 = vadd.f32 %v4142, %v4212
    %v4214 = vpop.f32.mrf.mxu0
    %v4215 = vpop.f32.mrf.mxu0
    %v4216 = vpop.f32.mrf.mxu0
    %4217 = vdwg.mxu0
    %v4218 = vadd.f32 %v3532, %v4182
    %v4219 = vadd.f32 %v3533, %v4185
    %v4220 = vadd.f32 %v3534, %v4190
    %v4221 = vadd.f32 %v3535, %v4193
    %v4222 = vadd.f32 %v3536, %v4200
    %v4223 = vadd.f32 %v3537, %v4205
    %v4224 = vadd.f32 %v3538, %v4208
    %v4225 = vadd.f32 %v3539, %v4213
    %v4226 = vld [vmem:[#allocation2] sm:$0xc0]
    %v4227 = vld [vmem:[#allocation2 + $0x8] sm:$0xc0]
    %v4228 = vld [vmem:[#allocation2 + $0x10] sm:$0xc0]
    %v4229 = vld [vmem:[#allocation2 + $0x18] sm:$0xc0]
    %v4230 = vld [vmem:[#allocation2 + $0x20] sm:$0xc0]
    %v4231 = vld [vmem:[#allocation2 + $0x168] sm:$0x3f]
    %v4232 = vld [vmem:[#allocation2 + $0x170] sm:$0x3f]
    %v4233 = vld [vmem:[#allocation2 + $0x178] sm:$0x3f]
    %v4234 = vld [vmem:[#allocation2 + $0x180] sm:$0x3f]
    %v4235 = vld [vmem:[#allocation2 + $0x188] sm:$0x3f]
    %v4236 = vpack.c.bf16 %v363, %v4226
    %v4237 = vpack.c.bf16 %v364, %v4227
    %v4238 = vpack.c.bf16 %v365, %v4228
    %v4239 = vpack.c.bf16 %v366, %v4229
    %v4240 = vpack.c.bf16 %v367, %v4230
    %v4241 = vpack.c.bf16 %v4231, %v398
    %v4242 = vpack.c.bf16 %v4232, %v399
    %v4243 = vpack.c.bf16 %v4233, %v400
    %v4244 = vpack.c.bf16 %v4234, %v401
    %v4245 = vpack.c.bf16 %v4235, %v402
    %s4246 = scalar_lea.vmem [#allocation9], 1560
    %v4247 = vld [vmem:[%s4246] sm:$0xf]
    %v4248 = vld [vmem:[%s4246 + $0x4] sm:$0xf]
    %v4249 = vld [vmem:[%s4246 + $0x8] sm:$0xf]
    %v4250 = vld [vmem:[%s4246 + $0xc] sm:$0xf]
    %v4251 = vld [vmem:[%s4246 + $0x10] sm:$0xf]
    %v4252 = vld [vmem:[%s4246 + $0x14] sm:$0xf]
    %v4253 = vld [vmem:[%s4246 + $0x18] sm:$0xf]
    %v4254 = vld [vmem:[%s4246 + $0x1c] sm:$0xf]
    %v4255 = vld [vmem:[%s4246 + $0x20] sm:$0xf]
    %v4256 = vld [vmem:[%s4246 + $0x24] sm:$0xf]
    %v4257 = vld [vmem:[%s4246 + $0x28] sm:$0xf]
    %v4258 = vld [vmem:[%s4246 + $0x2c] sm:$0xf]
    %v4259 = vld [vmem:[%s4246 + $0x30] sm:$0xf]
    %v4260 = vld [vmem:[%s4246 + $0x34] sm:$0xf]
    %v4261 = vld [vmem:[%s4246 + $0x38] sm:$0xf]
    %v4262 = vld [vmem:[%s4246 + $0x3c] sm:$0xf]
    %v4263 = vld [vmem:[%s4246 + $0x40] sm:$0xf]
    %v4264 = vld [vmem:[%s4246 + $0x44] sm:$0xf]
    %v4265 = vld [vmem:[%s4246 + $0x48] sm:$0xf]
    %v4266 = vld [vmem:[%s4246 + $0x4c] sm:$0xf]
    %v4267 = vld [vmem:[%s4246 + $0x50] sm:$0xf]
    %v4268 = vld [vmem:[%s4246 + $0x54] sm:$0xf]
    %v4269 = vld [vmem:[%s4246 + $0x58] sm:$0xf]
    %v4270 = vld [vmem:[%s4246 + $0x5c] sm:$0xf]
    %v4271 = vld [vmem:[%s4246 + $0x60] sm:$0xf]
    %v4272 = vld [vmem:[%s4246 + $0x64] sm:$0xf]
    %v4273 = vld [vmem:[%s4246 + $0x68] sm:$0xf]
    %v4274 = vld [vmem:[%s4246 + $0x6c] sm:$0xf]
    %v4275 = vld [vmem:[%s4246 + $0x70] sm:$0xf]
    %v4276 = vld [vmem:[%s4246 + $0x74] sm:$0xf]
    %v4277 = vld [vmem:[%s4246 + $0x78] sm:$0xf]
    %v4278 = vld [vmem:[%s4246 + $0x7c] sm:$0xf]
    %v4279 = vld [vmem:[%s4246 + $0x80] sm:$0xf]
    %v4280 = vld [vmem:[%s4246 + $0x84] sm:$0xf]
    %v4281 = vld [vmem:[%s4246 + $0x88] sm:$0xf]
    %v4282 = vld [vmem:[%s4246 + $0x8c] sm:$0xf]
    %v4283 = vld [vmem:[%s4246 + $0x90] sm:$0xf]
    %v4284 = vld [vmem:[%s4246 + $0x94] sm:$0xf]
    %v4285 = vld [vmem:[%s4246 + $0x98] sm:$0xf]
    %v4286 = vld [vmem:[%s4246 + $0x9c] sm:$0xf]
    %v4287 = vld [vmem:[%s4246 + $0xa0] sm:$0xf]
    %v4288 = vld [vmem:[%s4246 + $0xa4] sm:$0xf]
    %v4289 = vld [vmem:[%s4246 + $0xa8] sm:$0xf]
    %v4290 = vld [vmem:[%s4246 + $0xac] sm:$0xf]
    %v4291 = vld [vmem:[%s4246 + $0xb0] sm:$0xf]
    %v4292 = vld [vmem:[%s4246 + $0xb4] sm:$0xf]
    %v4293 = vld [vmem:[%s4246 + $0xb8] sm:$0xf]
    %v4294 = vld [vmem:[%s4246 + $0xbc] sm:$0xf]
    %v4295 = vld [vmem:[%s4246 + $0xc0] sm:$0xf]
    %v4296 = vld [vmem:[%s4246 + $0xc4] sm:$0xf]
    %v4297 = vld [vmem:[%s4246 + $0xc8] sm:$0xf]
    %v4298 = vld [vmem:[%s4246 + $0xcc] sm:$0xf]
    %v4299 = vld [vmem:[%s4246 + $0xd0] sm:$0xf]
    %v4300 = vld [vmem:[%s4246 + $0xd4] sm:$0xf]
    %v4301 = vld [vmem:[%s4246 + $0xd8] sm:$0xf]
    %v4302 = vld [vmem:[%s4246 + $0xdc] sm:$0xf]
    %v4303 = vld [vmem:[%s4246 + $0xe0] sm:$0xf]
    %v4304 = vld [vmem:[%s4246 + $0xe4] sm:$0xf]
    %v4305 = vld [vmem:[%s4246 + $0xe8] sm:$0xf]
    %v4306 = vld [vmem:[%s4246 + $0xec] sm:$0xf]
    %v4307 = vld [vmem:[%s4246 + $0xf0] sm:$0xf]
    %v4308 = vld [vmem:[%s4246 + $0xf4] sm:$0xf]
    %v4309 = vld [vmem:[%s4246 + $0xf8] sm:$0xf]
    %v4310 = vld [vmem:[%s4246 + $0xfc] sm:$0xf]
    %v4311 = vld [vmem:[%s4246 + $0x100] sm:$0x1]
    %vm4322 = vcmask 1044480
    %v4323 = vrot.slane %v4236, 3
    %v4324 = vrot.slane %v408, 3
    %v4325 = vsel %vm4322, %v4323, %v4324
    %v4326 = vrot.slane %v4237, 3
    %v4327 = vrot.slane %v409, 3
    %v4328 = vsel %vm4322, %v4326, %v4327
    %v4329 = vrot.slane %v4238, 3
    %v4330 = vrot.slane %v410, 3
    %v4331 = vsel %vm4322, %v4329, %v4330
    %v4332 = vrot.slane %v4239, 3
    %v4333 = vrot.slane %v411, 3
    %v4334 = vsel %vm4322, %v4332, %v4333
    %v4335 = vrot.slane %v4240, 3
    %v4336 = vrot.slane %v412, 3
    %v4337 = vsel %vm4322, %v4335, %v4336
    %v4338 = vrot.slane %v413, 3
    %v4339 = vsel %vm4322, %v4324, %v4338
    %v4340 = vrot.slane %v414, 3
    %v4341 = vsel %vm4322, %v4327, %v4340
    %v4342 = vrot.slane %v415, 3
    %v4343 = vsel %vm4322, %v4330, %v4342
    %v4344 = vrot.slane %v416, 3
    %v4345 = vsel %vm4322, %v4333, %v4344
    %v4346 = vrot.slane %v417, 3
    %v4347 = vsel %vm4322, %v4336, %v4346
    %v4348 = vrot.slane %v418, 3
    %v4349 = vsel %vm4322, %v4338, %v4348
    %v4350 = vrot.slane %v419, 3
    %v4351 = vsel %vm4322, %v4340, %v4350
    %v4352 = vrot.slane %v420, 3
    %v4353 = vsel %vm4322, %v4342, %v4352
    %v4354 = vrot.slane %v421, 3
    %v4355 = vsel %vm4322, %v4344, %v4354
    %v4356 = vrot.slane %v422, 3
    %v4357 = vsel %vm4322, %v4346, %v4356
    %v4358 = vrot.slane %v4241, 3
    %v4359 = vsel %vm4322, %v4348, %v4358
    %v4360 = vrot.slane %v4242, 3
    %v4361 = vsel %vm4322, %v4350, %v4360
    %v4362 = vrot.slane %v4243, 3
    %v4363 = vsel %vm4322, %v4352, %v4362
    %v4364 = vrot.slane %v4244, 3
    %v4365 = vsel %vm4322, %v4354, %v4364
    %v4366 = vrot.slane %v4245, 3
    %v4367 = vsel %vm4322, %v4356, %v4366
    %v4453 = vunpack.c.l.b16 %v4247
    %v4454 = vunpack.c.l.b16 %v4248
    %v4455 = vunpack.c.l.b16 %v4249
    %v4456 = vunpack.c.l.b16 %v4250
    %v4457 = vunpack.c.l.b16 %v4251
    %v4458 = vunpack.c.l.b16 %v4252
    %v4459 = vunpack.c.l.b16 %v4253
    %v4460 = vunpack.c.l.b16 %v4254
    %v4461 = vunpack.c.l.b16 %v4255
    %v4462 = vunpack.c.l.b16 %v4256
    %v4463 = vunpack.c.l.b16 %v4257
    %v4464 = vunpack.c.l.b16 %v4258
    %v4465 = vunpack.c.l.b16 %v4259
    %v4466 = vunpack.c.l.b16 %v4260
    %v4467 = vunpack.c.l.b16 %v4261
    %v4468 = vunpack.c.l.b16 %v4262
    %v4469 = vunpack.c.l.b16 %v4263
    %v4470 = vunpack.c.l.b16 %v4264
    %v4471 = vunpack.c.l.b16 %v4265
    %v4472 = vunpack.c.l.b16 %v4266
    %v4473 = vunpack.c.l.b16 %v4267
    %v4474 = vunpack.c.l.b16 %v4268
    %v4475 = vunpack.c.l.b16 %v4269
    %v4476 = vunpack.c.l.b16 %v4270
    %v4477 = vunpack.c.l.b16 %v4271
    %v4478 = vunpack.c.l.b16 %v4272
    %v4479 = vunpack.c.l.b16 %v4273
    %v4480 = vunpack.c.l.b16 %v4274
    %v4481 = vunpack.c.l.b16 %v4275
    %v4482 = vunpack.c.l.b16 %v4276
    %v4483 = vunpack.c.l.b16 %v4277
    %v4484 = vunpack.c.l.b16 %v4278
    %v4485 = vunpack.c.l.b16 %v4279
    %v4486 = vunpack.c.l.b16 %v4280
    %v4487 = vunpack.c.l.b16 %v4281
    %v4488 = vunpack.c.l.b16 %v4282
    %v4489 = vunpack.c.l.b16 %v4283
    %v4490 = vunpack.c.l.b16 %v4284
    %v4491 = vunpack.c.l.b16 %v4285
    %v4492 = vunpack.c.l.b16 %v4286
    %v4493 = vunpack.c.l.b16 %v4287
    %v4494 = vunpack.c.l.b16 %v4288
    %v4495 = vunpack.c.l.b16 %v4289
    %v4496 = vunpack.c.l.b16 %v4290
    %v4497 = vunpack.c.l.b16 %v4291
    %v4498 = vunpack.c.l.b16 %v4292
    %v4499 = vunpack.c.l.b16 %v4293
    %v4500 = vunpack.c.l.b16 %v4294
    %v4501 = vunpack.c.l.b16 %v4295
    %v4502 = vunpack.c.l.b16 %v4296
    %v4503 = vunpack.c.l.b16 %v4297
    %v4504 = vunpack.c.l.b16 %v4298
    %v4505 = vunpack.c.l.b16 %v4299
    %v4506 = vunpack.c.l.b16 %v4300
    %v4507 = vunpack.c.l.b16 %v4301
    %v4508 = vunpack.c.l.b16 %v4302
    %v4509 = vunpack.c.l.b16 %v4303
    %v4510 = vunpack.c.l.b16 %v4304
    %v4511 = vunpack.c.l.b16 %v4305
    %v4512 = vunpack.c.l.b16 %v4306
    %v4513 = vunpack.c.l.b16 %v4307
    %v4514 = vunpack.c.l.b16 %v4308
    %v4515 = vunpack.c.l.b16 %v4309
    %v4516 = vunpack.c.l.b16 %v4310
    %v4517 = vunpack.c.l.b16 %v4311
    %v4518 = vpack.c.b16 %v4454, %v4453
    %v4519 = vpack.c.b16 %v4456, %v4455
    %v4520 = vpack.c.b16 %v4458, %v4457
    %v4521 = vpack.c.b16 %v4460, %v4459
    %v4522 = vpack.c.b16 %v4462, %v4461
    %v4523 = vpack.c.b16 %v4464, %v4463
    %v4524 = vpack.c.b16 %v4466, %v4465
    %v4525 = vpack.c.b16 %v4468, %v4467
    %v4526 = vpack.c.b16 %v4470, %v4469
    %v4527 = vpack.c.b16 %v4472, %v4471
    %v4528 = vpack.c.b16 %v4474, %v4473
    %v4529 = vpack.c.b16 %v4476, %v4475
    %v4530 = vpack.c.b16 %v4478, %v4477
    %v4531 = vpack.c.b16 %v4480, %v4479
    %v4532 = vpack.c.b16 %v4482, %v4481
    %v4533 = vpack.c.b16 %v4484, %v4483
    %v4534 = vpack.c.b16 %v4486, %v4485
    %v4535 = vpack.c.b16 %v4488, %v4487
    %v4536 = vpack.c.b16 %v4490, %v4489
    %v4537 = vpack.c.b16 %v4492, %v4491
    %v4538 = vpack.c.b16 %v4494, %v4493
    %v4539 = vpack.c.b16 %v4496, %v4495
    %v4540 = vpack.c.b16 %v4498, %v4497
    %v4541 = vpack.c.b16 %v4500, %v4499
    %v4542 = vpack.c.b16 %v4502, %v4501
    %v4543 = vpack.c.b16 %v4504, %v4503
    %v4544 = vpack.c.b16 %v4506, %v4505
    %v4545 = vpack.c.b16 %v4508, %v4507
    %v4546 = vpack.c.b16 %v4510, %v4509
    %v4547 = vpack.c.b16 %v4512, %v4511
    %v4548 = vpack.c.b16 %v4514, %v4513
    %v4549 = vpack.c.b16 %v4516, %v4515
    %v4550 = vpack.c.b16 %v4517, %v4517
    %v4584 = vsel %vm215, %v4337, 0
    %v4587 = vsel %vm215, %v4347, 0
    %v4590 = vsel %vm215, %v4357, 0
    %v4593 = vsel %vm215, %v4367, 0
    %v4596 = vsel %vm215, %v4366, 0
    %v4599 = vand.u32 %v4550, %v1007
    %4601 = vmatprep.subr.bf16.mxu0 0
    %4602 = vmatpush1.bf16.msra.mxu0 %v4525
    %4603 = vmatprep.subr.bf16.mxu0 0
    %4604 = vmatpush1.bf16.msra.mxu0 %v4524
    %4605 = vmatprep.subr.bf16.mxu0 0
    %4606 = vmatpush1.bf16.msra.mxu0 %v4523
    %4607 = vmatprep.subr.bf16.mxu0 0
    %4608 = vmatpush1.bf16.msra.mxu0 %v4522
    %4609 = vmatprep.subr.bf16.mxu0 0
    %4610 = vmatpush1.bf16.msra.mxu0 %v4521
    %4611 = vmatprep.subr.bf16.mxu0 0
    %4612 = vmatpush1.bf16.msra.mxu0 %v4520
    %4613 = vmatprep.subr.bf16.mxu0 0
    %4614 = vmatpush1.bf16.msra.mxu0 %v4519
    %4615 = vmatprep.subr.bf16.mxu0 0
    %4616 = vmatpush1.bf16.msra.mxu0 %v4518
    %4617 = vmatprep.subr.bf16.mxu0 0
    %4618 = vmatpush2.bf16.msra.mxu0 %v4533
    %4619 = vmatprep.subr.bf16.mxu0 0
    %4620 = vmatpush2.bf16.msra.mxu0 %v4532
    %4621 = vmatprep.subr.bf16.mxu0 0
    %4622 = vmatpush2.bf16.msra.mxu0 %v4531
    %4623 = vmatprep.subr.bf16.mxu0 0
    %4624 = vmatpush2.bf16.msra.mxu0 %v4530
    %4625 = vmatprep.subr.bf16.mxu0 0
    %4626 = vmatpush2.bf16.msra.mxu0 %v4529
    %4627 = vmatprep.subr.bf16.mxu0 0
    %4628 = vmatpush2.bf16.msra.mxu0 %v4528
    %4629 = vmatprep.subr.bf16.mxu0 0
    %4630 = vmatpush2.bf16.msra.mxu0 %v4527
    %4631 = vmatprep.subr.bf16.mxu0 0
    %4632 = vmatpush2.bf16.msra.mxu0 %v4526
    %4633 = vmatprep.mubr.bf16.mxu0 %v4328
    %4634 = vmatmul.mubr.bf16.gmra.mxu0 %v4325
    %v4635 = vpop.f32.mrf.mxu0
    %v4636 = vadd.f32 0.0, %v4635
    %v4637 = vpop.f32.mrf.mxu0
    %v4638 = vpop.f32.mrf.mxu0
    %v4639 = vadd.f32 0.0, %v4638
    %v4640 = vpop.f32.mrf.mxu0
    %4641 = vmatprep.mubr.bf16.mxu0 %v4341
    %4642 = vmatmul.mubr.bf16.gmra.mxu0 %v4339
    %v4643 = vpop.f32.mrf.mxu0
    %v4644 = vadd.f32 0.0, %v4643
    %v4645 = vpop.f32.mrf.mxu0
    %v4646 = vpop.f32.mrf.mxu0
    %v4647 = vadd.f32 0.0, %v4646
    %v4648 = vpop.f32.mrf.mxu0
    %4649 = vmatprep.mubr.bf16.mxu0 %v4351
    %4650 = vmatmul.mubr.bf16.gmra.mxu0 %v4349
    %v4651 = vpop.f32.mrf.mxu0
    %v4652 = vpop.f32.mrf.mxu0
    %v4653 = vpop.f32.mrf.mxu0
    %v4654 = vadd.f32 0.0, %v4653
    %v4655 = vpop.f32.mrf.mxu0
    %4656 = vmatprep.mubr.bf16.mxu0 %v4361
    %4657 = vmatmul.mubr.bf16.gmra.mxu0 %v4359
    %v4658 = vpop.f32.mrf.mxu0
    %v4659 = vadd.f32 0.0, %v4658
    %v4660 = vpop.f32.mrf.mxu0
    %v4661 = vpop.f32.mrf.mxu0
    %v4662 = vadd.f32 0.0, %v4661
    %v4663 = vpop.f32.mrf.mxu0
    %4664 = vmatprep.mubr.bf16.mxu0 %v4360
    %4665 = vmatmul.mubr.bf16.gmra.mxu0 %v4358
    %v4666 = vpop.f32.mrf.mxu0
    %v4667 = vadd.f32 0.0, %v4666
    %v4668 = vpop.f32.mrf.mxu0
    %v4669 = vpop.f32.mrf.mxu0
    %v4670 = vpop.f32.mrf.mxu0
    %4671 = vdwg.mxu0
    %4672 = vmatprep.subr.bf16.mxu0 0
    %4673 = vmatpush1.bf16.msra.mxu0 %v4541
    %4674 = vmatprep.subr.bf16.mxu0 0
    %4675 = vmatpush1.bf16.msra.mxu0 %v4540
    %4676 = vmatprep.subr.bf16.mxu0 0
    %4677 = vmatpush1.bf16.msra.mxu0 %v4539
    %4678 = vmatprep.subr.bf16.mxu0 0
    %4679 = vmatpush1.bf16.msra.mxu0 %v4538
    %4680 = vmatprep.subr.bf16.mxu0 0
    %4681 = vmatpush1.bf16.msra.mxu0 %v4537
    %4682 = vmatprep.subr.bf16.mxu0 0
    %4683 = vmatpush1.bf16.msra.mxu0 %v4536
    %4684 = vmatprep.subr.bf16.mxu0 0
    %4685 = vmatpush1.bf16.msra.mxu0 %v4535
    %4686 = vmatprep.subr.bf16.mxu0 0
    %4687 = vmatpush1.bf16.msra.mxu0 %v4534
    %4688 = vmatprep.subr.bf16.mxu0 0
    %4689 = vmatpush2.bf16.msra.mxu0 %v4549
    %4690 = vmatprep.subr.bf16.mxu0 0
    %4691 = vmatpush2.bf16.msra.mxu0 %v4548
    %4692 = vmatprep.subr.bf16.mxu0 0
    %4693 = vmatpush2.bf16.msra.mxu0 %v4547
    %4694 = vmatprep.subr.bf16.mxu0 0
    %4695 = vmatpush2.bf16.msra.mxu0 %v4546
    %4696 = vmatprep.subr.bf16.mxu0 0
    %4697 = vmatpush2.bf16.msra.mxu0 %v4545
    %4698 = vmatprep.subr.bf16.mxu0 0
    %4699 = vmatpush2.bf16.msra.mxu0 %v4544
    %4700 = vmatprep.subr.bf16.mxu0 0
    %4701 = vmatpush2.bf16.msra.mxu0 %v4543
    %4702 = vmatprep.subr.bf16.mxu0 0
    %4703 = vmatpush2.bf16.msra.mxu0 %v4542
    %4704 = vmatprep.mubr.bf16.mxu0 %v4334
    %4705 = vmatmul.mubr.bf16.gmra.mxu0 %v4331
    %v4706 = vpop.f32.mrf.mxu0
    %v4707 = vadd.f32 %v4636, %v4706
    %v4708 = vpop.f32.mrf.mxu0
    %v4709 = vpop.f32.mrf.mxu0
    %v4710 = vadd.f32 %v4639, %v4709
    %v4711 = vpop.f32.mrf.mxu0
    %4712 = vmatprep.mubr.bf16.mxu0 %v4345
    %4713 = vmatmul.mubr.bf16.gmra.mxu0 %v4343
    %v4714 = vpop.f32.mrf.mxu0
    %v4715 = vadd.f32 %v4644, %v4714
    %v4716 = vpop.f32.mrf.mxu0
    %v4717 = vpop.f32.mrf.mxu0
    %v4718 = vadd.f32 %v4647, %v4717
    %v4719 = vpop.f32.mrf.mxu0
    %4720 = vmatprep.mubr.bf16.mxu0 %v4355
    %4721 = vmatmul.mubr.bf16.gmra.mxu0 %v4353
    %v4722 = vpop.f32.mrf.mxu0
    %v4723 = vpop.f32.mrf.mxu0
    %v4724 = vpop.f32.mrf.mxu0
    %v4725 = vadd.f32 %v4654, %v4724
    %v4726 = vpop.f32.mrf.mxu0
    %4727 = vmatprep.mubr.bf16.mxu0 %v4365
    %4728 = vmatmul.mubr.bf16.gmra.mxu0 %v4363
    %v4729 = vpop.f32.mrf.mxu0
    %v4730 = vadd.f32 %v4659, %v4729
    %v4731 = vpop.f32.mrf.mxu0
    %v4732 = vpop.f32.mrf.mxu0
    %v4733 = vadd.f32 %v4662, %v4732
    %v4734 = vpop.f32.mrf.mxu0
    %4735 = vmatprep.mubr.bf16.mxu0 %v4364
    %4736 = vmatmul.mubr.bf16.gmra.mxu0 %v4362
    %v4737 = vpop.f32.mrf.mxu0
    %v4738 = vadd.f32 %v4667, %v4737
    %v4739 = vpop.f32.mrf.mxu0
    %v4740 = vpop.f32.mrf.mxu0
    %v4741 = vpop.f32.mrf.mxu0
    %4742 = vdwg.mxu0
    %4743 = vmatprep.subr.bf16.mxu0 0
    %4744 = vmatpush1.bf16.msra.mxu0 0
    %4745 = vmatprep.subr.bf16.mxu0 0
    %4746 = vmatpush1.bf16.msra.mxu0 0
    %4747 = vmatprep.subr.bf16.mxu0 0
    %4748 = vmatpush1.bf16.msra.mxu0 0
    %4749 = vmatprep.subr.bf16.mxu0 0
    %4750 = vmatpush1.bf16.msra.mxu0 0
    %4751 = vmatprep.subr.bf16.mxu0 0
    %4752 = vmatpush1.bf16.msra.mxu0 0
    %4753 = vmatprep.subr.bf16.mxu0 0
    %4754 = vmatpush1.bf16.msra.mxu0 0
    %4755 = vmatprep.subr.bf16.mxu0 0
    %4756 = vmatpush1.bf16.msra.mxu0 0
    %4757 = vmatprep.subr.bf16.mxu0 0
    %4758 = vmatpush1.bf16.msra.mxu0 %v4599
    %4759 = vmatprep.subr.bf16.mxu0 0
    %4760 = vmatpush2.bf16.msra.mxu0 0
    %4761 = vmatprep.subr.bf16.mxu0 0
    %4762 = vmatpush2.bf16.msra.mxu0 0
    %4763 = vmatprep.subr.bf16.mxu0 0
    %4764 = vmatpush2.bf16.msra.mxu0 0
    %4765 = vmatprep.subr.bf16.mxu0 0
    %4766 = vmatpush2.bf16.msra.mxu0 0
    %4767 = vmatprep.subr.bf16.mxu0 0
    %4768 = vmatpush2.bf16.msra.mxu0 0
    %4769 = vmatprep.subr.bf16.mxu0 0
    %4770 = vmatpush2.bf16.msra.mxu0 0
    %4771 = vmatprep.subr.bf16.mxu0 0
    %4772 = vmatpush2.bf16.msra.mxu0 0
    %4773 = vmatprep.subr.bf16.mxu0 0
    %4774 = vmatpush2.bf16.msra.mxu0 0
    %4775 = vmatprep.mubr.bf16.mxu0 0
    %4776 = vmatmul.mubr.bf16.gmra.mxu0 %v4584
    %v4777 = vpop.f32.mrf.mxu0
    %v4778 = vadd.f32 %v4707, %v4777
    %v4779 = vpop.f32.mrf.mxu0
    %v4780 = vpop.f32.mrf.mxu0
    %v4781 = vadd.f32 %v4710, %v4780
    %v4782 = vpop.f32.mrf.mxu0
    %4783 = vmatprep.mubr.bf16.mxu0 0
    %4784 = vmatmul.mubr.bf16.gmra.mxu0 %v4587
    %v4785 = vpop.f32.mrf.mxu0
    %v4786 = vadd.f32 %v4715, %v4785
    %v4787 = vpop.f32.mrf.mxu0
    %v4788 = vpop.f32.mrf.mxu0
    %v4789 = vadd.f32 %v4718, %v4788
    %v4790 = vpop.f32.mrf.mxu0
    %4791 = vmatprep.mubr.bf16.mxu0 0
    %4792 = vmatmul.mubr.bf16.gmra.mxu0 %v4590
    %v4793 = vpop.f32.mrf.mxu0
    %v4794 = vpop.f32.mrf.mxu0
    %v4795 = vpop.f32.mrf.mxu0
    %v4796 = vadd.f32 %v4725, %v4795
    %v4797 = vpop.f32.mrf.mxu0
    %4798 = vmatprep.mubr.bf16.mxu0 0
    %4799 = vmatmul.mubr.bf16.gmra.mxu0 %v4593
    %v4800 = vpop.f32.mrf.mxu0
    %v4801 = vadd.f32 %v4730, %v4800
    %v4802 = vpop.f32.mrf.mxu0
    %v4803 = vpop.f32.mrf.mxu0
    %v4804 = vadd.f32 %v4733, %v4803
    %v4805 = vpop.f32.mrf.mxu0
    %4806 = vmatprep.mubr.bf16.mxu0 0
    %4807 = vmatmul.mubr.bf16.gmra.mxu0 %v4596
    %v4808 = vpop.f32.mrf.mxu0
    %v4809 = vadd.f32 %v4738, %v4808
    %v4810 = vpop.f32.mrf.mxu0
    %v4811 = vpop.f32.mrf.mxu0
    %v4812 = vpop.f32.mrf.mxu0
    %4813 = vdwg.mxu0
    %v4814 = vadd.f32 %v4218, %v4778
    %v4815 = vadd.f32 %v4219, %v4781
    %v4816 = vadd.f32 %v4220, %v4786
    %v4817 = vadd.f32 %v4221, %v4789
    %v4818 = vadd.f32 %v4222, %v4796
    %v4819 = vadd.f32 %v4223, %v4801
    %v4820 = vadd.f32 %v4224, %v4804
    %v4821 = vadd.f32 %v4225, %v4809
    %4822 = vst [vmem:[#allocation3] sm:$0x7] 0.0
    %4823 = vst [vmem:[#allocation3 + $0x23] sm:$0x1f] 0.0
    %4824 = vst [vmem:[#allocation3 + $0x28] sm:$0x7] 0.0
    %4825 = vst [vmem:[#allocation3 + $0x4b] sm:$0x1f] 0.0
    %v4826 = vld [vmem:[%s2] sm:$0x1]
    %v4828 = vlaneseq
    %v4829 = vshrl.u32 %v4828, 7
    %v4830 = vsub.s32 0, %v4829
    %v4831 = vrot.slane %v4826, %v4830
    %v4833 = vadd.f32 %v4814, %v4831
    %v4834 = vadd.f32 %v4815, %v4831
    %v4835 = vadd.f32 %v4816, %v4831
    %v4836 = vadd.f32 %v4817, %v4831
    %v4837 = vmax.f32 %v4833, 0.0
    %v4838 = vmax.f32 %v4834, 0.0
    %v4839 = vmax.f32 %v4835, 0.0
    %v4840 = vmax.f32 %v4836, 0.0
    %4841 = vst [vmem:[#allocation3 + $0x3] sm:$0xff] %v4837
    %4842 = vst [vmem:[#allocation3 + $0xb] sm:$0xff] %v4838
    %4843 = vst [vmem:[#allocation3 + $0x13] sm:$0xff] %v4839
    %4844 = vst [vmem:[#allocation3 + $0x1b] sm:$0xff] %v4840
    %v4845 = vld [vmem:[%s2] sm:$0x1]
    %v4847 = vlaneseq
    %v4848 = vshrl.u32 %v4847, 7
    %v4849 = vsub.s32 0, %v4848
    %v4850 = vrot.slane %v4845, %v4849
    %v4852 = vadd.f32 %v4818, %v4850
    %v4853 = vadd.f32 %v4819, %v4850
    %v4854 = vadd.f32 %v4820, %v4850
    %v4855 = vadd.f32 %v4821, %v4850
    %v4856 = vmax.f32 %v4852, 0.0
    %v4857 = vmax.f32 %v4853, 0.0
    %v4858 = vmax.f32 %v4854, 0.0
    %v4859 = vmax.f32 %v4855, 0.0
    %4860 = vst [vmem:[#allocation3 + $0x2b] sm:$0xff] %v4856
    %4861 = vst [vmem:[#allocation3 + $0x33] sm:$0xff] %v4857
    %4862 = vst [vmem:[#allocation3 + $0x3b] sm:$0xff] %v4858
    %4863 = vst [vmem:[#allocation3 + $0x43] sm:$0xff] %v4859
    %v4864 = vld [vmem:[#allocation11] sm:$0xf]
    %v4865 = vld [vmem:[#allocation11 + $0x4] sm:$0xf]
    %v4866 = vld [vmem:[#allocation11 + $0x8] sm:$0xf]
    %v4867 = vld [vmem:[#allocation11 + $0xc] sm:$0xf]
    %v4868 = vld [vmem:[#allocation11 + $0x10] sm:$0xf]
    %v4869 = vld [vmem:[#allocation11 + $0x14] sm:$0xf]
    %v4870 = vld [vmem:[#allocation11 + $0x18] sm:$0xf]
    %v4871 = vld [vmem:[#allocation11 + $0x1c] sm:$0xf]
    %v4872 = vld [vmem:[#allocation11 + $0x20] sm:$0xf]
    %v4873 = vld [vmem:[#allocation11 + $0x24] sm:$0xf]
    %v4874 = vld [vmem:[#allocation11 + $0x28] sm:$0xf]
    %v4875 = vld [vmem:[#allocation11 + $0x2c] sm:$0xf]
    %v4876 = vld [vmem:[#allocation11 + $0x30] sm:$0xf]
    %v4877 = vld [vmem:[#allocation11 + $0x34] sm:$0xf]
    %v4878 = vld [vmem:[#allocation11 + $0x38] sm:$0xf]
    %v4879 = vld [vmem:[#allocation11 + $0x3c] sm:$0xf]
    %v4880 = vld [vmem:[#allocation11 + $0x40] sm:$0xf]
    %v4881 = vld [vmem:[#allocation11 + $0x44] sm:$0xf]
    %v4882 = vld [vmem:[#allocation11 + $0x48] sm:$0xf]
    %v4883 = vld [vmem:[#allocation11 + $0x4c] sm:$0xf]
    %v4884 = vld [vmem:[#allocation11 + $0x50] sm:$0xf]
    %v4885 = vld [vmem:[#allocation11 + $0x54] sm:$0xf]
    %v4886 = vld [vmem:[#allocation11 + $0x58] sm:$0xf]
    %v4887 = vld [vmem:[#allocation11 + $0x5c] sm:$0xf]
    %v4888 = vld [vmem:[#allocation11 + $0x60] sm:$0xf]
    %v4889 = vld [vmem:[#allocation11 + $0x64] sm:$0xf]
    %v4890 = vld [vmem:[#allocation11 + $0x68] sm:$0xf]
    %v4891 = vld [vmem:[#allocation11 + $0x6c] sm:$0xf]
    %v4892 = vld [vmem:[#allocation11 + $0x70] sm:$0xf]
    %v4893 = vld [vmem:[#allocation11 + $0x74] sm:$0xf]
    %v4894 = vld [vmem:[#allocation11 + $0x78] sm:$0xf]
    %v4895 = vld [vmem:[#allocation11 + $0x7c] sm:$0xf]
    %v4896 = vld [vmem:[#allocation11 + $0x80] sm:$0xf]
    %v4897 = vld [vmem:[#allocation11 + $0x84] sm:$0xf]
    %v4898 = vld [vmem:[#allocation11 + $0x88] sm:$0xf]
    %v4899 = vld [vmem:[#allocation11 + $0x8c] sm:$0xf]
    %v4900 = vld [vmem:[#allocation11 + $0x90] sm:$0xf]
    %v4901 = vld [vmem:[#allocation11 + $0x94] sm:$0xf]
    %v4902 = vld [vmem:[#allocation11 + $0x98] sm:$0xf]
    %v4903 = vld [vmem:[#allocation11 + $0x9c] sm:$0xf]
    %v4904 = vld [vmem:[#allocation11 + $0xa0] sm:$0xf]
    %v4905 = vld [vmem:[#allocation11 + $0xa4] sm:$0xf]
    %v4906 = vld [vmem:[#allocation11 + $0xa8] sm:$0xf]
    %v4907 = vld [vmem:[#allocation11 + $0xac] sm:$0xf]
    %v4908 = vld [vmem:[#allocation11 + $0xb0] sm:$0xf]
    %v4909 = vld [vmem:[#allocation11 + $0xb4] sm:$0xf]
    %v4910 = vld [vmem:[#allocation11 + $0xb8] sm:$0xf]
    %v4911 = vld [vmem:[#allocation11 + $0xbc] sm:$0xf]
    %v4912 = vld [vmem:[#allocation11 + $0xc0] sm:$0xf]
    %v4913 = vld [vmem:[#allocation11 + $0xc4] sm:$0xf]
    %v4914 = vld [vmem:[#allocation11 + $0xc8] sm:$0xf]
    %v4915 = vld [vmem:[#allocation11 + $0xcc] sm:$0xf]
    %v4916 = vld [vmem:[#allocation11 + $0xd0] sm:$0xf]
    %v4917 = vld [vmem:[#allocation11 + $0xd4] sm:$0xf]
    %v4918 = vld [vmem:[#allocation11 + $0xd8] sm:$0xf]
    %v4919 = vld [vmem:[#allocation11 + $0xdc] sm:$0xf]
    %v4920 = vld [vmem:[#allocation11 + $0xe0] sm:$0xf]
    %v4921 = vld [vmem:[#allocation11 + $0xe4] sm:$0xf]
    %v4922 = vld [vmem:[#allocation11 + $0xe8] sm:$0xf]
    %v4923 = vld [vmem:[#allocation11 + $0xec] sm:$0xf]
    %v4924 = vld [vmem:[#allocation11 + $0xf0] sm:$0xf]
    %v4925 = vld [vmem:[#allocation11 + $0xf4] sm:$0xf]
    %v4926 = vld [vmem:[#allocation11 + $0xf8] sm:$0xf]
    %v4927 = vld [vmem:[#allocation11 + $0xfc] sm:$0xf]
    %v4928 = vld [vmem:[#allocation11 + $0x100] sm:$0xf]
    %v4929 = vld [vmem:[#allocation11 + $0x104] sm:$0xf]
    %v4930 = vld [vmem:[#allocation11 + $0x108] sm:$0xf]
    %v4931 = vld [vmem:[#allocation11 + $0x10c] sm:$0xf]
    %v4932 = vld [vmem:[#allocation11 + $0x110] sm:$0xf]
    %v4933 = vld [vmem:[#allocation11 + $0x114] sm:$0xf]
    %v4934 = vld [vmem:[#allocation11 + $0x118] sm:$0xf]
    %v4935 = vld [vmem:[#allocation11 + $0x11c] sm:$0xf]
    %v4936 = vld [vmem:[#allocation11 + $0x120] sm:$0xf]
    %v4937 = vld [vmem:[#allocation11 + $0x124] sm:$0xf]
    %v4938 = vld [vmem:[#allocation11 + $0x128] sm:$0xf]
    %v4939 = vld [vmem:[#allocation11 + $0x12c] sm:$0xf]
    %v4940 = vld [vmem:[#allocation11 + $0x130] sm:$0xf]
    %v4941 = vld [vmem:[#allocation11 + $0x134] sm:$0xf]
    %v4942 = vld [vmem:[#allocation11 + $0x138] sm:$0xf]
    %v4943 = vld [vmem:[#allocation11 + $0x13c] sm:$0xf]
    %v4944 = vld [vmem:[#allocation11 + $0x140] sm:$0xf]
    %v4945 = vld [vmem:[#allocation11 + $0x144] sm:$0xf]
    %v4946 = vld [vmem:[#allocation11 + $0x148] sm:$0xf]
    %v4947 = vld [vmem:[#allocation11 + $0x14c] sm:$0xf]
    %v4948 = vld [vmem:[#allocation11 + $0x150] sm:$0xf]
    %v4949 = vld [vmem:[#allocation11 + $0x154] sm:$0xf]
    %v4950 = vld [vmem:[#allocation11 + $0x158] sm:$0xf]
    %v4951 = vld [vmem:[#allocation11 + $0x15c] sm:$0xf]
    %v4952 = vld [vmem:[#allocation11 + $0x160] sm:$0xf]
    %v4953 = vld [vmem:[#allocation11 + $0x164] sm:$0xf]
    %v4954 = vld [vmem:[#allocation11 + $0x168] sm:$0xf]
    %v4955 = vld [vmem:[#allocation11 + $0x16c] sm:$0xf]
    %v4956 = vld [vmem:[#allocation11 + $0x170] sm:$0xf]
    %v4957 = vld [vmem:[#allocation11 + $0x174] sm:$0xf]
    %v4958 = vld [vmem:[#allocation11 + $0x178] sm:$0xf]
    %v4959 = vld [vmem:[#allocation11 + $0x17c] sm:$0xf]
    %v4960 = vld [vmem:[#allocation11 + $0x180] sm:$0xf]
    %v4961 = vld [vmem:[#allocation11 + $0x184] sm:$0xf]
    %v4962 = vld [vmem:[#allocation11 + $0x188] sm:$0xf]
    %v4963 = vld [vmem:[#allocation11 + $0x18c] sm:$0xf]
    %v4964 = vld [vmem:[#allocation11 + $0x190] sm:$0xf]
    %v4965 = vld [vmem:[#allocation11 + $0x194] sm:$0xf]
    %v4966 = vld [vmem:[#allocation11 + $0x198] sm:$0xf]
    %v4967 = vld [vmem:[#allocation11 + $0x19c] sm:$0xf]
    %v4968 = vld [vmem:[#allocation11 + $0x1a0] sm:$0xf]
    %v4969 = vld [vmem:[#allocation11 + $0x1a4] sm:$0xf]
    %v4970 = vld [vmem:[#allocation11 + $0x1a8] sm:$0xf]
    %v4971 = vld [vmem:[#allocation11 + $0x1ac] sm:$0xf]
    %v4972 = vld [vmem:[#allocation11 + $0x1b0] sm:$0xf]
    %v4973 = vld [vmem:[#allocation11 + $0x1b4] sm:$0xf]
    %v4974 = vld [vmem:[#allocation11 + $0x1b8] sm:$0xf]
    %v4975 = vld [vmem:[#allocation11 + $0x1bc] sm:$0xf]
    %v4976 = vld [vmem:[#allocation3] ss:$2 sm:$0xff]
    %s4977 = scalar_lea.vmem [#allocation3], 16
    %v4978 = vld [vmem:[%s4977] ss:$2 sm:$0xff]
    %s4979 = scalar_lea.vmem [#allocation3], 32
    %v4980 = vld [vmem:[%s4979] ss:$2 sm:$0xff]
    %s4981 = scalar_lea.vmem [#allocation3], 48
    %v4982 = vld [vmem:[%s4981] ss:$2 sm:$0xff]
    %s4983 = scalar_lea.vmem [#allocation3], 64
    %v4984 = vld [vmem:[%s4983] ss:$2 sm:$0xf]
    %s4985 = scalar_lea.vmem [#allocation3], 1
    %v4986 = vld [vmem:[%s4985] ss:$2 sm:$0xff]
    %s4987 = scalar_lea.vmem [#allocation3], 17
    %v4988 = vld [vmem:[%s4987] ss:$2 sm:$0xff]
    %s4989 = scalar_lea.vmem [#allocation3], 33
    %v4990 = vld [vmem:[%s4989] ss:$2 sm:$0xff]
    %s4991 = scalar_lea.vmem [#allocation3], 49
    %v4992 = vld [vmem:[%s4991] ss:$2 sm:$0xff]
    %s4993 = scalar_lea.vmem [#allocation3], 65
    %v4994 = vld [vmem:[%s4993] ss:$2 sm:$0xf]
    %s4995 = scalar_lea.vmem [#allocation3], 2
    %v4996 = vld [vmem:[%s4995] ss:$2 sm:$0xff]
    %s4997 = scalar_lea.vmem [#allocation3], 18
    %v4998 = vld [vmem:[%s4997] ss:$2 sm:$0xff]
    %s4999 = scalar_lea.vmem [#allocation3], 34
    %v5000 = vld [vmem:[%s4999] ss:$2 sm:$0xff]
    %s5001 = scalar_lea.vmem [#allocation3], 50
    %v5002 = vld [vmem:[%s5001] ss:$2 sm:$0xff]
    %s5003 = scalar_lea.vmem [#allocation3], 66
    %v5004 = vld [vmem:[%s5003] ss:$2 sm:$0xf]
    %s5005 = scalar_lea.vmem [#allocation3], 3
    %v5006 = vld [vmem:[%s5005] ss:$2 sm:$0xff]
    %s5007 = scalar_lea.vmem [#allocation3], 19
    %v5008 = vld [vmem:[%s5007] ss:$2 sm:$0xff]
    %s5009 = scalar_lea.vmem [#allocation3], 35
    %v5010 = vld [vmem:[%s5009] ss:$2 sm:$0xff]
    %s5011 = scalar_lea.vmem [#allocation3], 51
    %v5012 = vld [vmem:[%s5011] ss:$2 sm:$0xff]
    %s5013 = scalar_lea.vmem [#allocation3], 67
    %v5014 = vld [vmem:[%s5013] ss:$2 sm:$0xf]
    %s5015 = scalar_lea.vmem [#allocation3], 4
    %v5016 = vld [vmem:[%s5015] ss:$2 sm:$0xff]
    %s5017 = scalar_lea.vmem [#allocation3], 20
    %v5018 = vld [vmem:[%s5017] ss:$2 sm:$0xff]
    %s5019 = scalar_lea.vmem [#allocation3], 36
    %v5020 = vld [vmem:[%s5019] ss:$2 sm:$0xff]
    %s5021 = scalar_lea.vmem [#allocation3], 52
    %v5022 = vld [vmem:[%s5021] ss:$2 sm:$0xff]
    %s5023 = scalar_lea.vmem [#allocation3], 68
    %v5024 = vld [vmem:[%s5023] ss:$2 sm:$0xf]
    %s5025 = scalar_lea.vmem [#allocation3], 5
    %v5026 = vld [vmem:[%s5025] ss:$2 sm:$0xff]
    %s5027 = scalar_lea.vmem [#allocation3], 21
    %v5028 = vld [vmem:[%s5027] ss:$2 sm:$0xff]
    %s5029 = scalar_lea.vmem [#allocation3], 37
    %v5030 = vld [vmem:[%s5029] ss:$2 sm:$0xff]
    %s5031 = scalar_lea.vmem [#allocation3], 53
    %v5032 = vld [vmem:[%s5031] ss:$2 sm:$0xff]
    %s5033 = scalar_lea.vmem [#allocation3], 69
    %v5034 = vld [vmem:[%s5033] ss:$2 sm:$0xf]
    %s5035 = scalar_lea.vmem [#allocation3], 6
    %v5036 = vld [vmem:[%s5035] ss:$2 sm:$0xff]
    %s5037 = scalar_lea.vmem [#allocation3], 22
    %v5038 = vld [vmem:[%s5037] ss:$2 sm:$0xff]
    %s5039 = scalar_lea.vmem [#allocation3], 38
    %v5040 = vld [vmem:[%s5039] ss:$2 sm:$0xff]
    %s5041 = scalar_lea.vmem [#allocation3], 54
    %v5042 = vld [vmem:[%s5041] ss:$2 sm:$0xff]
    %s5043 = scalar_lea.vmem [#allocation3], 70
    %v5044 = vld [vmem:[%s5043] ss:$2 sm:$0xf]
    %v5045 = vpack.c.bf16 %v4978, %v4976
    %v5046 = vpack.c.bf16 %v4988, %v4986
    %v5047 = vpack.c.bf16 %v4998, %v4996
    %v5048 = vpack.c.bf16 %v5008, %v5006
    %v5049 = vpack.c.bf16 %v5018, %v5016
    %v5050 = vpack.c.bf16 %v5028, %v5026
    %v5051 = vpack.c.bf16 %v5038, %v5036
    %v5052 = vpack.c.bf16 %v4982, %v4980
    %v5053 = vpack.c.bf16 %v4992, %v4990
    %v5054 = vpack.c.bf16 %v5002, %v5000
    %v5055 = vpack.c.bf16 %v5012, %v5010
    %v5056 = vpack.c.bf16 %v5022, %v5020
    %v5057 = vpack.c.bf16 %v5032, %v5030
    %v5058 = vpack.c.bf16 %v5042, %v5040
    %v5059 = vpack.c.bf16 %v4984, %v4984
    %v5060 = vpack.c.bf16 %v4994, %v4994
    %v5061 = vpack.c.bf16 %v5004, %v5004
    %v5062 = vpack.c.bf16 %v5014, %v5014
    %v5063 = vpack.c.bf16 %v5024, %v5024
    %v5064 = vpack.c.bf16 %v5034, %v5034
    %v5065 = vpack.c.bf16 %v5044, %v5044
    %v5178 = vunpack.c.l.b16 %v4864
    %v5179 = vunpack.c.l.b16 %v4865
    %v5180 = vunpack.c.l.b16 %v4866
    %v5181 = vunpack.c.l.b16 %v4867
    %v5182 = vunpack.c.l.b16 %v4868
    %v5183 = vunpack.c.l.b16 %v4869
    %v5184 = vunpack.c.l.b16 %v4870
    %v5185 = vunpack.c.l.b16 %v4871
    %v5186 = vunpack.c.l.b16 %v4872
    %v5187 = vunpack.c.l.b16 %v4873
    %v5188 = vunpack.c.l.b16 %v4874
    %v5189 = vunpack.c.l.b16 %v4875
    %v5190 = vunpack.c.l.b16 %v4876
    %v5191 = vunpack.c.l.b16 %v4877
    %v5192 = vunpack.c.l.b16 %v4878
    %v5193 = vunpack.c.l.b16 %v4879
    %v5194 = vunpack.c.l.b16 %v4880
    %v5195 = vunpack.c.l.b16 %v4881
    %v5196 = vunpack.c.l.b16 %v4882
    %v5197 = vunpack.c.l.b16 %v4883
    %v5198 = vunpack.c.l.b16 %v4884
    %v5199 = vunpack.c.l.b16 %v4885
    %v5200 = vunpack.c.l.b16 %v4886
    %v5201 = vunpack.c.l.b16 %v4887
    %v5202 = vunpack.c.l.b16 %v4888
    %v5203 = vunpack.c.l.b16 %v4889
    %v5204 = vunpack.c.l.b16 %v4890
    %v5205 = vunpack.c.l.b16 %v4891
    %v5206 = vunpack.c.l.b16 %v4892
    %v5207 = vunpack.c.l.b16 %v4893
    %v5208 = vunpack.c.l.b16 %v4894
    %v5209 = vunpack.c.l.b16 %v4895
    %v5210 = vunpack.c.l.b16 %v4896
    %v5211 = vunpack.c.l.b16 %v4897
    %v5212 = vunpack.c.l.b16 %v4898
    %v5213 = vunpack.c.l.b16 %v4899
    %v5214 = vunpack.c.l.b16 %v4900
    %v5215 = vunpack.c.l.b16 %v4901
    %v5216 = vunpack.c.l.b16 %v4902
    %v5217 = vunpack.c.l.b16 %v4903
    %v5218 = vunpack.c.l.b16 %v4904
    %v5219 = vunpack.c.l.b16 %v4905
    %v5220 = vunpack.c.l.b16 %v4906
    %v5221 = vunpack.c.l.b16 %v4907
    %v5222 = vunpack.c.l.b16 %v4908
    %v5223 = vunpack.c.l.b16 %v4909
    %v5224 = vunpack.c.l.b16 %v4910
    %v5225 = vunpack.c.l.b16 %v4911
    %v5226 = vunpack.c.l.b16 %v4912
    %v5227 = vunpack.c.l.b16 %v4913
    %v5228 = vunpack.c.l.b16 %v4914
    %v5229 = vunpack.c.l.b16 %v4915
    %v5230 = vunpack.c.l.b16 %v4916
    %v5231 = vunpack.c.l.b16 %v4917
    %v5232 = vunpack.c.l.b16 %v4918
    %v5233 = vunpack.c.l.b16 %v4919
    %v5234 = vunpack.c.l.b16 %v4920
    %v5235 = vunpack.c.l.b16 %v4921
    %v5236 = vunpack.c.l.b16 %v4922
    %v5237 = vunpack.c.l.b16 %v4923
    %v5238 = vunpack.c.l.b16 %v4924
    %v5239 = vunpack.c.l.b16 %v4925
    %v5240 = vunpack.c.l.b16 %v4926
    %v5241 = vunpack.c.l.b16 %v4927
    %v5242 = vunpack.c.l.b16 %v4928
    %v5243 = vunpack.c.l.b16 %v4929
    %v5244 = vunpack.c.l.b16 %v4930
    %v5245 = vunpack.c.l.b16 %v4931
    %v5246 = vunpack.c.l.b16 %v4932
    %v5247 = vunpack.c.l.b16 %v4933
    %v5248 = vunpack.c.l.b16 %v4934
    %v5249 = vunpack.c.l.b16 %v4935
    %v5250 = vunpack.c.l.b16 %v4936
    %v5251 = vunpack.c.l.b16 %v4937
    %v5252 = vunpack.c.l.b16 %v4938
    %v5253 = vunpack.c.l.b16 %v4939
    %v5254 = vunpack.c.l.b16 %v4940
    %v5255 = vunpack.c.l.b16 %v4941
    %v5256 = vunpack.c.l.b16 %v4942
    %v5257 = vunpack.c.l.b16 %v4943
    %v5258 = vunpack.c.l.b16 %v4944
    %v5259 = vunpack.c.l.b16 %v4945
    %v5260 = vunpack.c.l.b16 %v4946
    %v5261 = vunpack.c.l.b16 %v4947
    %v5262 = vunpack.c.l.b16 %v4948
    %v5263 = vunpack.c.l.b16 %v4949
    %v5264 = vunpack.c.l.b16 %v4950
    %v5265 = vunpack.c.l.b16 %v4951
    %v5266 = vunpack.c.l.b16 %v4952
    %v5267 = vunpack.c.l.b16 %v4953
    %v5268 = vunpack.c.l.b16 %v4954
    %v5269 = vunpack.c.l.b16 %v4955
    %v5270 = vunpack.c.l.b16 %v4956
    %v5271 = vunpack.c.l.b16 %v4957
    %v5272 = vunpack.c.l.b16 %v4958
    %v5273 = vunpack.c.l.b16 %v4959
    %v5274 = vunpack.c.l.b16 %v4960
    %v5275 = vunpack.c.l.b16 %v4961
    %v5276 = vunpack.c.l.b16 %v4962
    %v5277 = vunpack.c.l.b16 %v4963
    %v5278 = vunpack.c.l.b16 %v4964
    %v5279 = vunpack.c.l.b16 %v4965
    %v5280 = vunpack.c.l.b16 %v4966
    %v5281 = vunpack.c.l.b16 %v4967
    %v5282 = vunpack.c.l.b16 %v4968
    %v5283 = vunpack.c.l.b16 %v4969
    %v5284 = vunpack.c.l.b16 %v4970
    %v5285 = vunpack.c.l.b16 %v4971
    %v5286 = vunpack.c.l.b16 %v4972
    %v5287 = vunpack.c.l.b16 %v4973
    %v5288 = vunpack.c.l.b16 %v4974
    %v5289 = vunpack.c.l.b16 %v4975
    %v5290 = vpack.c.b16 %v5179, %v5178
    %v5291 = vpack.c.b16 %v5181, %v5180
    %v5292 = vpack.c.b16 %v5183, %v5182
    %v5293 = vpack.c.b16 %v5185, %v5184
    %v5294 = vpack.c.b16 %v5187, %v5186
    %v5295 = vpack.c.b16 %v5189, %v5188
    %v5296 = vpack.c.b16 %v5191, %v5190
    %v5297 = vpack.c.b16 %v5193, %v5192
    %v5298 = vpack.c.b16 %v5195, %v5194
    %v5299 = vpack.c.b16 %v5197, %v5196
    %v5300 = vpack.c.b16 %v5199, %v5198
    %v5301 = vpack.c.b16 %v5201, %v5200
    %v5302 = vpack.c.b16 %v5203, %v5202
    %v5303 = vpack.c.b16 %v5205, %v5204
    %v5304 = vpack.c.b16 %v5207, %v5206
    %v5305 = vpack.c.b16 %v5209, %v5208
    %v5306 = vpack.c.b16 %v5211, %v5210
    %v5307 = vpack.c.b16 %v5213, %v5212
    %v5308 = vpack.c.b16 %v5215, %v5214
    %v5309 = vpack.c.b16 %v5217, %v5216
    %v5310 = vpack.c.b16 %v5219, %v5218
    %v5311 = vpack.c.b16 %v5221, %v5220
    %v5312 = vpack.c.b16 %v5223, %v5222
    %v5313 = vpack.c.b16 %v5225, %v5224
    %v5314 = vpack.c.b16 %v5227, %v5226
    %v5315 = vpack.c.b16 %v5229, %v5228
    %v5316 = vpack.c.b16 %v5231, %v5230
    %v5317 = vpack.c.b16 %v5233, %v5232
    %v5318 = vpack.c.b16 %v5235, %v5234
    %v5319 = vpack.c.b16 %v5237, %v5236
    %v5320 = vpack.c.b16 %v5239, %v5238
    %v5321 = vpack.c.b16 %v5241, %v5240
    %v5322 = vpack.c.b16 %v5243, %v5242
    %v5323 = vpack.c.b16 %v5245, %v5244
    %v5324 = vpack.c.b16 %v5247, %v5246
    %v5325 = vpack.c.b16 %v5249, %v5248
    %v5326 = vpack.c.b16 %v5251, %v5250
    %v5327 = vpack.c.b16 %v5253, %v5252
    %v5328 = vpack.c.b16 %v5255, %v5254
    %v5329 = vpack.c.b16 %v5257, %v5256
    %v5330 = vpack.c.b16 %v5259, %v5258
    %v5331 = vpack.c.b16 %v5261, %v5260
    %v5332 = vpack.c.b16 %v5263, %v5262
    %v5333 = vpack.c.b16 %v5265, %v5264
    %v5334 = vpack.c.b16 %v5267, %v5266
    %v5335 = vpack.c.b16 %v5269, %v5268
    %v5336 = vpack.c.b16 %v5271, %v5270
    %v5337 = vpack.c.b16 %v5273, %v5272
    %v5338 = vpack.c.b16 %v5275, %v5274
    %v5339 = vpack.c.b16 %v5277, %v5276
    %v5340 = vpack.c.b16 %v5279, %v5278
    %v5341 = vpack.c.b16 %v5281, %v5280
    %v5342 = vpack.c.b16 %v5283, %v5282
    %v5343 = vpack.c.b16 %v5285, %v5284
    %v5344 = vpack.c.b16 %v5287, %v5286
    %v5345 = vpack.c.b16 %v5289, %v5288
    %5402 = vmatprep.subr.bf16.mxu0 0
    %5403 = vmatpush1.bf16.msra.mxu0 %v5297
    %5404 = vmatprep.subr.bf16.mxu0 0
    %5405 = vmatpush1.bf16.msra.mxu0 %v5296
    %5406 = vmatprep.subr.bf16.mxu0 0
    %5407 = vmatpush1.bf16.msra.mxu0 %v5295
    %5408 = vmatprep.subr.bf16.mxu0 0
    %5409 = vmatpush1.bf16.msra.mxu0 %v5294
    %5410 = vmatprep.subr.bf16.mxu0 0
    %5411 = vmatpush1.bf16.msra.mxu0 %v5293
    %5412 = vmatprep.subr.bf16.mxu0 0
    %5413 = vmatpush1.bf16.msra.mxu0 %v5292
    %5414 = vmatprep.subr.bf16.mxu0 0
    %5415 = vmatpush1.bf16.msra.mxu0 %v5291
    %5416 = vmatprep.subr.bf16.mxu0 0
    %5417 = vmatpush1.bf16.msra.mxu0 %v5290
    %5418 = vmatprep.subr.bf16.mxu0 0
    %5419 = vmatpush2.bf16.msra.mxu0 %v5305
    %5420 = vmatprep.subr.bf16.mxu0 0
    %5421 = vmatpush2.bf16.msra.mxu0 %v5304
    %5422 = vmatprep.subr.bf16.mxu0 0
    %5423 = vmatpush2.bf16.msra.mxu0 %v5303
    %5424 = vmatprep.subr.bf16.mxu0 0
    %5425 = vmatpush2.bf16.msra.mxu0 %v5302
    %5426 = vmatprep.subr.bf16.mxu0 0
    %5427 = vmatpush2.bf16.msra.mxu0 %v5301
    %5428 = vmatprep.subr.bf16.mxu0 0
    %5429 = vmatpush2.bf16.msra.mxu0 %v5300
    %5430 = vmatprep.subr.bf16.mxu0 0
    %5431 = vmatpush2.bf16.msra.mxu0 %v5299
    %5432 = vmatprep.subr.bf16.mxu0 0
    %5433 = vmatpush2.bf16.msra.mxu0 %v5298
    %5434 = vmatprep.mubr.bf16.mxu0 %v5046
    %5435 = vmatmul.mubr.bf16.gmra.mxu0 %v5045
    %v5436 = vpop.f32.mrf.mxu0
    %v5437 = vadd.f32 0.0, %v5436
    %v5438 = vpop.f32.mrf.mxu0
    %v5439 = vpop.f32.mrf.mxu0
    %v5440 = vadd.f32 0.0, %v5439
    %v5441 = vpop.f32.mrf.mxu0
    %5442 = vmatprep.mubr.bf16.mxu0 %v5053
    %5443 = vmatmul.mubr.bf16.gmra.mxu0 %v5052
    %v5444 = vpop.f32.mrf.mxu0
    %v5445 = vadd.f32 0.0, %v5444
    %v5446 = vpop.f32.mrf.mxu0
    %v5447 = vpop.f32.mrf.mxu0
    %v5448 = vadd.f32 0.0, %v5447
    %v5449 = vpop.f32.mrf.mxu0
    %5450 = vmatprep.mubr.bf16.mxu0 %v5060
    %5451 = vmatmul.mubr.bf16.gmra.mxu0 %v5059
    %v5452 = vpop.f32.mrf.mxu0
    %v5453 = vadd.f32 0.0, %v5452
    %v5454 = vpop.f32.mrf.mxu0
    %v5455 = vpop.f32.mrf.mxu0
    %v5456 = vpop.f32.mrf.mxu0
    %5457 = vdwg.mxu0
    %5458 = vmatprep.subr.bf16.mxu0 0
    %5459 = vmatpush1.bf16.msra.mxu0 %v5313
    %5460 = vmatprep.subr.bf16.mxu0 0
    %5461 = vmatpush1.bf16.msra.mxu0 %v5312
    %5462 = vmatprep.subr.bf16.mxu0 0
    %5463 = vmatpush1.bf16.msra.mxu0 %v5311
    %5464 = vmatprep.subr.bf16.mxu0 0
    %5465 = vmatpush1.bf16.msra.mxu0 %v5310
    %5466 = vmatprep.subr.bf16.mxu0 0
    %5467 = vmatpush1.bf16.msra.mxu0 %v5309
    %5468 = vmatprep.subr.bf16.mxu0 0
    %5469 = vmatpush1.bf16.msra.mxu0 %v5308
    %5470 = vmatprep.subr.bf16.mxu0 0
    %5471 = vmatpush1.bf16.msra.mxu0 %v5307
    %5472 = vmatprep.subr.bf16.mxu0 0
    %5473 = vmatpush1.bf16.msra.mxu0 %v5306
    %5474 = vmatprep.subr.bf16.mxu0 0
    %5475 = vmatpush2.bf16.msra.mxu0 %v5321
    %5476 = vmatprep.subr.bf16.mxu0 0
    %5477 = vmatpush2.bf16.msra.mxu0 %v5320
    %5478 = vmatprep.subr.bf16.mxu0 0
    %5479 = vmatpush2.bf16.msra.mxu0 %v5319
    %5480 = vmatprep.subr.bf16.mxu0 0
    %5481 = vmatpush2.bf16.msra.mxu0 %v5318
    %5482 = vmatprep.subr.bf16.mxu0 0
    %5483 = vmatpush2.bf16.msra.mxu0 %v5317
    %5484 = vmatprep.subr.bf16.mxu0 0
    %5485 = vmatpush2.bf16.msra.mxu0 %v5316
    %5486 = vmatprep.subr.bf16.mxu0 0
    %5487 = vmatpush2.bf16.msra.mxu0 %v5315
    %5488 = vmatprep.subr.bf16.mxu0 0
    %5489 = vmatpush2.bf16.msra.mxu0 %v5314
    %5490 = vmatprep.mubr.bf16.mxu0 %v5048
    %5491 = vmatmul.mubr.bf16.gmra.mxu0 %v5047
    %v5492 = vpop.f32.mrf.mxu0
    %v5493 = vadd.f32 %v5437, %v5492
    %v5494 = vpop.f32.mrf.mxu0
    %v5495 = vpop.f32.mrf.mxu0
    %v5496 = vadd.f32 %v5440, %v5495
    %v5497 = vpop.f32.mrf.mxu0
    %5498 = vmatprep.mubr.bf16.mxu0 %v5055
    %5499 = vmatmul.mubr.bf16.gmra.mxu0 %v5054
    %v5500 = vpop.f32.mrf.mxu0
    %v5501 = vadd.f32 %v5445, %v5500
    %v5502 = vpop.f32.mrf.mxu0
    %v5503 = vpop.f32.mrf.mxu0
    %v5504 = vadd.f32 %v5448, %v5503
    %v5505 = vpop.f32.mrf.mxu0
    %5506 = vmatprep.mubr.bf16.mxu0 %v5062
    %5507 = vmatmul.mubr.bf16.gmra.mxu0 %v5061
    %v5508 = vpop.f32.mrf.mxu0
    %v5509 = vadd.f32 %v5453, %v5508
    %v5510 = vpop.f32.mrf.mxu0
    %v5511 = vpop.f32.mrf.mxu0
    %v5512 = vpop.f32.mrf.mxu0
    %5513 = vdwg.mxu0
    %5514 = vmatprep.subr.bf16.mxu0 0
    %5515 = vmatpush1.bf16.msra.mxu0 %v5329
    %5516 = vmatprep.subr.bf16.mxu0 0
    %5517 = vmatpush1.bf16.msra.mxu0 %v5328
    %5518 = vmatprep.subr.bf16.mxu0 0
    %5519 = vmatpush1.bf16.msra.mxu0 %v5327
    %5520 = vmatprep.subr.bf16.mxu0 0
    %5521 = vmatpush1.bf16.msra.mxu0 %v5326
    %5522 = vmatprep.subr.bf16.mxu0 0
    %5523 = vmatpush1.bf16.msra.mxu0 %v5325
    %5524 = vmatprep.subr.bf16.mxu0 0
    %5525 = vmatpush1.bf16.msra.mxu0 %v5324
    %5526 = vmatprep.subr.bf16.mxu0 0
    %5527 = vmatpush1.bf16.msra.mxu0 %v5323
    %5528 = vmatprep.subr.bf16.mxu0 0
    %5529 = vmatpush1.bf16.msra.mxu0 %v5322
    %5530 = vmatprep.subr.bf16.mxu0 0
    %5531 = vmatpush2.bf16.msra.mxu0 %v5337
    %5532 = vmatprep.subr.bf16.mxu0 0
    %5533 = vmatpush2.bf16.msra.mxu0 %v5336
    %5534 = vmatprep.subr.bf16.mxu0 0
    %5535 = vmatpush2.bf16.msra.mxu0 %v5335
    %5536 = vmatprep.subr.bf16.mxu0 0
    %5537 = vmatpush2.bf16.msra.mxu0 %v5334
    %5538 = vmatprep.subr.bf16.mxu0 0
    %5539 = vmatpush2.bf16.msra.mxu0 %v5333
    %5540 = vmatprep.subr.bf16.mxu0 0
    %5541 = vmatpush2.bf16.msra.mxu0 %v5332
    %5542 = vmatprep.subr.bf16.mxu0 0
    %5543 = vmatpush2.bf16.msra.mxu0 %v5331
    %5544 = vmatprep.subr.bf16.mxu0 0
    %5545 = vmatpush2.bf16.msra.mxu0 %v5330
    %5546 = vmatprep.mubr.bf16.mxu0 %v5050
    %5547 = vmatmul.mubr.bf16.gmra.mxu0 %v5049
    %v5548 = vpop.f32.mrf.mxu0
    %v5549 = vadd.f32 %v5493, %v5548
    %v5550 = vpop.f32.mrf.mxu0
    %v5551 = vpop.f32.mrf.mxu0
    %v5552 = vadd.f32 %v5496, %v5551
    %v5553 = vpop.f32.mrf.mxu0
    %5554 = vmatprep.mubr.bf16.mxu0 %v5057
    %5555 = vmatmul.mubr.bf16.gmra.mxu0 %v5056
    %v5556 = vpop.f32.mrf.mxu0
    %v5557 = vadd.f32 %v5501, %v5556
    %v5558 = vpop.f32.mrf.mxu0
    %v5559 = vpop.f32.mrf.mxu0
    %v5560 = vadd.f32 %v5504, %v5559
    %v5561 = vpop.f32.mrf.mxu0
    %5562 = vmatprep.mubr.bf16.mxu0 %v5064
    %5563 = vmatmul.mubr.bf16.gmra.mxu0 %v5063
    %v5564 = vpop.f32.mrf.mxu0
    %v5565 = vadd.f32 %v5509, %v5564
    %v5566 = vpop.f32.mrf.mxu0
    %v5567 = vpop.f32.mrf.mxu0
    %v5568 = vpop.f32.mrf.mxu0
    %5569 = vdwg.mxu0
    %5570 = vmatprep.subr.bf16.mxu0 0
    %5571 = vmatpush1.bf16.msra.mxu0 %v5345
    %5572 = vmatprep.subr.bf16.mxu0 0
    %5573 = vmatpush1.bf16.msra.mxu0 %v5344
    %5574 = vmatprep.subr.bf16.mxu0 0
    %5575 = vmatpush1.bf16.msra.mxu0 %v5343
    %5576 = vmatprep.subr.bf16.mxu0 0
    %5577 = vmatpush1.bf16.msra.mxu0 %v5342
    %5578 = vmatprep.subr.bf16.mxu0 0
    %5579 = vmatpush1.bf16.msra.mxu0 %v5341
    %5580 = vmatprep.subr.bf16.mxu0 0
    %5581 = vmatpush1.bf16.msra.mxu0 %v5340
    %5582 = vmatprep.subr.bf16.mxu0 0
    %5583 = vmatpush1.bf16.msra.mxu0 %v5339
    %5584 = vmatprep.subr.bf16.mxu0 0
    %5585 = vmatpush1.bf16.msra.mxu0 %v5338
    %5586 = vmatprep.subr.bf16.mxu0 0
    %5587 = vmatpush2.bf16.msra.mxu0 0
    %5588 = vmatprep.subr.bf16.mxu0 0
    %5589 = vmatpush2.bf16.msra.mxu0 0
    %5590 = vmatprep.subr.bf16.mxu0 0
    %5591 = vmatpush2.bf16.msra.mxu0 0
    %5592 = vmatprep.subr.bf16.mxu0 0
    %5593 = vmatpush2.bf16.msra.mxu0 0
    %5594 = vmatprep.subr.bf16.mxu0 0
    %5595 = vmatpush2.bf16.msra.mxu0 0
    %5596 = vmatprep.subr.bf16.mxu0 0
    %5597 = vmatpush2.bf16.msra.mxu0 0
    %5598 = vmatprep.subr.bf16.mxu0 0
    %5599 = vmatpush2.bf16.msra.mxu0 0
    %5600 = vmatprep.subr.bf16.mxu0 0
    %5601 = vmatpush2.bf16.msra.mxu0 0
    %5602 = vmatprep.mubr.bf16.mxu0 0
    %5603 = vmatmul.mubr.bf16.gmra.mxu0 %v5051
    %v5604 = vpop.f32.mrf.mxu0
    %v5605 = vadd.f32 %v5549, %v5604
    %v5606 = vpop.f32.mrf.mxu0
    %v5607 = vpop.f32.mrf.mxu0
    %v5608 = vadd.f32 %v5552, %v5607
    %v5609 = vpop.f32.mrf.mxu0
    %5610 = vmatprep.mubr.bf16.mxu0 0
    %5611 = vmatmul.mubr.bf16.gmra.mxu0 %v5058
    %v5612 = vpop.f32.mrf.mxu0
    %v5613 = vadd.f32 %v5557, %v5612
    %v5614 = vpop.f32.mrf.mxu0
    %v5615 = vpop.f32.mrf.mxu0
    %v5616 = vadd.f32 %v5560, %v5615
    %v5617 = vpop.f32.mrf.mxu0
    %5618 = vmatprep.mubr.bf16.mxu0 0
    %5619 = vmatmul.mubr.bf16.gmra.mxu0 %v5065
    %v5620 = vpop.f32.mrf.mxu0
    %v5621 = vadd.f32 %v5565, %v5620
    %v5622 = vpop.f32.mrf.mxu0
    %v5623 = vpop.f32.mrf.mxu0
    %v5624 = vpop.f32.mrf.mxu0
    %5625 = vdwg.mxu0
    %5626 = vst [vmem:[#allocation4] sm:$0x7] 0.0
    %5627 = vst [vmem:[#allocation4 + $0x13] sm:$0x1f] 0.0
    %5628 = vst [vmem:[#allocation4 + $0x18] sm:$0x7] 0.0
    %5629 = vst [vmem:[#allocation4 + $0x2b] sm:$0x1f] 0.0
    %v5630 = vld [vmem:[%s4] sm:$0x1]
    %v5632 = vlaneseq
    %v5633 = vshrl.u32 %v5632, 7
    %v5634 = vsub.s32 0, %v5633
    %v5635 = vrot.slane %v5630, %v5634
    %v5637 = vadd.f32 %v5605, %v5635
    %v5638 = vadd.f32 %v5608, %v5635
    %v5639 = vmax.f32 %v5637, 0.0
    %v5640 = vmax.f32 %v5638, 0.0
    %5641 = vst [vmem:[#allocation4 + $0x3] sm:$0xff] %v5639
    %5642 = vst [vmem:[#allocation4 + $0xb] sm:$0xff] %v5640
    %v5643 = vld [vmem:[%s4] sm:$0x1]
    %v5645 = vlaneseq
    %v5646 = vshrl.u32 %v5645, 7
    %v5647 = vsub.s32 0, %v5646
    %v5648 = vrot.slane %v5643, %v5647
    %v5650 = vadd.f32 %v5613, %v5648
    %v5651 = vadd.f32 %v5616, %v5648
    %v5652 = vadd.f32 %v5621, %v5648
    %v5653 = vmax.f32 %v5650, 0.0
    %v5654 = vmax.f32 %v5651, 0.0
    %v5655 = vmax.f32 %v5652, 0.0
    %5656 = vst [vmem:[#allocation4 + $0x17] sm:$0xf0] %v5653
    %5657 = vst [vmem:[#allocation4 + $0x1f] sm:$0xff] %v5654
    %5658 = vst [vmem:[#allocation4 + $0x27] sm:$0xf] %v5655
    %s5659 = scalar_lea.vmem [#allocation11], 448
    %v5660 = vld [vmem:[%s5659] sm:$0xf]
    %v5661 = vld [vmem:[%s5659 + $0x4] sm:$0xf]
    %v5662 = vld [vmem:[%s5659 + $0x8] sm:$0xf]
    %v5663 = vld [vmem:[%s5659 + $0xc] sm:$0xf]
    %v5664 = vld [vmem:[%s5659 + $0x10] sm:$0xf]
    %v5665 = vld [vmem:[%s5659 + $0x14] sm:$0xf]
    %v5666 = vld [vmem:[%s5659 + $0x18] sm:$0xf]
    %v5667 = vld [vmem:[%s5659 + $0x1c] sm:$0xf]
    %v5668 = vld [vmem:[%s5659 + $0x20] sm:$0xf]
    %v5669 = vld [vmem:[%s5659 + $0x24] sm:$0xf]
    %v5670 = vld [vmem:[%s5659 + $0x28] sm:$0xf]
    %v5671 = vld [vmem:[%s5659 + $0x2c] sm:$0xf]
    %v5672 = vld [vmem:[%s5659 + $0x30] sm:$0xf]
    %v5673 = vld [vmem:[%s5659 + $0x34] sm:$0xf]
    %v5674 = vld [vmem:[%s5659 + $0x38] sm:$0xf]
    %v5675 = vld [vmem:[%s5659 + $0x3c] sm:$0xf]
    %v5676 = vld [vmem:[%s5659 + $0x40] sm:$0xf]
    %v5677 = vld [vmem:[%s5659 + $0x44] sm:$0xf]
    %v5678 = vld [vmem:[%s5659 + $0x48] sm:$0xf]
    %v5679 = vld [vmem:[%s5659 + $0x4c] sm:$0xf]
    %v5680 = vld [vmem:[%s5659 + $0x50] sm:$0xf]
    %v5681 = vld [vmem:[%s5659 + $0x54] sm:$0xf]
    %v5682 = vld [vmem:[%s5659 + $0x58] sm:$0xf]
    %v5683 = vld [vmem:[%s5659 + $0x5c] sm:$0xf]
    %v5684 = vld [vmem:[%s5659 + $0x60] sm:$0xf]
    %v5685 = vld [vmem:[%s5659 + $0x64] sm:$0xf]
    %v5686 = vld [vmem:[%s5659 + $0x68] sm:$0xf]
    %v5687 = vld [vmem:[%s5659 + $0x6c] sm:$0xf]
    %v5688 = vld [vmem:[%s5659 + $0x70] sm:$0xf]
    %v5689 = vld [vmem:[%s5659 + $0x74] sm:$0xf]
    %v5690 = vld [vmem:[%s5659 + $0x78] sm:$0xf]
    %v5691 = vld [vmem:[%s5659 + $0x7c] sm:$0xf]
    %v5692 = vld [vmem:[%s5659 + $0x80] sm:$0xf]
    %v5693 = vld [vmem:[%s5659 + $0x84] sm:$0xf]
    %v5694 = vld [vmem:[%s5659 + $0x88] sm:$0xf]
    %v5695 = vld [vmem:[%s5659 + $0x8c] sm:$0xf]
    %v5696 = vld [vmem:[%s5659 + $0x90] sm:$0xf]
    %v5697 = vld [vmem:[%s5659 + $0x94] sm:$0xf]
    %v5698 = vld [vmem:[%s5659 + $0x98] sm:$0xf]
    %v5699 = vld [vmem:[%s5659 + $0x9c] sm:$0xf]
    %v5700 = vld [vmem:[%s5659 + $0xa0] sm:$0xf]
    %v5701 = vld [vmem:[%s5659 + $0xa4] sm:$0xf]
    %v5702 = vld [vmem:[%s5659 + $0xa8] sm:$0xf]
    %v5703 = vld [vmem:[%s5659 + $0xac] sm:$0xf]
    %v5704 = vld [vmem:[%s5659 + $0xb0] sm:$0xf]
    %v5705 = vld [vmem:[%s5659 + $0xb4] sm:$0xf]
    %v5706 = vld [vmem:[%s5659 + $0xb8] sm:$0xf]
    %v5707 = vld [vmem:[%s5659 + $0xbc] sm:$0xf]
    %v5708 = vld [vmem:[%s5659 + $0xc0] sm:$0xf]
    %v5709 = vld [vmem:[%s5659 + $0xc4] sm:$0xf]
    %v5710 = vld [vmem:[%s5659 + $0xc8] sm:$0xf]
    %v5711 = vld [vmem:[%s5659 + $0xcc] sm:$0xf]
    %v5712 = vld [vmem:[%s5659 + $0xd0] sm:$0xf]
    %v5713 = vld [vmem:[%s5659 + $0xd4] sm:$0xf]
    %v5714 = vld [vmem:[%s5659 + $0xd8] sm:$0xf]
    %v5715 = vld [vmem:[%s5659 + $0xdc] sm:$0xf]
    %v5716 = vld [vmem:[%s5659 + $0xe0] sm:$0xf]
    %v5717 = vld [vmem:[%s5659 + $0xe4] sm:$0xf]
    %v5718 = vld [vmem:[%s5659 + $0xe8] sm:$0xf]
    %v5719 = vld [vmem:[%s5659 + $0xec] sm:$0xf]
    %v5720 = vld [vmem:[%s5659 + $0xf0] sm:$0xf]
    %v5721 = vld [vmem:[%s5659 + $0xf4] sm:$0xf]
    %v5722 = vld [vmem:[%s5659 + $0xf8] sm:$0xf]
    %v5723 = vld [vmem:[%s5659 + $0xfc] sm:$0xf]
    %v5724 = vld [vmem:[%s5659 + $0x100] sm:$0xf]
    %v5725 = vld [vmem:[%s5659 + $0x104] sm:$0xf]
    %v5726 = vld [vmem:[%s5659 + $0x108] sm:$0xf]
    %v5727 = vld [vmem:[%s5659 + $0x10c] sm:$0xf]
    %v5728 = vld [vmem:[%s5659 + $0x110] sm:$0xf]
    %v5729 = vld [vmem:[%s5659 + $0x114] sm:$0xf]
    %v5730 = vld [vmem:[%s5659 + $0x118] sm:$0xf]
    %v5731 = vld [vmem:[%s5659 + $0x11c] sm:$0xf]
    %v5732 = vld [vmem:[%s5659 + $0x120] sm:$0xf]
    %v5733 = vld [vmem:[%s5659 + $0x124] sm:$0xf]
    %v5734 = vld [vmem:[%s5659 + $0x128] sm:$0xf]
    %v5735 = vld [vmem:[%s5659 + $0x12c] sm:$0xf]
    %v5736 = vld [vmem:[%s5659 + $0x130] sm:$0xf]
    %v5737 = vld [vmem:[%s5659 + $0x134] sm:$0xf]
    %v5738 = vld [vmem:[%s5659 + $0x138] sm:$0xf]
    %v5739 = vld [vmem:[%s5659 + $0x13c] sm:$0xf]
    %v5740 = vld [vmem:[%s5659 + $0x140] sm:$0xf]
    %v5741 = vld [vmem:[%s5659 + $0x144] sm:$0xf]
    %v5742 = vld [vmem:[%s5659 + $0x148] sm:$0xf]
    %v5743 = vld [vmem:[%s5659 + $0x14c] sm:$0xf]
    %v5744 = vld [vmem:[%s5659 + $0x150] sm:$0xf]
    %v5745 = vld [vmem:[%s5659 + $0x154] sm:$0xf]
    %v5746 = vld [vmem:[%s5659 + $0x158] sm:$0xf]
    %v5747 = vld [vmem:[%s5659 + $0x15c] sm:$0xf]
    %v5748 = vld [vmem:[%s5659 + $0x160] sm:$0xf]
    %v5749 = vld [vmem:[%s5659 + $0x164] sm:$0xf]
    %v5750 = vld [vmem:[%s5659 + $0x168] sm:$0xf]
    %v5751 = vld [vmem:[%s5659 + $0x16c] sm:$0xf]
    %v5752 = vld [vmem:[%s5659 + $0x170] sm:$0xf]
    %v5753 = vld [vmem:[%s5659 + $0x174] sm:$0xf]
    %v5754 = vld [vmem:[%s5659 + $0x178] sm:$0xf]
    %v5755 = vld [vmem:[%s5659 + $0x17c] sm:$0xf]
    %v5756 = vld [vmem:[%s5659 + $0x180] sm:$0xf]
    %v5757 = vld [vmem:[%s5659 + $0x184] sm:$0xf]
    %v5758 = vld [vmem:[%s5659 + $0x188] sm:$0xf]
    %v5759 = vld [vmem:[%s5659 + $0x18c] sm:$0xf]
    %v5760 = vld [vmem:[%s5659 + $0x190] sm:$0xf]
    %v5761 = vld [vmem:[%s5659 + $0x194] sm:$0xf]
    %v5762 = vld [vmem:[%s5659 + $0x198] sm:$0xf]
    %v5763 = vld [vmem:[%s5659 + $0x19c] sm:$0xf]
    %v5764 = vld [vmem:[%s5659 + $0x1a0] sm:$0xf]
    %v5765 = vld [vmem:[%s5659 + $0x1a4] sm:$0xf]
    %v5766 = vld [vmem:[%s5659 + $0x1a8] sm:$0xf]
    %v5767 = vld [vmem:[%s5659 + $0x1ac] sm:$0xf]
    %v5768 = vld [vmem:[%s5659 + $0x1b0] sm:$0xf]
    %v5769 = vld [vmem:[%s5659 + $0x1b4] sm:$0xf]
    %v5770 = vld [vmem:[%s5659 + $0x1b8] sm:$0xf]
    %v5771 = vld [vmem:[%s5659 + $0x1bc] sm:$0xf]
    %v5772 = vld [vmem:[#allocation4] ss:$2 sm:$0xff]
    %s5773 = scalar_lea.vmem [#allocation4], 16
    %v5774 = vld [vmem:[%s5773] ss:$2 sm:$0xff]
    %s5775 = scalar_lea.vmem [#allocation4], 32
    %v5776 = vld [vmem:[%s5775] ss:$2 sm:$0xf]
    %s5777 = scalar_lea.vmem [#allocation4], 1
    %v5778 = vld [vmem:[%s5777] ss:$2 sm:$0xff]
    %s5779 = scalar_lea.vmem [#allocation4], 17
    %v5780 = vld [vmem:[%s5779] ss:$2 sm:$0xff]
    %s5781 = scalar_lea.vmem [#allocation4], 33
    %v5782 = vld [vmem:[%s5781] ss:$2 sm:$0xf]
    %s5783 = scalar_lea.vmem [#allocation4], 2
    %v5784 = vld [vmem:[%s5783] ss:$2 sm:$0xff]
    %s5785 = scalar_lea.vmem [#allocation4], 18
    %v5786 = vld [vmem:[%s5785] ss:$2 sm:$0xff]
    %s5787 = scalar_lea.vmem [#allocation4], 34
    %v5788 = vld [vmem:[%s5787] ss:$2 sm:$0xf]
    %s5789 = scalar_lea.vmem [#allocation4], 3
    %v5790 = vld [vmem:[%s5789] ss:$2 sm:$0xff]
    %s5791 = scalar_lea.vmem [#allocation4], 19
    %v5792 = vld [vmem:[%s5791] ss:$2 sm:$0xff]
    %s5793 = scalar_lea.vmem [#allocation4], 35
    %v5794 = vld [vmem:[%s5793] ss:$2 sm:$0xf]
    %s5795 = scalar_lea.vmem [#allocation4], 4
    %v5796 = vld [vmem:[%s5795] ss:$2 sm:$0xff]
    %s5797 = scalar_lea.vmem [#allocation4], 20
    %v5798 = vld [vmem:[%s5797] ss:$2 sm:$0xff]
    %s5799 = scalar_lea.vmem [#allocation4], 36
    %v5800 = vld [vmem:[%s5799] ss:$2 sm:$0xf]
    %s5801 = scalar_lea.vmem [#allocation4], 5
    %v5802 = vld [vmem:[%s5801] ss:$2 sm:$0xff]
    %s5803 = scalar_lea.vmem [#allocation4], 21
    %v5804 = vld [vmem:[%s5803] ss:$2 sm:$0xff]
    %s5805 = scalar_lea.vmem [#allocation4], 37
    %v5806 = vld [vmem:[%s5805] ss:$2 sm:$0xf]
    %s5807 = scalar_lea.vmem [#allocation4], 6
    %v5808 = vld [vmem:[%s5807] ss:$2 sm:$0xff]
    %s5809 = scalar_lea.vmem [#allocation4], 22
    %v5810 = vld [vmem:[%s5809] ss:$2 sm:$0xff]
    %s5811 = scalar_lea.vmem [#allocation4], 38
    %v5812 = vld [vmem:[%s5811] ss:$2 sm:$0xf]
    %v5813 = vpack.c.bf16 %v5774, %v5772
    %v5814 = vpack.c.bf16 %v5780, %v5778
    %v5815 = vpack.c.bf16 %v5786, %v5784
    %v5816 = vpack.c.bf16 %v5792, %v5790
    %v5817 = vpack.c.bf16 %v5798, %v5796
    %v5818 = vpack.c.bf16 %v5804, %v5802
    %v5819 = vpack.c.bf16 %v5810, %v5808
    %v5820 = vpack.c.bf16 %v5776, %v5776
    %v5821 = vpack.c.bf16 %v5782, %v5782
    %v5822 = vpack.c.bf16 %v5788, %v5788
    %v5823 = vpack.c.bf16 %v5794, %v5794
    %v5824 = vpack.c.bf16 %v5800, %v5800
    %v5825 = vpack.c.bf16 %v5806, %v5806
    %v5826 = vpack.c.bf16 %v5812, %v5812
    %v5939 = vunpack.c.l.b16 %v5660
    %v5940 = vunpack.c.l.b16 %v5661
    %v5941 = vunpack.c.l.b16 %v5662
    %v5942 = vunpack.c.l.b16 %v5663
    %v5943 = vunpack.c.l.b16 %v5664
    %v5944 = vunpack.c.l.b16 %v5665
    %v5945 = vunpack.c.l.b16 %v5666
    %v5946 = vunpack.c.l.b16 %v5667
    %v5947 = vunpack.c.l.b16 %v5668
    %v5948 = vunpack.c.l.b16 %v5669
    %v5949 = vunpack.c.l.b16 %v5670
    %v5950 = vunpack.c.l.b16 %v5671
    %v5951 = vunpack.c.l.b16 %v5672
    %v5952 = vunpack.c.l.b16 %v5673
    %v5953 = vunpack.c.l.b16 %v5674
    %v5954 = vunpack.c.l.b16 %v5675
    %v5955 = vunpack.c.l.b16 %v5676
    %v5956 = vunpack.c.l.b16 %v5677
    %v5957 = vunpack.c.l.b16 %v5678
    %v5958 = vunpack.c.l.b16 %v5679
    %v5959 = vunpack.c.l.b16 %v5680
    %v5960 = vunpack.c.l.b16 %v5681
    %v5961 = vunpack.c.l.b16 %v5682
    %v5962 = vunpack.c.l.b16 %v5683
    %v5963 = vunpack.c.l.b16 %v5684
    %v5964 = vunpack.c.l.b16 %v5685
    %v5965 = vunpack.c.l.b16 %v5686
    %v5966 = vunpack.c.l.b16 %v5687
    %v5967 = vunpack.c.l.b16 %v5688
    %v5968 = vunpack.c.l.b16 %v5689
    %v5969 = vunpack.c.l.b16 %v5690
    %v5970 = vunpack.c.l.b16 %v5691
    %v5971 = vunpack.c.l.b16 %v5692
    %v5972 = vunpack.c.l.b16 %v5693
    %v5973 = vunpack.c.l.b16 %v5694
    %v5974 = vunpack.c.l.b16 %v5695
    %v5975 = vunpack.c.l.b16 %v5696
    %v5976 = vunpack.c.l.b16 %v5697
    %v5977 = vunpack.c.l.b16 %v5698
    %v5978 = vunpack.c.l.b16 %v5699
    %v5979 = vunpack.c.l.b16 %v5700
    %v5980 = vunpack.c.l.b16 %v5701
    %v5981 = vunpack.c.l.b16 %v5702
    %v5982 = vunpack.c.l.b16 %v5703
    %v5983 = vunpack.c.l.b16 %v5704
    %v5984 = vunpack.c.l.b16 %v5705
    %v5985 = vunpack.c.l.b16 %v5706
    %v5986 = vunpack.c.l.b16 %v5707
    %v5987 = vunpack.c.l.b16 %v5708
    %v5988 = vunpack.c.l.b16 %v5709
    %v5989 = vunpack.c.l.b16 %v5710
    %v5990 = vunpack.c.l.b16 %v5711
    %v5991 = vunpack.c.l.b16 %v5712
    %v5992 = vunpack.c.l.b16 %v5713
    %v5993 = vunpack.c.l.b16 %v5714
    %v5994 = vunpack.c.l.b16 %v5715
    %v5995 = vunpack.c.l.b16 %v5716
    %v5996 = vunpack.c.l.b16 %v5717
    %v5997 = vunpack.c.l.b16 %v5718
    %v5998 = vunpack.c.l.b16 %v5719
    %v5999 = vunpack.c.l.b16 %v5720
    %v6000 = vunpack.c.l.b16 %v5721
    %v6001 = vunpack.c.l.b16 %v5722
    %v6002 = vunpack.c.l.b16 %v5723
    %v6003 = vunpack.c.l.b16 %v5724
    %v6004 = vunpack.c.l.b16 %v5725
    %v6005 = vunpack.c.l.b16 %v5726
    %v6006 = vunpack.c.l.b16 %v5727
    %v6007 = vunpack.c.l.b16 %v5728
    %v6008 = vunpack.c.l.b16 %v5729
    %v6009 = vunpack.c.l.b16 %v5730
    %v6010 = vunpack.c.l.b16 %v5731
    %v6011 = vunpack.c.l.b16 %v5732
    %v6012 = vunpack.c.l.b16 %v5733
    %v6013 = vunpack.c.l.b16 %v5734
    %v6014 = vunpack.c.l.b16 %v5735
    %v6015 = vunpack.c.l.b16 %v5736
    %v6016 = vunpack.c.l.b16 %v5737
    %v6017 = vunpack.c.l.b16 %v5738
    %v6018 = vunpack.c.l.b16 %v5739
    %v6019 = vunpack.c.l.b16 %v5740
    %v6020 = vunpack.c.l.b16 %v5741
    %v6021 = vunpack.c.l.b16 %v5742
    %v6022 = vunpack.c.l.b16 %v5743
    %v6023 = vunpack.c.l.b16 %v5744
    %v6024 = vunpack.c.l.b16 %v5745
    %v6025 = vunpack.c.l.b16 %v5746
    %v6026 = vunpack.c.l.b16 %v5747
    %v6027 = vunpack.c.l.b16 %v5748
    %v6028 = vunpack.c.l.b16 %v5749
    %v6029 = vunpack.c.l.b16 %v5750
    %v6030 = vunpack.c.l.b16 %v5751
    %v6031 = vunpack.c.l.b16 %v5752
    %v6032 = vunpack.c.l.b16 %v5753
    %v6033 = vunpack.c.l.b16 %v5754
    %v6034 = vunpack.c.l.b16 %v5755
    %v6035 = vunpack.c.l.b16 %v5756
    %v6036 = vunpack.c.l.b16 %v5757
    %v6037 = vunpack.c.l.b16 %v5758
    %v6038 = vunpack.c.l.b16 %v5759
    %v6039 = vunpack.c.l.b16 %v5760
    %v6040 = vunpack.c.l.b16 %v5761
    %v6041 = vunpack.c.l.b16 %v5762
    %v6042 = vunpack.c.l.b16 %v5763
    %v6043 = vunpack.c.l.b16 %v5764
    %v6044 = vunpack.c.l.b16 %v5765
    %v6045 = vunpack.c.l.b16 %v5766
    %v6046 = vunpack.c.l.b16 %v5767
    %v6047 = vunpack.c.l.b16 %v5768
    %v6048 = vunpack.c.l.b16 %v5769
    %v6049 = vunpack.c.l.b16 %v5770
    %v6050 = vunpack.c.l.b16 %v5771
    %v6051 = vpack.c.b16 %v5940, %v5939
    %v6052 = vpack.c.b16 %v5942, %v5941
    %v6053 = vpack.c.b16 %v5944, %v5943
    %v6054 = vpack.c.b16 %v5946, %v5945
    %v6055 = vpack.c.b16 %v5948, %v5947
    %v6056 = vpack.c.b16 %v5950, %v5949
    %v6057 = vpack.c.b16 %v5952, %v5951
    %v6058 = vpack.c.b16 %v5954, %v5953
    %v6059 = vpack.c.b16 %v5956, %v5955
    %v6060 = vpack.c.b16 %v5958, %v5957
    %v6061 = vpack.c.b16 %v5960, %v5959
    %v6062 = vpack.c.b16 %v5962, %v5961
    %v6063 = vpack.c.b16 %v5964, %v5963
    %v6064 = vpack.c.b16 %v5966, %v5965
    %v6065 = vpack.c.b16 %v5968, %v5967
    %v6066 = vpack.c.b16 %v5970, %v5969
    %v6067 = vpack.c.b16 %v5972, %v5971
    %v6068 = vpack.c.b16 %v5974, %v5973
    %v6069 = vpack.c.b16 %v5976, %v5975
    %v6070 = vpack.c.b16 %v5978, %v5977
    %v6071 = vpack.c.b16 %v5980, %v5979
    %v6072 = vpack.c.b16 %v5982, %v5981
    %v6073 = vpack.c.b16 %v5984, %v5983
    %v6074 = vpack.c.b16 %v5986, %v5985
    %v6075 = vpack.c.b16 %v5988, %v5987
    %v6076 = vpack.c.b16 %v5990, %v5989
    %v6077 = vpack.c.b16 %v5992, %v5991
    %v6078 = vpack.c.b16 %v5994, %v5993
    %v6079 = vpack.c.b16 %v5996, %v5995
    %v6080 = vpack.c.b16 %v5998, %v5997
    %v6081 = vpack.c.b16 %v6000, %v5999
    %v6082 = vpack.c.b16 %v6002, %v6001
    %v6083 = vpack.c.b16 %v6004, %v6003
    %v6084 = vpack.c.b16 %v6006, %v6005
    %v6085 = vpack.c.b16 %v6008, %v6007
    %v6086 = vpack.c.b16 %v6010, %v6009
    %v6087 = vpack.c.b16 %v6012, %v6011
    %v6088 = vpack.c.b16 %v6014, %v6013
    %v6089 = vpack.c.b16 %v6016, %v6015
    %v6090 = vpack.c.b16 %v6018, %v6017
    %v6091 = vpack.c.b16 %v6020, %v6019
    %v6092 = vpack.c.b16 %v6022, %v6021
    %v6093 = vpack.c.b16 %v6024, %v6023
    %v6094 = vpack.c.b16 %v6026, %v6025
    %v6095 = vpack.c.b16 %v6028, %v6027
    %v6096 = vpack.c.b16 %v6030, %v6029
    %v6097 = vpack.c.b16 %v6032, %v6031
    %v6098 = vpack.c.b16 %v6034, %v6033
    %v6099 = vpack.c.b16 %v6036, %v6035
    %v6100 = vpack.c.b16 %v6038, %v6037
    %v6101 = vpack.c.b16 %v6040, %v6039
    %v6102 = vpack.c.b16 %v6042, %v6041
    %v6103 = vpack.c.b16 %v6044, %v6043
    %v6104 = vpack.c.b16 %v6046, %v6045
    %v6105 = vpack.c.b16 %v6048, %v6047
    %v6106 = vpack.c.b16 %v6050, %v6049
    %6163 = vmatprep.subr.bf16.mxu0 0
    %6164 = vmatpush1.bf16.msra.mxu0 %v6058
    %6165 = vmatprep.subr.bf16.mxu0 0
    %6166 = vmatpush1.bf16.msra.mxu0 %v6057
    %6167 = vmatprep.subr.bf16.mxu0 0
    %6168 = vmatpush1.bf16.msra.mxu0 %v6056
    %6169 = vmatprep.subr.bf16.mxu0 0
    %6170 = vmatpush1.bf16.msra.mxu0 %v6055
    %6171 = vmatprep.subr.bf16.mxu0 0
    %6172 = vmatpush1.bf16.msra.mxu0 %v6054
    %6173 = vmatprep.subr.bf16.mxu0 0
    %6174 = vmatpush1.bf16.msra.mxu0 %v6053
    %6175 = vmatprep.subr.bf16.mxu0 0
    %6176 = vmatpush1.bf16.msra.mxu0 %v6052
    %6177 = vmatprep.subr.bf16.mxu0 0
    %6178 = vmatpush1.bf16.msra.mxu0 %v6051
    %6179 = vmatprep.subr.bf16.mxu0 0
    %6180 = vmatpush2.bf16.msra.mxu0 %v6066
    %6181 = vmatprep.subr.bf16.mxu0 0
    %6182 = vmatpush2.bf16.msra.mxu0 %v6065
    %6183 = vmatprep.subr.bf16.mxu0 0
    %6184 = vmatpush2.bf16.msra.mxu0 %v6064
    %6185 = vmatprep.subr.bf16.mxu0 0
    %6186 = vmatpush2.bf16.msra.mxu0 %v6063
    %6187 = vmatprep.subr.bf16.mxu0 0
    %6188 = vmatpush2.bf16.msra.mxu0 %v6062
    %6189 = vmatprep.subr.bf16.mxu0 0
    %6190 = vmatpush2.bf16.msra.mxu0 %v6061
    %6191 = vmatprep.subr.bf16.mxu0 0
    %6192 = vmatpush2.bf16.msra.mxu0 %v6060
    %6193 = vmatprep.subr.bf16.mxu0 0
    %6194 = vmatpush2.bf16.msra.mxu0 %v6059
    %6195 = vmatprep.mubr.bf16.mxu0 %v5814
    %6196 = vmatmul.mubr.bf16.gmra.mxu0 %v5813
    %v6197 = vpop.f32.mrf.mxu0
    %v6198 = vadd.f32 0.0, %v6197
    %v6199 = vpop.f32.mrf.mxu0
    %v6200 = vpop.f32.mrf.mxu0
    %v6201 = vadd.f32 0.0, %v6200
    %v6202 = vpop.f32.mrf.mxu0
    %6203 = vmatprep.mubr.bf16.mxu0 %v5821
    %6204 = vmatmul.mubr.bf16.gmra.mxu0 %v5820
    %v6205 = vpop.f32.mrf.mxu0
    %v6206 = vadd.f32 0.0, %v6205
    %v6207 = vpop.f32.mrf.mxu0
    %v6208 = vpop.f32.mrf.mxu0
    %v6209 = vpop.f32.mrf.mxu0
    %6210 = vdwg.mxu0
    %6211 = vmatprep.subr.bf16.mxu0 0
    %6212 = vmatpush1.bf16.msra.mxu0 %v6074
    %6213 = vmatprep.subr.bf16.mxu0 0
    %6214 = vmatpush1.bf16.msra.mxu0 %v6073
    %6215 = vmatprep.subr.bf16.mxu0 0
    %6216 = vmatpush1.bf16.msra.mxu0 %v6072
    %6217 = vmatprep.subr.bf16.mxu0 0
    %6218 = vmatpush1.bf16.msra.mxu0 %v6071
    %6219 = vmatprep.subr.bf16.mxu0 0
    %6220 = vmatpush1.bf16.msra.mxu0 %v6070
    %6221 = vmatprep.subr.bf16.mxu0 0
    %6222 = vmatpush1.bf16.msra.mxu0 %v6069
    %6223 = vmatprep.subr.bf16.mxu0 0
    %6224 = vmatpush1.bf16.msra.mxu0 %v6068
    %6225 = vmatprep.subr.bf16.mxu0 0
    %6226 = vmatpush1.bf16.msra.mxu0 %v6067
    %6227 = vmatprep.subr.bf16.mxu0 0
    %6228 = vmatpush2.bf16.msra.mxu0 %v6082
    %6229 = vmatprep.subr.bf16.mxu0 0
    %6230 = vmatpush2.bf16.msra.mxu0 %v6081
    %6231 = vmatprep.subr.bf16.mxu0 0
    %6232 = vmatpush2.bf16.msra.mxu0 %v6080
    %6233 = vmatprep.subr.bf16.mxu0 0
    %6234 = vmatpush2.bf16.msra.mxu0 %v6079
    %6235 = vmatprep.subr.bf16.mxu0 0
    %6236 = vmatpush2.bf16.msra.mxu0 %v6078
    %6237 = vmatprep.subr.bf16.mxu0 0
    %6238 = vmatpush2.bf16.msra.mxu0 %v6077
    %6239 = vmatprep.subr.bf16.mxu0 0
    %6240 = vmatpush2.bf16.msra.mxu0 %v6076
    %6241 = vmatprep.subr.bf16.mxu0 0
    %6242 = vmatpush2.bf16.msra.mxu0 %v6075
    %6243 = vmatprep.mubr.bf16.mxu0 %v5816
    %6244 = vmatmul.mubr.bf16.gmra.mxu0 %v5815
    %v6245 = vpop.f32.mrf.mxu0
    %v6246 = vadd.f32 %v6198, %v6245
    %v6247 = vpop.f32.mrf.mxu0
    %v6248 = vpop.f32.mrf.mxu0
    %v6249 = vadd.f32 %v6201, %v6248
    %v6250 = vpop.f32.mrf.mxu0
    %6251 = vmatprep.mubr.bf16.mxu0 %v5823
    %6252 = vmatmul.mubr.bf16.gmra.mxu0 %v5822
    %v6253 = vpop.f32.mrf.mxu0
    %v6254 = vadd.f32 %v6206, %v6253
    %v6255 = vpop.f32.mrf.mxu0
    %v6256 = vpop.f32.mrf.mxu0
    %v6257 = vpop.f32.mrf.mxu0
    %6258 = vdwg.mxu0
    %6259 = vmatprep.subr.bf16.mxu0 0
    %6260 = vmatpush1.bf16.msra.mxu0 %v6090
    %6261 = vmatprep.subr.bf16.mxu0 0
    %6262 = vmatpush1.bf16.msra.mxu0 %v6089
    %6263 = vmatprep.subr.bf16.mxu0 0
    %6264 = vmatpush1.bf16.msra.mxu0 %v6088
    %6265 = vmatprep.subr.bf16.mxu0 0
    %6266 = vmatpush1.bf16.msra.mxu0 %v6087
    %6267 = vmatprep.subr.bf16.mxu0 0
    %6268 = vmatpush1.bf16.msra.mxu0 %v6086
    %6269 = vmatprep.subr.bf16.mxu0 0
    %6270 = vmatpush1.bf16.msra.mxu0 %v6085
    %6271 = vmatprep.subr.bf16.mxu0 0
    %6272 = vmatpush1.bf16.msra.mxu0 %v6084
    %6273 = vmatprep.subr.bf16.mxu0 0
    %6274 = vmatpush1.bf16.msra.mxu0 %v6083
    %6275 = vmatprep.subr.bf16.mxu0 0
    %6276 = vmatpush2.bf16.msra.mxu0 %v6098
    %6277 = vmatprep.subr.bf16.mxu0 0
    %6278 = vmatpush2.bf16.msra.mxu0 %v6097
    %6279 = vmatprep.subr.bf16.mxu0 0
    %6280 = vmatpush2.bf16.msra.mxu0 %v6096
    %6281 = vmatprep.subr.bf16.mxu0 0
    %6282 = vmatpush2.bf16.msra.mxu0 %v6095
    %6283 = vmatprep.subr.bf16.mxu0 0
    %6284 = vmatpush2.bf16.msra.mxu0 %v6094
    %6285 = vmatprep.subr.bf16.mxu0 0
    %6286 = vmatpush2.bf16.msra.mxu0 %v6093
    %6287 = vmatprep.subr.bf16.mxu0 0
    %6288 = vmatpush2.bf16.msra.mxu0 %v6092
    %6289 = vmatprep.subr.bf16.mxu0 0
    %6290 = vmatpush2.bf16.msra.mxu0 %v6091
    %6291 = vmatprep.mubr.bf16.mxu0 %v5818
    %6292 = vmatmul.mubr.bf16.gmra.mxu0 %v5817
    %v6293 = vpop.f32.mrf.mxu0
    %v6294 = vadd.f32 %v6246, %v6293
    %v6295 = vpop.f32.mrf.mxu0
    %v6296 = vpop.f32.mrf.mxu0
    %v6297 = vadd.f32 %v6249, %v6296
    %v6298 = vpop.f32.mrf.mxu0
    %6299 = vmatprep.mubr.bf16.mxu0 %v5825
    %6300 = vmatmul.mubr.bf16.gmra.mxu0 %v5824
    %v6301 = vpop.f32.mrf.mxu0
    %v6302 = vadd.f32 %v6254, %v6301
    %v6303 = vpop.f32.mrf.mxu0
    %v6304 = vpop.f32.mrf.mxu0
    %v6305 = vpop.f32.mrf.mxu0
    %6306 = vdwg.mxu0
    %6307 = vmatprep.subr.bf16.mxu0 0
    %6308 = vmatpush1.bf16.msra.mxu0 %v6106
    %6309 = vmatprep.subr.bf16.mxu0 0
    %6310 = vmatpush1.bf16.msra.mxu0 %v6105
    %6311 = vmatprep.subr.bf16.mxu0 0
    %6312 = vmatpush1.bf16.msra.mxu0 %v6104
    %6313 = vmatprep.subr.bf16.mxu0 0
    %6314 = vmatpush1.bf16.msra.mxu0 %v6103
    %6315 = vmatprep.subr.bf16.mxu0 0
    %6316 = vmatpush1.bf16.msra.mxu0 %v6102
    %6317 = vmatprep.subr.bf16.mxu0 0
    %6318 = vmatpush1.bf16.msra.mxu0 %v6101
    %6319 = vmatprep.subr.bf16.mxu0 0
    %6320 = vmatpush1.bf16.msra.mxu0 %v6100
    %6321 = vmatprep.subr.bf16.mxu0 0
    %6322 = vmatpush1.bf16.msra.mxu0 %v6099
    %6323 = vmatprep.subr.bf16.mxu0 0
    %6324 = vmatpush2.bf16.msra.mxu0 0
    %6325 = vmatprep.subr.bf16.mxu0 0
    %6326 = vmatpush2.bf16.msra.mxu0 0
    %6327 = vmatprep.subr.bf16.mxu0 0
    %6328 = vmatpush2.bf16.msra.mxu0 0
    %6329 = vmatprep.subr.bf16.mxu0 0
    %6330 = vmatpush2.bf16.msra.mxu0 0
    %6331 = vmatprep.subr.bf16.mxu0 0
    %6332 = vmatpush2.bf16.msra.mxu0 0
    %6333 = vmatprep.subr.bf16.mxu0 0
    %6334 = vmatpush2.bf16.msra.mxu0 0
    %6335 = vmatprep.subr.bf16.mxu0 0
    %6336 = vmatpush2.bf16.msra.mxu0 0
    %6337 = vmatprep.subr.bf16.mxu0 0
    %6338 = vmatpush2.bf16.msra.mxu0 0
    %6339 = vmatprep.mubr.bf16.mxu0 0
    %6340 = vmatmul.mubr.bf16.gmra.mxu0 %v5819
    %v6341 = vpop.f32.mrf.mxu0
    %v6342 = vadd.f32 %v6294, %v6341
    %v6343 = vpop.f32.mrf.mxu0
    %v6344 = vpop.f32.mrf.mxu0
    %v6345 = vadd.f32 %v6297, %v6344
    %v6346 = vpop.f32.mrf.mxu0
    %6347 = vmatprep.mubr.bf16.mxu0 0
    %6348 = vmatmul.mubr.bf16.gmra.mxu0 %v5826
    %v6349 = vpop.f32.mrf.mxu0
    %v6350 = vadd.f32 %v6302, %v6349
    %v6351 = vpop.f32.mrf.mxu0
    %v6352 = vpop.f32.mrf.mxu0
    %v6353 = vpop.f32.mrf.mxu0
    %6354 = vdwg.mxu0
    %6355 = vst [vmem:[#allocation5] sm:$0x7] 0.0
    %6356 = vst [vmem:[#allocation5 + $0xb] sm:$0x1f] 0.0
    %6357 = vst [vmem:[#allocation5 + $0x10] sm:$0x7] 0.0
    %6358 = vst [vmem:[#allocation5 + $0x1b] sm:$0x1f] 0.0
    %s6359 = scalar_lea.vmem %s4, 1
    %v6360 = vld [vmem:[%s6359] sm:$0x1]
    %v6362 = vlaneseq
    %v6363 = vshrl.u32 %v6362, 7
    %v6364 = vsub.s32 0, %v6363
    %v6365 = vrot.slane %v6360, %v6364
    %v6367 = vadd.f32 %v6342, %v6365
    %v6368 = vmax.f32 %v6367, 0.0
    %6369 = vst [vmem:[#allocation5 + $0x3] sm:$0xff] %v6368
    %v6370 = vld [vmem:[%s6359] sm:$0x1]
    %v6372 = vlaneseq
    %v6373 = vshrl.u32 %v6372, 7
    %v6374 = vsub.s32 0, %v6373
    %v6375 = vrot.slane %v6370, %v6374
    %v6377 = vadd.f32 %v6345, %v6375
    %v6378 = vadd.f32 %v6350, %v6375
    %v6379 = vmax.f32 %v6377, 0.0
    %v6380 = vmax.f32 %v6378, 0.0
    %6381 = vst [vmem:[#allocation5 + $0xf] sm:$0xf0] %v6379
    %6382 = vst [vmem:[#allocation5 + $0x17] sm:$0xf] %v6380
    %s6383 = scalar_lea.vmem [#allocation11], 896
    %v6384 = vld [vmem:[%s6383] sm:$0xf]
    %v6385 = vld [vmem:[%s6383 + $0x4] sm:$0xf]
    %v6386 = vld [vmem:[%s6383 + $0x8] sm:$0xf]
    %v6387 = vld [vmem:[%s6383 + $0xc] sm:$0xf]
    %v6388 = vld [vmem:[%s6383 + $0x10] sm:$0xf]
    %v6389 = vld [vmem:[%s6383 + $0x14] sm:$0xf]
    %v6390 = vld [vmem:[%s6383 + $0x18] sm:$0xf]
    %v6391 = vld [vmem:[%s6383 + $0x1c] sm:$0xf]
    %v6392 = vld [vmem:[%s6383 + $0x20] sm:$0xf]
    %v6393 = vld [vmem:[%s6383 + $0x24] sm:$0xf]
    %v6394 = vld [vmem:[%s6383 + $0x28] sm:$0xf]
    %v6395 = vld [vmem:[%s6383 + $0x2c] sm:$0xf]
    %v6396 = vld [vmem:[%s6383 + $0x30] sm:$0xf]
    %v6397 = vld [vmem:[%s6383 + $0x34] sm:$0xf]
    %v6398 = vld [vmem:[%s6383 + $0x38] sm:$0xf]
    %v6399 = vld [vmem:[%s6383 + $0x3c] sm:$0xf]
    %v6400 = vld [vmem:[%s6383 + $0x40] sm:$0xf]
    %v6401 = vld [vmem:[%s6383 + $0x44] sm:$0xf]
    %v6402 = vld [vmem:[%s6383 + $0x48] sm:$0xf]
    %v6403 = vld [vmem:[%s6383 + $0x4c] sm:$0xf]
    %v6404 = vld [vmem:[%s6383 + $0x50] sm:$0xf]
    %v6405 = vld [vmem:[%s6383 + $0x54] sm:$0xf]
    %v6406 = vld [vmem:[%s6383 + $0x58] sm:$0xf]
    %v6407 = vld [vmem:[%s6383 + $0x5c] sm:$0xf]
    %v6408 = vld [vmem:[%s6383 + $0x60] sm:$0xf]
    %v6409 = vld [vmem:[%s6383 + $0x64] sm:$0xf]
    %v6410 = vld [vmem:[%s6383 + $0x68] sm:$0xf]
    %v6411 = vld [vmem:[%s6383 + $0x6c] sm:$0xf]
    %v6412 = vld [vmem:[%s6383 + $0x70] sm:$0xf]
    %v6413 = vld [vmem:[%s6383 + $0x74] sm:$0xf]
    %v6414 = vld [vmem:[%s6383 + $0x78] sm:$0xf]
    %v6415 = vld [vmem:[%s6383 + $0x7c] sm:$0xf]
    %v6416 = vld [vmem:[%s6383 + $0x80] sm:$0xf]
    %v6417 = vld [vmem:[%s6383 + $0x84] sm:$0xf]
    %v6418 = vld [vmem:[%s6383 + $0x88] sm:$0xf]
    %v6419 = vld [vmem:[%s6383 + $0x8c] sm:$0xf]
    %v6420 = vld [vmem:[%s6383 + $0x90] sm:$0xf]
    %v6421 = vld [vmem:[%s6383 + $0x94] sm:$0xf]
    %v6422 = vld [vmem:[%s6383 + $0x98] sm:$0xf]
    %v6423 = vld [vmem:[%s6383 + $0x9c] sm:$0xf]
    %v6424 = vld [vmem:[%s6383 + $0xa0] sm:$0xf]
    %v6425 = vld [vmem:[%s6383 + $0xa4] sm:$0xf]
    %v6426 = vld [vmem:[%s6383 + $0xa8] sm:$0xf]
    %v6427 = vld [vmem:[%s6383 + $0xac] sm:$0xf]
    %v6428 = vld [vmem:[%s6383 + $0xb0] sm:$0xf]
    %v6429 = vld [vmem:[%s6383 + $0xb4] sm:$0xf]
    %v6430 = vld [vmem:[%s6383 + $0xb8] sm:$0xf]
    %v6431 = vld [vmem:[%s6383 + $0xbc] sm:$0xf]
    %v6432 = vld [vmem:[%s6383 + $0xc0] sm:$0xf]
    %v6433 = vld [vmem:[%s6383 + $0xc4] sm:$0xf]
    %v6434 = vld [vmem:[%s6383 + $0xc8] sm:$0xf]
    %v6435 = vld [vmem:[%s6383 + $0xcc] sm:$0xf]
    %v6436 = vld [vmem:[%s6383 + $0xd0] sm:$0xf]
    %v6437 = vld [vmem:[%s6383 + $0xd4] sm:$0xf]
    %v6438 = vld [vmem:[%s6383 + $0xd8] sm:$0xf]
    %v6439 = vld [vmem:[%s6383 + $0xdc] sm:$0xf]
    %v6440 = vld [vmem:[%s6383 + $0xe0] sm:$0xf]
    %v6441 = vld [vmem:[%s6383 + $0xe4] sm:$0xf]
    %v6442 = vld [vmem:[%s6383 + $0xe8] sm:$0xf]
    %v6443 = vld [vmem:[%s6383 + $0xec] sm:$0xf]
    %v6444 = vld [vmem:[%s6383 + $0xf0] sm:$0xf]
    %v6445 = vld [vmem:[%s6383 + $0xf4] sm:$0xf]
    %v6446 = vld [vmem:[%s6383 + $0xf8] sm:$0xf]
    %v6447 = vld [vmem:[%s6383 + $0xfc] sm:$0xf]
    %v6448 = vld [vmem:[%s6383 + $0x100] sm:$0xf]
    %v6449 = vld [vmem:[%s6383 + $0x104] sm:$0xf]
    %v6450 = vld [vmem:[%s6383 + $0x108] sm:$0xf]
    %v6451 = vld [vmem:[%s6383 + $0x10c] sm:$0xf]
    %v6452 = vld [vmem:[%s6383 + $0x110] sm:$0xf]
    %v6453 = vld [vmem:[%s6383 + $0x114] sm:$0xf]
    %v6454 = vld [vmem:[%s6383 + $0x118] sm:$0xf]
    %v6455 = vld [vmem:[%s6383 + $0x11c] sm:$0xf]
    %v6456 = vld [vmem:[%s6383 + $0x120] sm:$0xf]
    %v6457 = vld [vmem:[%s6383 + $0x124] sm:$0xf]
    %v6458 = vld [vmem:[%s6383 + $0x128] sm:$0xf]
    %v6459 = vld [vmem:[%s6383 + $0x12c] sm:$0xf]
    %v6460 = vld [vmem:[%s6383 + $0x130] sm:$0xf]
    %v6461 = vld [vmem:[%s6383 + $0x134] sm:$0xf]
    %v6462 = vld [vmem:[%s6383 + $0x138] sm:$0xf]
    %v6463 = vld [vmem:[%s6383 + $0x13c] sm:$0xf]
    %v6464 = vld [vmem:[%s6383 + $0x140] sm:$0xf]
    %v6465 = vld [vmem:[%s6383 + $0x144] sm:$0xf]
    %v6466 = vld [vmem:[%s6383 + $0x148] sm:$0xf]
    %v6467 = vld [vmem:[%s6383 + $0x14c] sm:$0xf]
    %v6468 = vld [vmem:[%s6383 + $0x150] sm:$0xf]
    %v6469 = vld [vmem:[%s6383 + $0x154] sm:$0xf]
    %v6470 = vld [vmem:[%s6383 + $0x158] sm:$0xf]
    %v6471 = vld [vmem:[%s6383 + $0x15c] sm:$0xf]
    %v6472 = vld [vmem:[%s6383 + $0x160] sm:$0xf]
    %v6473 = vld [vmem:[%s6383 + $0x164] sm:$0xf]
    %v6474 = vld [vmem:[%s6383 + $0x168] sm:$0xf]
    %v6475 = vld [vmem:[%s6383 + $0x16c] sm:$0xf]
    %v6476 = vld [vmem:[%s6383 + $0x170] sm:$0xf]
    %v6477 = vld [vmem:[%s6383 + $0x174] sm:$0xf]
    %v6478 = vld [vmem:[%s6383 + $0x178] sm:$0xf]
    %v6479 = vld [vmem:[%s6383 + $0x17c] sm:$0xf]
    %v6480 = vld [vmem:[%s6383 + $0x180] sm:$0xf]
    %v6481 = vld [vmem:[%s6383 + $0x184] sm:$0xf]
    %v6482 = vld [vmem:[%s6383 + $0x188] sm:$0xf]
    %v6483 = vld [vmem:[%s6383 + $0x18c] sm:$0xf]
    %v6484 = vld [vmem:[%s6383 + $0x190] sm:$0xf]
    %v6485 = vld [vmem:[%s6383 + $0x194] sm:$0xf]
    %v6486 = vld [vmem:[%s6383 + $0x198] sm:$0xf]
    %v6487 = vld [vmem:[%s6383 + $0x19c] sm:$0xf]
    %v6488 = vld [vmem:[%s6383 + $0x1a0] sm:$0xf]
    %v6489 = vld [vmem:[%s6383 + $0x1a4] sm:$0xf]
    %v6490 = vld [vmem:[%s6383 + $0x1a8] sm:$0xf]
    %v6491 = vld [vmem:[%s6383 + $0x1ac] sm:$0xf]
    %v6492 = vld [vmem:[%s6383 + $0x1b0] sm:$0xf]
    %v6493 = vld [vmem:[%s6383 + $0x1b4] sm:$0xf]
    %v6494 = vld [vmem:[%s6383 + $0x1b8] sm:$0xf]
    %v6495 = vld [vmem:[%s6383 + $0x1bc] sm:$0xf]
    %v6496 = vld [vmem:[#allocation5] ss:$2 sm:$0xff]
    %s6497 = scalar_lea.vmem [#allocation5], 16
    %v6498 = vld [vmem:[%s6497] ss:$2 sm:$0xf]
    %s6499 = scalar_lea.vmem [#allocation5], 1
    %v6500 = vld [vmem:[%s6499] ss:$2 sm:$0xff]
    %s6501 = scalar_lea.vmem [#allocation5], 17
    %v6502 = vld [vmem:[%s6501] ss:$2 sm:$0xf]
    %s6503 = scalar_lea.vmem [#allocation5], 2
    %v6504 = vld [vmem:[%s6503] ss:$2 sm:$0xff]
    %s6505 = scalar_lea.vmem [#allocation5], 18
    %v6506 = vld [vmem:[%s6505] ss:$2 sm:$0xf]
    %s6507 = scalar_lea.vmem [#allocation5], 3
    %v6508 = vld [vmem:[%s6507] ss:$2 sm:$0xff]
    %s6509 = scalar_lea.vmem [#allocation5], 19
    %v6510 = vld [vmem:[%s6509] ss:$2 sm:$0xf]
    %s6511 = scalar_lea.vmem [#allocation5], 4
    %v6512 = vld [vmem:[%s6511] ss:$2 sm:$0xff]
    %s6513 = scalar_lea.vmem [#allocation5], 20
    %v6514 = vld [vmem:[%s6513] ss:$2 sm:$0xf]
    %s6515 = scalar_lea.vmem [#allocation5], 5
    %v6516 = vld [vmem:[%s6515] ss:$2 sm:$0xff]
    %s6517 = scalar_lea.vmem [#allocation5], 21
    %v6518 = vld [vmem:[%s6517] ss:$2 sm:$0xf]
    %s6519 = scalar_lea.vmem [#allocation5], 6
    %v6520 = vld [vmem:[%s6519] ss:$2 sm:$0xff]
    %s6521 = scalar_lea.vmem [#allocation5], 22
    %v6522 = vld [vmem:[%s6521] ss:$2 sm:$0xf]
    %v6523 = vpack.c.bf16 %v6498, %v6496
    %v6524 = vpack.c.bf16 %v6502, %v6500
    %v6525 = vpack.c.bf16 %v6506, %v6504
    %v6526 = vpack.c.bf16 %v6510, %v6508
    %v6527 = vpack.c.bf16 %v6514, %v6512
    %v6528 = vpack.c.bf16 %v6518, %v6516
    %v6529 = vpack.c.bf16 %v6522, %v6520
    %s6530 = scalar_lea.vmem %s4, 2
    %v6531 = vld [vmem:[%s6530] sm:$0x1]
    %v6533 = vlaneseq
    %v6534 = vshrl.u32 %v6533, 7
    %v6535 = vsub.s32 0, %v6534
    %v6536 = vrot.slane %v6531, %v6535
    %v6650 = vunpack.c.l.b16 %v6384
    %v6651 = vunpack.c.l.b16 %v6385
    %v6652 = vunpack.c.l.b16 %v6386
    %v6653 = vunpack.c.l.b16 %v6387
    %v6654 = vunpack.c.l.b16 %v6388
    %v6655 = vunpack.c.l.b16 %v6389
    %v6656 = vunpack.c.l.b16 %v6390
    %v6657 = vunpack.c.l.b16 %v6391
    %v6658 = vunpack.c.l.b16 %v6392
    %v6659 = vunpack.c.l.b16 %v6393
    %v6660 = vunpack.c.l.b16 %v6394
    %v6661 = vunpack.c.l.b16 %v6395
    %v6662 = vunpack.c.l.b16 %v6396
    %v6663 = vunpack.c.l.b16 %v6397
    %v6664 = vunpack.c.l.b16 %v6398
    %v6665 = vunpack.c.l.b16 %v6399
    %v6666 = vunpack.c.l.b16 %v6400
    %v6667 = vunpack.c.l.b16 %v6401
    %v6668 = vunpack.c.l.b16 %v6402
    %v6669 = vunpack.c.l.b16 %v6403
    %v6670 = vunpack.c.l.b16 %v6404
    %v6671 = vunpack.c.l.b16 %v6405
    %v6672 = vunpack.c.l.b16 %v6406
    %v6673 = vunpack.c.l.b16 %v6407
    %v6674 = vunpack.c.l.b16 %v6408
    %v6675 = vunpack.c.l.b16 %v6409
    %v6676 = vunpack.c.l.b16 %v6410
    %v6677 = vunpack.c.l.b16 %v6411
    %v6678 = vunpack.c.l.b16 %v6412
    %v6679 = vunpack.c.l.b16 %v6413
    %v6680 = vunpack.c.l.b16 %v6414
    %v6681 = vunpack.c.l.b16 %v6415
    %v6682 = vunpack.c.l.b16 %v6416
    %v6683 = vunpack.c.l.b16 %v6417
    %v6684 = vunpack.c.l.b16 %v6418
    %v6685 = vunpack.c.l.b16 %v6419
    %v6686 = vunpack.c.l.b16 %v6420
    %v6687 = vunpack.c.l.b16 %v6421
    %v6688 = vunpack.c.l.b16 %v6422
    %v6689 = vunpack.c.l.b16 %v6423
    %v6690 = vunpack.c.l.b16 %v6424
    %v6691 = vunpack.c.l.b16 %v6425
    %v6692 = vunpack.c.l.b16 %v6426
    %v6693 = vunpack.c.l.b16 %v6427
    %v6694 = vunpack.c.l.b16 %v6428
    %v6695 = vunpack.c.l.b16 %v6429
    %v6696 = vunpack.c.l.b16 %v6430
    %v6697 = vunpack.c.l.b16 %v6431
    %v6698 = vunpack.c.l.b16 %v6432
    %v6699 = vunpack.c.l.b16 %v6433
    %v6700 = vunpack.c.l.b16 %v6434
    %v6701 = vunpack.c.l.b16 %v6435
    %v6702 = vunpack.c.l.b16 %v6436
    %v6703 = vunpack.c.l.b16 %v6437
    %v6704 = vunpack.c.l.b16 %v6438
    %v6705 = vunpack.c.l.b16 %v6439
    %v6706 = vunpack.c.l.b16 %v6440
    %v6707 = vunpack.c.l.b16 %v6441
    %v6708 = vunpack.c.l.b16 %v6442
    %v6709 = vunpack.c.l.b16 %v6443
    %v6710 = vunpack.c.l.b16 %v6444
    %v6711 = vunpack.c.l.b16 %v6445
    %v6712 = vunpack.c.l.b16 %v6446
    %v6713 = vunpack.c.l.b16 %v6447
    %v6714 = vunpack.c.l.b16 %v6448
    %v6715 = vunpack.c.l.b16 %v6449
    %v6716 = vunpack.c.l.b16 %v6450
    %v6717 = vunpack.c.l.b16 %v6451
    %v6718 = vunpack.c.l.b16 %v6452
    %v6719 = vunpack.c.l.b16 %v6453
    %v6720 = vunpack.c.l.b16 %v6454
    %v6721 = vunpack.c.l.b16 %v6455
    %v6722 = vunpack.c.l.b16 %v6456
    %v6723 = vunpack.c.l.b16 %v6457
    %v6724 = vunpack.c.l.b16 %v6458
    %v6725 = vunpack.c.l.b16 %v6459
    %v6726 = vunpack.c.l.b16 %v6460
    %v6727 = vunpack.c.l.b16 %v6461
    %v6728 = vunpack.c.l.b16 %v6462
    %v6729 = vunpack.c.l.b16 %v6463
    %v6730 = vunpack.c.l.b16 %v6464
    %v6731 = vunpack.c.l.b16 %v6465
    %v6732 = vunpack.c.l.b16 %v6466
    %v6733 = vunpack.c.l.b16 %v6467
    %v6734 = vunpack.c.l.b16 %v6468
    %v6735 = vunpack.c.l.b16 %v6469
    %v6736 = vunpack.c.l.b16 %v6470
    %v6737 = vunpack.c.l.b16 %v6471
    %v6738 = vunpack.c.l.b16 %v6472
    %v6739 = vunpack.c.l.b16 %v6473
    %v6740 = vunpack.c.l.b16 %v6474
    %v6741 = vunpack.c.l.b16 %v6475
    %v6742 = vunpack.c.l.b16 %v6476
    %v6743 = vunpack.c.l.b16 %v6477
    %v6744 = vunpack.c.l.b16 %v6478
    %v6745 = vunpack.c.l.b16 %v6479
    %v6746 = vunpack.c.l.b16 %v6480
    %v6747 = vunpack.c.l.b16 %v6481
    %v6748 = vunpack.c.l.b16 %v6482
    %v6749 = vunpack.c.l.b16 %v6483
    %v6750 = vunpack.c.l.b16 %v6484
    %v6751 = vunpack.c.l.b16 %v6485
    %v6752 = vunpack.c.l.b16 %v6486
    %v6753 = vunpack.c.l.b16 %v6487
    %v6754 = vunpack.c.l.b16 %v6488
    %v6755 = vunpack.c.l.b16 %v6489
    %v6756 = vunpack.c.l.b16 %v6490
    %v6757 = vunpack.c.l.b16 %v6491
    %v6758 = vunpack.c.l.b16 %v6492
    %v6759 = vunpack.c.l.b16 %v6493
    %v6760 = vunpack.c.l.b16 %v6494
    %v6761 = vunpack.c.l.b16 %v6495
    %v6762 = vpack.c.b16 %v6651, %v6650
    %v6763 = vpack.c.b16 %v6653, %v6652
    %v6764 = vpack.c.b16 %v6655, %v6654
    %v6765 = vpack.c.b16 %v6657, %v6656
    %v6766 = vpack.c.b16 %v6659, %v6658
    %v6767 = vpack.c.b16 %v6661, %v6660
    %v6768 = vpack.c.b16 %v6663, %v6662
    %v6769 = vpack.c.b16 %v6665, %v6664
    %v6770 = vpack.c.b16 %v6667, %v6666
    %v6771 = vpack.c.b16 %v6669, %v6668
    %v6772 = vpack.c.b16 %v6671, %v6670
    %v6773 = vpack.c.b16 %v6673, %v6672
    %v6774 = vpack.c.b16 %v6675, %v6674
    %v6775 = vpack.c.b16 %v6677, %v6676
    %v6776 = vpack.c.b16 %v6679, %v6678
    %v6777 = vpack.c.b16 %v6681, %v6680
    %v6778 = vpack.c.b16 %v6683, %v6682
    %v6779 = vpack.c.b16 %v6685, %v6684
    %v6780 = vpack.c.b16 %v6687, %v6686
    %v6781 = vpack.c.b16 %v6689, %v6688
    %v6782 = vpack.c.b16 %v6691, %v6690
    %v6783 = vpack.c.b16 %v6693, %v6692
    %v6784 = vpack.c.b16 %v6695, %v6694
    %v6785 = vpack.c.b16 %v6697, %v6696
    %v6786 = vpack.c.b16 %v6699, %v6698
    %v6787 = vpack.c.b16 %v6701, %v6700
    %v6788 = vpack.c.b16 %v6703, %v6702
    %v6789 = vpack.c.b16 %v6705, %v6704
    %v6790 = vpack.c.b16 %v6707, %v6706
    %v6791 = vpack.c.b16 %v6709, %v6708
    %v6792 = vpack.c.b16 %v6711, %v6710
    %v6793 = vpack.c.b16 %v6713, %v6712
    %v6794 = vpack.c.b16 %v6715, %v6714
    %v6795 = vpack.c.b16 %v6717, %v6716
    %v6796 = vpack.c.b16 %v6719, %v6718
    %v6797 = vpack.c.b16 %v6721, %v6720
    %v6798 = vpack.c.b16 %v6723, %v6722
    %v6799 = vpack.c.b16 %v6725, %v6724
    %v6800 = vpack.c.b16 %v6727, %v6726
    %v6801 = vpack.c.b16 %v6729, %v6728
    %v6802 = vpack.c.b16 %v6731, %v6730
    %v6803 = vpack.c.b16 %v6733, %v6732
    %v6804 = vpack.c.b16 %v6735, %v6734
    %v6805 = vpack.c.b16 %v6737, %v6736
    %v6806 = vpack.c.b16 %v6739, %v6738
    %v6807 = vpack.c.b16 %v6741, %v6740
    %v6808 = vpack.c.b16 %v6743, %v6742
    %v6809 = vpack.c.b16 %v6745, %v6744
    %v6810 = vpack.c.b16 %v6747, %v6746
    %v6811 = vpack.c.b16 %v6749, %v6748
    %v6812 = vpack.c.b16 %v6751, %v6750
    %v6813 = vpack.c.b16 %v6753, %v6752
    %v6814 = vpack.c.b16 %v6755, %v6754
    %v6815 = vpack.c.b16 %v6757, %v6756
    %v6816 = vpack.c.b16 %v6759, %v6758
    %v6817 = vpack.c.b16 %v6761, %v6760
    %6874 = vmatprep.subr.bf16.mxu0 0
    %6875 = vmatpush1.bf16.msra.mxu0 %v6769
    %6876 = vmatprep.subr.bf16.mxu0 0
    %6877 = vmatpush1.bf16.msra.mxu0 %v6768
    %6878 = vmatprep.subr.bf16.mxu0 0
    %6879 = vmatpush1.bf16.msra.mxu0 %v6767
    %6880 = vmatprep.subr.bf16.mxu0 0
    %6881 = vmatpush1.bf16.msra.mxu0 %v6766
    %6882 = vmatprep.subr.bf16.mxu0 0
    %6883 = vmatpush1.bf16.msra.mxu0 %v6765
    %6884 = vmatprep.subr.bf16.mxu0 0
    %6885 = vmatpush1.bf16.msra.mxu0 %v6764
    %6886 = vmatprep.subr.bf16.mxu0 0
    %6887 = vmatpush1.bf16.msra.mxu0 %v6763
    %6888 = vmatprep.subr.bf16.mxu0 0
    %6889 = vmatpush1.bf16.msra.mxu0 %v6762
    %6890 = vmatprep.subr.bf16.mxu0 0
    %6891 = vmatpush2.bf16.msra.mxu0 %v6777
    %6892 = vmatprep.subr.bf16.mxu0 0
    %6893 = vmatpush2.bf16.msra.mxu0 %v6776
    %6894 = vmatprep.subr.bf16.mxu0 0
    %6895 = vmatpush2.bf16.msra.mxu0 %v6775
    %6896 = vmatprep.subr.bf16.mxu0 0
    %6897 = vmatpush2.bf16.msra.mxu0 %v6774
    %6898 = vmatprep.subr.bf16.mxu0 0
    %6899 = vmatpush2.bf16.msra.mxu0 %v6773
    %6900 = vmatprep.subr.bf16.mxu0 0
    %6901 = vmatpush2.bf16.msra.mxu0 %v6772
    %6902 = vmatprep.subr.bf16.mxu0 0
    %6903 = vmatpush2.bf16.msra.mxu0 %v6771
    %6904 = vmatprep.subr.bf16.mxu0 0
    %6905 = vmatpush2.bf16.msra.mxu0 %v6770
    %6906 = vmatprep.mubr.bf16.mxu0 %v6524
    %6907 = vmatmul.mubr.bf16.gmra.mxu0 %v6523
    %v6908 = vpop.f32.mrf.mxu0
    %v6909 = vadd.f32 %v6536, %v6908
    %v6910 = vpop.f32.mrf.mxu0
    %v6911 = vpop.f32.mrf.mxu0
    %v6912 = vadd.f32 %v6536, %v6911
    %v6913 = vpop.f32.mrf.mxu0
    %6914 = vdwg.mxu0
    %6915 = vmatprep.subr.bf16.mxu0 0
    %6916 = vmatpush1.bf16.msra.mxu0 %v6785
    %6917 = vmatprep.subr.bf16.mxu0 0
    %6918 = vmatpush1.bf16.msra.mxu0 %v6784
    %6919 = vmatprep.subr.bf16.mxu0 0
    %6920 = vmatpush1.bf16.msra.mxu0 %v6783
    %6921 = vmatprep.subr.bf16.mxu0 0
    %6922 = vmatpush1.bf16.msra.mxu0 %v6782
    %6923 = vmatprep.subr.bf16.mxu0 0
    %6924 = vmatpush1.bf16.msra.mxu0 %v6781
    %6925 = vmatprep.subr.bf16.mxu0 0
    %6926 = vmatpush1.bf16.msra.mxu0 %v6780
    %6927 = vmatprep.subr.bf16.mxu0 0
    %6928 = vmatpush1.bf16.msra.mxu0 %v6779
    %6929 = vmatprep.subr.bf16.mxu0 0
    %6930 = vmatpush1.bf16.msra.mxu0 %v6778
    %6931 = vmatprep.subr.bf16.mxu0 0
    %6932 = vmatpush2.bf16.msra.mxu0 %v6793
    %6933 = vmatprep.subr.bf16.mxu0 0
    %6934 = vmatpush2.bf16.msra.mxu0 %v6792
    %6935 = vmatprep.subr.bf16.mxu0 0
    %6936 = vmatpush2.bf16.msra.mxu0 %v6791
    %6937 = vmatprep.subr.bf16.mxu0 0
    %6938 = vmatpush2.bf16.msra.mxu0 %v6790
    %6939 = vmatprep.subr.bf16.mxu0 0
    %6940 = vmatpush2.bf16.msra.mxu0 %v6789
    %6941 = vmatprep.subr.bf16.mxu0 0
    %6942 = vmatpush2.bf16.msra.mxu0 %v6788
    %6943 = vmatprep.subr.bf16.mxu0 0
    %6944 = vmatpush2.bf16.msra.mxu0 %v6787
    %6945 = vmatprep.subr.bf16.mxu0 0
    %6946 = vmatpush2.bf16.msra.mxu0 %v6786
    %6947 = vmatprep.mubr.bf16.mxu0 %v6526
    %6948 = vmatmul.mubr.bf16.gmra.mxu0 %v6525
    %v6949 = vpop.f32.mrf.mxu0
    %v6950 = vadd.f32 %v6909, %v6949
    %v6951 = vpop.f32.mrf.mxu0
    %v6952 = vpop.f32.mrf.mxu0
    %v6953 = vadd.f32 %v6912, %v6952
    %v6954 = vpop.f32.mrf.mxu0
    %6955 = vdwg.mxu0
    %6956 = vmatprep.subr.bf16.mxu0 0
    %6957 = vmatpush1.bf16.msra.mxu0 %v6801
    %6958 = vmatprep.subr.bf16.mxu0 0
    %6959 = vmatpush1.bf16.msra.mxu0 %v6800
    %6960 = vmatprep.subr.bf16.mxu0 0
    %6961 = vmatpush1.bf16.msra.mxu0 %v6799
    %6962 = vmatprep.subr.bf16.mxu0 0
    %6963 = vmatpush1.bf16.msra.mxu0 %v6798
    %6964 = vmatprep.subr.bf16.mxu0 0
    %6965 = vmatpush1.bf16.msra.mxu0 %v6797
    %6966 = vmatprep.subr.bf16.mxu0 0
    %6967 = vmatpush1.bf16.msra.mxu0 %v6796
    %6968 = vmatprep.subr.bf16.mxu0 0
    %6969 = vmatpush1.bf16.msra.mxu0 %v6795
    %6970 = vmatprep.subr.bf16.mxu0 0
    %6971 = vmatpush1.bf16.msra.mxu0 %v6794
    %6972 = vmatprep.subr.bf16.mxu0 0
    %6973 = vmatpush2.bf16.msra.mxu0 %v6809
    %6974 = vmatprep.subr.bf16.mxu0 0
    %6975 = vmatpush2.bf16.msra.mxu0 %v6808
    %6976 = vmatprep.subr.bf16.mxu0 0
    %6977 = vmatpush2.bf16.msra.mxu0 %v6807
    %6978 = vmatprep.subr.bf16.mxu0 0
    %6979 = vmatpush2.bf16.msra.mxu0 %v6806
    %6980 = vmatprep.subr.bf16.mxu0 0
    %6981 = vmatpush2.bf16.msra.mxu0 %v6805
    %6982 = vmatprep.subr.bf16.mxu0 0
    %6983 = vmatpush2.bf16.msra.mxu0 %v6804
    %6984 = vmatprep.subr.bf16.mxu0 0
    %6985 = vmatpush2.bf16.msra.mxu0 %v6803
    %6986 = vmatprep.subr.bf16.mxu0 0
    %6987 = vmatpush2.bf16.msra.mxu0 %v6802
    %6988 = vmatprep.mubr.bf16.mxu0 %v6528
    %6989 = vmatmul.mubr.bf16.gmra.mxu0 %v6527
    %v6990 = vpop.f32.mrf.mxu0
    %v6991 = vadd.f32 %v6950, %v6990
    %v6992 = vpop.f32.mrf.mxu0
    %v6993 = vpop.f32.mrf.mxu0
    %v6994 = vadd.f32 %v6953, %v6993
    %v6995 = vpop.f32.mrf.mxu0
    %6996 = vdwg.mxu0
    %6997 = vmatprep.subr.bf16.mxu0 0
    %6998 = vmatpush1.bf16.msra.mxu0 %v6817
    %6999 = vmatprep.subr.bf16.mxu0 0
    %7000 = vmatpush1.bf16.msra.mxu0 %v6816
    %7001 = vmatprep.subr.bf16.mxu0 0
    %7002 = vmatpush1.bf16.msra.mxu0 %v6815
    %7003 = vmatprep.subr.bf16.mxu0 0
    %7004 = vmatpush1.bf16.msra.mxu0 %v6814
    %7005 = vmatprep.subr.bf16.mxu0 0
    %7006 = vmatpush1.bf16.msra.mxu0 %v6813
    %7007 = vmatprep.subr.bf16.mxu0 0
    %7008 = vmatpush1.bf16.msra.mxu0 %v6812
    %7009 = vmatprep.subr.bf16.mxu0 0
    %7010 = vmatpush1.bf16.msra.mxu0 %v6811
    %7011 = vmatprep.subr.bf16.mxu0 0
    %7012 = vmatpush1.bf16.msra.mxu0 %v6810
    %7013 = vmatprep.subr.bf16.mxu0 0
    %7014 = vmatpush2.bf16.msra.mxu0 0
    %7015 = vmatprep.subr.bf16.mxu0 0
    %7016 = vmatpush2.bf16.msra.mxu0 0
    %7017 = vmatprep.subr.bf16.mxu0 0
    %7018 = vmatpush2.bf16.msra.mxu0 0
    %7019 = vmatprep.subr.bf16.mxu0 0
    %7020 = vmatpush2.bf16.msra.mxu0 0
    %7021 = vmatprep.subr.bf16.mxu0 0
    %7022 = vmatpush2.bf16.msra.mxu0 0
    %7023 = vmatprep.subr.bf16.mxu0 0
    %7024 = vmatpush2.bf16.msra.mxu0 0
    %7025 = vmatprep.subr.bf16.mxu0 0
    %7026 = vmatpush2.bf16.msra.mxu0 0
    %7027 = vmatprep.subr.bf16.mxu0 0
    %7028 = vmatpush2.bf16.msra.mxu0 0
    %7029 = vmatprep.mubr.bf16.mxu0 0
    %7030 = vmatmul.mubr.bf16.gmra.mxu0 %v6529
    %v7031 = vpop.f32.mrf.mxu0
    %v7032 = vadd.f32 %v6991, %v7031
    %v7033 = vpop.f32.mrf.mxu0
    %v7034 = vpop.f32.mrf.mxu0
    %v7035 = vadd.f32 %v6994, %v7034
    %v7036 = vpop.f32.mrf.mxu0
    %7037 = vdwg.mxu0
    %v7038 = vmax.f32 %v7032, 0.0
    %v7039 = vmax.f32 %v7035, 0.0
    %v7040 = vlaneseq
    %v7041 = vand.u32 %v7040, 127
    %v7042 = vlaneseq
    %v7043 = vshrl.u32 %v7042, 7
    %v7044 = vmul.u32 %v7043, 8
    %v7045 = vsub.s32 %v7041, %v7044
    %vm7046 = vcmp.ge.s32.totalorder %v7045, 0
    %vm7047 = vcmp.le.s32.totalorder %v7045, 2
    %vm7048 = vmand %vm7046, %vm7047
    %v7049 = vand.u32 %v7045, 1
    %vm7050 = vcmp.eq.s32.totalorder %v7049, 0
    %vm7051 = vmand %vm7048, %vm7050
    %v7052 = vsel %vm7051, 1.0, 0.0
    %vm7053 = vcmask 97280
    %v7055 = vsel %vm7053, %v7052, 0
    %vm7057 = vcmask 1043456
    %v7059 = vsel %vm7057, %v7039, 0
    %7061 = vmatprep.subr.mxu0 0.0
    %7062 = vmatpush1.msra.mxu0 0.0
    %7063 = vmatprep.subr.mxu0 0.0
    %7064 = vmatpush1.msra.mxu0 0.0
    %7065 = vmatprep.subr.mxu0 0.0
    %7066 = vmatpush1.msra.mxu0 0.0
    %7067 = vmatprep.subr.mxu0 0.0
    %7068 = vmatpush1.msra.mxu0 0.0
    %7069 = vmatprep.subr.mxu0 0.0
    %7070 = vmatpush1.msra.mxu0 0.0
    %7071 = vmatprep.subr.mxu0 0.0
    %7072 = vmatpush1.msra.mxu0 0.0
    %7073 = vmatprep.subr.mxu0 0.0
    %7074 = vmatpush1.msra.mxu0 0.0
    %7075 = vmatprep.subr.mxu0 0.0
    %7076 = vmatpush1.msra.mxu0 0.0
    %7077 = vmatprep.subr.mxu0 0.0
    %7078 = vmatpush1.msra.mxu0 0.0
    %7079 = vmatprep.subr.mxu0 0.0
    %7080 = vmatpush1.msra.mxu0 0.0
    %7081 = vmatprep.subr.mxu0 0.0
    %7082 = vmatpush1.msra.mxu0 0.0
    %7083 = vmatprep.subr.mxu0 0.0
    %7084 = vmatpush1.msra.mxu0 0.0
    %7085 = vmatprep.subr.mxu0 0.0
    %7086 = vmatpush1.msra.mxu0 0.0
    %7087 = vmatprep.subr.mxu0 0.0
    %7088 = vmatpush1.msra.mxu0 0.0
    %7089 = vmatprep.subr.mxu0 0.0
    %7090 = vmatpush1.msra.mxu0 %v7059
    %7091 = vmatprep.subr.mxu0 0.0
    %7092 = vmatpush1.msra.mxu0 %v7038
    %7093 = vmatprep.subr.mxu0 0.0
    %7094 = vmatpush2.msra.mxu0 0.0
    %7095 = vmatprep.subr.mxu0 0.0
    %7096 = vmatpush2.msra.mxu0 0.0
    %7097 = vmatprep.subr.mxu0 0.0
    %7098 = vmatpush2.msra.mxu0 0.0
    %7099 = vmatprep.subr.mxu0 0.0
    %7100 = vmatpush2.msra.mxu0 0.0
    %7101 = vmatprep.subr.mxu0 0.0
    %7102 = vmatpush2.msra.mxu0 0.0
    %7103 = vmatprep.subr.mxu0 0.0
    %7104 = vmatpush2.msra.mxu0 0.0
    %7105 = vmatprep.subr.mxu0 0.0
    %7106 = vmatpush2.msra.mxu0 0.0
    %7107 = vmatprep.subr.mxu0 0.0
    %7108 = vmatpush2.msra.mxu0 0.0
    %7109 = vmatprep.subr.mxu0 0.0
    %7110 = vmatpush2.msra.mxu0 0.0
    %7111 = vmatprep.subr.mxu0 0.0
    %7112 = vmatpush2.msra.mxu0 0.0
    %7113 = vmatprep.subr.mxu0 0.0
    %7114 = vmatpush2.msra.mxu0 0.0
    %7115 = vmatprep.subr.mxu0 0.0
    %7116 = vmatpush2.msra.mxu0 0.0
    %7117 = vmatprep.subr.mxu0 0.0
    %7118 = vmatpush2.msra.mxu0 0.0
    %7119 = vmatprep.subr.mxu0 0.0
    %7120 = vmatpush2.msra.mxu0 0.0
    %7121 = vmatprep.subr.mxu0 0.0
    %7122 = vmatpush2.msra.mxu0 0.0
    %7123 = vmatprep.subr.mxu0 0.0
    %7124 = vmatpush2.msra.mxu0 0.0
    %7125 = vmatprep.mubr.f32.mxu0 0.0
    %7126 = vmatmul.mubr.f32.gmra.mxu0 %v7055
    %v7127 = vpop.f32.mrf.mxu0
    %v7128 = vadd.f32 0.0, %v7127
    %v7129 = vpop.f32.mrf.mxu0
    %7130 = vdwg.mxu0
    %v7131 = vmul.f32 %v7128, 0.5
    %v7132 = vpack.c.bf16 %v7131, %v7131
    %v7133 = vld [vmem:[#allocation12] sm:$0xf]
    %v7134 = vld [vmem:[#allocation12 + $0x4] sm:$0xf]
    %v7135 = vld [vmem:[#allocation12 + $0x8] sm:$0xf]
    %v7136 = vld [vmem:[#allocation12 + $0xc] sm:$0xf]
    %v7137 = vld [vmem:[#allocation12 + $0x10] sm:$0xf]
    %v7138 = vld [vmem:[#allocation12 + $0x14] sm:$0xf]
    %v7139 = vld [vmem:[#allocation12 + $0x18] sm:$0xf]
    %v7140 = vld [vmem:[#allocation12 + $0x1c] sm:$0xf]
    %v7141 = vld [vmem:[#allocation12 + $0x20] sm:$0xf]
    %v7142 = vld [vmem:[#allocation12 + $0x24] sm:$0xf]
    %v7143 = vld [vmem:[#allocation12 + $0x28] sm:$0xf]
    %v7144 = vld [vmem:[#allocation12 + $0x2c] sm:$0xf]
    %v7145 = vld [vmem:[#allocation12 + $0x30] sm:$0xf]
    %v7146 = vld [vmem:[#allocation12 + $0x34] sm:$0xf]
    %v7147 = vld [vmem:[#allocation12 + $0x38] sm:$0xf]
    %v7148 = vld [vmem:[#allocation12 + $0x3c] sm:$0xf]
    %v7149 = vld [vmem:[%s6] sm:$0x1]
    %v7151 = vlaneseq
    %v7152 = vshrl.u32 %v7151, 7
    %v7153 = vsub.s32 0, %v7152
    %v7154 = vrot.slane %v7149, %v7153
    %v7172 = vunpack.c.l.b16 %v7133
    %v7173 = vunpack.c.l.b16 %v7134
    %v7174 = vunpack.c.l.b16 %v7135
    %v7175 = vunpack.c.l.b16 %v7136
    %v7176 = vunpack.c.l.b16 %v7137
    %v7177 = vunpack.c.l.b16 %v7138
    %v7178 = vunpack.c.l.b16 %v7139
    %v7179 = vunpack.c.l.b16 %v7140
    %v7180 = vunpack.c.l.b16 %v7141
    %v7181 = vunpack.c.l.b16 %v7142
    %v7182 = vunpack.c.l.b16 %v7143
    %v7183 = vunpack.c.l.b16 %v7144
    %v7184 = vunpack.c.l.b16 %v7145
    %v7185 = vunpack.c.l.b16 %v7146
    %v7186 = vunpack.c.l.b16 %v7147
    %v7187 = vunpack.c.l.b16 %v7148
    %v7188 = vpack.c.b16 %v7173, %v7172
    %v7189 = vpack.c.b16 %v7175, %v7174
    %v7190 = vpack.c.b16 %v7177, %v7176
    %v7191 = vpack.c.b16 %v7179, %v7178
    %v7192 = vpack.c.b16 %v7181, %v7180
    %v7193 = vpack.c.b16 %v7183, %v7182
    %v7194 = vpack.c.b16 %v7185, %v7184
    %v7195 = vpack.c.b16 %v7187, %v7186
    %7204 = vmatprep.subr.bf16.mxu0 0
    %7205 = vmatpush1.bf16.msra.mxu0 %v7195
    %7206 = vmatprep.subr.bf16.mxu0 0
    %7207 = vmatpush1.bf16.msra.mxu0 %v7194
    %7208 = vmatprep.subr.bf16.mxu0 0
    %7209 = vmatpush1.bf16.msra.mxu0 %v7193
    %7210 = vmatprep.subr.bf16.mxu0 0
    %7211 = vmatpush1.bf16.msra.mxu0 %v7192
    %7212 = vmatprep.subr.bf16.mxu0 0
    %7213 = vmatpush1.bf16.msra.mxu0 %v7191
    %7214 = vmatprep.subr.bf16.mxu0 0
    %7215 = vmatpush1.bf16.msra.mxu0 %v7190
    %7216 = vmatprep.subr.bf16.mxu0 0
    %7217 = vmatpush1.bf16.msra.mxu0 %v7189
    %7218 = vmatprep.subr.bf16.mxu0 0
    %7219 = vmatpush1.bf16.msra.mxu0 %v7188
    %7220 = vmatprep.subr.bf16.mxu0 0
    %7221 = vmatpush2.bf16.msra.mxu0 0
    %7222 = vmatprep.subr.bf16.mxu0 0
    %7223 = vmatpush2.bf16.msra.mxu0 0
    %7224 = vmatprep.subr.bf16.mxu0 0
    %7225 = vmatpush2.bf16.msra.mxu0 0
    %7226 = vmatprep.subr.bf16.mxu0 0
    %7227 = vmatpush2.bf16.msra.mxu0 0
    %7228 = vmatprep.subr.bf16.mxu0 0
    %7229 = vmatpush2.bf16.msra.mxu0 0
    %7230 = vmatprep.subr.bf16.mxu0 0
    %7231 = vmatpush2.bf16.msra.mxu0 0
    %7232 = vmatprep.subr.bf16.mxu0 0
    %7233 = vmatpush2.bf16.msra.mxu0 0
    %7234 = vmatprep.subr.bf16.mxu0 0
    %7235 = vmatpush2.bf16.msra.mxu0 0
    %7236 = vmatprep.mubr.bf16.mxu0 0
    %7237 = vmatmul.mubr.bf16.gmra.mxu0 %v7132
    %v7238 = vpop.f32.mrf.mxu0
    %v7239 = vadd.f32 %v7154, %v7238
    %v7240 = vpop.f32.mrf.mxu0
    %v7241 = vpop.f32.mrf.mxu0
    %v7242 = vpop.f32.mrf.mxu0
    %7243 = vdwg.mxu0
    %7244 = vst [vmem:[#allocation14] sm:$0x3] %v7239
    // Predicated region
    $region46: #{rect_cnn_forward.1} parent=1 // pred_check
      _
    $region47: #{rect_cnn_forward.1} parent=1 // pred_check_branch
      %7246 = sbr.rel (0) target = $region49
    $region48: #{rect_cnn_forward.1} parent=1 // pred_region
      %s7248 = ssub.s32 32, 32
      %7249 = vsyncadd [#allocation8], %s7248
      %s7251 = sshll.u32 [#allocation14], 4
      %s7252 = int_to_ptr.vmem [resolvable:$true] %s7251
      %7254 = dma.vmem_to_hbm [thread:$0]  %s7252, 32, %s7, [#allocation8]
    $region49: #{rect_cnn_forward.1} parent=1 // pred_fallthru
      _
    // Predicated region
    $region50: #{rect_cnn_forward.1} parent=1 // pred_check
      _
    $region51: #{rect_cnn_forward.1} parent=1 // pred_check_branch
      %7256 = sbr.rel (0) target = $region53
    $region52: #{rect_cnn_forward.1} parent=1 // pred_region
      %7257 = dma.done [#allocation8], 32
    $region53: #{rect_cnn_forward.1} parent=1 // pred_fallthru
      _
    %7258 = vsyncpa [#allocation7], 1
    %7259 = vsyncpa [#allocation10], 1
    %7260 = vsyncpa [#allocation13], 1
    %7261 = vsyncpa [#allocation8], 1

</llo_original>
